<compile_context>
chip_gen: v7x
topology: tpu7x:2x2x1
jax: 0.10.0
libtpu: 0.0.40
codegen_flags: <defaults>
</compile_context>

<pallas_src>
import functools

import numpy as np
import jax
import jax.numpy as jnp
from jax import lax
from jax.experimental import pallas as pl
from jax.experimental.pallas import tpu as pltpu


# ------------------------------ fused kernel ------------------------------- #

def _bottleneck_kernel(x_ref, xtop_ref, xbot_ref,
                       w1_ref, s1_ref, b1_ref,
                       w2_ref, s2_ref, b2_ref,
                       w3_ref, s3_ref, b3_ref,
                       o_ref, *, fold):
    """One (clip, H-tile): TSM-shifted conv1/bn1/relu + 3x3 conv2/bn2/relu +
    conv3/bn3 + residual + relu, entirely in VMEM."""
    T, tile_h, W, Cin = x_ref.shape
    C1p = w1_ref.shape[-1]                 # lane-padded bottleneck width
    He = tile_h + 2                        # tile rows + 1 halo row each side
    rows_e = T * He * W                    # conv1 runs on the halo'd slab
    rows = T * tile_h * W
    j = pl.program_id(1)
    n_h = pl.num_programs(1)
    f32 = jnp.float32
    bf16 = jnp.bfloat16

    # ---- assemble the H-extended (halo'd) input tile ------------------------
    xe = jnp.concatenate([xtop_ref[...], x_ref[...], xbot_ref[...]], axis=1)
    xef = xe.reshape(rows_e, Cin)                               # bf16

    # ---- conv1 (1x1) with the TSM shift folded into K-slab matmuls ----------
    w1 = w1_ref[...]                                            # (Cin, C1p) bf16
    if fold > 0:
        fhw = He * W
        pa = jnp.dot(xef[:, :fold], w1[:fold],
                     preferred_element_type=f32).reshape(T, fhw, C1p)
        pb = jnp.dot(xef[:, fold:2 * fold], w1[fold:2 * fold],
                     preferred_element_type=f32).reshape(T, fhw, C1p)
        zt = jnp.zeros((1, fhw, C1p), f32)
        # frame t takes channel group a from frame t+1, group b from frame t-1
        h1 = (jnp.concatenate([pa[1:], zt], axis=0)
              + jnp.concatenate([zt, pb[:-1]], axis=0))
        if Cin > 2 * fold:
            h1 = h1 + jnp.dot(xef[:, 2 * fold:], w1[2 * fold:],
                              preferred_element_type=f32).reshape(T, fhw, C1p)
        h1 = h1.reshape(rows_e, C1p)
    else:
        h1 = jnp.dot(xef, w1, preferred_element_type=f32)

    # bn1 + relu (padded lanes have scale=bias=0 and stay exactly 0)
    h1 = jnp.maximum(h1 * s1_ref[...] + b1_ref[...], 0.0)
    h1 = h1.reshape(T, He, W, C1p)

    # Halo rows that fall outside the image must be zero -- they ARE conv2's
    # zero padding (h1 of a pad row is 0, not relu(bn1 bias)).
    h1_top = jnp.where(j > 0, h1[:, 0:1], 0.0)
    h1_bot = jnp.where(j < n_h - 1, h1[:, He - 1:He], 0.0)
    h1 = jnp.concatenate([h1_top, h1[:, 1:He - 1], h1_bot], axis=1)

    # ---- conv2 (3x3): W taps via XLU rolls, fused along K (K = 3*C1p) -------
    wcol = lax.broadcasted_iota(jnp.int32, (W, C1p), 0)
    left = jnp.where(wcol == 0, 0.0, pltpu.roll(h1, 1, 2))            # in[.., w-1, ..]
    right = jnp.where(wcol == W - 1, 0.0, pltpu.roll(h1, W - 1, 2))   # in[.., w+1, ..]
    slab = jnp.concatenate([left.astype(bf16), h1.astype(bf16),
                            right.astype(bf16)], axis=-1)             # (T,He,W,3*C1p)

    acc = jnp.dot(slab[:, 0:tile_h].reshape(rows, 3 * C1p), w2_ref[0],
                  preferred_element_type=f32)
    for dy in (1, 2):
        acc = acc + jnp.dot(slab[:, dy:dy + tile_h].reshape(rows, 3 * C1p),
                            w2_ref[dy], preferred_element_type=f32)
    h2 = jnp.maximum(acc * s2_ref[...] + b2_ref[...], 0.0)

    # ---- conv3 (1x1) + bn3 + residual + relu --------------------------------
    y = jnp.dot(h2.astype(bf16), w3_ref[...], preferred_element_type=f32)
    y = y * s3_ref[...] + b3_ref[...]
    # reload the residual at the add site (cheap vld; keeps x's live range short)
    y = y + x_ref[...].reshape(rows, Cin).astype(f32)
    y = jnp.maximum(y, 0.0)
    o_ref[...] = y.reshape(T, tile_h, W, o_ref.shape[-1]).astype(o_ref.dtype)


# -------------------------------- wrappers ---------------------------------- #

def bottleneck_forward_nhwc(x_nhwc, p, *, n_segment, fold_div,
                            place="blockres", tile_h=None):
    """NHWC entry point (preferred: keep the whole net NHWC to avoid transposes)."""
    NT, H, W, Cin = x_nhwc.shape
    assert NT % n_segment == 0
    T = n_segment
    NB = NT // T
    C1 = p["w1"].shape[1]
    Cout = p["w3"].shape[1]
    assert Cout == Cin, "downsample=None requires inplanes == planes * expansion"

    if tile_h is None:
        tile_h = H
    assert H % tile_h == 0
    n_h = H // tile_h

    # Lane-pad the bottleneck width to a multiple of 128; padded lanes get
    # scale=bias=0 (bn1/bn2) and zero rows in w3, so they stay exactly 0.
    C1p = -(-C1 // 128) * 128
    padw = C1p - C1
    bf16 = jnp.bfloat16
    w1p = jnp.pad(p["w1"], ((0, 0), (0, padw))).astype(bf16)               # (Cin, C1p)
    w2p = jnp.pad(p["w2"], ((0, 0), (0, 0), (0, padw), (0, padw))).astype(bf16)
    w2c = w2p.reshape(3, 3 * C1p, C1p)   # rows ordered (dx, ci) == lane order [left|mid|right]
    w3p = jnp.pad(p["w3"], ((0, padw), (0, 0))).astype(bf16)               # (C1p, Cout)
    s1p = jnp.pad(p["s1"], ((0, 0), (0, padw)))
    b1p = jnp.pad(p["b1"], ((0, 0), (0, padw)))
    s2p = jnp.pad(p["s2"], ((0, 0), (0, padw)))
    b2p = jnp.pad(p["b2"], ((0, 0), (0, padw)))

    fold = (Cin // fold_div) if place == "blockres" else 0   # fold=0 disables shift
    x_bf = x_nhwc.astype(bf16)                               # bf16 at the HBM boundary

    def const_spec(shape):
        zeros = (0,) * len(shape)
        # Constant index_map -> DMA'd once (Pallas skips re-fetch of unchanged blocks).
        return pl.BlockSpec(shape, lambda b, j: zeros)

    top_map = lambda b, j: (b, jnp.maximum(j * tile_h - 1, 0), 0, 0)
    bot_map = lambda b, j: (b, jnp.minimum((j + 1) * tile_h, H - 1), 0, 0)

    # Raise the scoped VMEM limit (defaults: 16/32 MiB) but stay well under the
    # physical capacity of the current generation (64 MiB/TC on v7x).
    try:
        vmem_cap = int(pltpu.get_tpu_info().vmem_capacity_bytes)
    except Exception:
        vmem_cap = 64 * 1024 * 1024
    vmem_limit = vmem_cap * 3 // 4

    kernel = functools.partial(_bottleneck_kernel, fold=fold)

    return pl.pallas_call(
        kernel,
        out_shape=jax.ShapeDtypeStruct((NT, H, W, Cout), bf16),
        grid=(NB, n_h),                                      # (clips, H-tiles)
        in_specs=[
            pl.BlockSpec((T, tile_h, W, Cin), lambda b, j: (b, j, 0, 0)),
            pl.BlockSpec((T, 1, W, Cin), top_map),           # halo row above the tile
            pl.BlockSpec((T, 1, W, Cin), bot_map),           # halo row below the tile
            const_spec((Cin, C1p)), const_spec((1, C1p)), const_spec((1, C1p)),
            const_spec((3, 3 * C1p, C1p)), const_spec((1, C1p)), const_spec((1, C1p)),
            const_spec((C1p, Cout)), const_spec((1, Cout)), const_spec((1, Cout)),
        ],
        out_specs=pl.BlockSpec((T, tile_h, W, Cout), lambda b, j: (b, j, 0, 0)),
        compiler_params=pltpu.CompilerParams(
            dimension_semantics=("parallel", "parallel"),
            vmem_limit_bytes=vmem_limit),
    )(x_bf, x_bf, x_bf, w1p, s1p, b1p, w2c, s2p, b2p, w3p, p["s3"], p["b3"])


def bottleneck_forward(x_nchw, p, *, n_segment, fold_div, place="blockres",
                       tile_h=None):
    # NOTE: NCHW wrapper only to match the PyTorch interface; each transpose is
    # an extra full HBM pass -- keep activations NHWC/bf16 in a real network.
    x_nhwc = jnp.transpose(x_nchw, (0, 2, 3, 1))
    out = bottleneck_forward_nhwc(x_nhwc, p, n_segment=n_segment,
                                  fold_div=fold_div, place=place, tile_h=tile_h)
    return jnp.transpose(out.astype(x_nchw.dtype), (0, 3, 1, 2))


# --------------------- deterministic parameter init ------------------------ #

def init_params(key, inplanes, planes, expansion=4, eps=1e-5):
    Cout = planes * expansion
    ks = jax.random.split(key, 15)

    def bn_fold(kg, kb, km, kv, C):
        gamma = 1.0 + 0.1 * jax.random.normal(kg, (C,), jnp.float32)
        beta = 0.1 * jax.random.normal(kb, (C,), jnp.float32)
        mean = 0.1 * jax.random.normal(km, (C,), jnp.float32)
        var = jax.random.uniform(kv, (C,), jnp.float32, 0.5, 1.5)
        scale = gamma / jnp.sqrt(var + eps)
        bias = beta - mean * scale
        return scale.reshape(1, C), bias.reshape(1, C)

    w1 = 0.1 * jax.random.normal(ks[0], (inplanes, planes), jnp.float32)      # 1x1: (Ci,Co)
    w2 = 0.1 * jax.random.normal(ks[1], (3, 3, planes, planes), jnp.float32)  # HWIO
    w3 = 0.1 * jax.random.normal(ks[2], (planes, Cout), jnp.float32)          # 1x1: (Ci,Co)
    s1, b1 = bn_fold(ks[3], ks[4], ks[5], ks[6], planes)
    s2, b2 = bn_fold(ks[7], ks[8], ks[9], ks[10], planes)
    s3, b3 = bn_fold(ks[11], ks[12], ks[13], ks[14], Cout)
    return dict(w1=w1, w2=w2, w3=w3, s1=s1, b1=b1, s2=s2, b2=b2, s3=s3, b3=b3)


# ----------------------- pure-JAX f32 reference (NCHW) ---------------------- #

def reference_forward(x_nchw, p, *, n_segment, fold_div, place="blockres"):
    NT, C, H, W = x_nchw.shape
    if place == "blockres":
        fold = C // fold_div
        nb = NT // n_segment
        xv = x_nchw.reshape(nb, n_segment, C, H, W)
        out = jnp.zeros_like(xv)
        out = out.at[:, :-1, :fold].set(xv[:, 1:, :fold])
        out = out.at[:, 1:, fold:2 * fold].set(xv[:, :-1, fold:2 * fold])
        out = out.at[:, :, 2 * fold:].set(xv[:, :, 2 * fold:])
        xin = out.reshape(NT, C, H, W)
    else:
        xin = x_nchw

    def conv(h, w_hwio, pad):
        return lax.conv_general_dilated(
            h, w_hwio, (1, 1), pad, dimension_numbers=("NCHW", "HWIO", "NCHW"))

    def bn(h, s, b):
        return h * s.reshape(1, -1, 1, 1) + b.reshape(1, -1, 1, 1)

    h = conv(xin, p["w1"].reshape(1, 1, *p["w1"].shape), "VALID")
    h = jnp.maximum(bn(h, p["s1"], p["b1"]), 0.0)
    h = conv(h, p["w2"], ((1, 1), (1, 1)))
    h = jnp.maximum(bn(h, p["s2"], p["b2"]), 0.0)
    h = conv(h, p["w3"].reshape(1, 1, *p["w3"].shape), "VALID")
    h = bn(h, p["s3"], p["b3"]) + x_nchw
    return jnp.maximum(h, 0.0)


# ---------------------------------- main ------------------------------------ #

if __name__ == "__main__":
    n_segment = 4
    n_batch = 2
    fold_div = 8
    planes = 4
    inplanes = planes * 4          # Bottleneck.expansion == 4, residual adds cleanly
    H = W = 16
    tile_h = 8                     # 2 H-tiles per clip -> exercises the halo path
    NT = n_batch * n_segment       # PyTorch "nt" batch dim (videos x frames)

    key = jax.random.PRNGKey(0)
    kx, kp = jax.random.split(key)
    x = jax.random.normal(kx, (NT, inplanes, H, W), jnp.float32)   # NCHW, like PyTorch
    params = init_params(kp, inplanes, planes)

    out = bottleneck_forward(x, params, n_segment=n_segment,
                             fold_div=fold_div, place="blockres", tile_h=tile_h)
    out = jax.block_until_ready(out)

    ref = reference_forward(x, params, n_segment=n_segment,
                            fold_div=fold_div, place="blockres")
    assert out.shape == ref.shape == (NT, inplanes, H, W)
    # Kernel runs bf16 I/O + bf16 MXU matmuls with f32 accumulation; compare
    # against the f32 reference with a bf16-appropriate tolerance.
    np.testing.assert_allclose(np.asarray(out), np.asarray(ref),
                               rtol=2e-2, atol=3e-2)
    print("KERNEL_OK")
</pallas_src>

<mosaic_0001>
module attributes {stable_mosaic.version = 11 : i64} {
  func.func @_bottleneck_kernel(%arg0: i32, %arg1: i32, %arg2: memref<4x8x16x16xbf16, #tpu.memory_space<vmem>>, %arg3: memref<4x1x16x16xbf16, #tpu.memory_space<vmem>>, %arg4: memref<4x1x16x16xbf16, #tpu.memory_space<vmem>>, %arg5: memref<16x128xbf16, #tpu.memory_space<vmem>>, %arg6: memref<1x128xf32, #tpu.memory_space<vmem>>, %arg7: memref<1x128xf32, #tpu.memory_space<vmem>>, %arg8: memref<3x384x128xbf16, #tpu.memory_space<vmem>>, %arg9: memref<1x128xf32, #tpu.memory_space<vmem>>, %arg10: memref<1x128xf32, #tpu.memory_space<vmem>>, %arg11: memref<128x16xbf16, #tpu.memory_space<vmem>>, %arg12: memref<1x16xf32, #tpu.memory_space<vmem>>, %arg13: memref<1x16xf32, #tpu.memory_space<vmem>>, %arg14: memref<4x8x16x16xbf16, #tpu.memory_space<vmem>>) attributes {dimension_semantics = [#tpu.dimension_semantics<parallel>, #tpu.dimension_semantics<parallel>], iteration_bounds = array<i64: 2, 2>, scalar_prefetch = 0 : i64, scratch_operands = 0 : i64, tpu.core_type = #tpu.core_type<tc>, window_params = [{transform_indices = @transform_0, window_bounds = array<i64: 4, 8, 16, 16>}, {transform_indices = @transform_1, window_bounds = array<i64: 4, 1, 16, 16>}, {transform_indices = @transform_2, window_bounds = array<i64: 4, 1, 16, 16>}, {pipeline_mode = #tpu.pipeline_mode<synchronous>, transform_indices = @transform_3, window_bounds = array<i64: 16, 128>}, {pipeline_mode = #tpu.pipeline_mode<synchronous>, transform_indices = @transform_4, window_bounds = array<i64: 1, 128>}, {pipeline_mode = #tpu.pipeline_mode<synchronous>, transform_indices = @transform_5, window_bounds = array<i64: 1, 128>}, {pipeline_mode = #tpu.pipeline_mode<synchronous>, transform_indices = @transform_6, window_bounds = array<i64: 3, 384, 128>}, {pipeline_mode = #tpu.pipeline_mode<synchronous>, transform_indices = @transform_7, window_bounds = array<i64: 1, 128>}, {pipeline_mode = #tpu.pipeline_mode<synchronous>, transform_indices = @transform_8, window_bounds = array<i64: 1, 128>}, {pipeline_mode = #tpu.pipeline_mode<synchronous>, transform_indices = @transform_9, window_bounds = array<i64: 128, 16>}, {pipeline_mode = #tpu.pipeline_mode<synchronous>, transform_indices = @transform_10, window_bounds = array<i64: 1, 16>}, {pipeline_mode = #tpu.pipeline_mode<synchronous>, transform_indices = @transform_11, window_bounds = array<i64: 1, 16>}, {transform_indices = @transform_12, window_bounds = array<i64: 4, 8, 16, 16>}]} {
    %c0 = arith.constant 0 : index
    %c0_0 = arith.constant 0 : index
    %c0_1 = arith.constant 0 : index
    %c0_2 = arith.constant 0 : index
    %0 = vector.load %arg3[%c0, %c0_0, %c0_1, %c0_2] : memref<4x1x16x16xbf16, #tpu.memory_space<vmem>>, vector<4x1x16x16xbf16>
    %c0_3 = arith.constant 0 : index
    %c0_4 = arith.constant 0 : index
    %c0_5 = arith.constant 0 : index
    %c0_6 = arith.constant 0 : index
    %1 = vector.load %arg2[%c0_3, %c0_4, %c0_5, %c0_6] : memref<4x8x16x16xbf16, #tpu.memory_space<vmem>>, vector<4x8x16x16xbf16>
    %c0_7 = arith.constant 0 : index
    %c0_8 = arith.constant 0 : index
    %c0_9 = arith.constant 0 : index
    %c0_10 = arith.constant 0 : index
    %2 = vector.load %arg4[%c0_7, %c0_8, %c0_9, %c0_10] : memref<4x1x16x16xbf16, #tpu.memory_space<vmem>>, vector<4x1x16x16xbf16>
    %3 = tpu.concatenate %0, %1, %2 in 1 : vector<4x1x16x16xbf16>, vector<4x8x16x16xbf16>, vector<4x1x16x16xbf16> -> vector<4x10x16x16xbf16>
    %4 = vector.shape_cast %3 : vector<4x10x16x16xbf16> to vector<640x16xbf16>
    %c0_11 = arith.constant 0 : index
    %c0_12 = arith.constant 0 : index
    %5 = vector.load %arg5[%c0_11, %c0_12] : memref<16x128xbf16, #tpu.memory_space<vmem>>, vector<16x128xbf16>
    %6 = vector.extract_strided_slice %4 {offsets = [0, 0], sizes = [640, 2], strides = [1, 1]} : vector<640x16xbf16> to vector<640x2xbf16>
    %7 = vector.extract_strided_slice %5 {offsets = [0, 0], sizes = [2, 128], strides = [1, 1]} : vector<16x128xbf16> to vector<2x128xbf16>
    %cst = arith.constant dense<0.000000e+00> : vector<640x128xf32>
    %8 = tpu.matmul %6, %7, %cst {dimension_numbers = #tpu.dot_dimension_numbers<[1], [0], [0], [1], [0, 0, 1, 1], [], []>} : vector<640x2xbf16>, vector<2x128xbf16>, vector<640x128xf32> -> vector<640x128xf32>
    %9 = vector.shape_cast %8 : vector<640x128xf32> to vector<4x160x128xf32>
    %10 = vector.extract_strided_slice %4 {offsets = [0, 2], sizes = [640, 2], strides = [1, 1]} : vector<640x16xbf16> to vector<640x2xbf16>
    %11 = vector.extract_strided_slice %5 {offsets = [2, 0], sizes = [2, 128], strides = [1, 1]} : vector<16x128xbf16> to vector<2x128xbf16>
    %cst_13 = arith.constant dense<0.000000e+00> : vector<640x128xf32>
    %12 = tpu.matmul %10, %11, %cst_13 {dimension_numbers = #tpu.dot_dimension_numbers<[1], [0], [0], [1], [0, 0, 1, 1], [], []>} : vector<640x2xbf16>, vector<2x128xbf16>, vector<640x128xf32> -> vector<640x128xf32>
    %13 = vector.shape_cast %12 : vector<640x128xf32> to vector<4x160x128xf32>
    %cst_14 = arith.constant 0.000000e+00 : f32
    %14 = vector.broadcast %cst_14 : f32 to vector<1x160x128xf32>
    %15 = vector.extract_strided_slice %9 {offsets = [1, 0, 0], sizes = [3, 160, 128], strides = [1, 1, 1]} : vector<4x160x128xf32> to vector<3x160x128xf32>
    %16 = tpu.concatenate %15, %14 in 0 : vector<3x160x128xf32>, vector<1x160x128xf32> -> vector<4x160x128xf32>
    %17 = vector.extract_strided_slice %13 {offsets = [0, 0, 0], sizes = [3, 160, 128], strides = [1, 1, 1]} : vector<4x160x128xf32> to vector<3x160x128xf32>
    %18 = tpu.concatenate %14, %17 in 0 : vector<1x160x128xf32>, vector<3x160x128xf32> -> vector<4x160x128xf32>
    %19 = arith.addf %16, %18 : vector<4x160x128xf32>
    %20 = vector.extract_strided_slice %4 {offsets = [0, 4], sizes = [640, 12], strides = [1, 1]} : vector<640x16xbf16> to vector<640x12xbf16>
    %21 = vector.extract_strided_slice %5 {offsets = [4, 0], sizes = [12, 128], strides = [1, 1]} : vector<16x128xbf16> to vector<12x128xbf16>
    %cst_15 = arith.constant dense<0.000000e+00> : vector<640x128xf32>
    %22 = tpu.matmul %20, %21, %cst_15 {dimension_numbers = #tpu.dot_dimension_numbers<[1], [0], [0], [1], [0, 0, 1, 1], [], []>} : vector<640x12xbf16>, vector<12x128xbf16>, vector<640x128xf32> -> vector<640x128xf32>
    %23 = vector.shape_cast %22 : vector<640x128xf32> to vector<4x160x128xf32>
    %24 = arith.addf %19, %23 : vector<4x160x128xf32>
    %25 = vector.shape_cast %24 : vector<4x160x128xf32> to vector<640x128xf32>
    %c0_16 = arith.constant 0 : index
    %c0_17 = arith.constant 0 : index
    %26 = vector.load %arg6[%c0_16, %c0_17] : memref<1x128xf32, #tpu.memory_space<vmem>>, vector<1x128xf32>
    %27 = vector.broadcast %26 : vector<1x128xf32> to vector<640x128xf32>
    %28 = arith.mulf %25, %27 : vector<640x128xf32>
    %c0_18 = arith.constant 0 : index
    %c0_19 = arith.constant 0 : index
    %29 = vector.load %arg7[%c0_18, %c0_19] : memref<1x128xf32, #tpu.memory_space<vmem>>, vector<1x128xf32>
    %30 = vector.broadcast %29 : vector<1x128xf32> to vector<640x128xf32>
    %31 = arith.addf %28, %30 : vector<640x128xf32>
    %cst_20 = arith.constant 0.000000e+00 : f32
    %32 = vector.broadcast %cst_20 : f32 to vector<640x128xf32>
    %33 = arith.maximumf %31, %32 : vector<640x128xf32>
    %34 = vector.shape_cast %33 : vector<640x128xf32> to vector<4x10x16x128xf32>
    %c0_i32 = arith.constant 0 : i32
    %35 = arith.cmpi sgt, %arg1, %c0_i32 : i32
    %36 = vector.extract_strided_slice %34 {offsets = [0, 0, 0, 0], sizes = [4, 1, 16, 128], strides = [1, 1, 1, 1]} : vector<4x10x16x128xf32> to vector<4x1x16x128xf32>
    %cst_21 = arith.constant 0.000000e+00 : f32
    %37 = vector.broadcast %cst_21 : f32 to vector<4x1x16x128xf32>
    %38 = arith.select %35, %36, %37 : vector<4x1x16x128xf32>
    %c1_i32 = arith.constant 1 : i32
    %39 = arith.cmpi slt, %arg1, %c1_i32 : i32
    %40 = vector.extract_strided_slice %34 {offsets = [0, 9, 0, 0], sizes = [4, 1, 16, 128], strides = [1, 1, 1, 1]} : vector<4x10x16x128xf32> to vector<4x1x16x128xf32>
    %cst_22 = arith.constant 0.000000e+00 : f32
    %41 = vector.broadcast %cst_22 : f32 to vector<4x1x16x128xf32>
    %42 = arith.select %39, %40, %41 : vector<4x1x16x128xf32>
    %43 = vector.extract_strided_slice %34 {offsets = [0, 1, 0, 0], sizes = [4, 8, 16, 128], strides = [1, 1, 1, 1]} : vector<4x10x16x128xf32> to vector<4x8x16x128xf32>
    %44 = tpu.concatenate %38, %43, %42 in 1 : vector<4x1x16x128xf32>, vector<4x8x16x128xf32>, vector<4x1x16x128xf32> -> vector<4x10x16x128xf32>
    %45 = tpu.iota {dimensions = array<i32: 0>} : vector<16x128xi32>
    %c0_i32_23 = arith.constant 0 : i32
    %46 = vector.broadcast %c0_i32_23 : i32 to vector<16x128xi32>
    %47 = arith.cmpi eq, %45, %46 : vector<16x128xi32>
    %c1_i32_24 = arith.constant 1 : i32
    %48 = tpu.dynamic_rotate %44 by %c1_i32_24 dim 2 : vector<4x10x16x128xf32>, i32 -> vector<4x10x16x128xf32>
    %cst_25 = arith.constant 0.000000e+00 : f32
    %49 = vector.shape_cast %47 : vector<16x128xi1> to vector<1x1x16x128xi1>
    %50 = vector.broadcast %49 : vector<1x1x16x128xi1> to vector<4x10x16x128xi1>
    %51 = vector.broadcast %cst_25 : f32 to vector<4x10x16x128xf32>
    %52 = arith.select %50, %51, %48 : vector<4x10x16x128xi1>, vector<4x10x16x128xf32>
    %c15_i32 = arith.constant 15 : i32
    %53 = vector.broadcast %c15_i32 : i32 to vector<16x128xi32>
    %54 = arith.cmpi eq, %45, %53 : vector<16x128xi32>
    %c15_i32_26 = arith.constant 15 : i32
    %55 = tpu.dynamic_rotate %44 by %c15_i32_26 dim 2 : vector<4x10x16x128xf32>, i32 -> vector<4x10x16x128xf32>
    %cst_27 = arith.constant 0.000000e+00 : f32
    %56 = vector.shape_cast %54 : vector<16x128xi1> to vector<1x1x16x128xi1>
    %57 = vector.broadcast %56 : vector<1x1x16x128xi1> to vector<4x10x16x128xi1>
    %58 = vector.broadcast %cst_27 : f32 to vector<4x10x16x128xf32>
    %59 = arith.select %57, %58, %55 : vector<4x10x16x128xi1>, vector<4x10x16x128xf32>
    %60 = arith.truncf %52 : vector<4x10x16x128xf32> to vector<4x10x16x128xbf16>
    %61 = arith.truncf %44 : vector<4x10x16x128xf32> to vector<4x10x16x128xbf16>
    %62 = arith.truncf %59 : vector<4x10x16x128xf32> to vector<4x10x16x128xbf16>
    %63 = tpu.concatenate %60, %61, %62 in 3 : vector<4x10x16x128xbf16>, vector<4x10x16x128xbf16>, vector<4x10x16x128xbf16> -> vector<4x10x16x384xbf16>
    %64 = vector.extract_strided_slice %63 {offsets = [0, 0, 0, 0], sizes = [4, 8, 16, 384], strides = [1, 1, 1, 1]} : vector<4x10x16x384xbf16> to vector<4x8x16x384xbf16>
    %65 = vector.shape_cast %64 : vector<4x8x16x384xbf16> to vector<512x384xbf16>
    %c0_28 = arith.constant 0 : index
    %c0_29 = arith.constant 0 : index
    %c0_30 = arith.constant 0 : index
    %66 = vector.load %arg8[%c0_28, %c0_29, %c0_30] : memref<3x384x128xbf16, #tpu.memory_space<vmem>>, vector<1x384x128xbf16>
    %67 = vector.shape_cast %66 : vector<1x384x128xbf16> to vector<384x128xbf16>
    %cst_31 = arith.constant dense<0.000000e+00> : vector<512x128xf32>
    %68 = tpu.matmul %65, %67, %cst_31 {dimension_numbers = #tpu.dot_dimension_numbers<[1], [0], [0], [1], [0, 0, 1, 1], [], []>} : vector<512x384xbf16>, vector<384x128xbf16>, vector<512x128xf32> -> vector<512x128xf32>
    %69 = vector.extract_strided_slice %63 {offsets = [0, 1, 0, 0], sizes = [4, 8, 16, 384], strides = [1, 1, 1, 1]} : vector<4x10x16x384xbf16> to vector<4x8x16x384xbf16>
    %70 = vector.shape_cast %69 : vector<4x8x16x384xbf16> to vector<512x384xbf16>
    %c1 = arith.constant 1 : index
    %c0_32 = arith.constant 0 : index
    %c0_33 = arith.constant 0 : index
    %71 = vector.load %arg8[%c1, %c0_32, %c0_33] : memref<3x384x128xbf16, #tpu.memory_space<vmem>>, vector<1x384x128xbf16>
    %72 = vector.shape_cast %71 : vector<1x384x128xbf16> to vector<384x128xbf16>
    %cst_34 = arith.constant dense<0.000000e+00> : vector<512x128xf32>
    %73 = tpu.matmul %70, %72, %cst_34 {dimension_numbers = #tpu.dot_dimension_numbers<[1], [0], [0], [1], [0, 0, 1, 1], [], []>} : vector<512x384xbf16>, vector<384x128xbf16>, vector<512x128xf32> -> vector<512x128xf32>
    %74 = arith.addf %68, %73 : vector<512x128xf32>
    %75 = vector.extract_strided_slice %63 {offsets = [0, 2, 0, 0], sizes = [4, 8, 16, 384], strides = [1, 1, 1, 1]} : vector<4x10x16x384xbf16> to vector<4x8x16x384xbf16>
    %76 = vector.shape_cast %75 : vector<4x8x16x384xbf16> to vector<512x384xbf16>
    %c2 = arith.constant 2 : index
    %c0_35 = arith.constant 0 : index
    %c0_36 = arith.constant 0 : index
    %77 = vector.load %arg8[%c2, %c0_35, %c0_36] : memref<3x384x128xbf16, #tpu.memory_space<vmem>>, vector<1x384x128xbf16>
    %78 = vector.shape_cast %77 : vector<1x384x128xbf16> to vector<384x128xbf16>
    %cst_37 = arith.constant dense<0.000000e+00> : vector<512x128xf32>
    %79 = tpu.matmul %76, %78, %cst_37 {dimension_numbers = #tpu.dot_dimension_numbers<[1], [0], [0], [1], [0, 0, 1, 1], [], []>} : vector<512x384xbf16>, vector<384x128xbf16>, vector<512x128xf32> -> vector<512x128xf32>
    %80 = arith.addf %74, %79 : vector<512x128xf32>
    %c0_38 = arith.constant 0 : index
    %c0_39 = arith.constant 0 : index
    %81 = vector.load %arg9[%c0_38, %c0_39] : memref<1x128xf32, #tpu.memory_space<vmem>>, vector<1x128xf32>
    %82 = vector.broadcast %81 : vector<1x128xf32> to vector<512x128xf32>
    %83 = arith.mulf %80, %82 : vector<512x128xf32>
    %c0_40 = arith.constant 0 : index
    %c0_41 = arith.constant 0 : index
    %84 = vector.load %arg10[%c0_40, %c0_41] : memref<1x128xf32, #tpu.memory_space<vmem>>, vector<1x128xf32>
    %85 = vector.broadcast %84 : vector<1x128xf32> to vector<512x128xf32>
    %86 = arith.addf %83, %85 : vector<512x128xf32>
    %cst_42 = arith.constant 0.000000e+00 : f32
    %87 = vector.broadcast %cst_42 : f32 to vector<512x128xf32>
    %88 = arith.maximumf %86, %87 : vector<512x128xf32>
    %89 = arith.truncf %88 : vector<512x128xf32> to vector<512x128xbf16>
    %c0_43 = arith.constant 0 : index
    %c0_44 = arith.constant 0 : index
    %90 = vector.load %arg11[%c0_43, %c0_44] : memref<128x16xbf16, #tpu.memory_space<vmem>>, vector<128x16xbf16>
    %cst_45 = arith.constant dense<0.000000e+00> : vector<512x16xf32>
    %91 = tpu.matmul %89, %90, %cst_45 {dimension_numbers = #tpu.dot_dimension_numbers<[1], [0], [0], [1], [0, 0, 1, 1], [], []>} : vector<512x128xbf16>, vector<128x16xbf16>, vector<512x16xf32> -> vector<512x16xf32>
    %c0_46 = arith.constant 0 : index
    %c0_47 = arith.constant 0 : index
    %92 = vector.load %arg12[%c0_46, %c0_47] : memref<1x16xf32, #tpu.memory_space<vmem>>, vector<1x16xf32>
    %93 = vector.broadcast %92 : vector<1x16xf32> to vector<512x16xf32>
    %94 = arith.mulf %91, %93 : vector<512x16xf32>
    %c0_48 = arith.constant 0 : index
    %c0_49 = arith.constant 0 : index
    %95 = vector.load %arg13[%c0_48, %c0_49] : memref<1x16xf32, #tpu.memory_space<vmem>>, vector<1x16xf32>
    %96 = vector.broadcast %95 : vector<1x16xf32> to vector<512x16xf32>
    %97 = arith.addf %94, %96 : vector<512x16xf32>
    %c0_50 = arith.constant 0 : index
    %c0_51 = arith.constant 0 : index
    %c0_52 = arith.constant 0 : index
    %c0_53 = arith.constant 0 : index
    %98 = vector.load %arg2[%c0_50, %c0_51, %c0_52, %c0_53] : memref<4x8x16x16xbf16, #tpu.memory_space<vmem>>, vector<4x8x16x16xbf16>
    %99 = vector.shape_cast %98 : vector<4x8x16x16xbf16> to vector<512x16xbf16>
    %100 = arith.extf %99 : vector<512x16xbf16> to vector<512x16xf32>
    %101 = arith.addf %97, %100 : vector<512x16xf32>
    %cst_54 = arith.constant 0.000000e+00 : f32
    %102 = vector.broadcast %cst_54 : f32 to vector<512x16xf32>
    %103 = arith.maximumf %101, %102 : vector<512x16xf32>
    %104 = vector.shape_cast %103 : vector<512x16xf32> to vector<4x8x16x16xf32>
    %105 = arith.truncf %104 : vector<4x8x16x16xf32> to vector<4x8x16x16xbf16>
    %c0_55 = arith.constant 0 : index
    %c0_56 = arith.constant 0 : index
    %c0_57 = arith.constant 0 : index
    %c0_58 = arith.constant 0 : index
    %106 = vector.load %arg14[%c0_55, %c0_56, %c0_57, %c0_58] : memref<4x8x16x16xbf16, #tpu.memory_space<vmem>>, vector<4x8x16x16xbf16>
    tpu.vector_store %arg14[%c0_55, %c0_56, %c0_57, %c0_58], %105 {strides = array<i32>} : memref<4x8x16x16xbf16, #tpu.memory_space<vmem>>, vector<4x8x16x16xbf16>,
    return
  }
  func.func @transform_0(%arg0: i32, %arg1: i32) -> (i32, i32, i32, i32) {
    %c0_i32 = arith.constant 0 : i32
    %c0_i32_0 = arith.constant 0 : i32
    %c0_i32_1 = arith.constant 0 : i32
    return %arg0, %arg1, %c0_i32, %c0_i32_0 : i32, i32, i32, i32
  }
  func.func @transform_1(%arg0: i32, %arg1: i32) -> (i32, i32, i32, i32) {
    %c8_i32 = arith.constant 8 : i32
    %0 = arith.muli %arg1, %c8_i32 : i32
    %c1_i32 = arith.constant 1 : i32
    %1 = arith.subi %0, %c1_i32 : i32
    %c0_i32 = arith.constant 0 : i32
    %2 = arith.maxsi %1, %c0_i32 : i32
    %c0_i32_0 = arith.constant 0 : i32
    %c0_i32_1 = arith.constant 0 : i32
    %c0_i32_2 = arith.constant 0 : i32
    return %arg0, %2, %c0_i32_0, %c0_i32_1 : i32, i32, i32, i32
  }
  func.func @transform_2(%arg0: i32, %arg1: i32) -> (i32, i32, i32, i32) {
    %c1_i32 = arith.constant 1 : i32
    %0 = arith.addi %arg1, %c1_i32 : i32
    %c8_i32 = arith.constant 8 : i32
    %1 = arith.muli %0, %c8_i32 : i32
    %c15_i32 = arith.constant 15 : i32
    %2 = arith.minsi %1, %c15_i32 : i32
    %c0_i32 = arith.constant 0 : i32
    %c0_i32_0 = arith.constant 0 : i32
    %c0_i32_1 = arith.constant 0 : i32
    return %arg0, %2, %c0_i32, %c0_i32_0 : i32, i32, i32, i32
  }
  func.func @transform_3(%arg0: i32, %arg1: i32) -> (i32, i32) {
    %c0_i32 = arith.constant 0 : i32
    %c0_i32_0 = arith.constant 0 : i32
    %c0_i32_1 = arith.constant 0 : i32
    return %c0_i32, %c0_i32_0 : i32, i32
  }
  func.func @transform_4(%arg0: i32, %arg1: i32) -> (i32, i32) {
    %c0_i32 = arith.constant 0 : i32
    %c0_i32_0 = arith.constant 0 : i32
    %c0_i32_1 = arith.constant 0 : i32
    return %c0_i32, %c0_i32_0 : i32, i32
  }
  func.func @transform_5(%arg0: i32, %arg1: i32) -> (i32, i32) {
    %c0_i32 = arith.constant 0 : i32
    %c0_i32_0 = arith.constant 0 : i32
    %c0_i32_1 = arith.constant 0 : i32
    return %c0_i32, %c0_i32_0 : i32, i32
  }
  func.func @transform_6(%arg0: i32, %arg1: i32) -> (i32, i32, i32) {
    %c0_i32 = arith.constant 0 : i32
    %c0_i32_0 = arith.constant 0 : i32
    %c0_i32_1 = arith.constant 0 : i32
    %c0_i32_2 = arith.constant 0 : i32
    return %c0_i32, %c0_i32_0, %c0_i32_1 : i32, i32, i32
  }
  func.func @transform_7(%arg0: i32, %arg1: i32) -> (i32, i32) {
    %c0_i32 = arith.constant 0 : i32
    %c0_i32_0 = arith.constant 0 : i32
    %c0_i32_1 = arith.constant 0 : i32
    return %c0_i32, %c0_i32_0 : i32, i32
  }
  func.func @transform_8(%arg0: i32, %arg1: i32) -> (i32, i32) {
    %c0_i32 = arith.constant 0 : i32
    %c0_i32_0 = arith.constant 0 : i32
    %c0_i32_1 = arith.constant 0 : i32
    return %c0_i32, %c0_i32_0 : i32, i32
  }
  func.func @transform_9(%arg0: i32, %arg1: i32) -> (i32, i32) {
    %c0_i32 = arith.constant 0 : i32
    %c0_i32_0 = arith.constant 0 : i32
    %c0_i32_1 = arith.constant 0 : i32
    return %c0_i32, %c0_i32_0 : i32, i32
  }
  func.func @transform_10(%arg0: i32, %arg1: i32) -> (i32, i32) {
    %c0_i32 = arith.constant 0 : i32
    %c0_i32_0 = arith.constant 0 : i32
    %c0_i32_1 = arith.constant 0 : i32
    return %c0_i32, %c0_i32_0 : i32, i32
  }
  func.func @transform_11(%arg0: i32, %arg1: i32) -> (i32, i32) {
    %c0_i32 = arith.constant 0 : i32
    %c0_i32_0 = arith.constant 0 : i32
    %c0_i32_1 = arith.constant 0 : i32
    return %c0_i32, %c0_i32_0 : i32, i32
  }
  func.func @transform_12(%arg0: i32, %arg1: i32) -> (i32, i32, i32, i32) {
    %c0_i32 = arith.constant 0 : i32
    %c0_i32_0 = arith.constant 0 : i32
    %c0_i32_1 = arith.constant 0 : i32
    return %arg0, %arg1, %c0_i32, %c0_i32_0 : i32, i32, i32, i32
  }
}

</mosaic_0001>

<llo_original>
// kernel: tpu_custom_call.1
$region0: #{tpu_custom_call.1}
  #allocation0 [shape = 'u32[]', space=smem, size = 0x4, offset = 0x4, fixed_abs, tag = 'smem constant byte address 0x4 - core index']
  #allocation1 [shape = 'u32[144,128]{1,0:T(1,128)}', space=vmem, size = 0x12000, scoped, tag = 'internal scratch']
  #allocation11 [shape = 's32[]', space=sflag, size = 0x4, offset = 0, fixed_abs, tag = 'sflag constant byte address 0x0 - dummy sync flag']
  #allocation13 [shape = 's32[]', space=sflag, size = 0x4, offset = 0, fixed_abs, tag = 'sflag constant byte address 0x0 - dummy sync flag']
  #allocation15 [shape = 's32[]', space=sflag, size = 0x4, offset = 0, fixed_abs, tag = 'sflag constant byte address 0x0 - dummy sync flag']
  #allocation17 [shape = 's32[]', space=sflag, size = 0x4, offset = 0, fixed_abs, tag = 'sflag constant byte address 0x0 - dummy sync flag']
  %s0 = inlined_call_operand.hbm [shape: bf16[8,16,16,16], index: 0, kind: input, shape index: {}]
  %s1 = inlined_call_operand.hbm [shape: bf16[8,16,16,16], index: 1, kind: input, shape index: {}]
  %s2 = inlined_call_operand.hbm [shape: bf16[8,16,16,16], index: 2, kind: input, shape index: {}]
  %s3 = inlined_call_operand.vmem [shape: bf16[16,128], index: 3, kind: input, shape index: {}]
  %s4 = inlined_call_operand.vmem [shape: f32[1,128], index: 4, kind: input, shape index: {}]
  %s5 = inlined_call_operand.vmem [shape: f32[1,128], index: 5, kind: input, shape index: {}]
  %s6 = inlined_call_operand.hbm [shape: bf16[3,384,128], index: 6, kind: input, shape index: {}]
  %s7 = inlined_call_operand.vmem [shape: f32[1,128], index: 7, kind: input, shape index: {}]
  %s8 = inlined_call_operand.vmem [shape: f32[1,128], index: 8, kind: input, shape index: {}]
  %s9 = inlined_call_operand.vmem [shape: bf16[128,16], index: 9, kind: input, shape index: {}]
  %s10 = inlined_call_operand.vmem [shape: f32[1,16], index: 10, kind: input, shape index: {}]
  %s11 = inlined_call_operand.vmem [shape: f32[1,16], index: 11, kind: input, shape index: {}]
  %s12 = inlined_call_operand.hbm [shape: bf16[8,16,16,16], index: 12, kind: output, shape index: {}]
  %s13 = sld [smem:[#allocation0]]
  $region97: #{tpu_custom_call.1} parent=0
    _
  %s15 = ssub.s32 1, %s13
  %s16 = scalar_select 0, %s15, %s13
  $region1: #{tpu_custom_call.1} parent=0
    #allocation2 [shape = 'u8[262144]{0}', space=vmem, size = 0x40000, scoped, tag = 'input window, operand 0']
    #allocation3 [shape = 's32[2]{0}', space=sflag, size = 0x8, scoped, tag = 'scoped memory for tpu_custom_call.1']
    #allocation4 [shape = 's32[2]{0}', space=sflag, size = 0x8, scoped, tag = 'scoped memory for tpu_custom_call.1']
    #allocation5 [shape = 'u8[32768]{0}', space=vmem, size = 0x8000, scoped, tag = 'input window, operand 1']
    #allocation6 [shape = 's32[2]{0}', space=sflag, size = 0x8, scoped, tag = 'scoped memory for tpu_custom_call.1']
    #allocation7 [shape = 'u8[32768]{0}', space=vmem, size = 0x8000, scoped, tag = 'input window, operand 2']
    #allocation8 [shape = 'u8[294912]{0}', space=vmem, size = 0x48000, scoped, tag = 'input window, operand 6, single buffered']
    #allocation9 [shape = 's32[1]{0}', space=sflag, size = 0x4, scoped, tag = 'scoped memory for tpu_custom_call.1']
    #allocation10 [shape = 'u8[262144]{0}', space=vmem, size = 0x40000, scoped, tag = 'output window, operand 0']
    %17 = vsyncpa [#allocation3], 0
    %s18 = scalar_lea.sflag [#allocation3], 1
    %19 = vsyncpa %s18, 0
    %20 = vsyncpa [#allocation6], 0
    %s21 = scalar_lea.sflag [#allocation6], 1
    %22 = vsyncpa %s21, 0
    %23 = vsyncpa [#allocation9], 0
    %24 = vsyncpa [#allocation4], 0
    %s25 = scalar_lea.sflag [#allocation4], 1
    %26 = vsyncpa %s25, 0
    loop: start=0, step=1, limit=6
    $region2: #{tpu_custom_call.1} parent=1 // loop_pre_header
      _
    $region3: #{tpu_custom_call.1} parent=1 // loop_header
      %s28 = sphi 0, %s32
      %p29 = scmp.ge.s32.totalorder %s28, 6
      %s35 = sphi 0, %s47
      %s36 = sphi 0, %s43
      %s37 = sphi 0, %s35
      %s38 = sphi 0, %s36
      %s39 = sphi 0, %s37
      %s40 = sphi 0, %s38
      %s52 = sphi 0, %s54
      %s55 = sphi 0, %s52
      %s56 = sphi 0, %s55
      %s72 = sphi 0, %s56
      %s88 = sphi 0, %s90
      %s91 = sphi 0, %s88
      %s92 = sphi 0, %s91
      %s108 = sphi 0, %s92
      %s124 = sphi 0, %s126
      %s127 = sphi 0, %s124
      %s128 = sphi 0, %s127
      %s144 = sphi 0, %s128
      %s148 = sphi 0, %s148
      %s150 = sphi 0, %s148
      %s151 = sphi 0, %s150
      %s165 = sphi 0, %s151
      %s169 = sphi 0, %s169
      %s171 = sphi 0, %s169
      %s172 = sphi 0, %s171
      %s186 = sphi 0, %s172
      %s190 = sphi 0, %s190
      %s192 = sphi 0, %s190
      %s193 = sphi 0, %s192
      %s207 = sphi 0, %s193
      %s211 = sphi 0, %s211
      %s213 = sphi 0, %s211
      %s214 = sphi 0, %s213
      %s228 = sphi 0, %s214
      %s232 = sphi 0, %s232
      %s234 = sphi 0, %s232
      %s235 = sphi 0, %s234
      %s249 = sphi 0, %s235
      %s253 = sphi 0, %s253
      %s255 = sphi 0, %s253
      %s256 = sphi 0, %s255
      %s270 = sphi 0, %s256
      %s274 = sphi 0, %s274
      %s276 = sphi 0, %s274
      %s277 = sphi 0, %s276
      %s291 = sphi 0, %s277
      %s295 = sphi 0, %s295
      %s297 = sphi 0, %s295
      %s298 = sphi 0, %s297
      %s312 = sphi 0, %s298
      %s316 = sphi 0, %s316
      %s318 = sphi 0, %s316
      %s319 = sphi 0, %s318
      %s333 = sphi 0, %s319
      %s341 = sphi 0, %s343
      %s344 = sphi 0, %s341
      %s345 = sphi 0, %s344
      %s361 = sphi 0, %s345
    $region4: #{tpu_custom_call.1} parent=1 // loop_header_branch
      %31 = sbr.rel (%p29) target = $region8
    $region5: #{tpu_custom_call.1} parent=1 // loop_body
      %s33 = ssub.s32 %s28, 1
      %s34 = ssub.s32 %s28, 2
      %s41 = sadd.s32 1, %s36
      %p42 = scmp.ge.s32.totalorder %s41, 2
      %s43 = scalar_select %p42, 0, %s41
      %s44 = sadd.s32 1, %s35
      %s45 = scalar_select %p42, %s44, %s35
      %p46 = scmp.ge.s32.totalorder %s45, 2
      %s47 = scalar_select %p46, 0, %s45
      %s48 = ssub.s32 %s35, %s47
      %s49 = ssub.s32 %s36, %s43
      %s50 = sor.u32 %s48, %s49
      %p51 = scmp.eq.s32.totalorder %s50, 0
      %s53 = sadd.s32 %s52, 1
      %s54 = scalar_select %p51, %s52, %s53
      %p57 = pneg %p51
      %p58 = scmp.eq.s32.totalorder %s28, 3
      %p59 = por %p57, %p58
      %p60 = scmp.ne.s32.totalorder %s52, %s55
      %p61 = scmp.eq.s32.totalorder %s28, 0
      %p62 = por %p60, %p61
      %p63 = scmp.ne.s32.totalorder %s52, %s55
      %p64 = scmp.eq.s32.totalorder %s33, 3
      %p65 = por %p63, %p64
      %p66 = scmp.ne.s32.totalorder %s55, %s56
      %p67 = scmp.eq.s32.totalorder %s33, 0
      %p68 = por %p66, %p67
      %p69 = scmp.ne.s32.totalorder %s55, %s56
      %p70 = scmp.eq.s32.totalorder %s34, 3
      %p71 = por %p69, %p70
      %p73 = scmp.ne.s32.totalorder %s56, %s72
      %p74 = scmp.eq.s32.totalorder %s34, 0
      %p75 = por %p73, %p74
      %s76 = smul.u32 %s36, 8
      %s77 = ssub.s32 %s76, 1
      %p78 = scmp.gt.s32.totalorder %s77, 0
      %s79 = scalar_select %p78, %s77, 0
      %s80 = smul.u32 %s43, 8
      %s81 = ssub.s32 %s80, 1
      %p82 = scmp.gt.s32.totalorder %s81, 0
      %s83 = scalar_select %p82, %s81, 0
      %s84 = ssub.s32 %s35, %s47
      %s85 = ssub.s32 %s79, %s83
      %s86 = sor.u32 %s84, %s85
      %p87 = scmp.eq.s32.totalorder %s86, 0
      %s89 = sadd.s32 %s88, 1
      %s90 = scalar_select %p87, %s88, %s89
      %p93 = pneg %p87
      %p94 = scmp.eq.s32.totalorder %s28, 3
      %p95 = por %p93, %p94
      %p96 = scmp.ne.s32.totalorder %s88, %s91
      %p97 = scmp.eq.s32.totalorder %s28, 0
      %p98 = por %p96, %p97
      %p99 = scmp.ne.s32.totalorder %s88, %s91
      %p100 = scmp.eq.s32.totalorder %s33, 3
      %p101 = por %p99, %p100
      %p102 = scmp.ne.s32.totalorder %s91, %s92
      %p103 = scmp.eq.s32.totalorder %s33, 0
      %p104 = por %p102, %p103
      %p105 = scmp.ne.s32.totalorder %s91, %s92
      %p106 = scmp.eq.s32.totalorder %s34, 3
      %p107 = por %p105, %p106
      %p109 = scmp.ne.s32.totalorder %s92, %s108
      %p110 = scmp.eq.s32.totalorder %s34, 0
      %p111 = por %p109, %p110
      %s112 = sadd.s32 %s36, 1
      %s113 = smul.u32 %s112, 8
      %p114 = scmp.lt.s32.totalorder %s113, 15
      %s115 = scalar_select %p114, %s113, 15
      %s116 = sadd.s32 %s43, 1
      %s117 = smul.u32 %s116, 8
      %p118 = scmp.lt.s32.totalorder %s117, 15
      %s119 = scalar_select %p118, %s117, 15
      %s120 = ssub.s32 %s35, %s47
      %s121 = ssub.s32 %s115, %s119
      %s122 = sor.u32 %s120, %s121
      %p123 = scmp.eq.s32.totalorder %s122, 0
      %s125 = sadd.s32 %s124, 1
      %s126 = scalar_select %p123, %s124, %s125
      %p129 = pneg %p123
      %p130 = scmp.eq.s32.totalorder %s28, 3
      %p131 = por %p129, %p130
      %p132 = scmp.ne.s32.totalorder %s124, %s127
      %p133 = scmp.eq.s32.totalorder %s28, 0
      %p134 = por %p132, %p133
      %p135 = scmp.ne.s32.totalorder %s124, %s127
      %p136 = scmp.eq.s32.totalorder %s33, 3
      %p137 = por %p135, %p136
      %p138 = scmp.ne.s32.totalorder %s127, %s128
      %p139 = scmp.eq.s32.totalorder %s33, 0
      %p140 = por %p138, %p139
      %p141 = scmp.ne.s32.totalorder %s127, %s128
      %p142 = scmp.eq.s32.totalorder %s34, 3
      %p143 = por %p141, %p142
      %p145 = scmp.ne.s32.totalorder %s128, %s144
      %p146 = scmp.eq.s32.totalorder %s34, 0
      %p147 = por %p145, %p146
      %s149 = sadd.s32 %s148, 1
      %p152 = scmp.eq.s32.totalorder %s28, 3
      %p153 = scmp.ne.s32.totalorder %s148, %s150
      %p154 = scmp.eq.s32.totalorder %s28, 0
      %p155 = por %p153, %p154
      %p156 = scmp.ne.s32.totalorder %s148, %s150
      %p157 = scmp.eq.s32.totalorder %s33, 3
      %p158 = por %p156, %p157
      %p159 = scmp.ne.s32.totalorder %s150, %s151
      %p160 = scmp.eq.s32.totalorder %s33, 0
      %p161 = por %p159, %p160
      %p162 = scmp.ne.s32.totalorder %s150, %s151
      %p163 = scmp.eq.s32.totalorder %s34, 3
      %p164 = por %p162, %p163
      %p166 = scmp.ne.s32.totalorder %s151, %s165
      %p167 = scmp.eq.s32.totalorder %s34, 0
      %p168 = por %p166, %p167
      %s170 = sadd.s32 %s169, 1
      %p173 = scmp.eq.s32.totalorder %s28, 3
      %p174 = scmp.ne.s32.totalorder %s169, %s171
      %p175 = scmp.eq.s32.totalorder %s28, 0
      %p176 = por %p174, %p175
      %p177 = scmp.ne.s32.totalorder %s169, %s171
      %p178 = scmp.eq.s32.totalorder %s33, 3
      %p179 = por %p177, %p178
      %p180 = scmp.ne.s32.totalorder %s171, %s172
      %p181 = scmp.eq.s32.totalorder %s33, 0
      %p182 = por %p180, %p181
      %p183 = scmp.ne.s32.totalorder %s171, %s172
      %p184 = scmp.eq.s32.totalorder %s34, 3
      %p185 = por %p183, %p184
      %p187 = scmp.ne.s32.totalorder %s172, %s186
      %p188 = scmp.eq.s32.totalorder %s34, 0
      %p189 = por %p187, %p188
      %s191 = sadd.s32 %s190, 1
      %p194 = scmp.eq.s32.totalorder %s28, 3
      %p195 = scmp.ne.s32.totalorder %s190, %s192
      %p196 = scmp.eq.s32.totalorder %s28, 0
      %p197 = por %p195, %p196
      %p198 = scmp.ne.s32.totalorder %s190, %s192
      %p199 = scmp.eq.s32.totalorder %s33, 3
      %p200 = por %p198, %p199
      %p201 = scmp.ne.s32.totalorder %s192, %s193
      %p202 = scmp.eq.s32.totalorder %s33, 0
      %p203 = por %p201, %p202
      %p204 = scmp.ne.s32.totalorder %s192, %s193
      %p205 = scmp.eq.s32.totalorder %s34, 3
      %p206 = por %p204, %p205
      %p208 = scmp.ne.s32.totalorder %s193, %s207
      %p209 = scmp.eq.s32.totalorder %s34, 0
      %p210 = por %p208, %p209
      %s212 = sadd.s32 %s211, 1
      %p215 = scmp.eq.s32.totalorder %s28, 3
      %p216 = scmp.ne.s32.totalorder %s211, %s213
      %p217 = scmp.eq.s32.totalorder %s28, 0
      %p218 = por %p216, %p217
      %p219 = scmp.ne.s32.totalorder %s211, %s213
      %p220 = scmp.eq.s32.totalorder %s33, 3
      %p221 = por %p219, %p220
      %p222 = scmp.ne.s32.totalorder %s213, %s214
      %p223 = scmp.eq.s32.totalorder %s33, 0
      %p224 = por %p222, %p223
      %p225 = scmp.ne.s32.totalorder %s213, %s214
      %p226 = scmp.eq.s32.totalorder %s34, 3
      %p227 = por %p225, %p226
      %p229 = scmp.ne.s32.totalorder %s214, %s228
      %p230 = scmp.eq.s32.totalorder %s34, 0
      %p231 = por %p229, %p230
      %s233 = sadd.s32 %s232, 1
      %p236 = scmp.eq.s32.totalorder %s28, 3
      %p237 = scmp.ne.s32.totalorder %s232, %s234
      %p238 = scmp.eq.s32.totalorder %s28, 0
      %p239 = por %p237, %p238
      %p240 = scmp.ne.s32.totalorder %s232, %s234
      %p241 = scmp.eq.s32.totalorder %s33, 3
      %p242 = por %p240, %p241
      %p243 = scmp.ne.s32.totalorder %s234, %s235
      %p244 = scmp.eq.s32.totalorder %s33, 0
      %p245 = por %p243, %p244
      %p246 = scmp.ne.s32.totalorder %s234, %s235
      %p247 = scmp.eq.s32.totalorder %s34, 3
      %p248 = por %p246, %p247
      %p250 = scmp.ne.s32.totalorder %s235, %s249
      %p251 = scmp.eq.s32.totalorder %s34, 0
      %p252 = por %p250, %p251
      %s254 = sadd.s32 %s253, 1
      %p257 = scmp.eq.s32.totalorder %s28, 3
      %p258 = scmp.ne.s32.totalorder %s253, %s255
      %p259 = scmp.eq.s32.totalorder %s28, 0
      %p260 = por %p258, %p259
      %p261 = scmp.ne.s32.totalorder %s253, %s255
      %p262 = scmp.eq.s32.totalorder %s33, 3
      %p263 = por %p261, %p262
      %p264 = scmp.ne.s32.totalorder %s255, %s256
      %p265 = scmp.eq.s32.totalorder %s33, 0
      %p266 = por %p264, %p265
      %p267 = scmp.ne.s32.totalorder %s255, %s256
      %p268 = scmp.eq.s32.totalorder %s34, 3
      %p269 = por %p267, %p268
      %p271 = scmp.ne.s32.totalorder %s256, %s270
      %p272 = scmp.eq.s32.totalorder %s34, 0
      %p273 = por %p271, %p272
      %s275 = sadd.s32 %s274, 1
      %p278 = scmp.eq.s32.totalorder %s28, 3
      %p279 = scmp.ne.s32.totalorder %s274, %s276
      %p280 = scmp.eq.s32.totalorder %s28, 0
      %p281 = por %p279, %p280
      %p282 = scmp.ne.s32.totalorder %s274, %s276
      %p283 = scmp.eq.s32.totalorder %s33, 3
      %p284 = por %p282, %p283
      %p285 = scmp.ne.s32.totalorder %s276, %s277
      %p286 = scmp.eq.s32.totalorder %s33, 0
      %p287 = por %p285, %p286
      %p288 = scmp.ne.s32.totalorder %s276, %s277
      %p289 = scmp.eq.s32.totalorder %s34, 3
      %p290 = por %p288, %p289
      %p292 = scmp.ne.s32.totalorder %s277, %s291
      %p293 = scmp.eq.s32.totalorder %s34, 0
      %p294 = por %p292, %p293
      %s296 = sadd.s32 %s295, 1
      %p299 = scmp.eq.s32.totalorder %s28, 3
      %p300 = scmp.ne.s32.totalorder %s295, %s297
      %p301 = scmp.eq.s32.totalorder %s28, 0
      %p302 = por %p300, %p301
      %p303 = scmp.ne.s32.totalorder %s295, %s297
      %p304 = scmp.eq.s32.totalorder %s33, 3
      %p305 = por %p303, %p304
      %p306 = scmp.ne.s32.totalorder %s297, %s298
      %p307 = scmp.eq.s32.totalorder %s33, 0
      %p308 = por %p306, %p307
      %p309 = scmp.ne.s32.totalorder %s297, %s298
      %p310 = scmp.eq.s32.totalorder %s34, 3
      %p311 = por %p309, %p310
      %p313 = scmp.ne.s32.totalorder %s298, %s312
      %p314 = scmp.eq.s32.totalorder %s34, 0
      %p315 = por %p313, %p314
      %s317 = sadd.s32 %s316, 1
      %p320 = scmp.eq.s32.totalorder %s28, 3
      %p321 = scmp.ne.s32.totalorder %s316, %s318
      %p322 = scmp.eq.s32.totalorder %s28, 0
      %p323 = por %p321, %p322
      %p324 = scmp.ne.s32.totalorder %s316, %s318
      %p325 = scmp.eq.s32.totalorder %s33, 3
      %p326 = por %p324, %p325
      %p327 = scmp.ne.s32.totalorder %s318, %s319
      %p328 = scmp.eq.s32.totalorder %s33, 0
      %p329 = por %p327, %p328
      %p330 = scmp.ne.s32.totalorder %s318, %s319
      %p331 = scmp.eq.s32.totalorder %s34, 3
      %p332 = por %p330, %p331
      %p334 = scmp.ne.s32.totalorder %s319, %s333
      %p335 = scmp.eq.s32.totalorder %s34, 0
      %p336 = por %p334, %p335
      %s337 = ssub.s32 %s35, %s47
      %s338 = ssub.s32 %s36, %s43
      %s339 = sor.u32 %s337, %s338
      %p340 = scmp.eq.s32.totalorder %s339, 0
      %s342 = sadd.s32 %s341, 1
      %s343 = scalar_select %p340, %s341, %s342
      %p346 = pneg %p340
      %p347 = scmp.eq.s32.totalorder %s28, 3
      %p348 = por %p346, %p347
      %p349 = scmp.ne.s32.totalorder %s341, %s344
      %p350 = scmp.eq.s32.totalorder %s28, 0
      %p351 = por %p349, %p350
      %p352 = scmp.ne.s32.totalorder %s341, %s344
      %p353 = scmp.eq.s32.totalorder %s33, 3
      %p354 = por %p352, %p353
      %p355 = scmp.ne.s32.totalorder %s344, %s345
      %p356 = scmp.eq.s32.totalorder %s33, 0
      %p357 = por %p355, %p356
      %p358 = scmp.ne.s32.totalorder %s344, %s345
      %p359 = scmp.eq.s32.totalorder %s34, 3
      %p360 = por %p358, %p359
      %p362 = scmp.ne.s32.totalorder %s345, %s361
      %p363 = scmp.eq.s32.totalorder %s34, 0
      %p364 = por %p362, %p363
      %p365 = scmp.le.s32.totalorder 1, %s28
      %p366 = scmp.lt.s32.totalorder %s28, 5
      %p367 = pnand %p365, %p366
      %p368 = pneg %p367
      // Predicated region
      $region9: #{tpu_custom_call.1} parent=5 // pred_check
        _
      $region10: #{tpu_custom_call.1} parent=5 // pred_check_branch
        %370 = sbr.rel (%p367) target = $region12
      $region11: #{tpu_custom_call.1} parent=5 // pred_region
        %s371 = ssub.s32 %s28, 1
        // Predicated region
        $region13: #{tpu_custom_call.1} parent=11 // pred_check
          %p372 = pneg %p161
        $region14: #{tpu_custom_call.1} parent=11 // pred_check_branch
          %374 = sbr.rel (%p372) target = $region16
        $region15: #{tpu_custom_call.1} parent=11 // pred_region
          _
        $region16: #{tpu_custom_call.1} parent=11 // pred_fallthru
          _
        // Predicated region
        $region17: #{tpu_custom_call.1} parent=11 // pred_check
          %p375 = pneg %p182
        $region18: #{tpu_custom_call.1} parent=11 // pred_check_branch
          %377 = sbr.rel (%p375) target = $region20
        $region19: #{tpu_custom_call.1} parent=11 // pred_region
          _
        $region20: #{tpu_custom_call.1} parent=11 // pred_fallthru
          _
        // Predicated region
        $region21: #{tpu_custom_call.1} parent=11 // pred_check
          %p378 = pneg %p203
        $region22: #{tpu_custom_call.1} parent=11 // pred_check_branch
          %380 = sbr.rel (%p378) target = $region24
        $region23: #{tpu_custom_call.1} parent=11 // pred_region
          _
        $region24: #{tpu_custom_call.1} parent=11 // pred_fallthru
          _
        // Predicated region
        $region25: #{tpu_custom_call.1} parent=11 // pred_check
          %p381 = pneg %p224
        $region26: #{tpu_custom_call.1} parent=11 // pred_check_branch
          %383 = sbr.rel (%p381) target = $region28
        $region27: #{tpu_custom_call.1} parent=11 // pred_region
          %s385 = ssub.s32 9216, 9216
          %386 = vsyncadd [#allocation9], %s385
          %s387 = sshll.u32 [#allocation8], 4
          %s388 = int_to_ptr.vmem [resolvable:$true] %s387
          %393 = dma.hbm_to_vmem [thread:$0]  %s6, 9216, %s388, [#allocation9], 64, 64, 4
        $region28: #{tpu_custom_call.1} parent=11 // pred_fallthru
          _
        // Predicated region
        $region29: #{tpu_custom_call.1} parent=11 // pred_check
          %p394 = pneg %p245
        $region30: #{tpu_custom_call.1} parent=11 // pred_check_branch
          %396 = sbr.rel (%p394) target = $region32
        $region31: #{tpu_custom_call.1} parent=11 // pred_region
          _
        $region32: #{tpu_custom_call.1} parent=11 // pred_fallthru
          _
        // Predicated region
        $region33: #{tpu_custom_call.1} parent=11 // pred_check
          %p397 = pneg %p266
        $region34: #{tpu_custom_call.1} parent=11 // pred_check_branch
          %399 = sbr.rel (%p397) target = $region36
        $region35: #{tpu_custom_call.1} parent=11 // pred_region
          _
        $region36: #{tpu_custom_call.1} parent=11 // pred_fallthru
          _
        // Predicated region
        $region37: #{tpu_custom_call.1} parent=11 // pred_check
          %p400 = pneg %p287
        $region38: #{tpu_custom_call.1} parent=11 // pred_check_branch
          %402 = sbr.rel (%p400) target = $region40
        $region39: #{tpu_custom_call.1} parent=11 // pred_region
          _
        $region40: #{tpu_custom_call.1} parent=11 // pred_fallthru
          _
        // Predicated region
        $region41: #{tpu_custom_call.1} parent=11 // pred_check
          %p403 = pneg %p308
        $region42: #{tpu_custom_call.1} parent=11 // pred_check_branch
          %405 = sbr.rel (%p403) target = $region44
        $region43: #{tpu_custom_call.1} parent=11 // pred_region
          _
        $region44: #{tpu_custom_call.1} parent=11 // pred_fallthru
          _
        // Predicated region
        $region45: #{tpu_custom_call.1} parent=11 // pred_check
          %p406 = pneg %p329
        $region46: #{tpu_custom_call.1} parent=11 // pred_check_branch
          %408 = sbr.rel (%p406) target = $region48
        $region47: #{tpu_custom_call.1} parent=11 // pred_region
          _
        $region48: #{tpu_custom_call.1} parent=11 // pred_fallthru
          _
      $region12: #{tpu_custom_call.1} parent=5 // pred_fallthru
        _
      %p409 = scmp.lt.s32.totalorder %s28, 4
      // Predicated region
      $region49: #{tpu_custom_call.1} parent=5 // pred_check
        %p410 = pneg %p409
      $region50: #{tpu_custom_call.1} parent=5 // pred_check_branch
        %412 = sbr.rel (%p410) target = $region52
      $region51: #{tpu_custom_call.1} parent=5 // pred_region
        // Predicated region
        $region53: #{tpu_custom_call.1} parent=51 // pred_check
          %p413 = pneg %p62
        $region54: #{tpu_custom_call.1} parent=51 // pred_check_branch
          %415 = sbr.rel (%p413) target = $region56
        $region55: #{tpu_custom_call.1} parent=51 // pred_region
          #allocation12 [shape = 'u32[6]{0}', space=smem, size = 0x18, scoped, tag = 'DMA stride descriptor']
          %s416 = sand.u32 %s52, 1
          %s417 = scalar_lea.sflag [#allocation3], %s416
          %s418 = sand.u32 %s52, 1
          %s419 = smul.addr %s418, 256
          %s420 = scalar_lea.vmem [#allocation2], %s419
          %s421 = smul.u32 4, %s35
          %s422 = smul.u32 8, %s36
          %s424 = ssub.s32 4096, 4096
          %425 = vsyncadd %s417, %s424
          %s426 = smul.addr %s422, 2
          %s427 = smul.addr %s421, 32
          %s428 = sadd.s32 %s426, %s427
          %s429 = smul.addr %s428, 64
          %s430 = scalar_lea.hbm %s0, %s429
          %s432 = sshll.u32 1, 14
          %s433 = sxor.u32 4294967295, %s432
          %s435 = sld [smem:[#allocation0]]
          %s436 = sadd.s32 2, %s435
          %s438 = sshll.u32 7, 26
          %s439 = sxor.u32 4294967295, %s438
          %s440 = sand.u32 0, %s439
          %s441 = sshll.u32 %s436, 26
          %s442 = sor.u32 %s440, %s441
          %s443 = sshll.u32 %s420, 4
          %s444 = int_to_ptr.vmem [resolvable:$true] %s443
          %450 = sst [smem:[#allocation12]] 2048
          %s451 = scalar_lea.smem [#allocation12], 1
          %452 = sst [smem:[%s451]] 1024
          %s453 = scalar_lea.smem [#allocation12], 2
          %454 = sst [smem:[%s453]] 16
          %s455 = scalar_lea.smem [#allocation12], 3
          %456 = sst [smem:[%s455]] 64
          %s457 = scalar_lea.smem [#allocation12], 4
          %458 = sst [smem:[%s457]] 64
          %s459 = scalar_lea.smem [#allocation12], 5
          %460 = sst [smem:[%s459]] 4
          %462 = dma.general %s430, 4096, %s444, %s417, [#allocation11], [#allocation12], %s442, 0
        $region56: #{tpu_custom_call.1} parent=51 // pred_fallthru
          _
        // Predicated region
        $region57: #{tpu_custom_call.1} parent=51 // pred_check
          %p463 = pneg %p98
        $region58: #{tpu_custom_call.1} parent=51 // pred_check_branch
          %465 = sbr.rel (%p463) target = $region60
        $region59: #{tpu_custom_call.1} parent=51 // pred_region
          #allocation14 [shape = 'u32[6]{0}', space=smem, size = 0x18, scoped, tag = 'DMA stride descriptor']
          %s466 = sand.u32 %s28, 1
          %s467 = scalar_lea.sflag [#allocation6], %s466
          %s468 = sand.u32 %s88, 1
          %s469 = smul.addr %s468, 32
          %s470 = scalar_lea.vmem [#allocation5], %s469
          %s471 = smul.u32 %s36, 8
          %s472 = ssub.s32 %s471, 1
          %p473 = scmp.gt.s32.totalorder %s472, 0
          %s474 = scalar_select %p473, %s472, 0
          %s475 = smul.u32 4, %s35
          %s477 = ssub.s32 512, 512
          %478 = vsyncadd %s467, %s477
          %s479 = smul.addr %s474, 2
          %s480 = smul.addr %s475, 32
          %s481 = sadd.s32 %s479, %s480
          %s482 = smul.addr %s481, 64
          %s483 = scalar_lea.hbm %s1, %s482
          %s485 = sshll.u32 1, 14
          %s486 = sxor.u32 4294967295, %s485
          %s488 = sld [smem:[#allocation0]]
          %s489 = sadd.s32 2, %s488
          %s491 = sshll.u32 7, 26
          %s492 = sxor.u32 4294967295, %s491
          %s493 = sand.u32 0, %s492
          %s494 = sshll.u32 %s489, 26
          %s495 = sor.u32 %s493, %s494
          %s496 = sshll.u32 %s470, 4
          %s497 = int_to_ptr.vmem [resolvable:$true] %s496
          %503 = sst [smem:[#allocation14]] 2048
          %s504 = scalar_lea.smem [#allocation14], 1
          %505 = sst [smem:[%s504]] 128
          %s506 = scalar_lea.smem [#allocation14], 2
          %507 = sst [smem:[%s506]] 2
          %s508 = scalar_lea.smem [#allocation14], 3
          %509 = sst [smem:[%s508]] 64
          %s510 = scalar_lea.smem [#allocation14], 4
          %511 = sst [smem:[%s510]] 64
          %s512 = scalar_lea.smem [#allocation14], 5
          %513 = sst [smem:[%s512]] 4
          %515 = dma.general %s483, 512, %s497, %s467, [#allocation13], [#allocation14], %s495, 0
        $region60: #{tpu_custom_call.1} parent=51 // pred_fallthru
          _
        // Predicated region
        $region61: #{tpu_custom_call.1} parent=51 // pred_check
          %p516 = pneg %p134
        $region62: #{tpu_custom_call.1} parent=51 // pred_check_branch
          %518 = sbr.rel (%p516) target = $region64
        $region63: #{tpu_custom_call.1} parent=51 // pred_region
          #allocation16 [shape = 'u32[6]{0}', space=smem, size = 0x18, scoped, tag = 'DMA stride descriptor']
          %s519 = sand.u32 %s28, 1
          %s520 = scalar_lea.sflag [#allocation6], %s519
          %s521 = sand.u32 %s124, 1
          %s522 = smul.addr %s521, 32
          %s523 = scalar_lea.vmem [#allocation7], %s522
          %s524 = sadd.s32 %s36, 1
          %s525 = smul.u32 %s524, 8
          %p526 = scmp.lt.s32.totalorder %s525, 15
          %s527 = scalar_select %p526, %s525, 15
          %s528 = smul.u32 4, %s35
          %s530 = ssub.s32 512, 512
          %531 = vsyncadd %s520, %s530
          %s532 = smul.addr %s527, 2
          %s533 = smul.addr %s528, 32
          %s534 = sadd.s32 %s532, %s533
          %s535 = smul.addr %s534, 64
          %s536 = scalar_lea.hbm %s2, %s535
          %s538 = sshll.u32 1, 14
          %s539 = sxor.u32 4294967295, %s538
          %s541 = sld [smem:[#allocation0]]
          %s542 = sadd.s32 2, %s541
          %s544 = sshll.u32 7, 26
          %s545 = sxor.u32 4294967295, %s544
          %s546 = sand.u32 0, %s545
          %s547 = sshll.u32 %s542, 26
          %s548 = sor.u32 %s546, %s547
          %s549 = sshll.u32 %s523, 4
          %s550 = int_to_ptr.vmem [resolvable:$true] %s549
          %556 = sst [smem:[#allocation16]] 2048
          %s557 = scalar_lea.smem [#allocation16], 1
          %558 = sst [smem:[%s557]] 128
          %s559 = scalar_lea.smem [#allocation16], 2
          %560 = sst [smem:[%s559]] 2
          %s561 = scalar_lea.smem [#allocation16], 3
          %562 = sst [smem:[%s561]] 64
          %s563 = scalar_lea.smem [#allocation16], 4
          %564 = sst [smem:[%s563]] 64
          %s565 = scalar_lea.smem [#allocation16], 5
          %566 = sst [smem:[%s565]] 4
          %568 = dma.general %s536, 512, %s550, %s520, [#allocation15], [#allocation16], %s548, 0
        $region64: #{tpu_custom_call.1} parent=51 // pred_fallthru
          _
      $region52: #{tpu_custom_call.1} parent=5 // pred_fallthru
        _
      %p569 = scmp.le.s32.totalorder 1, %s28
      %p570 = scmp.lt.s32.totalorder %s28, 5
      %p571 = pnand %p569, %p570
      %p572 = pneg %p571
      // Predicated region
      $region65: #{tpu_custom_call.1} parent=5 // pred_check
        _
      $region66: #{tpu_custom_call.1} parent=5 // pred_check_branch
        %574 = sbr.rel (%p571) target = $region68
      $region67: #{tpu_custom_call.1} parent=5 // pred_region
        %s575 = ssub.s32 %s28, 1
        %s576 = sand.u32 %s55, 1
        %s577 = scalar_lea.sflag [#allocation3], %s576
        %s578 = sand.u32 %s55, 1
        %s579 = smul.addr %s578, 256
        %s580 = scalar_lea.vmem [#allocation2], %s579
        // Predicated region
        $region69: #{tpu_custom_call.1} parent=67 // pred_check
          %p581 = pneg %p68
        $region70: #{tpu_custom_call.1} parent=67 // pred_check_branch
          %583 = sbr.rel (%p581) target = $region72
        $region71: #{tpu_custom_call.1} parent=67 // pred_region
          %584 = dma.done %s577, 4096
        $region72: #{tpu_custom_call.1} parent=67 // pred_fallthru
          _
        %s585 = sand.u32 %s33, 1
        %s586 = scalar_lea.sflag [#allocation6], %s585
        %s587 = sand.u32 %s91, 1
        %s588 = smul.addr %s587, 32
        %s589 = scalar_lea.vmem [#allocation5], %s588
        // Predicated region
        $region73: #{tpu_custom_call.1} parent=67 // pred_check
          %p590 = pneg %p104
        $region74: #{tpu_custom_call.1} parent=67 // pred_check_branch
          %592 = sbr.rel (%p590) target = $region76
        $region75: #{tpu_custom_call.1} parent=67 // pred_region
          %593 = dma.done %s586, 512
        $region76: #{tpu_custom_call.1} parent=67 // pred_fallthru
          _
        %s594 = sand.u32 %s33, 1
        %s595 = scalar_lea.sflag [#allocation6], %s594
        %s596 = sand.u32 %s127, 1
        %s597 = smul.addr %s596, 32
        %s598 = scalar_lea.vmem [#allocation7], %s597
        // Predicated region
        $region77: #{tpu_custom_call.1} parent=67 // pred_check
          %p599 = pneg %p140
        $region78: #{tpu_custom_call.1} parent=67 // pred_check_branch
          %601 = sbr.rel (%p599) target = $region80
        $region79: #{tpu_custom_call.1} parent=67 // pred_region
          %602 = dma.done %s595, 512
        $region80: #{tpu_custom_call.1} parent=67 // pred_fallthru
          _
        // Predicated region
        $region81: #{tpu_custom_call.1} parent=67 // pred_check
          %p603 = pneg %p224
        $region82: #{tpu_custom_call.1} parent=67 // pred_check_branch
          %605 = sbr.rel (%p603) target = $region84
        $region83: #{tpu_custom_call.1} parent=67 // pred_region
          %606 = dma.done [#allocation9], 9216
        $region84: #{tpu_custom_call.1} parent=67 // pred_fallthru
          _
        %s607 = sand.u32 %s55, 1
        %s608 = scalar_lea.sflag [#allocation3], %s607
        %s609 = sand.u32 %s55, 1
        %s610 = smul.addr %s609, 256
        %s611 = scalar_lea.vmem [#allocation2], %s610
        %p612 = pneg %p68
        %p613 = pneg %p65
        %s614 = sand.u32 %s33, 1
        %s615 = scalar_lea.sflag [#allocation6], %s614
        %s616 = sand.u32 %s91, 1
        %s617 = smul.addr %s616, 32
        %s618 = scalar_lea.vmem [#allocation5], %s617
        %p619 = pneg %p104
        %p620 = pneg %p101
        %s621 = sand.u32 %s33, 1
        %s622 = scalar_lea.sflag [#allocation6], %s621
        %s623 = sand.u32 %s127, 1
        %s624 = smul.addr %s623, 32
        %s625 = scalar_lea.vmem [#allocation7], %s624
        %p626 = pneg %p140
        %p627 = pneg %p137
        %p628 = pneg %p161
        %p629 = pneg %p158
        %p630 = pneg %p182
        %p631 = pneg %p179
        %p632 = pneg %p203
        %p633 = pneg %p200
        %p634 = pneg %p224
        %p635 = pneg %p221
        %p636 = pneg %p245
        %p637 = pneg %p242
        %p638 = pneg %p266
        %p639 = pneg %p263
        %p640 = pneg %p287
        %p641 = pneg %p284
        %p642 = pneg %p308
        %p643 = pneg %p305
        %p644 = pneg %p329
        %p645 = pneg %p326
        %p646 = pneg %p357
        %p647 = pneg %p354
        %s648 = sand.u32 %s344, 1
        %s649 = scalar_lea.sflag [#allocation4], %s648
        %s650 = sand.u32 %s344, 1
        %s651 = smul.addr %s650, 256
        %s652 = scalar_lea.vmem [#allocation10], %s651
        %s653 = smul.u32 4, %s37
        %s654 = smul.u32 8, %s38
        %s655 = smul.u32 %s38, 8
        %s656 = ssub.s32 %s655, 1
        %p657 = scmp.gt.s32.totalorder %s656, 0
        %s658 = scalar_select %p657, %s656, 0
        %s659 = smul.u32 4, %s37
        %s660 = sadd.s32 %s38, 1
        %s661 = smul.u32 %s660, 8
        %p662 = scmp.lt.s32.totalorder %s661, 15
        %s663 = scalar_select %p662, %s661, 15
        %s664 = smul.u32 4, %s37
        %s665 = smul.u32 4, %s37
        %s666 = smul.u32 8, %s38
        %v668 = vld [vmem:[%s589] sm:$0xf]
        %v669 = vld [vmem:[%s589 + $0x4] sm:$0xf]
        %v670 = vld [vmem:[%s589 + $0x8] sm:$0xf]
        %v671 = vld [vmem:[%s589 + $0xc] sm:$0xf]
        %v672 = vld [vmem:[%s589 + $0x10] sm:$0xf]
        %v673 = vld [vmem:[%s589 + $0x14] sm:$0xf]
        %v674 = vld [vmem:[%s589 + $0x18] sm:$0xf]
        %v675 = vld [vmem:[%s589 + $0x1c] sm:$0xf]
        %v676 = vld [vmem:[%s580] sm:$0xf]
        %v677 = vld [vmem:[%s580 + $0x4] sm:$0xf]
        %v678 = vld [vmem:[%s580 + $0x8] sm:$0xf]
        %v679 = vld [vmem:[%s580 + $0xc] sm:$0xf]
        %v680 = vld [vmem:[%s580 + $0x10] sm:$0xf]
        %v681 = vld [vmem:[%s580 + $0x14] sm:$0xf]
        %v682 = vld [vmem:[%s580 + $0x18] sm:$0xf]
        %v683 = vld [vmem:[%s580 + $0x1c] sm:$0xf]
        %v684 = vld [vmem:[%s580 + $0x20] sm:$0xf]
        %v685 = vld [vmem:[%s580 + $0x24] sm:$0xf]
        %v686 = vld [vmem:[%s580 + $0x28] sm:$0xf]
        %v687 = vld [vmem:[%s580 + $0x2c] sm:$0xf]
        %v688 = vld [vmem:[%s580 + $0x30] sm:$0xf]
        %v689 = vld [vmem:[%s580 + $0x34] sm:$0xf]
        %v690 = vld [vmem:[%s580 + $0x38] sm:$0xf]
        %v691 = vld [vmem:[%s580 + $0x3c] sm:$0xf]
        %v692 = vld [vmem:[%s580 + $0x40] sm:$0xf]
        %v693 = vld [vmem:[%s580 + $0x44] sm:$0xf]
        %v694 = vld [vmem:[%s580 + $0x48] sm:$0xf]
        %v695 = vld [vmem:[%s580 + $0x4c] sm:$0xf]
        %v696 = vld [vmem:[%s580 + $0x50] sm:$0xf]
        %v697 = vld [vmem:[%s580 + $0x54] sm:$0xf]
        %v698 = vld [vmem:[%s580 + $0x58] sm:$0xf]
        %v699 = vld [vmem:[%s580 + $0x5c] sm:$0xf]
        %v700 = vld [vmem:[%s580 + $0x60] sm:$0xf]
        %v701 = vld [vmem:[%s580 + $0x64] sm:$0xf]
        %v702 = vld [vmem:[%s580 + $0x68] sm:$0xf]
        %v703 = vld [vmem:[%s580 + $0x6c] sm:$0xf]
        %v704 = vld [vmem:[%s580 + $0x70] sm:$0xf]
        %v705 = vld [vmem:[%s580 + $0x74] sm:$0xf]
        %v706 = vld [vmem:[%s580 + $0x78] sm:$0xf]
        %v707 = vld [vmem:[%s580 + $0x7c] sm:$0xf]
        %v708 = vld [vmem:[%s580 + $0x80] sm:$0xf]
        %v709 = vld [vmem:[%s580 + $0x84] sm:$0xf]
        %v710 = vld [vmem:[%s580 + $0x88] sm:$0xf]
        %v711 = vld [vmem:[%s580 + $0x8c] sm:$0xf]
        %v712 = vld [vmem:[%s580 + $0x90] sm:$0xf]
        %v713 = vld [vmem:[%s580 + $0x94] sm:$0xf]
        %v714 = vld [vmem:[%s580 + $0x98] sm:$0xf]
        %v715 = vld [vmem:[%s580 + $0x9c] sm:$0xf]
        %v716 = vld [vmem:[%s580 + $0xa0] sm:$0xf]
        %v717 = vld [vmem:[%s580 + $0xa4] sm:$0xf]
        %v718 = vld [vmem:[%s580 + $0xa8] sm:$0xf]
        %v719 = vld [vmem:[%s580 + $0xac] sm:$0xf]
        %v720 = vld [vmem:[%s580 + $0xb0] sm:$0xf]
        %v721 = vld [vmem:[%s580 + $0xb4] sm:$0xf]
        %v722 = vld [vmem:[%s580 + $0xb8] sm:$0xf]
        %v723 = vld [vmem:[%s580 + $0xbc] sm:$0xf]
        %v724 = vld [vmem:[%s580 + $0xc0] sm:$0xf]
        %v725 = vld [vmem:[%s580 + $0xc4] sm:$0xf]
        %v726 = vld [vmem:[%s580 + $0xc8] sm:$0xf]
        %v727 = vld [vmem:[%s580 + $0xcc] sm:$0xf]
        %v728 = vld [vmem:[%s580 + $0xd0] sm:$0xf]
        %v729 = vld [vmem:[%s580 + $0xd4] sm:$0xf]
        %v730 = vld [vmem:[%s580 + $0xd8] sm:$0xf]
        %v731 = vld [vmem:[%s580 + $0xdc] sm:$0xf]
        %v732 = vld [vmem:[%s580 + $0xe0] sm:$0xf]
        %v733 = vld [vmem:[%s580 + $0xe4] sm:$0xf]
        %v734 = vld [vmem:[%s580 + $0xe8] sm:$0xf]
        %v735 = vld [vmem:[%s580 + $0xec] sm:$0xf]
        %v736 = vld [vmem:[%s580 + $0xf0] sm:$0xf]
        %v737 = vld [vmem:[%s580 + $0xf4] sm:$0xf]
        %v738 = vld [vmem:[%s580 + $0xf8] sm:$0xf]
        %v739 = vld [vmem:[%s580 + $0xfc] sm:$0xf]
        %v740 = vld [vmem:[%s598] sm:$0xf]
        %v741 = vld [vmem:[%s598 + $0x4] sm:$0xf]
        %v742 = vld [vmem:[%s598 + $0x8] sm:$0xf]
        %v743 = vld [vmem:[%s598 + $0xc] sm:$0xf]
        %v744 = vld [vmem:[%s598 + $0x10] sm:$0xf]
        %v745 = vld [vmem:[%s598 + $0x14] sm:$0xf]
        %v746 = vld [vmem:[%s598 + $0x18] sm:$0xf]
        %v747 = vld [vmem:[%s598 + $0x1c] sm:$0xf]
        %v748 = vld [vmem:[%s3] sm:$0xf]
        %v749 = vld [vmem:[%s3 + $0x4] sm:$0xf]
        %v830 = vunpack.c.l.b16 %v668
        %v831 = vunpack.c.l.b16 %v669
        %v832 = vunpack.c.l.b16 %v676
        %v833 = vunpack.c.l.b16 %v677
        %v834 = vunpack.c.l.b16 %v678
        %v835 = vunpack.c.l.b16 %v679
        %v836 = vunpack.c.l.b16 %v680
        %v837 = vunpack.c.l.b16 %v681
        %v838 = vunpack.c.l.b16 %v682
        %v839 = vunpack.c.l.b16 %v683
        %v840 = vunpack.c.l.b16 %v684
        %v841 = vunpack.c.l.b16 %v685
        %v842 = vunpack.c.l.b16 %v686
        %v843 = vunpack.c.l.b16 %v687
        %v844 = vunpack.c.l.b16 %v688
        %v845 = vunpack.c.l.b16 %v689
        %v846 = vunpack.c.l.b16 %v690
        %v847 = vunpack.c.l.b16 %v691
        %v848 = vunpack.c.l.b16 %v740
        %v849 = vunpack.c.l.b16 %v741
        %v850 = vunpack.c.l.b16 %v670
        %v851 = vunpack.c.l.b16 %v671
        %v852 = vunpack.c.l.b16 %v692
        %v853 = vunpack.c.l.b16 %v693
        %v854 = vunpack.c.l.b16 %v694
        %v855 = vunpack.c.l.b16 %v695
        %v856 = vunpack.c.l.b16 %v696
        %v857 = vunpack.c.l.b16 %v697
        %v858 = vunpack.c.l.b16 %v698
        %v859 = vunpack.c.l.b16 %v699
        %v860 = vunpack.c.l.b16 %v700
        %v861 = vunpack.c.l.b16 %v701
        %v862 = vunpack.c.l.b16 %v702
        %v863 = vunpack.c.l.b16 %v703
        %v864 = vunpack.c.l.b16 %v704
        %v865 = vunpack.c.l.b16 %v705
        %v866 = vunpack.c.l.b16 %v706
        %v867 = vunpack.c.l.b16 %v707
        %v868 = vunpack.c.l.b16 %v742
        %v869 = vunpack.c.l.b16 %v743
        %v870 = vunpack.c.l.b16 %v672
        %v871 = vunpack.c.l.b16 %v673
        %v872 = vunpack.c.l.b16 %v708
        %v873 = vunpack.c.l.b16 %v709
        %v874 = vunpack.c.l.b16 %v710
        %v875 = vunpack.c.l.b16 %v711
        %v876 = vunpack.c.l.b16 %v712
        %v877 = vunpack.c.l.b16 %v713
        %v878 = vunpack.c.l.b16 %v714
        %v879 = vunpack.c.l.b16 %v715
        %v880 = vunpack.c.l.b16 %v716
        %v881 = vunpack.c.l.b16 %v717
        %v882 = vunpack.c.l.b16 %v718
        %v883 = vunpack.c.l.b16 %v719
        %v884 = vunpack.c.l.b16 %v720
        %v885 = vunpack.c.l.b16 %v721
        %v886 = vunpack.c.l.b16 %v722
        %v887 = vunpack.c.l.b16 %v723
        %v888 = vunpack.c.l.b16 %v744
        %v889 = vunpack.c.l.b16 %v745
        %v890 = vunpack.c.l.b16 %v674
        %v891 = vunpack.c.l.b16 %v675
        %v892 = vunpack.c.l.b16 %v724
        %v893 = vunpack.c.l.b16 %v725
        %v894 = vunpack.c.l.b16 %v726
        %v895 = vunpack.c.l.b16 %v727
        %v896 = vunpack.c.l.b16 %v728
        %v897 = vunpack.c.l.b16 %v729
        %v898 = vunpack.c.l.b16 %v730
        %v899 = vunpack.c.l.b16 %v731
        %v900 = vunpack.c.l.b16 %v732
        %v901 = vunpack.c.l.b16 %v733
        %v902 = vunpack.c.l.b16 %v734
        %v903 = vunpack.c.l.b16 %v735
        %v904 = vunpack.c.l.b16 %v736
        %v905 = vunpack.c.l.b16 %v737
        %v906 = vunpack.c.l.b16 %v738
        %v907 = vunpack.c.l.b16 %v739
        %v908 = vunpack.c.l.b16 %v746
        %v909 = vunpack.c.l.b16 %v747
        %v910 = vpack.c.b16 %v831, %v830
        %v911 = vpack.c.b16 %v833, %v832
        %v912 = vpack.c.b16 %v835, %v834
        %v913 = vpack.c.b16 %v837, %v836
        %v914 = vpack.c.b16 %v839, %v838
        %v915 = vpack.c.b16 %v841, %v840
        %v916 = vpack.c.b16 %v843, %v842
        %v917 = vpack.c.b16 %v845, %v844
        %v918 = vpack.c.b16 %v847, %v846
        %v919 = vpack.c.b16 %v849, %v848
        %v920 = vpack.c.b16 %v851, %v850
        %v921 = vpack.c.b16 %v853, %v852
        %v922 = vpack.c.b16 %v855, %v854
        %v923 = vpack.c.b16 %v857, %v856
        %v924 = vpack.c.b16 %v859, %v858
        %v925 = vpack.c.b16 %v861, %v860
        %v926 = vpack.c.b16 %v863, %v862
        %v927 = vpack.c.b16 %v865, %v864
        %v928 = vpack.c.b16 %v867, %v866
        %v929 = vpack.c.b16 %v869, %v868
        %v930 = vpack.c.b16 %v871, %v870
        %v931 = vpack.c.b16 %v873, %v872
        %v932 = vpack.c.b16 %v875, %v874
        %v933 = vpack.c.b16 %v877, %v876
        %v934 = vpack.c.b16 %v879, %v878
        %v935 = vpack.c.b16 %v881, %v880
        %v936 = vpack.c.b16 %v883, %v882
        %v937 = vpack.c.b16 %v885, %v884
        %v938 = vpack.c.b16 %v887, %v886
        %v939 = vpack.c.b16 %v889, %v888
        %v940 = vpack.c.b16 %v891, %v890
        %v941 = vpack.c.b16 %v893, %v892
        %v942 = vpack.c.b16 %v895, %v894
        %v943 = vpack.c.b16 %v897, %v896
        %v944 = vpack.c.b16 %v899, %v898
        %v945 = vpack.c.b16 %v901, %v900
        %v946 = vpack.c.b16 %v903, %v902
        %v947 = vpack.c.b16 %v905, %v904
        %v948 = vpack.c.b16 %v907, %v906
        %v949 = vpack.c.b16 %v909, %v908
        %vm950 = vcmask 15360
        %v952 = vsel %vm950, %v910, 0
        %v955 = vsel %vm950, %v911, 0
        %v958 = vsel %vm950, %v912, 0
        %v961 = vsel %vm950, %v913, 0
        %v964 = vsel %vm950, %v914, 0
        %v967 = vsel %vm950, %v915, 0
        %v970 = vsel %vm950, %v916, 0
        %v973 = vsel %vm950, %v917, 0
        %v976 = vsel %vm950, %v918, 0
        %v979 = vsel %vm950, %v919, 0
        %v982 = vsel %vm950, %v920, 0
        %v985 = vsel %vm950, %v921, 0
        %v988 = vsel %vm950, %v922, 0
        %v991 = vsel %vm950, %v923, 0
        %v994 = vsel %vm950, %v924, 0
        %v997 = vsel %vm950, %v925, 0
        %v1000 = vsel %vm950, %v926, 0
        %v1003 = vsel %vm950, %v927, 0
        %v1006 = vsel %vm950, %v928, 0
        %v1009 = vsel %vm950, %v929, 0
        %v1012 = vsel %vm950, %v930, 0
        %v1015 = vsel %vm950, %v931, 0
        %v1018 = vsel %vm950, %v932, 0
        %v1021 = vsel %vm950, %v933, 0
        %v1024 = vsel %vm950, %v934, 0
        %v1027 = vsel %vm950, %v935, 0
        %v1030 = vsel %vm950, %v936, 0
        %v1033 = vsel %vm950, %v937, 0
        %v1036 = vsel %vm950, %v938, 0
        %v1039 = vsel %vm950, %v939, 0
        %v1042 = vsel %vm950, %v940, 0
        %v1045 = vsel %vm950, %v941, 0
        %v1048 = vsel %vm950, %v942, 0
        %v1051 = vsel %vm950, %v943, 0
        %v1054 = vsel %vm950, %v944, 0
        %v1057 = vsel %vm950, %v945, 0
        %v1060 = vsel %vm950, %v946, 0
        %v1063 = vsel %vm950, %v947, 0
        %v1066 = vsel %vm950, %v948, 0
        %v1069 = vsel %vm950, %v949, 0
        %vm1071 = vcmask 1040384
        %v1073 = vsel %vm1071, %v748, 0
        %1075 = vmatprep.subr.bf16.mxu0 0
        %1076 = vmatpush1.bf16.msra.mxu0 %v1073
        %1077 = vmatprep.subr.bf16.mxu0 0
        %1078 = vmatpush1.bf16.msra.mxu0 0
        %1079 = vmatprep.subr.bf16.mxu0 0
        %1080 = vmatpush1.bf16.msra.mxu0 0
        %1081 = vmatprep.subr.bf16.mxu0 0
        %1082 = vmatpush1.bf16.msra.mxu0 0
        %1083 = vmatprep.subr.bf16.mxu0 0
        %1084 = vmatpush1.bf16.msra.mxu0 0
        %1085 = vmatprep.subr.bf16.mxu0 0
        %1086 = vmatpush1.bf16.msra.mxu0 0
        %1087 = vmatprep.subr.bf16.mxu0 0
        %1088 = vmatpush1.bf16.msra.mxu0 0
        %1089 = vmatprep.subr.bf16.mxu0 0
        %1090 = vmatpush1.bf16.msra.mxu0 0
        %1091 = vmatprep.subr.bf16.mxu0 0
        %1092 = vmatpush1.bf16.msra.mxu0 0
        %1093 = vmatprep.subr.bf16.mxu0 0
        %1094 = vmatpush1.bf16.msra.mxu0 0
        %1095 = vmatprep.subr.bf16.mxu0 0
        %1096 = vmatpush1.bf16.msra.mxu0 0
        %1097 = vmatprep.subr.bf16.mxu0 0
        %1098 = vmatpush1.bf16.msra.mxu0 0
        %1099 = vmatprep.subr.bf16.mxu0 0
        %1100 = vmatpush1.bf16.msra.mxu0 0
        %1101 = vmatprep.subr.bf16.mxu0 0
        %1102 = vmatpush1.bf16.msra.mxu0 0
        %1103 = vmatprep.subr.bf16.mxu0 0
        %1104 = vmatpush1.bf16.msra.mxu0 0
        %1105 = vmatprep.subr.bf16.mxu0 0
        %1106 = vmatpush1.bf16.msra.mxu0 0
        %1107 = vmatprep.mubr.bf16.mxu0 0
        %1108 = vmatmul.mubr.bf16.gmra.mrb[0].mxu0 %v952
        %v1109 = vpop.f32.mrb[0].mxu0
        %v1110 = vpop.f32.mrb[0].mxu0
        %v1111 = vpop.f32.mrb[0].mxu0
        %v1112 = vpop.f32.mrb[0].mxu0
        %1113 = vmatprep.mubr.bf16.mxu0 0
        %1114 = vmatmul.mubr.bf16.gmra.mrb[0].mxu0 %v955
        %v1115 = vpop.f32.mrb[0].mxu0
        %v1116 = vpop.f32.mrb[0].mxu0
        %v1117 = vpop.f32.mrb[0].mxu0
        %v1118 = vpop.f32.mrb[0].mxu0
        %1119 = vmatprep.mubr.bf16.mxu0 0
        %1120 = vmatmul.mubr.bf16.gmra.mrb[0].mxu0 %v958
        %v1121 = vpop.f32.mrb[0].mxu0
        %v1122 = vpop.f32.mrb[0].mxu0
        %v1123 = vpop.f32.mrb[0].mxu0
        %v1124 = vpop.f32.mrb[0].mxu0
        %1125 = vmatprep.mubr.bf16.mxu0 0
        %1126 = vmatmul.mubr.bf16.gmra.mrb[0].mxu0 %v961
        %v1127 = vpop.f32.mrb[0].mxu0
        %v1128 = vpop.f32.mrb[0].mxu0
        %v1129 = vpop.f32.mrb[0].mxu0
        %v1130 = vpop.f32.mrb[0].mxu0
        %1131 = vmatprep.mubr.bf16.mxu0 0
        %1132 = vmatmul.mubr.bf16.gmra.mrb[0].mxu0 %v964
        %v1133 = vpop.f32.mrb[0].mxu0
        %v1134 = vpop.f32.mrb[0].mxu0
        %v1135 = vpop.f32.mrb[0].mxu0
        %v1136 = vpop.f32.mrb[0].mxu0
        %1137 = vmatprep.mubr.bf16.mxu0 0
        %1138 = vmatmul.mubr.bf16.gmra.mrb[0].mxu0 %v967
        %v1139 = vpop.f32.mrb[0].mxu0
        %v1140 = vpop.f32.mrb[0].mxu0
        %v1141 = vpop.f32.mrb[0].mxu0
        %v1142 = vpop.f32.mrb[0].mxu0
        %1143 = vmatprep.mubr.bf16.mxu0 0
        %1144 = vmatmul.mubr.bf16.gmra.mrb[0].mxu0 %v970
        %v1145 = vpop.f32.mrb[0].mxu0
        %v1146 = vpop.f32.mrb[0].mxu0
        %v1147 = vpop.f32.mrb[0].mxu0
        %v1148 = vpop.f32.mrb[0].mxu0
        %1149 = vmatprep.mubr.bf16.mxu0 0
        %1150 = vmatmul.mubr.bf16.gmra.mrb[0].mxu0 %v973
        %v1151 = vpop.f32.mrb[0].mxu0
        %v1152 = vpop.f32.mrb[0].mxu0
        %v1153 = vpop.f32.mrb[0].mxu0
        %v1154 = vpop.f32.mrb[0].mxu0
        %1155 = vmatprep.mubr.bf16.mxu0 0
        %1156 = vmatmul.mubr.bf16.gmra.mrb[0].mxu0 %v976
        %v1157 = vpop.f32.mrb[0].mxu0
        %v1158 = vpop.f32.mrb[0].mxu0
        %v1159 = vpop.f32.mrb[0].mxu0
        %v1160 = vpop.f32.mrb[0].mxu0
        %1161 = vmatprep.mubr.bf16.mxu0 0
        %1162 = vmatmul.mubr.bf16.gmra.mrb[0].mxu0 %v979
        %v1163 = vpop.f32.mrb[0].mxu0
        %v1164 = vpop.f32.mrb[0].mxu0
        %v1165 = vpop.f32.mrb[0].mxu0
        %v1166 = vpop.f32.mrb[0].mxu0
        %1167 = vmatprep.mubr.bf16.mxu0 0
        %1168 = vmatmul.mubr.bf16.gmra.mrb[0].mxu0 %v982
        %v1169 = vpop.f32.mrb[0].mxu0
        %v1170 = vadd.f32 0.0, %v1169
        %v1171 = vpop.f32.mrb[0].mxu0
        %v1172 = vpop.f32.mrb[0].mxu0
        %v1173 = vadd.f32 0.0, %v1172
        %v1174 = vpop.f32.mrb[0].mxu0
        %1175 = vmatprep.mubr.bf16.mxu0 0
        %1176 = vmatmul.mubr.bf16.gmra.mrb[0].mxu0 %v985
        %v1177 = vpop.f32.mrb[0].mxu0
        %v1178 = vadd.f32 0.0, %v1177
        %v1179 = vpop.f32.mrb[0].mxu0
        %v1180 = vpop.f32.mrb[0].mxu0
        %v1181 = vadd.f32 0.0, %v1180
        %v1182 = vpop.f32.mrb[0].mxu0
        %1183 = vmatprep.mubr.bf16.mxu0 0
        %1184 = vmatmul.mubr.bf16.gmra.mrb[0].mxu0 %v988
        %v1185 = vpop.f32.mrb[0].mxu0
        %v1186 = vadd.f32 0.0, %v1185
        %v1187 = vpop.f32.mrb[0].mxu0
        %v1188 = vpop.f32.mrb[0].mxu0
        %v1189 = vadd.f32 0.0, %v1188
        %v1190 = vpop.f32.mrb[0].mxu0
        %1191 = vmatprep.mubr.bf16.mxu0 0
        %1192 = vmatmul.mubr.bf16.gmra.mrb[0].mxu0 %v991
        %v1193 = vpop.f32.mrb[0].mxu0
        %v1194 = vadd.f32 0.0, %v1193
        %v1195 = vpop.f32.mrb[0].mxu0
        %v1196 = vpop.f32.mrb[0].mxu0
        %v1197 = vadd.f32 0.0, %v1196
        %v1198 = vpop.f32.mrb[0].mxu0
        %1199 = vmatprep.mubr.bf16.mxu0 0
        %1200 = vmatmul.mubr.bf16.gmra.mrb[0].mxu0 %v994
        %v1201 = vpop.f32.mrb[0].mxu0
        %v1202 = vadd.f32 0.0, %v1201
        %v1203 = vpop.f32.mrb[0].mxu0
        %v1204 = vpop.f32.mrb[0].mxu0
        %v1205 = vadd.f32 0.0, %v1204
        %v1206 = vpop.f32.mrb[0].mxu0
        %1207 = vmatprep.mubr.bf16.mxu0 0
        %1208 = vmatmul.mubr.bf16.gmra.mrb[0].mxu0 %v997
        %v1209 = vpop.f32.mrb[0].mxu0
        %v1210 = vadd.f32 0.0, %v1209
        %v1211 = vpop.f32.mrb[0].mxu0
        %v1212 = vpop.f32.mrb[0].mxu0
        %v1213 = vadd.f32 0.0, %v1212
        %v1214 = vpop.f32.mrb[0].mxu0
        %1215 = vmatprep.mubr.bf16.mxu0 0
        %1216 = vmatmul.mubr.bf16.gmra.mrb[0].mxu0 %v1000
        %v1217 = vpop.f32.mrb[0].mxu0
        %v1218 = vadd.f32 0.0, %v1217
        %v1219 = vpop.f32.mrb[0].mxu0
        %v1220 = vpop.f32.mrb[0].mxu0
        %v1221 = vadd.f32 0.0, %v1220
        %v1222 = vpop.f32.mrb[0].mxu0
        %1223 = vmatprep.mubr.bf16.mxu0 0
        %1224 = vmatmul.mubr.bf16.gmra.mrb[0].mxu0 %v1003
        %v1225 = vpop.f32.mrb[0].mxu0
        %v1226 = vadd.f32 0.0, %v1225
        %v1227 = vpop.f32.mrb[0].mxu0
        %v1228 = vpop.f32.mrb[0].mxu0
        %v1229 = vadd.f32 0.0, %v1228
        %v1230 = vpop.f32.mrb[0].mxu0
        %1231 = vmatprep.mubr.bf16.mxu0 0
        %1232 = vmatmul.mubr.bf16.gmra.mrb[0].mxu0 %v1006
        %v1233 = vpop.f32.mrb[0].mxu0
        %v1234 = vadd.f32 0.0, %v1233
        %v1235 = vpop.f32.mrb[0].mxu0
        %v1236 = vpop.f32.mrb[0].mxu0
        %v1237 = vadd.f32 0.0, %v1236
        %v1238 = vpop.f32.mrb[0].mxu0
        %1239 = vmatprep.mubr.bf16.mxu0 0
        %1240 = vmatmul.mubr.bf16.gmra.mrb[0].mxu0 %v1009
        %v1241 = vpop.f32.mrb[0].mxu0
        %v1242 = vadd.f32 0.0, %v1241
        %v1243 = vpop.f32.mrb[0].mxu0
        %v1244 = vpop.f32.mrb[0].mxu0
        %v1245 = vadd.f32 0.0, %v1244
        %v1246 = vpop.f32.mrb[0].mxu0
        %1247 = vmatprep.mubr.bf16.mxu0 0
        %1248 = vmatmul.mubr.bf16.gmra.mrb[0].mxu0 %v1012
        %v1249 = vpop.f32.mrb[0].mxu0
        %v1250 = vadd.f32 0.0, %v1249
        %v1251 = vpop.f32.mrb[0].mxu0
        %v1252 = vpop.f32.mrb[0].mxu0
        %v1253 = vadd.f32 0.0, %v1252
        %v1254 = vpop.f32.mrb[0].mxu0
        %1255 = vmatprep.mubr.bf16.mxu0 0
        %1256 = vmatmul.mubr.bf16.gmra.mrb[0].mxu0 %v1015
        %v1257 = vpop.f32.mrb[0].mxu0
        %v1258 = vadd.f32 0.0, %v1257
        %v1259 = vpop.f32.mrb[0].mxu0
        %v1260 = vpop.f32.mrb[0].mxu0
        %v1261 = vadd.f32 0.0, %v1260
        %v1262 = vpop.f32.mrb[0].mxu0
        %1263 = vmatprep.mubr.bf16.mxu0 0
        %1264 = vmatmul.mubr.bf16.gmra.mrb[0].mxu0 %v1018
        %v1265 = vpop.f32.mrb[0].mxu0
        %v1266 = vadd.f32 0.0, %v1265
        %v1267 = vpop.f32.mrb[0].mxu0
        %v1268 = vpop.f32.mrb[0].mxu0
        %v1269 = vadd.f32 0.0, %v1268
        %v1270 = vpop.f32.mrb[0].mxu0
        %1271 = vmatprep.mubr.bf16.mxu0 0
        %1272 = vmatmul.mubr.bf16.gmra.mrb[0].mxu0 %v1021
        %v1273 = vpop.f32.mrb[0].mxu0
        %v1274 = vadd.f32 0.0, %v1273
        %v1275 = vpop.f32.mrb[0].mxu0
        %v1276 = vpop.f32.mrb[0].mxu0
        %v1277 = vadd.f32 0.0, %v1276
        %v1278 = vpop.f32.mrb[0].mxu0
        %1279 = vmatprep.mubr.bf16.mxu0 0
        %1280 = vmatmul.mubr.bf16.gmra.mrb[0].mxu0 %v1024
        %v1281 = vpop.f32.mrb[0].mxu0
        %v1282 = vadd.f32 0.0, %v1281
        %v1283 = vpop.f32.mrb[0].mxu0
        %v1284 = vpop.f32.mrb[0].mxu0
        %v1285 = vadd.f32 0.0, %v1284
        %v1286 = vpop.f32.mrb[0].mxu0
        %1287 = vmatprep.mubr.bf16.mxu0 0
        %1288 = vmatmul.mubr.bf16.gmra.mrb[0].mxu0 %v1027
        %v1289 = vpop.f32.mrb[0].mxu0
        %v1290 = vadd.f32 0.0, %v1289
        %v1291 = vpop.f32.mrb[0].mxu0
        %v1292 = vpop.f32.mrb[0].mxu0
        %v1293 = vadd.f32 0.0, %v1292
        %v1294 = vpop.f32.mrb[0].mxu0
        %1295 = vmatprep.mubr.bf16.mxu0 0
        %1296 = vmatmul.mubr.bf16.gmra.mrb[0].mxu0 %v1030
        %v1297 = vpop.f32.mrb[0].mxu0
        %v1298 = vadd.f32 0.0, %v1297
        %v1299 = vpop.f32.mrb[0].mxu0
        %v1300 = vpop.f32.mrb[0].mxu0
        %v1301 = vadd.f32 0.0, %v1300
        %v1302 = vpop.f32.mrb[0].mxu0
        %1303 = vmatprep.mubr.bf16.mxu0 0
        %1304 = vmatmul.mubr.bf16.gmra.mrb[0].mxu0 %v1033
        %v1305 = vpop.f32.mrb[0].mxu0
        %v1306 = vadd.f32 0.0, %v1305
        %v1307 = vpop.f32.mrb[0].mxu0
        %v1308 = vpop.f32.mrb[0].mxu0
        %v1309 = vadd.f32 0.0, %v1308
        %v1310 = vpop.f32.mrb[0].mxu0
        %1311 = vmatprep.mubr.bf16.mxu0 0
        %1312 = vmatmul.mubr.bf16.gmra.mrb[0].mxu0 %v1036
        %v1313 = vpop.f32.mrb[0].mxu0
        %v1314 = vadd.f32 0.0, %v1313
        %v1315 = vpop.f32.mrb[0].mxu0
        %v1316 = vpop.f32.mrb[0].mxu0
        %v1317 = vadd.f32 0.0, %v1316
        %v1318 = vpop.f32.mrb[0].mxu0
        %1319 = vmatprep.mubr.bf16.mxu0 0
        %1320 = vmatmul.mubr.bf16.gmra.mrb[0].mxu0 %v1039
        %v1321 = vpop.f32.mrb[0].mxu0
        %v1322 = vadd.f32 0.0, %v1321
        %v1323 = vpop.f32.mrb[0].mxu0
        %v1324 = vpop.f32.mrb[0].mxu0
        %v1325 = vadd.f32 0.0, %v1324
        %v1326 = vpop.f32.mrb[0].mxu0
        %1327 = vmatprep.mubr.bf16.mxu0 0
        %1328 = vmatmul.mubr.bf16.gmra.mrb[0].mxu0 %v1042
        %v1329 = vpop.f32.mrb[0].mxu0
        %v1330 = vadd.f32 0.0, %v1329
        %v1331 = vpop.f32.mrb[0].mxu0
        %v1332 = vpop.f32.mrb[0].mxu0
        %v1333 = vadd.f32 0.0, %v1332
        %v1334 = vpop.f32.mrb[0].mxu0
        %1335 = vmatprep.mubr.bf16.mxu0 0
        %1336 = vmatmul.mubr.bf16.gmra.mrb[0].mxu0 %v1045
        %v1337 = vpop.f32.mrb[0].mxu0
        %v1338 = vadd.f32 0.0, %v1337
        %v1339 = vpop.f32.mrb[0].mxu0
        %v1340 = vpop.f32.mrb[0].mxu0
        %v1341 = vadd.f32 0.0, %v1340
        %v1342 = vpop.f32.mrb[0].mxu0
        %1343 = vmatprep.mubr.bf16.mxu0 0
        %1344 = vmatmul.mubr.bf16.gmra.mrb[0].mxu0 %v1048
        %v1345 = vpop.f32.mrb[0].mxu0
        %v1346 = vadd.f32 0.0, %v1345
        %v1347 = vpop.f32.mrb[0].mxu0
        %v1348 = vpop.f32.mrb[0].mxu0
        %v1349 = vadd.f32 0.0, %v1348
        %v1350 = vpop.f32.mrb[0].mxu0
        %1351 = vmatprep.mubr.bf16.mxu0 0
        %1352 = vmatmul.mubr.bf16.gmra.mrb[0].mxu0 %v1051
        %v1353 = vpop.f32.mrb[0].mxu0
        %v1354 = vadd.f32 0.0, %v1353
        %v1355 = vpop.f32.mrb[0].mxu0
        %v1356 = vpop.f32.mrb[0].mxu0
        %v1357 = vadd.f32 0.0, %v1356
        %v1358 = vpop.f32.mrb[0].mxu0
        %1359 = vmatprep.mubr.bf16.mxu0 0
        %1360 = vmatmul.mubr.bf16.gmra.mrb[0].mxu0 %v1054
        %v1361 = vpop.f32.mrb[0].mxu0
        %v1362 = vadd.f32 0.0, %v1361
        %v1363 = vpop.f32.mrb[0].mxu0
        %v1364 = vpop.f32.mrb[0].mxu0
        %v1365 = vadd.f32 0.0, %v1364
        %v1366 = vpop.f32.mrb[0].mxu0
        %1367 = vmatprep.mubr.bf16.mxu0 0
        %1368 = vmatmul.mubr.bf16.gmra.mrb[0].mxu0 %v1057
        %v1369 = vpop.f32.mrb[0].mxu0
        %v1370 = vadd.f32 0.0, %v1369
        %v1371 = vpop.f32.mrb[0].mxu0
        %v1372 = vpop.f32.mrb[0].mxu0
        %v1373 = vadd.f32 0.0, %v1372
        %v1374 = vpop.f32.mrb[0].mxu0
        %1375 = vmatprep.mubr.bf16.mxu0 0
        %1376 = vmatmul.mubr.bf16.gmra.mrb[0].mxu0 %v1060
        %v1377 = vpop.f32.mrb[0].mxu0
        %v1378 = vadd.f32 0.0, %v1377
        %v1379 = vpop.f32.mrb[0].mxu0
        %v1380 = vpop.f32.mrb[0].mxu0
        %v1381 = vadd.f32 0.0, %v1380
        %v1382 = vpop.f32.mrb[0].mxu0
        %1383 = vmatprep.mubr.bf16.mxu0 0
        %1384 = vmatmul.mubr.bf16.gmra.mrb[0].mxu0 %v1063
        %v1385 = vpop.f32.mrb[0].mxu0
        %v1386 = vadd.f32 0.0, %v1385
        %v1387 = vpop.f32.mrb[0].mxu0
        %v1388 = vpop.f32.mrb[0].mxu0
        %v1389 = vadd.f32 0.0, %v1388
        %v1390 = vpop.f32.mrb[0].mxu0
        %1391 = vmatprep.mubr.bf16.mxu0 0
        %1392 = vmatmul.mubr.bf16.gmra.mrb[0].mxu0 %v1066
        %v1393 = vpop.f32.mrb[0].mxu0
        %v1394 = vadd.f32 0.0, %v1393
        %v1395 = vpop.f32.mrb[0].mxu0
        %v1396 = vpop.f32.mrb[0].mxu0
        %v1397 = vadd.f32 0.0, %v1396
        %v1398 = vpop.f32.mrb[0].mxu0
        %1399 = vmatprep.mubr.bf16.mxu0 0
        %1400 = vmatmul.mubr.bf16.gmra.mrb[0].mxu0 %v1069
        %v1401 = vpop.f32.mrb[0].mxu0
        %v1402 = vadd.f32 0.0, %v1401
        %v1403 = vpop.f32.mrb[0].mxu0
        %v1404 = vpop.f32.mrb[0].mxu0
        %v1405 = vadd.f32 0.0, %v1404
        %v1406 = vpop.f32.mrb[0].mxu0
        %1407 = vdwg.mxu0
        %1408 = vrot.lane.b32.xlu0 %v910, 126
        %v1409 = vpop.permute.xlu0 %1408
        %1410 = vrot.lane.b32.xlu0 %v911, 126
        %v1411 = vpop.permute.xlu0 %1410
        %1412 = vrot.lane.b32.xlu0 %v912, 126
        %v1413 = vpop.permute.xlu0 %1412
        %1414 = vrot.lane.b32.xlu0 %v913, 126
        %v1415 = vpop.permute.xlu0 %1414
        %1416 = vrot.lane.b32.xlu0 %v914, 126
        %v1417 = vpop.permute.xlu0 %1416
        %1418 = vrot.lane.b32.xlu0 %v915, 126
        %v1419 = vpop.permute.xlu0 %1418
        %1420 = vrot.lane.b32.xlu0 %v916, 126
        %v1421 = vpop.permute.xlu0 %1420
        %1422 = vrot.lane.b32.xlu0 %v917, 126
        %v1423 = vpop.permute.xlu0 %1422
        %1424 = vrot.lane.b32.xlu0 %v918, 126
        %v1425 = vpop.permute.xlu0 %1424
        %1426 = vrot.lane.b32.xlu0 %v919, 126
        %v1427 = vpop.permute.xlu0 %1426
        %1428 = vrot.lane.b32.xlu0 %v920, 126
        %v1429 = vpop.permute.xlu0 %1428
        %1430 = vrot.lane.b32.xlu0 %v921, 126
        %v1431 = vpop.permute.xlu0 %1430
        %1432 = vrot.lane.b32.xlu0 %v922, 126
        %v1433 = vpop.permute.xlu0 %1432
        %1434 = vrot.lane.b32.xlu0 %v923, 126
        %v1435 = vpop.permute.xlu0 %1434
        %1436 = vrot.lane.b32.xlu0 %v924, 126
        %v1437 = vpop.permute.xlu0 %1436
        %1438 = vrot.lane.b32.xlu0 %v925, 126
        %v1439 = vpop.permute.xlu0 %1438
        %1440 = vrot.lane.b32.xlu0 %v926, 126
        %v1441 = vpop.permute.xlu0 %1440
        %1442 = vrot.lane.b32.xlu0 %v927, 126
        %v1443 = vpop.permute.xlu0 %1442
        %1444 = vrot.lane.b32.xlu0 %v928, 126
        %v1445 = vpop.permute.xlu0 %1444
        %1446 = vrot.lane.b32.xlu0 %v929, 126
        %v1447 = vpop.permute.xlu0 %1446
        %1448 = vrot.lane.b32.xlu0 %v930, 126
        %v1449 = vpop.permute.xlu0 %1448
        %1450 = vrot.lane.b32.xlu0 %v931, 126
        %v1451 = vpop.permute.xlu0 %1450
        %1452 = vrot.lane.b32.xlu0 %v932, 126
        %v1453 = vpop.permute.xlu0 %1452
        %1454 = vrot.lane.b32.xlu0 %v933, 126
        %v1455 = vpop.permute.xlu0 %1454
        %1456 = vrot.lane.b32.xlu0 %v934, 126
        %v1457 = vpop.permute.xlu0 %1456
        %1458 = vrot.lane.b32.xlu0 %v935, 126
        %v1459 = vpop.permute.xlu0 %1458
        %1460 = vrot.lane.b32.xlu0 %v936, 126
        %v1461 = vpop.permute.xlu0 %1460
        %1462 = vrot.lane.b32.xlu0 %v937, 126
        %v1463 = vpop.permute.xlu0 %1462
        %1464 = vrot.lane.b32.xlu0 %v938, 126
        %v1465 = vpop.permute.xlu0 %1464
        %1466 = vrot.lane.b32.xlu0 %v939, 126
        %v1467 = vpop.permute.xlu0 %1466
        %1468 = vrot.lane.b32.xlu0 %v940, 126
        %v1469 = vpop.permute.xlu0 %1468
        %1470 = vrot.lane.b32.xlu0 %v941, 126
        %v1471 = vpop.permute.xlu0 %1470
        %1472 = vrot.lane.b32.xlu0 %v942, 126
        %v1473 = vpop.permute.xlu0 %1472
        %1474 = vrot.lane.b32.xlu0 %v943, 126
        %v1475 = vpop.permute.xlu0 %1474
        %1476 = vrot.lane.b32.xlu0 %v944, 126
        %v1477 = vpop.permute.xlu0 %1476
        %1478 = vrot.lane.b32.xlu0 %v945, 126
        %v1479 = vpop.permute.xlu0 %1478
        %1480 = vrot.lane.b32.xlu0 %v946, 126
        %v1481 = vpop.permute.xlu0 %1480
        %1482 = vrot.lane.b32.xlu0 %v947, 126
        %v1483 = vpop.permute.xlu0 %1482
        %1484 = vrot.lane.b32.xlu0 %v948, 126
        %v1485 = vpop.permute.xlu0 %1484
        %1486 = vrot.lane.b32.xlu0 %v949, 126
        %v1487 = vpop.permute.xlu0 %1486
        %v1489 = vunpack.c.l.b16 %v748
        %v1490 = vpack.c.b16 %v1489, %v1489
        %v1491 = vrot.slane %v1490, 1
        %v1493 = vsel %vm950, %v1409, 0
        %v1496 = vsel %vm950, %v1411, 0
        %v1499 = vsel %vm950, %v1413, 0
        %v1502 = vsel %vm950, %v1415, 0
        %v1505 = vsel %vm950, %v1417, 0
        %v1508 = vsel %vm950, %v1419, 0
        %v1511 = vsel %vm950, %v1421, 0
        %v1514 = vsel %vm950, %v1423, 0
        %v1517 = vsel %vm950, %v1425, 0
        %v1520 = vsel %vm950, %v1427, 0
        %v1523 = vsel %vm950, %v1429, 0
        %v1526 = vsel %vm950, %v1431, 0
        %v1529 = vsel %vm950, %v1433, 0
        %v1532 = vsel %vm950, %v1435, 0
        %v1535 = vsel %vm950, %v1437, 0
        %v1538 = vsel %vm950, %v1439, 0
        %v1541 = vsel %vm950, %v1441, 0
        %v1544 = vsel %vm950, %v1443, 0
        %v1547 = vsel %vm950, %v1445, 0
        %v1550 = vsel %vm950, %v1447, 0
        %v1553 = vsel %vm950, %v1449, 0
        %v1556 = vsel %vm950, %v1451, 0
        %v1559 = vsel %vm950, %v1453, 0
        %v1562 = vsel %vm950, %v1455, 0
        %v1565 = vsel %vm950, %v1457, 0
        %v1568 = vsel %vm950, %v1459, 0
        %v1571 = vsel %vm950, %v1461, 0
        %v1574 = vsel %vm950, %v1463, 0
        %v1577 = vsel %vm950, %v1465, 0
        %v1580 = vsel %vm950, %v1467, 0
        %v1583 = vsel %vm950, %v1469, 0
        %v1586 = vsel %vm950, %v1471, 0
        %v1589 = vsel %vm950, %v1473, 0
        %v1592 = vsel %vm950, %v1475, 0
        %v1595 = vsel %vm950, %v1477, 0
        %v1598 = vsel %vm950, %v1479, 0
        %v1601 = vsel %vm950, %v1481, 0
        %v1604 = vsel %vm950, %v1483, 0
        %v1607 = vsel %vm950, %v1485, 0
        %v1610 = vsel %vm950, %v1487, 0
        %v1613 = vsel %vm1071, %v1491, 0
        %1615 = vmatprep.subr.bf16.mxu0 0
        %1616 = vmatpush1.bf16.msra.mxu0 %v1613
        %1617 = vmatprep.subr.bf16.mxu0 0
        %1618 = vmatpush1.bf16.msra.mxu0 0
        %1619 = vmatprep.subr.bf16.mxu0 0
        %1620 = vmatpush1.bf16.msra.mxu0 0
        %1621 = vmatprep.subr.bf16.mxu0 0
        %1622 = vmatpush1.bf16.msra.mxu0 0
        %1623 = vmatprep.subr.bf16.mxu0 0
        %1624 = vmatpush1.bf16.msra.mxu0 0
        %1625 = vmatprep.subr.bf16.mxu0 0
        %1626 = vmatpush1.bf16.msra.mxu0 0
        %1627 = vmatprep.subr.bf16.mxu0 0
        %1628 = vmatpush1.bf16.msra.mxu0 0
        %1629 = vmatprep.subr.bf16.mxu0 0
        %1630 = vmatpush1.bf16.msra.mxu0 0
        %1631 = vmatprep.subr.bf16.mxu0 0
        %1632 = vmatpush1.bf16.msra.mxu0 0
        %1633 = vmatprep.subr.bf16.mxu0 0
        %1634 = vmatpush1.bf16.msra.mxu0 0
        %1635 = vmatprep.subr.bf16.mxu0 0
        %1636 = vmatpush1.bf16.msra.mxu0 0
        %1637 = vmatprep.subr.bf16.mxu0 0
        %1638 = vmatpush1.bf16.msra.mxu0 0
        %1639 = vmatprep.subr.bf16.mxu0 0
        %1640 = vmatpush1.bf16.msra.mxu0 0
        %1641 = vmatprep.subr.bf16.mxu0 0
        %1642 = vmatpush1.bf16.msra.mxu0 0
        %1643 = vmatprep.subr.bf16.mxu0 0
        %1644 = vmatpush1.bf16.msra.mxu0 0
        %1645 = vmatprep.subr.bf16.mxu0 0
        %1646 = vmatpush1.bf16.msra.mxu0 0
        %1647 = vmatprep.mubr.bf16.mxu0 0
        %1648 = vmatmul.mubr.bf16.gmra.mrb[0].mxu0 %v1493
        %v1649 = vpop.f32.mrb[0].mxu0
        %v1650 = vadd.f32 0.0, %v1649
        %v1651 = vpop.f32.mrb[0].mxu0
        %v1652 = vpop.f32.mrb[0].mxu0
        %v1653 = vadd.f32 0.0, %v1652
        %v1654 = vpop.f32.mrb[0].mxu0
        %1655 = vmatprep.mubr.bf16.mxu0 0
        %1656 = vmatmul.mubr.bf16.gmra.mrb[0].mxu0 %v1496
        %v1657 = vpop.f32.mrb[0].mxu0
        %v1658 = vadd.f32 0.0, %v1657
        %v1659 = vpop.f32.mrb[0].mxu0
        %v1660 = vpop.f32.mrb[0].mxu0
        %v1661 = vadd.f32 0.0, %v1660
        %v1662 = vpop.f32.mrb[0].mxu0
        %1663 = vmatprep.mubr.bf16.mxu0 0
        %1664 = vmatmul.mubr.bf16.gmra.mrb[0].mxu0 %v1499
        %v1665 = vpop.f32.mrb[0].mxu0
        %v1666 = vadd.f32 0.0, %v1665
        %v1667 = vpop.f32.mrb[0].mxu0
        %v1668 = vpop.f32.mrb[0].mxu0
        %v1669 = vadd.f32 0.0, %v1668
        %v1670 = vpop.f32.mrb[0].mxu0
        %1671 = vmatprep.mubr.bf16.mxu0 0
        %1672 = vmatmul.mubr.bf16.gmra.mrb[0].mxu0 %v1502
        %v1673 = vpop.f32.mrb[0].mxu0
        %v1674 = vadd.f32 0.0, %v1673
        %v1675 = vpop.f32.mrb[0].mxu0
        %v1676 = vpop.f32.mrb[0].mxu0
        %v1677 = vadd.f32 0.0, %v1676
        %v1678 = vpop.f32.mrb[0].mxu0
        %1679 = vmatprep.mubr.bf16.mxu0 0
        %1680 = vmatmul.mubr.bf16.gmra.mrb[0].mxu0 %v1505
        %v1681 = vpop.f32.mrb[0].mxu0
        %v1682 = vadd.f32 0.0, %v1681
        %v1683 = vpop.f32.mrb[0].mxu0
        %v1684 = vpop.f32.mrb[0].mxu0
        %v1685 = vadd.f32 0.0, %v1684
        %v1686 = vpop.f32.mrb[0].mxu0
        %1687 = vmatprep.mubr.bf16.mxu0 0
        %1688 = vmatmul.mubr.bf16.gmra.mrb[0].mxu0 %v1508
        %v1689 = vpop.f32.mrb[0].mxu0
        %v1690 = vadd.f32 0.0, %v1689
        %v1691 = vpop.f32.mrb[0].mxu0
        %v1692 = vpop.f32.mrb[0].mxu0
        %v1693 = vadd.f32 0.0, %v1692
        %v1694 = vpop.f32.mrb[0].mxu0
        %1695 = vmatprep.mubr.bf16.mxu0 0
        %1696 = vmatmul.mubr.bf16.gmra.mrb[0].mxu0 %v1511
        %v1697 = vpop.f32.mrb[0].mxu0
        %v1698 = vadd.f32 0.0, %v1697
        %v1699 = vpop.f32.mrb[0].mxu0
        %v1700 = vpop.f32.mrb[0].mxu0
        %v1701 = vadd.f32 0.0, %v1700
        %v1702 = vpop.f32.mrb[0].mxu0
        %1703 = vmatprep.mubr.bf16.mxu0 0
        %1704 = vmatmul.mubr.bf16.gmra.mrb[0].mxu0 %v1514
        %v1705 = vpop.f32.mrb[0].mxu0
        %v1706 = vadd.f32 0.0, %v1705
        %v1707 = vpop.f32.mrb[0].mxu0
        %v1708 = vpop.f32.mrb[0].mxu0
        %v1709 = vadd.f32 0.0, %v1708
        %v1710 = vpop.f32.mrb[0].mxu0
        %1711 = vmatprep.mubr.bf16.mxu0 0
        %1712 = vmatmul.mubr.bf16.gmra.mrb[0].mxu0 %v1517
        %v1713 = vpop.f32.mrb[0].mxu0
        %v1714 = vadd.f32 0.0, %v1713
        %v1715 = vpop.f32.mrb[0].mxu0
        %v1716 = vpop.f32.mrb[0].mxu0
        %v1717 = vadd.f32 0.0, %v1716
        %v1718 = vpop.f32.mrb[0].mxu0
        %1719 = vmatprep.mubr.bf16.mxu0 0
        %1720 = vmatmul.mubr.bf16.gmra.mrb[0].mxu0 %v1520
        %v1721 = vpop.f32.mrb[0].mxu0
        %v1722 = vadd.f32 0.0, %v1721
        %v1723 = vpop.f32.mrb[0].mxu0
        %v1724 = vpop.f32.mrb[0].mxu0
        %v1725 = vadd.f32 0.0, %v1724
        %v1726 = vpop.f32.mrb[0].mxu0
        %1727 = vmatprep.mubr.bf16.mxu0 0
        %1728 = vmatmul.mubr.bf16.gmra.mrb[0].mxu0 %v1523
        %v1729 = vpop.f32.mrb[0].mxu0
        %v1730 = vadd.f32 0.0, %v1729
        %v1731 = vpop.f32.mrb[0].mxu0
        %v1732 = vpop.f32.mrb[0].mxu0
        %v1733 = vadd.f32 0.0, %v1732
        %v1734 = vpop.f32.mrb[0].mxu0
        %1735 = vmatprep.mubr.bf16.mxu0 0
        %1736 = vmatmul.mubr.bf16.gmra.mrb[0].mxu0 %v1526
        %v1737 = vpop.f32.mrb[0].mxu0
        %v1738 = vadd.f32 0.0, %v1737
        %v1739 = vpop.f32.mrb[0].mxu0
        %v1740 = vpop.f32.mrb[0].mxu0
        %v1741 = vadd.f32 0.0, %v1740
        %v1742 = vpop.f32.mrb[0].mxu0
        %1743 = vmatprep.mubr.bf16.mxu0 0
        %1744 = vmatmul.mubr.bf16.gmra.mrb[0].mxu0 %v1529
        %v1745 = vpop.f32.mrb[0].mxu0
        %v1746 = vadd.f32 0.0, %v1745
        %v1747 = vpop.f32.mrb[0].mxu0
        %v1748 = vpop.f32.mrb[0].mxu0
        %v1749 = vadd.f32 0.0, %v1748
        %v1750 = vpop.f32.mrb[0].mxu0
        %1751 = vmatprep.mubr.bf16.mxu0 0
        %1752 = vmatmul.mubr.bf16.gmra.mrb[0].mxu0 %v1532
        %v1753 = vpop.f32.mrb[0].mxu0
        %v1754 = vadd.f32 0.0, %v1753
        %v1755 = vpop.f32.mrb[0].mxu0
        %v1756 = vpop.f32.mrb[0].mxu0
        %v1757 = vadd.f32 0.0, %v1756
        %v1758 = vpop.f32.mrb[0].mxu0
        %1759 = vmatprep.mubr.bf16.mxu0 0
        %1760 = vmatmul.mubr.bf16.gmra.mrb[0].mxu0 %v1535
        %v1761 = vpop.f32.mrb[0].mxu0
        %v1762 = vadd.f32 0.0, %v1761
        %v1763 = vpop.f32.mrb[0].mxu0
        %v1764 = vpop.f32.mrb[0].mxu0
        %v1765 = vadd.f32 0.0, %v1764
        %v1766 = vpop.f32.mrb[0].mxu0
        %1767 = vmatprep.mubr.bf16.mxu0 0
        %1768 = vmatmul.mubr.bf16.gmra.mrb[0].mxu0 %v1538
        %v1769 = vpop.f32.mrb[0].mxu0
        %v1770 = vadd.f32 0.0, %v1769
        %v1771 = vpop.f32.mrb[0].mxu0
        %v1772 = vpop.f32.mrb[0].mxu0
        %v1773 = vadd.f32 0.0, %v1772
        %v1774 = vpop.f32.mrb[0].mxu0
        %1775 = vmatprep.mubr.bf16.mxu0 0
        %1776 = vmatmul.mubr.bf16.gmra.mrb[0].mxu0 %v1541
        %v1777 = vpop.f32.mrb[0].mxu0
        %v1778 = vadd.f32 0.0, %v1777
        %v1779 = vpop.f32.mrb[0].mxu0
        %v1780 = vpop.f32.mrb[0].mxu0
        %v1781 = vadd.f32 0.0, %v1780
        %v1782 = vpop.f32.mrb[0].mxu0
        %1783 = vmatprep.mubr.bf16.mxu0 0
        %1784 = vmatmul.mubr.bf16.gmra.mrb[0].mxu0 %v1544
        %v1785 = vpop.f32.mrb[0].mxu0
        %v1786 = vadd.f32 0.0, %v1785
        %v1787 = vpop.f32.mrb[0].mxu0
        %v1788 = vpop.f32.mrb[0].mxu0
        %v1789 = vadd.f32 0.0, %v1788
        %v1790 = vpop.f32.mrb[0].mxu0
        %1791 = vmatprep.mubr.bf16.mxu0 0
        %1792 = vmatmul.mubr.bf16.gmra.mrb[0].mxu0 %v1547
        %v1793 = vpop.f32.mrb[0].mxu0
        %v1794 = vadd.f32 0.0, %v1793
        %v1795 = vpop.f32.mrb[0].mxu0
        %v1796 = vpop.f32.mrb[0].mxu0
        %v1797 = vadd.f32 0.0, %v1796
        %v1798 = vpop.f32.mrb[0].mxu0
        %1799 = vmatprep.mubr.bf16.mxu0 0
        %1800 = vmatmul.mubr.bf16.gmra.mrb[0].mxu0 %v1550
        %v1801 = vpop.f32.mrb[0].mxu0
        %v1802 = vadd.f32 0.0, %v1801
        %v1803 = vpop.f32.mrb[0].mxu0
        %v1804 = vpop.f32.mrb[0].mxu0
        %v1805 = vadd.f32 0.0, %v1804
        %v1806 = vpop.f32.mrb[0].mxu0
        %1807 = vmatprep.mubr.bf16.mxu0 0
        %1808 = vmatmul.mubr.bf16.gmra.mrb[0].mxu0 %v1553
        %v1809 = vpop.f32.mrb[0].mxu0
        %v1810 = vadd.f32 0.0, %v1809
        %v1811 = vpop.f32.mrb[0].mxu0
        %v1812 = vpop.f32.mrb[0].mxu0
        %v1813 = vadd.f32 0.0, %v1812
        %v1814 = vpop.f32.mrb[0].mxu0
        %1815 = vmatprep.mubr.bf16.mxu0 0
        %1816 = vmatmul.mubr.bf16.gmra.mrb[0].mxu0 %v1556
        %v1817 = vpop.f32.mrb[0].mxu0
        %v1818 = vadd.f32 0.0, %v1817
        %v1819 = vpop.f32.mrb[0].mxu0
        %v1820 = vpop.f32.mrb[0].mxu0
        %v1821 = vadd.f32 0.0, %v1820
        %v1822 = vpop.f32.mrb[0].mxu0
        %1823 = vmatprep.mubr.bf16.mxu0 0
        %1824 = vmatmul.mubr.bf16.gmra.mrb[0].mxu0 %v1559
        %v1825 = vpop.f32.mrb[0].mxu0
        %v1826 = vadd.f32 0.0, %v1825
        %v1827 = vpop.f32.mrb[0].mxu0
        %v1828 = vpop.f32.mrb[0].mxu0
        %v1829 = vadd.f32 0.0, %v1828
        %v1830 = vpop.f32.mrb[0].mxu0
        %1831 = vmatprep.mubr.bf16.mxu0 0
        %1832 = vmatmul.mubr.bf16.gmra.mrb[0].mxu0 %v1562
        %v1833 = vpop.f32.mrb[0].mxu0
        %v1834 = vadd.f32 0.0, %v1833
        %v1835 = vpop.f32.mrb[0].mxu0
        %v1836 = vpop.f32.mrb[0].mxu0
        %v1837 = vadd.f32 0.0, %v1836
        %v1838 = vpop.f32.mrb[0].mxu0
        %1839 = vmatprep.mubr.bf16.mxu0 0
        %1840 = vmatmul.mubr.bf16.gmra.mrb[0].mxu0 %v1565
        %v1841 = vpop.f32.mrb[0].mxu0
        %v1842 = vadd.f32 0.0, %v1841
        %v1843 = vpop.f32.mrb[0].mxu0
        %v1844 = vpop.f32.mrb[0].mxu0
        %v1845 = vadd.f32 0.0, %v1844
        %v1846 = vpop.f32.mrb[0].mxu0
        %1847 = vmatprep.mubr.bf16.mxu0 0
        %1848 = vmatmul.mubr.bf16.gmra.mrb[0].mxu0 %v1568
        %v1849 = vpop.f32.mrb[0].mxu0
        %v1850 = vadd.f32 0.0, %v1849
        %v1851 = vpop.f32.mrb[0].mxu0
        %v1852 = vpop.f32.mrb[0].mxu0
        %v1853 = vadd.f32 0.0, %v1852
        %v1854 = vpop.f32.mrb[0].mxu0
        %1855 = vmatprep.mubr.bf16.mxu0 0
        %1856 = vmatmul.mubr.bf16.gmra.mrb[0].mxu0 %v1571
        %v1857 = vpop.f32.mrb[0].mxu0
        %v1858 = vadd.f32 0.0, %v1857
        %v1859 = vpop.f32.mrb[0].mxu0
        %v1860 = vpop.f32.mrb[0].mxu0
        %v1861 = vadd.f32 0.0, %v1860
        %v1862 = vpop.f32.mrb[0].mxu0
        %1863 = vmatprep.mubr.bf16.mxu0 0
        %1864 = vmatmul.mubr.bf16.gmra.mrb[0].mxu0 %v1574
        %v1865 = vpop.f32.mrb[0].mxu0
        %v1866 = vadd.f32 0.0, %v1865
        %v1867 = vpop.f32.mrb[0].mxu0
        %v1868 = vpop.f32.mrb[0].mxu0
        %v1869 = vadd.f32 0.0, %v1868
        %v1870 = vpop.f32.mrb[0].mxu0
        %1871 = vmatprep.mubr.bf16.mxu0 0
        %1872 = vmatmul.mubr.bf16.gmra.mrb[0].mxu0 %v1577
        %v1873 = vpop.f32.mrb[0].mxu0
        %v1874 = vadd.f32 0.0, %v1873
        %v1875 = vpop.f32.mrb[0].mxu0
        %v1876 = vpop.f32.mrb[0].mxu0
        %v1877 = vadd.f32 0.0, %v1876
        %v1878 = vpop.f32.mrb[0].mxu0
        %1879 = vmatprep.mubr.bf16.mxu0 0
        %1880 = vmatmul.mubr.bf16.gmra.mrb[0].mxu0 %v1580
        %v1881 = vpop.f32.mrb[0].mxu0
        %v1882 = vadd.f32 0.0, %v1881
        %v1883 = vpop.f32.mrb[0].mxu0
        %v1884 = vpop.f32.mrb[0].mxu0
        %v1885 = vadd.f32 0.0, %v1884
        %v1886 = vpop.f32.mrb[0].mxu0
        %1887 = vmatprep.mubr.bf16.mxu0 0
        %1888 = vmatmul.mubr.bf16.gmra.mrb[0].mxu0 %v1583
        %v1889 = vpop.f32.mrb[0].mxu0
        %v1890 = vpop.f32.mrb[0].mxu0
        %v1891 = vpop.f32.mrb[0].mxu0
        %v1892 = vpop.f32.mrb[0].mxu0
        %1893 = vmatprep.mubr.bf16.mxu0 0
        %1894 = vmatmul.mubr.bf16.gmra.mrb[0].mxu0 %v1586
        %v1895 = vpop.f32.mrb[0].mxu0
        %v1896 = vpop.f32.mrb[0].mxu0
        %v1897 = vpop.f32.mrb[0].mxu0
        %v1898 = vpop.f32.mrb[0].mxu0
        %1899 = vmatprep.mubr.bf16.mxu0 0
        %1900 = vmatmul.mubr.bf16.gmra.mrb[0].mxu0 %v1589
        %v1901 = vpop.f32.mrb[0].mxu0
        %v1902 = vpop.f32.mrb[0].mxu0
        %v1903 = vpop.f32.mrb[0].mxu0
        %v1904 = vpop.f32.mrb[0].mxu0
        %1905 = vmatprep.mubr.bf16.mxu0 0
        %1906 = vmatmul.mubr.bf16.gmra.mrb[0].mxu0 %v1592
        %v1907 = vpop.f32.mrb[0].mxu0
        %v1908 = vpop.f32.mrb[0].mxu0
        %v1909 = vpop.f32.mrb[0].mxu0
        %v1910 = vpop.f32.mrb[0].mxu0
        %1911 = vmatprep.mubr.bf16.mxu0 0
        %1912 = vmatmul.mubr.bf16.gmra.mrb[0].mxu0 %v1595
        %v1913 = vpop.f32.mrb[0].mxu0
        %v1914 = vpop.f32.mrb[0].mxu0
        %v1915 = vpop.f32.mrb[0].mxu0
        %v1916 = vpop.f32.mrb[0].mxu0
        %1917 = vmatprep.mubr.bf16.mxu0 0
        %1918 = vmatmul.mubr.bf16.gmra.mrb[0].mxu0 %v1598
        %v1919 = vpop.f32.mrb[0].mxu0
        %v1920 = vpop.f32.mrb[0].mxu0
        %v1921 = vpop.f32.mrb[0].mxu0
        %v1922 = vpop.f32.mrb[0].mxu0
        %1923 = vmatprep.mubr.bf16.mxu0 0
        %1924 = vmatmul.mubr.bf16.gmra.mrb[0].mxu0 %v1601
        %v1925 = vpop.f32.mrb[0].mxu0
        %v1926 = vpop.f32.mrb[0].mxu0
        %v1927 = vpop.f32.mrb[0].mxu0
        %v1928 = vpop.f32.mrb[0].mxu0
        %1929 = vmatprep.mubr.bf16.mxu0 0
        %1930 = vmatmul.mubr.bf16.gmra.mrb[0].mxu0 %v1604
        %v1931 = vpop.f32.mrb[0].mxu0
        %v1932 = vpop.f32.mrb[0].mxu0
        %v1933 = vpop.f32.mrb[0].mxu0
        %v1934 = vpop.f32.mrb[0].mxu0
        %1935 = vmatprep.mubr.bf16.mxu0 0
        %1936 = vmatmul.mubr.bf16.gmra.mrb[0].mxu0 %v1607
        %v1937 = vpop.f32.mrb[0].mxu0
        %v1938 = vpop.f32.mrb[0].mxu0
        %v1939 = vpop.f32.mrb[0].mxu0
        %v1940 = vpop.f32.mrb[0].mxu0
        %1941 = vmatprep.mubr.bf16.mxu0 0
        %1942 = vmatmul.mubr.bf16.gmra.mrb[0].mxu0 %v1610
        %v1943 = vpop.f32.mrb[0].mxu0
        %v1944 = vpop.f32.mrb[0].mxu0
        %v1945 = vpop.f32.mrb[0].mxu0
        %v1946 = vpop.f32.mrb[0].mxu0
        %1947 = vdwg.mxu0
        %v1948 = vadd.f32 %v1170, 0.0
        %v1949 = vadd.f32 %v1173, 0.0
        %v1950 = vadd.f32 %v1178, 0.0
        %v1951 = vadd.f32 %v1181, 0.0
        %v1952 = vadd.f32 %v1186, 0.0
        %v1953 = vadd.f32 %v1189, 0.0
        %v1954 = vadd.f32 %v1194, 0.0
        %v1955 = vadd.f32 %v1197, 0.0
        %v1956 = vadd.f32 %v1202, 0.0
        %v1957 = vadd.f32 %v1205, 0.0
        %v1958 = vadd.f32 %v1210, 0.0
        %v1959 = vadd.f32 %v1213, 0.0
        %v1960 = vadd.f32 %v1218, 0.0
        %v1961 = vadd.f32 %v1221, 0.0
        %v1962 = vadd.f32 %v1226, 0.0
        %v1963 = vadd.f32 %v1229, 0.0
        %v1964 = vadd.f32 %v1234, 0.0
        %v1965 = vadd.f32 %v1237, 0.0
        %v1966 = vadd.f32 %v1242, 0.0
        %v1967 = vadd.f32 %v1245, 0.0
        %v1968 = vadd.f32 %v1250, %v1650
        %v1969 = vadd.f32 %v1253, %v1653
        %v1970 = vadd.f32 %v1258, %v1658
        %v1971 = vadd.f32 %v1261, %v1661
        %v1972 = vadd.f32 %v1266, %v1666
        %v1973 = vadd.f32 %v1269, %v1669
        %v1974 = vadd.f32 %v1274, %v1674
        %v1975 = vadd.f32 %v1277, %v1677
        %v1976 = vadd.f32 %v1282, %v1682
        %v1977 = vadd.f32 %v1285, %v1685
        %v1978 = vadd.f32 %v1290, %v1690
        %v1979 = vadd.f32 %v1293, %v1693
        %v1980 = vadd.f32 %v1298, %v1698
        %v1981 = vadd.f32 %v1301, %v1701
        %v1982 = vadd.f32 %v1306, %v1706
        %v1983 = vadd.f32 %v1309, %v1709
        %v1984 = vadd.f32 %v1314, %v1714
        %v1985 = vadd.f32 %v1317, %v1717
        %v1986 = vadd.f32 %v1322, %v1722
        %v1987 = vadd.f32 %v1325, %v1725
        %v1988 = vadd.f32 %v1330, %v1730
        %v1989 = vadd.f32 %v1333, %v1733
        %v1990 = vadd.f32 %v1338, %v1738
        %v1991 = vadd.f32 %v1341, %v1741
        %v1992 = vadd.f32 %v1346, %v1746
        %v1993 = vadd.f32 %v1349, %v1749
        %v1994 = vadd.f32 %v1354, %v1754
        %v1995 = vadd.f32 %v1357, %v1757
        %v1996 = vadd.f32 %v1362, %v1762
        %v1997 = vadd.f32 %v1365, %v1765
        %v1998 = vadd.f32 %v1370, %v1770
        %v1999 = vadd.f32 %v1373, %v1773
        %v2000 = vadd.f32 %v1378, %v1778
        %v2001 = vadd.f32 %v1381, %v1781
        %v2002 = vadd.f32 %v1386, %v1786
        %v2003 = vadd.f32 %v1389, %v1789
        %v2004 = vadd.f32 %v1394, %v1794
        %v2005 = vadd.f32 %v1397, %v1797
        %v2006 = vadd.f32 %v1402, %v1802
        %v2007 = vadd.f32 %v1405, %v1805
        %v2008 = vadd.f32 %v1810, 0.0
        %v2009 = vadd.f32 %v1813, 0.0
        %v2010 = vadd.f32 %v1818, 0.0
        %v2011 = vadd.f32 %v1821, 0.0
        %v2012 = vadd.f32 %v1826, 0.0
        %v2013 = vadd.f32 %v1829, 0.0
        %v2014 = vadd.f32 %v1834, 0.0
        %v2015 = vadd.f32 %v1837, 0.0
        %v2016 = vadd.f32 %v1842, 0.0
        %v2017 = vadd.f32 %v1845, 0.0
        %v2018 = vadd.f32 %v1850, 0.0
        %v2019 = vadd.f32 %v1853, 0.0
        %v2020 = vadd.f32 %v1858, 0.0
        %v2021 = vadd.f32 %v1861, 0.0
        %v2022 = vadd.f32 %v1866, 0.0
        %v2023 = vadd.f32 %v1869, 0.0
        %v2024 = vadd.f32 %v1874, 0.0
        %v2025 = vadd.f32 %v1877, 0.0
        %v2026 = vadd.f32 %v1882, 0.0
        %v2027 = vadd.f32 %v1885, 0.0
        %2028 = vrot.lane.b32.xlu0 %v910, 124
        %v2029 = vpop.permute.xlu0 %2028
        %2030 = vrot.lane.b32.xlu0 %v911, 124
        %v2031 = vpop.permute.xlu0 %2030
        %2032 = vrot.lane.b32.xlu0 %v912, 124
        %v2033 = vpop.permute.xlu0 %2032
        %2034 = vrot.lane.b32.xlu0 %v913, 124
        %v2035 = vpop.permute.xlu0 %2034
        %2036 = vrot.lane.b32.xlu0 %v914, 124
        %v2037 = vpop.permute.xlu0 %2036
        %2038 = vrot.lane.b32.xlu0 %v915, 124
        %v2039 = vpop.permute.xlu0 %2038
        %2040 = vrot.lane.b32.xlu0 %v916, 124
        %v2041 = vpop.permute.xlu0 %2040
        %2042 = vrot.lane.b32.xlu0 %v917, 124
        %v2043 = vpop.permute.xlu0 %2042
        %2044 = vrot.lane.b32.xlu0 %v918, 124
        %v2045 = vpop.permute.xlu0 %2044
        %2046 = vrot.lane.b32.xlu0 %v919, 124
        %v2047 = vpop.permute.xlu0 %2046
        %2048 = vrot.lane.b32.xlu0 %v920, 124
        %v2049 = vpop.permute.xlu0 %2048
        %2050 = vrot.lane.b32.xlu0 %v921, 124
        %v2051 = vpop.permute.xlu0 %2050
        %2052 = vrot.lane.b32.xlu0 %v922, 124
        %v2053 = vpop.permute.xlu0 %2052
        %2054 = vrot.lane.b32.xlu0 %v923, 124
        %v2055 = vpop.permute.xlu0 %2054
        %2056 = vrot.lane.b32.xlu0 %v924, 124
        %v2057 = vpop.permute.xlu0 %2056
        %2058 = vrot.lane.b32.xlu0 %v925, 124
        %v2059 = vpop.permute.xlu0 %2058
        %2060 = vrot.lane.b32.xlu0 %v926, 124
        %v2061 = vpop.permute.xlu0 %2060
        %2062 = vrot.lane.b32.xlu0 %v927, 124
        %v2063 = vpop.permute.xlu0 %2062
        %2064 = vrot.lane.b32.xlu0 %v928, 124
        %v2065 = vpop.permute.xlu0 %2064
        %2066 = vrot.lane.b32.xlu0 %v929, 124
        %v2067 = vpop.permute.xlu0 %2066
        %2068 = vrot.lane.b32.xlu0 %v930, 124
        %v2069 = vpop.permute.xlu0 %2068
        %2070 = vrot.lane.b32.xlu0 %v931, 124
        %v2071 = vpop.permute.xlu0 %2070
        %2072 = vrot.lane.b32.xlu0 %v932, 124
        %v2073 = vpop.permute.xlu0 %2072
        %2074 = vrot.lane.b32.xlu0 %v933, 124
        %v2075 = vpop.permute.xlu0 %2074
        %2076 = vrot.lane.b32.xlu0 %v934, 124
        %v2077 = vpop.permute.xlu0 %2076
        %2078 = vrot.lane.b32.xlu0 %v935, 124
        %v2079 = vpop.permute.xlu0 %2078
        %2080 = vrot.lane.b32.xlu0 %v936, 124
        %v2081 = vpop.permute.xlu0 %2080
        %2082 = vrot.lane.b32.xlu0 %v937, 124
        %v2083 = vpop.permute.xlu0 %2082
        %2084 = vrot.lane.b32.xlu0 %v938, 124
        %v2085 = vpop.permute.xlu0 %2084
        %2086 = vrot.lane.b32.xlu0 %v939, 124
        %v2087 = vpop.permute.xlu0 %2086
        %2088 = vrot.lane.b32.xlu0 %v940, 124
        %v2089 = vpop.permute.xlu0 %2088
        %2090 = vrot.lane.b32.xlu0 %v941, 124
        %v2091 = vpop.permute.xlu0 %2090
        %2092 = vrot.lane.b32.xlu0 %v942, 124
        %v2093 = vpop.permute.xlu0 %2092
        %2094 = vrot.lane.b32.xlu0 %v943, 124
        %v2095 = vpop.permute.xlu0 %2094
        %2096 = vrot.lane.b32.xlu0 %v944, 124
        %v2097 = vpop.permute.xlu0 %2096
        %2098 = vrot.lane.b32.xlu0 %v945, 124
        %v2099 = vpop.permute.xlu0 %2098
        %2100 = vrot.lane.b32.xlu0 %v946, 124
        %v2101 = vpop.permute.xlu0 %2100
        %2102 = vrot.lane.b32.xlu0 %v947, 124
        %v2103 = vpop.permute.xlu0 %2102
        %2104 = vrot.lane.b32.xlu0 %v948, 124
        %v2105 = vpop.permute.xlu0 %2104
        %2106 = vrot.lane.b32.xlu0 %v949, 124
        %v2107 = vpop.permute.xlu0 %2106
        %v2109 = vunpack.c.l.b16 %v749
        %v2110 = vpack.c.b16 %v2109, %v1489
        %v2111 = vrot.slane %v2110, 2
        %vm2112 = vcmask 97280
        %v2114 = vsel %vm2112, %v2029, 0
        %v2117 = vsel %vm2112, %v2031, 0
        %v2120 = vsel %vm2112, %v2033, 0
        %v2123 = vsel %vm2112, %v2035, 0
        %v2126 = vsel %vm2112, %v2037, 0
        %v2129 = vsel %vm2112, %v2039, 0
        %v2132 = vsel %vm2112, %v2041, 0
        %v2135 = vsel %vm2112, %v2043, 0
        %v2138 = vsel %vm2112, %v2045, 0
        %v2141 = vsel %vm2112, %v2047, 0
        %v2144 = vsel %vm2112, %v2049, 0
        %v2147 = vsel %vm2112, %v2051, 0
        %v2150 = vsel %vm2112, %v2053, 0
        %v2153 = vsel %vm2112, %v2055, 0
        %v2156 = vsel %vm2112, %v2057, 0
        %v2159 = vsel %vm2112, %v2059, 0
        %v2162 = vsel %vm2112, %v2061, 0
        %v2165 = vsel %vm2112, %v2063, 0
        %v2168 = vsel %vm2112, %v2065, 0
        %v2171 = vsel %vm2112, %v2067, 0
        %v2174 = vsel %vm2112, %v2069, 0
        %v2177 = vsel %vm2112, %v2071, 0
        %v2180 = vsel %vm2112, %v2073, 0
        %v2183 = vsel %vm2112, %v2075, 0
        %v2186 = vsel %vm2112, %v2077, 0
        %v2189 = vsel %vm2112, %v2079, 0
        %v2192 = vsel %vm2112, %v2081, 0
        %v2195 = vsel %vm2112, %v2083, 0
        %v2198 = vsel %vm2112, %v2085, 0
        %v2201 = vsel %vm2112, %v2087, 0
        %v2204 = vsel %vm2112, %v2089, 0
        %v2207 = vsel %vm2112, %v2091, 0
        %v2210 = vsel %vm2112, %v2093, 0
        %v2213 = vsel %vm2112, %v2095, 0
        %v2216 = vsel %vm2112, %v2097, 0
        %v2219 = vsel %vm2112, %v2099, 0
        %v2222 = vsel %vm2112, %v2101, 0
        %v2225 = vsel %vm2112, %v2103, 0
        %v2228 = vsel %vm2112, %v2105, 0
        %v2231 = vsel %vm2112, %v2107, 0
        %vm2233 = vcmask 1045504
        %v2235 = vsel %vm2233, %v2111, 0
        %2237 = vmatprep.subr.bf16.mxu0 0
        %2238 = vmatpush1.bf16.msra.mxu0 %v2235
        %2239 = vmatprep.subr.bf16.mxu0 0
        %2240 = vmatpush1.bf16.msra.mxu0 0
        %2241 = vmatprep.subr.bf16.mxu0 0
        %2242 = vmatpush1.bf16.msra.mxu0 0
        %2243 = vmatprep.subr.bf16.mxu0 0
        %2244 = vmatpush1.bf16.msra.mxu0 0
        %2245 = vmatprep.subr.bf16.mxu0 0
        %2246 = vmatpush1.bf16.msra.mxu0 0
        %2247 = vmatprep.subr.bf16.mxu0 0
        %2248 = vmatpush1.bf16.msra.mxu0 0
        %2249 = vmatprep.subr.bf16.mxu0 0
        %2250 = vmatpush1.bf16.msra.mxu0 0
        %2251 = vmatprep.subr.bf16.mxu0 0
        %2252 = vmatpush1.bf16.msra.mxu0 0
        %2253 = vmatprep.subr.bf16.mxu0 0
        %2254 = vmatpush1.bf16.msra.mxu0 0
        %2255 = vmatprep.subr.bf16.mxu0 0
        %2256 = vmatpush1.bf16.msra.mxu0 0
        %2257 = vmatprep.subr.bf16.mxu0 0
        %2258 = vmatpush1.bf16.msra.mxu0 0
        %2259 = vmatprep.subr.bf16.mxu0 0
        %2260 = vmatpush1.bf16.msra.mxu0 0
        %2261 = vmatprep.subr.bf16.mxu0 0
        %2262 = vmatpush1.bf16.msra.mxu0 0
        %2263 = vmatprep.subr.bf16.mxu0 0
        %2264 = vmatpush1.bf16.msra.mxu0 0
        %2265 = vmatprep.subr.bf16.mxu0 0
        %2266 = vmatpush1.bf16.msra.mxu0 0
        %2267 = vmatprep.subr.bf16.mxu0 0
        %2268 = vmatpush1.bf16.msra.mxu0 0
        %2269 = vmatprep.mubr.bf16.mxu0 0
        %2270 = vmatmul.mubr.bf16.gmra.mrb[0].mxu0 %v2114
        %v2271 = vpop.f32.mrb[0].mxu0
        %v2272 = vadd.f32 0.0, %v2271
        %v2273 = vpop.f32.mrb[0].mxu0
        %v2274 = vpop.f32.mrb[0].mxu0
        %v2275 = vadd.f32 0.0, %v2274
        %v2276 = vpop.f32.mrb[0].mxu0
        %2277 = vmatprep.mubr.bf16.mxu0 0
        %2278 = vmatmul.mubr.bf16.gmra.mrb[0].mxu0 %v2117
        %v2279 = vpop.f32.mrb[0].mxu0
        %v2280 = vadd.f32 0.0, %v2279
        %v2281 = vpop.f32.mrb[0].mxu0
        %v2282 = vpop.f32.mrb[0].mxu0
        %v2283 = vadd.f32 0.0, %v2282
        %v2284 = vpop.f32.mrb[0].mxu0
        %2285 = vmatprep.mubr.bf16.mxu0 0
        %2286 = vmatmul.mubr.bf16.gmra.mrb[0].mxu0 %v2120
        %v2287 = vpop.f32.mrb[0].mxu0
        %v2288 = vadd.f32 0.0, %v2287
        %v2289 = vpop.f32.mrb[0].mxu0
        %v2290 = vpop.f32.mrb[0].mxu0
        %v2291 = vadd.f32 0.0, %v2290
        %v2292 = vpop.f32.mrb[0].mxu0
        %2293 = vmatprep.mubr.bf16.mxu0 0
        %2294 = vmatmul.mubr.bf16.gmra.mrb[0].mxu0 %v2123
        %v2295 = vpop.f32.mrb[0].mxu0
        %v2296 = vadd.f32 0.0, %v2295
        %v2297 = vpop.f32.mrb[0].mxu0
        %v2298 = vpop.f32.mrb[0].mxu0
        %v2299 = vadd.f32 0.0, %v2298
        %v2300 = vpop.f32.mrb[0].mxu0
        %2301 = vmatprep.mubr.bf16.mxu0 0
        %2302 = vmatmul.mubr.bf16.gmra.mrb[0].mxu0 %v2126
        %v2303 = vpop.f32.mrb[0].mxu0
        %v2304 = vadd.f32 0.0, %v2303
        %v2305 = vpop.f32.mrb[0].mxu0
        %v2306 = vpop.f32.mrb[0].mxu0
        %v2307 = vadd.f32 0.0, %v2306
        %v2308 = vpop.f32.mrb[0].mxu0
        %2309 = vmatprep.mubr.bf16.mxu0 0
        %2310 = vmatmul.mubr.bf16.gmra.mrb[0].mxu0 %v2129
        %v2311 = vpop.f32.mrb[0].mxu0
        %v2312 = vadd.f32 0.0, %v2311
        %v2313 = vpop.f32.mrb[0].mxu0
        %v2314 = vpop.f32.mrb[0].mxu0
        %v2315 = vadd.f32 0.0, %v2314
        %v2316 = vpop.f32.mrb[0].mxu0
        %2317 = vmatprep.mubr.bf16.mxu0 0
        %2318 = vmatmul.mubr.bf16.gmra.mrb[0].mxu0 %v2132
        %v2319 = vpop.f32.mrb[0].mxu0
        %v2320 = vadd.f32 0.0, %v2319
        %v2321 = vpop.f32.mrb[0].mxu0
        %v2322 = vpop.f32.mrb[0].mxu0
        %v2323 = vadd.f32 0.0, %v2322
        %v2324 = vpop.f32.mrb[0].mxu0
        %2325 = vmatprep.mubr.bf16.mxu0 0
        %2326 = vmatmul.mubr.bf16.gmra.mrb[0].mxu0 %v2135
        %v2327 = vpop.f32.mrb[0].mxu0
        %v2328 = vadd.f32 0.0, %v2327
        %v2329 = vpop.f32.mrb[0].mxu0
        %v2330 = vpop.f32.mrb[0].mxu0
        %v2331 = vadd.f32 0.0, %v2330
        %v2332 = vpop.f32.mrb[0].mxu0
        %2333 = vmatprep.mubr.bf16.mxu0 0
        %2334 = vmatmul.mubr.bf16.gmra.mrb[0].mxu0 %v2138
        %v2335 = vpop.f32.mrb[0].mxu0
        %v2336 = vadd.f32 0.0, %v2335
        %v2337 = vpop.f32.mrb[0].mxu0
        %v2338 = vpop.f32.mrb[0].mxu0
        %v2339 = vadd.f32 0.0, %v2338
        %v2340 = vpop.f32.mrb[0].mxu0
        %2341 = vmatprep.mubr.bf16.mxu0 0
        %2342 = vmatmul.mubr.bf16.gmra.mrb[0].mxu0 %v2141
        %v2343 = vpop.f32.mrb[0].mxu0
        %v2344 = vadd.f32 0.0, %v2343
        %v2345 = vpop.f32.mrb[0].mxu0
        %v2346 = vpop.f32.mrb[0].mxu0
        %v2347 = vadd.f32 0.0, %v2346
        %v2348 = vpop.f32.mrb[0].mxu0
        %2349 = vmatprep.mubr.bf16.mxu0 0
        %2350 = vmatmul.mubr.bf16.gmra.mrb[0].mxu0 %v2144
        %v2351 = vpop.f32.mrb[0].mxu0
        %v2352 = vadd.f32 0.0, %v2351
        %v2353 = vpop.f32.mrb[0].mxu0
        %v2354 = vpop.f32.mrb[0].mxu0
        %v2355 = vadd.f32 0.0, %v2354
        %v2356 = vpop.f32.mrb[0].mxu0
        %2357 = vmatprep.mubr.bf16.mxu0 0
        %2358 = vmatmul.mubr.bf16.gmra.mrb[0].mxu0 %v2147
        %v2359 = vpop.f32.mrb[0].mxu0
        %v2360 = vadd.f32 0.0, %v2359
        %v2361 = vpop.f32.mrb[0].mxu0
        %v2362 = vpop.f32.mrb[0].mxu0
        %v2363 = vadd.f32 0.0, %v2362
        %v2364 = vpop.f32.mrb[0].mxu0
        %2365 = vmatprep.mubr.bf16.mxu0 0
        %2366 = vmatmul.mubr.bf16.gmra.mrb[0].mxu0 %v2150
        %v2367 = vpop.f32.mrb[0].mxu0
        %v2368 = vadd.f32 0.0, %v2367
        %v2369 = vpop.f32.mrb[0].mxu0
        %v2370 = vpop.f32.mrb[0].mxu0
        %v2371 = vadd.f32 0.0, %v2370
        %v2372 = vpop.f32.mrb[0].mxu0
        %2373 = vmatprep.mubr.bf16.mxu0 0
        %2374 = vmatmul.mubr.bf16.gmra.mrb[0].mxu0 %v2153
        %v2375 = vpop.f32.mrb[0].mxu0
        %v2376 = vadd.f32 0.0, %v2375
        %v2377 = vpop.f32.mrb[0].mxu0
        %v2378 = vpop.f32.mrb[0].mxu0
        %v2379 = vadd.f32 0.0, %v2378
        %v2380 = vpop.f32.mrb[0].mxu0
        %2381 = vmatprep.mubr.bf16.mxu0 0
        %2382 = vmatmul.mubr.bf16.gmra.mrb[0].mxu0 %v2156
        %v2383 = vpop.f32.mrb[0].mxu0
        %v2384 = vadd.f32 0.0, %v2383
        %v2385 = vpop.f32.mrb[0].mxu0
        %v2386 = vpop.f32.mrb[0].mxu0
        %v2387 = vadd.f32 0.0, %v2386
        %v2388 = vpop.f32.mrb[0].mxu0
        %2389 = vmatprep.mubr.bf16.mxu0 0
        %2390 = vmatmul.mubr.bf16.gmra.mrb[0].mxu0 %v2159
        %v2391 = vpop.f32.mrb[0].mxu0
        %v2392 = vadd.f32 0.0, %v2391
        %v2393 = vpop.f32.mrb[0].mxu0
        %v2394 = vpop.f32.mrb[0].mxu0
        %v2395 = vadd.f32 0.0, %v2394
        %v2396 = vpop.f32.mrb[0].mxu0
        %2397 = vmatprep.mubr.bf16.mxu0 0
        %2398 = vmatmul.mubr.bf16.gmra.mrb[0].mxu0 %v2162
        %v2399 = vpop.f32.mrb[0].mxu0
        %v2400 = vadd.f32 0.0, %v2399
        %v2401 = vpop.f32.mrb[0].mxu0
        %v2402 = vpop.f32.mrb[0].mxu0
        %v2403 = vadd.f32 0.0, %v2402
        %v2404 = vpop.f32.mrb[0].mxu0
        %2405 = vmatprep.mubr.bf16.mxu0 0
        %2406 = vmatmul.mubr.bf16.gmra.mrb[0].mxu0 %v2165
        %v2407 = vpop.f32.mrb[0].mxu0
        %v2408 = vadd.f32 0.0, %v2407
        %v2409 = vpop.f32.mrb[0].mxu0
        %v2410 = vpop.f32.mrb[0].mxu0
        %v2411 = vadd.f32 0.0, %v2410
        %v2412 = vpop.f32.mrb[0].mxu0
        %2413 = vmatprep.mubr.bf16.mxu0 0
        %2414 = vmatmul.mubr.bf16.gmra.mrb[0].mxu0 %v2168
        %v2415 = vpop.f32.mrb[0].mxu0
        %v2416 = vadd.f32 0.0, %v2415
        %v2417 = vpop.f32.mrb[0].mxu0
        %v2418 = vpop.f32.mrb[0].mxu0
        %v2419 = vadd.f32 0.0, %v2418
        %v2420 = vpop.f32.mrb[0].mxu0
        %2421 = vmatprep.mubr.bf16.mxu0 0
        %2422 = vmatmul.mubr.bf16.gmra.mrb[0].mxu0 %v2171
        %v2423 = vpop.f32.mrb[0].mxu0
        %v2424 = vadd.f32 0.0, %v2423
        %v2425 = vpop.f32.mrb[0].mxu0
        %v2426 = vpop.f32.mrb[0].mxu0
        %v2427 = vadd.f32 0.0, %v2426
        %v2428 = vpop.f32.mrb[0].mxu0
        %2429 = vmatprep.mubr.bf16.mxu0 0
        %2430 = vmatmul.mubr.bf16.gmra.mrb[0].mxu0 %v2174
        %v2431 = vpop.f32.mrb[0].mxu0
        %v2432 = vadd.f32 0.0, %v2431
        %v2433 = vpop.f32.mrb[0].mxu0
        %v2434 = vpop.f32.mrb[0].mxu0
        %v2435 = vadd.f32 0.0, %v2434
        %v2436 = vpop.f32.mrb[0].mxu0
        %2437 = vmatprep.mubr.bf16.mxu0 0
        %2438 = vmatmul.mubr.bf16.gmra.mrb[0].mxu0 %v2177
        %v2439 = vpop.f32.mrb[0].mxu0
        %v2440 = vadd.f32 0.0, %v2439
        %v2441 = vpop.f32.mrb[0].mxu0
        %v2442 = vpop.f32.mrb[0].mxu0
        %v2443 = vadd.f32 0.0, %v2442
        %v2444 = vpop.f32.mrb[0].mxu0
        %2445 = vmatprep.mubr.bf16.mxu0 0
        %2446 = vmatmul.mubr.bf16.gmra.mrb[0].mxu0 %v2180
        %v2447 = vpop.f32.mrb[0].mxu0
        %v2448 = vadd.f32 0.0, %v2447
        %v2449 = vpop.f32.mrb[0].mxu0
        %v2450 = vpop.f32.mrb[0].mxu0
        %v2451 = vadd.f32 0.0, %v2450
        %v2452 = vpop.f32.mrb[0].mxu0
        %2453 = vmatprep.mubr.bf16.mxu0 0
        %2454 = vmatmul.mubr.bf16.gmra.mrb[0].mxu0 %v2183
        %v2455 = vpop.f32.mrb[0].mxu0
        %v2456 = vadd.f32 0.0, %v2455
        %v2457 = vpop.f32.mrb[0].mxu0
        %v2458 = vpop.f32.mrb[0].mxu0
        %v2459 = vadd.f32 0.0, %v2458
        %v2460 = vpop.f32.mrb[0].mxu0
        %2461 = vmatprep.mubr.bf16.mxu0 0
        %2462 = vmatmul.mubr.bf16.gmra.mrb[0].mxu0 %v2186
        %v2463 = vpop.f32.mrb[0].mxu0
        %v2464 = vadd.f32 0.0, %v2463
        %v2465 = vpop.f32.mrb[0].mxu0
        %v2466 = vpop.f32.mrb[0].mxu0
        %v2467 = vadd.f32 0.0, %v2466
        %v2468 = vpop.f32.mrb[0].mxu0
        %2469 = vmatprep.mubr.bf16.mxu0 0
        %2470 = vmatmul.mubr.bf16.gmra.mrb[0].mxu0 %v2189
        %v2471 = vpop.f32.mrb[0].mxu0
        %v2472 = vadd.f32 0.0, %v2471
        %v2473 = vpop.f32.mrb[0].mxu0
        %v2474 = vpop.f32.mrb[0].mxu0
        %v2475 = vadd.f32 0.0, %v2474
        %v2476 = vpop.f32.mrb[0].mxu0
        %2477 = vmatprep.mubr.bf16.mxu0 0
        %2478 = vmatmul.mubr.bf16.gmra.mrb[0].mxu0 %v2192
        %v2479 = vpop.f32.mrb[0].mxu0
        %v2480 = vadd.f32 0.0, %v2479
        %v2481 = vpop.f32.mrb[0].mxu0
        %v2482 = vpop.f32.mrb[0].mxu0
        %v2483 = vadd.f32 0.0, %v2482
        %v2484 = vpop.f32.mrb[0].mxu0
        %2485 = vmatprep.mubr.bf16.mxu0 0
        %2486 = vmatmul.mubr.bf16.gmra.mrb[0].mxu0 %v2195
        %v2487 = vpop.f32.mrb[0].mxu0
        %v2488 = vadd.f32 0.0, %v2487
        %v2489 = vpop.f32.mrb[0].mxu0
        %v2490 = vpop.f32.mrb[0].mxu0
        %v2491 = vadd.f32 0.0, %v2490
        %v2492 = vpop.f32.mrb[0].mxu0
        %2493 = vmatprep.mubr.bf16.mxu0 0
        %2494 = vmatmul.mubr.bf16.gmra.mrb[0].mxu0 %v2198
        %v2495 = vpop.f32.mrb[0].mxu0
        %v2496 = vadd.f32 0.0, %v2495
        %v2497 = vpop.f32.mrb[0].mxu0
        %v2498 = vpop.f32.mrb[0].mxu0
        %v2499 = vadd.f32 0.0, %v2498
        %v2500 = vpop.f32.mrb[0].mxu0
        %2501 = vmatprep.mubr.bf16.mxu0 0
        %2502 = vmatmul.mubr.bf16.gmra.mrb[0].mxu0 %v2201
        %v2503 = vpop.f32.mrb[0].mxu0
        %v2504 = vadd.f32 0.0, %v2503
        %v2505 = vpop.f32.mrb[0].mxu0
        %v2506 = vpop.f32.mrb[0].mxu0
        %v2507 = vadd.f32 0.0, %v2506
        %v2508 = vpop.f32.mrb[0].mxu0
        %2509 = vmatprep.mubr.bf16.mxu0 0
        %2510 = vmatmul.mubr.bf16.gmra.mrb[0].mxu0 %v2204
        %v2511 = vpop.f32.mrb[0].mxu0
        %v2512 = vadd.f32 0.0, %v2511
        %v2513 = vpop.f32.mrb[0].mxu0
        %v2514 = vpop.f32.mrb[0].mxu0
        %v2515 = vadd.f32 0.0, %v2514
        %v2516 = vpop.f32.mrb[0].mxu0
        %2517 = vmatprep.mubr.bf16.mxu0 0
        %2518 = vmatmul.mubr.bf16.gmra.mrb[0].mxu0 %v2207
        %v2519 = vpop.f32.mrb[0].mxu0
        %v2520 = vadd.f32 0.0, %v2519
        %v2521 = vpop.f32.mrb[0].mxu0
        %v2522 = vpop.f32.mrb[0].mxu0
        %v2523 = vadd.f32 0.0, %v2522
        %v2524 = vpop.f32.mrb[0].mxu0
        %2525 = vmatprep.mubr.bf16.mxu0 0
        %2526 = vmatmul.mubr.bf16.gmra.mrb[0].mxu0 %v2210
        %v2527 = vpop.f32.mrb[0].mxu0
        %v2528 = vadd.f32 0.0, %v2527
        %v2529 = vpop.f32.mrb[0].mxu0
        %v2530 = vpop.f32.mrb[0].mxu0
        %v2531 = vadd.f32 0.0, %v2530
        %v2532 = vpop.f32.mrb[0].mxu0
        %2533 = vmatprep.mubr.bf16.mxu0 0
        %2534 = vmatmul.mubr.bf16.gmra.mrb[0].mxu0 %v2213
        %v2535 = vpop.f32.mrb[0].mxu0
        %v2536 = vadd.f32 0.0, %v2535
        %v2537 = vpop.f32.mrb[0].mxu0
        %v2538 = vpop.f32.mrb[0].mxu0
        %v2539 = vadd.f32 0.0, %v2538
        %v2540 = vpop.f32.mrb[0].mxu0
        %2541 = vmatprep.mubr.bf16.mxu0 0
        %2542 = vmatmul.mubr.bf16.gmra.mrb[0].mxu0 %v2216
        %v2543 = vpop.f32.mrb[0].mxu0
        %v2544 = vadd.f32 0.0, %v2543
        %v2545 = vpop.f32.mrb[0].mxu0
        %v2546 = vpop.f32.mrb[0].mxu0
        %v2547 = vadd.f32 0.0, %v2546
        %v2548 = vpop.f32.mrb[0].mxu0
        %2549 = vmatprep.mubr.bf16.mxu0 0
        %2550 = vmatmul.mubr.bf16.gmra.mrb[0].mxu0 %v2219
        %v2551 = vpop.f32.mrb[0].mxu0
        %v2552 = vadd.f32 0.0, %v2551
        %v2553 = vpop.f32.mrb[0].mxu0
        %v2554 = vpop.f32.mrb[0].mxu0
        %v2555 = vadd.f32 0.0, %v2554
        %v2556 = vpop.f32.mrb[0].mxu0
        %2557 = vmatprep.mubr.bf16.mxu0 0
        %2558 = vmatmul.mubr.bf16.gmra.mrb[0].mxu0 %v2222
        %v2559 = vpop.f32.mrb[0].mxu0
        %v2560 = vadd.f32 0.0, %v2559
        %v2561 = vpop.f32.mrb[0].mxu0
        %v2562 = vpop.f32.mrb[0].mxu0
        %v2563 = vadd.f32 0.0, %v2562
        %v2564 = vpop.f32.mrb[0].mxu0
        %2565 = vmatprep.mubr.bf16.mxu0 0
        %2566 = vmatmul.mubr.bf16.gmra.mrb[0].mxu0 %v2225
        %v2567 = vpop.f32.mrb[0].mxu0
        %v2568 = vadd.f32 0.0, %v2567
        %v2569 = vpop.f32.mrb[0].mxu0
        %v2570 = vpop.f32.mrb[0].mxu0
        %v2571 = vadd.f32 0.0, %v2570
        %v2572 = vpop.f32.mrb[0].mxu0
        %2573 = vmatprep.mubr.bf16.mxu0 0
        %2574 = vmatmul.mubr.bf16.gmra.mrb[0].mxu0 %v2228
        %v2575 = vpop.f32.mrb[0].mxu0
        %v2576 = vadd.f32 0.0, %v2575
        %v2577 = vpop.f32.mrb[0].mxu0
        %v2578 = vpop.f32.mrb[0].mxu0
        %v2579 = vadd.f32 0.0, %v2578
        %v2580 = vpop.f32.mrb[0].mxu0
        %2581 = vmatprep.mubr.bf16.mxu0 0
        %2582 = vmatmul.mubr.bf16.gmra.mrb[0].mxu0 %v2231
        %v2583 = vpop.f32.mrb[0].mxu0
        %v2584 = vadd.f32 0.0, %v2583
        %v2585 = vpop.f32.mrb[0].mxu0
        %v2586 = vpop.f32.mrb[0].mxu0
        %v2587 = vadd.f32 0.0, %v2586
        %v2588 = vpop.f32.mrb[0].mxu0
        %2589 = vdwg.mxu0
        %v2590 = vadd.f32 %v1948, %v2272
        %v2591 = vadd.f32 %v1949, %v2275
        %v2592 = vadd.f32 %v1950, %v2280
        %v2593 = vadd.f32 %v1951, %v2283
        %v2594 = vadd.f32 %v1952, %v2288
        %v2595 = vadd.f32 %v1953, %v2291
        %v2596 = vadd.f32 %v1954, %v2296
        %v2597 = vadd.f32 %v1955, %v2299
        %v2598 = vadd.f32 %v1956, %v2304
        %v2599 = vadd.f32 %v1957, %v2307
        %v2600 = vadd.f32 %v1958, %v2312
        %v2601 = vadd.f32 %v1959, %v2315
        %v2602 = vadd.f32 %v1960, %v2320
        %v2603 = vadd.f32 %v1961, %v2323
        %v2604 = vadd.f32 %v1962, %v2328
        %v2605 = vadd.f32 %v1963, %v2331
        %v2606 = vadd.f32 %v1964, %v2336
        %v2607 = vadd.f32 %v1965, %v2339
        %v2608 = vadd.f32 %v1966, %v2344
        %v2609 = vadd.f32 %v1967, %v2347
        %v2610 = vadd.f32 %v1968, %v2352
        %v2611 = vadd.f32 %v1969, %v2355
        %v2612 = vadd.f32 %v1970, %v2360
        %v2613 = vadd.f32 %v1971, %v2363
        %v2614 = vadd.f32 %v1972, %v2368
        %v2615 = vadd.f32 %v1973, %v2371
        %v2616 = vadd.f32 %v1974, %v2376
        %v2617 = vadd.f32 %v1975, %v2379
        %v2618 = vadd.f32 %v1976, %v2384
        %v2619 = vadd.f32 %v1977, %v2387
        %v2620 = vadd.f32 %v1978, %v2392
        %v2621 = vadd.f32 %v1979, %v2395
        %v2622 = vadd.f32 %v1980, %v2400
        %v2623 = vadd.f32 %v1981, %v2403
        %v2624 = vadd.f32 %v1982, %v2408
        %v2625 = vadd.f32 %v1983, %v2411
        %v2626 = vadd.f32 %v1984, %v2416
        %v2627 = vadd.f32 %v1985, %v2419
        %v2628 = vadd.f32 %v1986, %v2424
        %v2629 = vadd.f32 %v1987, %v2427
        %v2630 = vadd.f32 %v1988, %v2432
        %v2631 = vadd.f32 %v1989, %v2435
        %v2632 = vadd.f32 %v1990, %v2440
        %v2633 = vadd.f32 %v1991, %v2443
        %v2634 = vadd.f32 %v1992, %v2448
        %v2635 = vadd.f32 %v1993, %v2451
        %v2636 = vadd.f32 %v1994, %v2456
        %v2637 = vadd.f32 %v1995, %v2459
        %v2638 = vadd.f32 %v1996, %v2464
        %v2639 = vadd.f32 %v1997, %v2467
        %v2640 = vadd.f32 %v1998, %v2472
        %v2641 = vadd.f32 %v1999, %v2475
        %v2642 = vadd.f32 %v2000, %v2480
        %v2643 = vadd.f32 %v2001, %v2483
        %v2644 = vadd.f32 %v2002, %v2488
        %v2645 = vadd.f32 %v2003, %v2491
        %v2646 = vadd.f32 %v2004, %v2496
        %v2647 = vadd.f32 %v2005, %v2499
        %v2648 = vadd.f32 %v2006, %v2504
        %v2649 = vadd.f32 %v2007, %v2507
        %v2650 = vadd.f32 %v2008, %v2512
        %v2651 = vadd.f32 %v2009, %v2515
        %v2652 = vadd.f32 %v2010, %v2520
        %v2653 = vadd.f32 %v2011, %v2523
        %v2654 = vadd.f32 %v2012, %v2528
        %v2655 = vadd.f32 %v2013, %v2531
        %v2656 = vadd.f32 %v2014, %v2536
        %v2657 = vadd.f32 %v2015, %v2539
        %v2658 = vadd.f32 %v2016, %v2544
        %v2659 = vadd.f32 %v2017, %v2547
        %v2660 = vadd.f32 %v2018, %v2552
        %v2661 = vadd.f32 %v2019, %v2555
        %v2662 = vadd.f32 %v2020, %v2560
        %v2663 = vadd.f32 %v2021, %v2563
        %v2664 = vadd.f32 %v2022, %v2568
        %v2665 = vadd.f32 %v2023, %v2571
        %v2666 = vadd.f32 %v2024, %v2576
        %v2667 = vadd.f32 %v2025, %v2579
        %v2668 = vadd.f32 %v2026, %v2584
        %v2669 = vadd.f32 %v2027, %v2587
        %v2670 = vld [vmem:[%s4] sm:$0x1]
        %v2672 = vlaneseq
        %v2673 = vshrl.u32 %v2672, 7
        %v2674 = vsub.s32 0, %v2673
        %v2675 = vrot.slane %v2670, %v2674
        %v2677 = vmul.f32 %v2590, %v2675
        %v2678 = vmul.f32 %v2591, %v2675
        %v2679 = vmul.f32 %v2592, %v2675
        %v2680 = vmul.f32 %v2593, %v2675
        %v2681 = vmul.f32 %v2594, %v2675
        %v2682 = vmul.f32 %v2595, %v2675
        %v2683 = vmul.f32 %v2596, %v2675
        %v2684 = vmul.f32 %v2597, %v2675
        %v2685 = vmul.f32 %v2598, %v2675
        %v2686 = vmul.f32 %v2599, %v2675
        %v2687 = vmul.f32 %v2600, %v2675
        %v2688 = vmul.f32 %v2601, %v2675
        %v2689 = vmul.f32 %v2602, %v2675
        %v2690 = vmul.f32 %v2603, %v2675
        %v2691 = vmul.f32 %v2604, %v2675
        %v2692 = vmul.f32 %v2605, %v2675
        %v2693 = vmul.f32 %v2606, %v2675
        %v2694 = vmul.f32 %v2607, %v2675
        %v2695 = vmul.f32 %v2608, %v2675
        %v2696 = vmul.f32 %v2609, %v2675
        %v2697 = vmul.f32 %v2610, %v2675
        %v2698 = vmul.f32 %v2611, %v2675
        %v2699 = vmul.f32 %v2612, %v2675
        %v2700 = vmul.f32 %v2613, %v2675
        %v2701 = vmul.f32 %v2614, %v2675
        %v2702 = vmul.f32 %v2615, %v2675
        %v2703 = vmul.f32 %v2616, %v2675
        %v2704 = vmul.f32 %v2617, %v2675
        %v2705 = vmul.f32 %v2618, %v2675
        %v2706 = vmul.f32 %v2619, %v2675
        %v2707 = vmul.f32 %v2620, %v2675
        %v2708 = vmul.f32 %v2621, %v2675
        %v2709 = vmul.f32 %v2622, %v2675
        %v2710 = vmul.f32 %v2623, %v2675
        %v2711 = vmul.f32 %v2624, %v2675
        %v2712 = vmul.f32 %v2625, %v2675
        %v2713 = vmul.f32 %v2626, %v2675
        %v2714 = vmul.f32 %v2627, %v2675
        %v2715 = vmul.f32 %v2628, %v2675
        %v2716 = vmul.f32 %v2629, %v2675
        %v2717 = vmul.f32 %v2630, %v2675
        %v2718 = vmul.f32 %v2631, %v2675
        %v2719 = vmul.f32 %v2632, %v2675
        %v2720 = vmul.f32 %v2633, %v2675
        %v2721 = vmul.f32 %v2634, %v2675
        %v2722 = vmul.f32 %v2635, %v2675
        %v2723 = vmul.f32 %v2636, %v2675
        %v2724 = vmul.f32 %v2637, %v2675
        %v2725 = vmul.f32 %v2638, %v2675
        %v2726 = vmul.f32 %v2639, %v2675
        %v2727 = vmul.f32 %v2640, %v2675
        %v2728 = vmul.f32 %v2641, %v2675
        %v2729 = vmul.f32 %v2642, %v2675
        %v2730 = vmul.f32 %v2643, %v2675
        %v2731 = vmul.f32 %v2644, %v2675
        %v2732 = vmul.f32 %v2645, %v2675
        %v2733 = vmul.f32 %v2646, %v2675
        %v2734 = vmul.f32 %v2647, %v2675
        %v2735 = vmul.f32 %v2648, %v2675
        %v2736 = vmul.f32 %v2649, %v2675
        %v2737 = vmul.f32 %v2650, %v2675
        %v2738 = vmul.f32 %v2651, %v2675
        %v2739 = vmul.f32 %v2652, %v2675
        %v2740 = vmul.f32 %v2653, %v2675
        %v2741 = vmul.f32 %v2654, %v2675
        %v2742 = vmul.f32 %v2655, %v2675
        %v2743 = vmul.f32 %v2656, %v2675
        %v2744 = vmul.f32 %v2657, %v2675
        %v2745 = vmul.f32 %v2658, %v2675
        %v2746 = vmul.f32 %v2659, %v2675
        %v2747 = vmul.f32 %v2660, %v2675
        %v2748 = vmul.f32 %v2661, %v2675
        %v2749 = vmul.f32 %v2662, %v2675
        %v2750 = vmul.f32 %v2663, %v2675
        %v2751 = vmul.f32 %v2664, %v2675
        %v2752 = vmul.f32 %v2665, %v2675
        %v2753 = vmul.f32 %v2666, %v2675
        %v2754 = vmul.f32 %v2667, %v2675
        %v2755 = vmul.f32 %v2668, %v2675
        %v2756 = vmul.f32 %v2669, %v2675
        %v2757 = vld [vmem:[%s5] sm:$0x1]
        %v2759 = vlaneseq
        %v2760 = vshrl.u32 %v2759, 7
        %v2761 = vsub.s32 0, %v2760
        %v2762 = vrot.slane %v2757, %v2761
        %v2764 = vadd.f32 %v2677, %v2762
        %v2765 = vadd.f32 %v2678, %v2762
        %v2766 = vadd.f32 %v2679, %v2762
        %v2767 = vadd.f32 %v2680, %v2762
        %v2768 = vadd.f32 %v2681, %v2762
        %v2769 = vadd.f32 %v2682, %v2762
        %v2770 = vadd.f32 %v2683, %v2762
        %v2771 = vadd.f32 %v2684, %v2762
        %v2772 = vadd.f32 %v2685, %v2762
        %v2773 = vadd.f32 %v2686, %v2762
        %v2774 = vadd.f32 %v2687, %v2762
        %v2775 = vadd.f32 %v2688, %v2762
        %v2776 = vadd.f32 %v2689, %v2762
        %v2777 = vadd.f32 %v2690, %v2762
        %v2778 = vadd.f32 %v2691, %v2762
        %v2779 = vadd.f32 %v2692, %v2762
        %v2780 = vadd.f32 %v2693, %v2762
        %v2781 = vadd.f32 %v2694, %v2762
        %v2782 = vadd.f32 %v2695, %v2762
        %v2783 = vadd.f32 %v2696, %v2762
        %v2784 = vadd.f32 %v2697, %v2762
        %v2785 = vadd.f32 %v2698, %v2762
        %v2786 = vadd.f32 %v2699, %v2762
        %v2787 = vadd.f32 %v2700, %v2762
        %v2788 = vadd.f32 %v2701, %v2762
        %v2789 = vadd.f32 %v2702, %v2762
        %v2790 = vadd.f32 %v2703, %v2762
        %v2791 = vadd.f32 %v2704, %v2762
        %v2792 = vadd.f32 %v2705, %v2762
        %v2793 = vadd.f32 %v2706, %v2762
        %v2794 = vadd.f32 %v2707, %v2762
        %v2795 = vadd.f32 %v2708, %v2762
        %v2796 = vadd.f32 %v2709, %v2762
        %v2797 = vadd.f32 %v2710, %v2762
        %v2798 = vadd.f32 %v2711, %v2762
        %v2799 = vadd.f32 %v2712, %v2762
        %v2800 = vadd.f32 %v2713, %v2762
        %v2801 = vadd.f32 %v2714, %v2762
        %v2802 = vadd.f32 %v2715, %v2762
        %v2803 = vadd.f32 %v2716, %v2762
        %v2804 = vadd.f32 %v2717, %v2762
        %v2805 = vadd.f32 %v2718, %v2762
        %v2806 = vadd.f32 %v2719, %v2762
        %v2807 = vadd.f32 %v2720, %v2762
        %v2808 = vadd.f32 %v2721, %v2762
        %v2809 = vadd.f32 %v2722, %v2762
        %v2810 = vadd.f32 %v2723, %v2762
        %v2811 = vadd.f32 %v2724, %v2762
        %v2812 = vadd.f32 %v2725, %v2762
        %v2813 = vadd.f32 %v2726, %v2762
        %v2814 = vadd.f32 %v2727, %v2762
        %v2815 = vadd.f32 %v2728, %v2762
        %v2816 = vadd.f32 %v2729, %v2762
        %v2817 = vadd.f32 %v2730, %v2762
        %v2818 = vadd.f32 %v2731, %v2762
        %v2819 = vadd.f32 %v2732, %v2762
        %v2820 = vadd.f32 %v2733, %v2762
        %v2821 = vadd.f32 %v2734, %v2762
        %v2822 = vadd.f32 %v2735, %v2762
        %v2823 = vadd.f32 %v2736, %v2762
        %v2824 = vadd.f32 %v2737, %v2762
        %v2825 = vadd.f32 %v2738, %v2762
        %v2826 = vadd.f32 %v2739, %v2762
        %v2827 = vadd.f32 %v2740, %v2762
        %v2828 = vadd.f32 %v2741, %v2762
        %v2829 = vadd.f32 %v2742, %v2762
        %v2830 = vadd.f32 %v2743, %v2762
        %v2831 = vadd.f32 %v2744, %v2762
        %v2832 = vadd.f32 %v2745, %v2762
        %v2833 = vadd.f32 %v2746, %v2762
        %v2834 = vadd.f32 %v2747, %v2762
        %v2835 = vadd.f32 %v2748, %v2762
        %v2836 = vadd.f32 %v2749, %v2762
        %v2837 = vadd.f32 %v2750, %v2762
        %v2838 = vadd.f32 %v2751, %v2762
        %v2839 = vadd.f32 %v2752, %v2762
        %v2840 = vadd.f32 %v2753, %v2762
        %v2841 = vadd.f32 %v2754, %v2762
        %v2842 = vadd.f32 %v2755, %v2762
        %v2843 = vadd.f32 %v2756, %v2762
        %v2844 = vmax.f32 %v2764, 0.0
        %v2845 = vmax.f32 %v2765, 0.0
        %v2846 = vmax.f32 %v2766, 0.0
        %v2847 = vmax.f32 %v2767, 0.0
        %v2848 = vmax.f32 %v2768, 0.0
        %v2849 = vmax.f32 %v2769, 0.0
        %v2850 = vmax.f32 %v2770, 0.0
        %v2851 = vmax.f32 %v2771, 0.0
        %v2852 = vmax.f32 %v2772, 0.0
        %v2853 = vmax.f32 %v2773, 0.0
        %v2854 = vmax.f32 %v2774, 0.0
        %v2855 = vmax.f32 %v2775, 0.0
        %v2856 = vmax.f32 %v2776, 0.0
        %v2857 = vmax.f32 %v2777, 0.0
        %v2858 = vmax.f32 %v2778, 0.0
        %v2859 = vmax.f32 %v2779, 0.0
        %v2860 = vmax.f32 %v2780, 0.0
        %v2861 = vmax.f32 %v2781, 0.0
        %v2862 = vmax.f32 %v2782, 0.0
        %v2863 = vmax.f32 %v2783, 0.0
        %v2864 = vmax.f32 %v2784, 0.0
        %v2865 = vmax.f32 %v2785, 0.0
        %v2866 = vmax.f32 %v2786, 0.0
        %v2867 = vmax.f32 %v2787, 0.0
        %v2868 = vmax.f32 %v2788, 0.0
        %v2869 = vmax.f32 %v2789, 0.0
        %v2870 = vmax.f32 %v2790, 0.0
        %v2871 = vmax.f32 %v2791, 0.0
        %v2872 = vmax.f32 %v2792, 0.0
        %v2873 = vmax.f32 %v2793, 0.0
        %v2874 = vmax.f32 %v2794, 0.0
        %v2875 = vmax.f32 %v2795, 0.0
        %v2876 = vmax.f32 %v2796, 0.0
        %v2877 = vmax.f32 %v2797, 0.0
        %v2878 = vmax.f32 %v2798, 0.0
        %v2879 = vmax.f32 %v2799, 0.0
        %v2880 = vmax.f32 %v2800, 0.0
        %v2881 = vmax.f32 %v2801, 0.0
        %v2882 = vmax.f32 %v2802, 0.0
        %v2883 = vmax.f32 %v2803, 0.0
        %v2884 = vmax.f32 %v2804, 0.0
        %v2885 = vmax.f32 %v2805, 0.0
        %v2886 = vmax.f32 %v2806, 0.0
        %v2887 = vmax.f32 %v2807, 0.0
        %v2888 = vmax.f32 %v2808, 0.0
        %v2889 = vmax.f32 %v2809, 0.0
        %v2890 = vmax.f32 %v2810, 0.0
        %v2891 = vmax.f32 %v2811, 0.0
        %v2892 = vmax.f32 %v2812, 0.0
        %v2893 = vmax.f32 %v2813, 0.0
        %v2894 = vmax.f32 %v2814, 0.0
        %v2895 = vmax.f32 %v2815, 0.0
        %v2896 = vmax.f32 %v2816, 0.0
        %v2897 = vmax.f32 %v2817, 0.0
        %v2898 = vmax.f32 %v2818, 0.0
        %v2899 = vmax.f32 %v2819, 0.0
        %v2900 = vmax.f32 %v2820, 0.0
        %v2901 = vmax.f32 %v2821, 0.0
        %v2902 = vmax.f32 %v2822, 0.0
        %v2903 = vmax.f32 %v2823, 0.0
        %v2904 = vmax.f32 %v2824, 0.0
        %v2905 = vmax.f32 %v2825, 0.0
        %v2906 = vmax.f32 %v2826, 0.0
        %v2907 = vmax.f32 %v2827, 0.0
        %v2908 = vmax.f32 %v2828, 0.0
        %v2909 = vmax.f32 %v2829, 0.0
        %v2910 = vmax.f32 %v2830, 0.0
        %v2911 = vmax.f32 %v2831, 0.0
        %v2912 = vmax.f32 %v2832, 0.0
        %v2913 = vmax.f32 %v2833, 0.0
        %v2914 = vmax.f32 %v2834, 0.0
        %v2915 = vmax.f32 %v2835, 0.0
        %v2916 = vmax.f32 %v2836, 0.0
        %v2917 = vmax.f32 %v2837, 0.0
        %v2918 = vmax.f32 %v2838, 0.0
        %v2919 = vmax.f32 %v2839, 0.0
        %v2920 = vmax.f32 %v2840, 0.0
        %v2921 = vmax.f32 %v2841, 0.0
        %v2922 = vmax.f32 %v2842, 0.0
        %v2923 = vmax.f32 %v2843, 0.0
        %p2924 = scmp.gt.s32.totalorder %s38, 0
        %s2925 = scalar_select %p2924, 1, 0
        %v2926 = vstv %s2925
        %vm2927 = vcmp.eq.s32.totalorder %v2926, 1
        %v2928 = vsel %vm2927, %v2844, 0.0
        %v2929 = vsel %vm2927, %v2845, 0.0
        %v2930 = vsel %vm2927, %v2864, 0.0
        %v2931 = vsel %vm2927, %v2865, 0.0
        %v2932 = vsel %vm2927, %v2884, 0.0
        %v2933 = vsel %vm2927, %v2885, 0.0
        %v2934 = vsel %vm2927, %v2904, 0.0
        %v2935 = vsel %vm2927, %v2905, 0.0
        %p2936 = scmp.lt.s32.totalorder %s38, 1
        %s2937 = scalar_select %p2936, 1, 0
        %v2938 = vstv %s2937
        %vm2939 = vcmp.eq.s32.totalorder %v2938, 1
        %v2940 = vsel %vm2939, %v2862, 0.0
        %v2941 = vsel %vm2939, %v2863, 0.0
        %v2942 = vsel %vm2939, %v2882, 0.0
        %v2943 = vsel %vm2939, %v2883, 0.0
        %v2944 = vsel %vm2939, %v2902, 0.0
        %v2945 = vsel %vm2939, %v2903, 0.0
        %v2946 = vsel %vm2939, %v2922, 0.0
        %v2947 = vsel %vm2939, %v2923, 0.0
        %v2948 = vlaneseq
        %v2949 = vshrl.u32 %v2948, 7
        %v2950 = vadd.s32 %v2949, 8
        %vm2951 = vcmp.eq.s32.totalorder %v2949, 0
        %vm2952 = vcmp.eq.s32.totalorder %v2950, 0
        %v2953 = vrot.slane %v2928, 7
        %v2954 = vrot.slane %v2846, 7
        %v2955 = vrot.slane %v2848, 7
        %v2956 = vrot.slane %v2850, 7
        %v2957 = vrot.slane %v2852, 7
        %v2958 = vrot.slane %v2854, 7
        %v2959 = vrot.slane %v2856, 7
        %v2960 = vrot.slane %v2858, 7
        %v2961 = vrot.slane %v2860, 7
        %v2962 = vrot.slane %v2940, 7
        %v2963 = vrot.slane %v2930, 7
        %v2964 = vrot.slane %v2866, 7
        %v2965 = vrot.slane %v2868, 7
        %v2966 = vrot.slane %v2870, 7
        %v2967 = vrot.slane %v2872, 7
        %v2968 = vrot.slane %v2874, 7
        %v2969 = vrot.slane %v2876, 7
        %v2970 = vrot.slane %v2878, 7
        %v2971 = vrot.slane %v2880, 7
        %v2972 = vrot.slane %v2942, 7
        %v2973 = vrot.slane %v2932, 7
        %v2974 = vrot.slane %v2886, 7
        %v2975 = vrot.slane %v2888, 7
        %v2976 = vrot.slane %v2890, 7
        %v2977 = vrot.slane %v2892, 7
        %v2978 = vrot.slane %v2894, 7
        %v2979 = vrot.slane %v2896, 7
        %v2980 = vrot.slane %v2898, 7
        %v2981 = vrot.slane %v2900, 7
        %v2982 = vrot.slane %v2944, 7
        %v2983 = vrot.slane %v2934, 7
        %v2984 = vrot.slane %v2906, 7
        %v2985 = vrot.slane %v2908, 7
        %v2986 = vrot.slane %v2910, 7
        %v2987 = vrot.slane %v2912, 7
        %v2988 = vrot.slane %v2914, 7
        %v2989 = vrot.slane %v2916, 7
        %v2990 = vrot.slane %v2918, 7
        %v2991 = vrot.slane %v2920, 7
        %v2992 = vrot.slane %v2946, 7
        %v2993 = vrot.slane %v2929, 7
        %v2994 = vrot.slane %v2847, 7
        %v2995 = vrot.slane %v2849, 7
        %v2996 = vrot.slane %v2851, 7
        %v2997 = vrot.slane %v2853, 7
        %v2998 = vrot.slane %v2855, 7
        %v2999 = vrot.slane %v2857, 7
        %v3000 = vrot.slane %v2859, 7
        %v3001 = vrot.slane %v2861, 7
        %v3002 = vrot.slane %v2941, 7
        %v3003 = vrot.slane %v2931, 7
        %v3004 = vrot.slane %v2867, 7
        %v3005 = vrot.slane %v2869, 7
        %v3006 = vrot.slane %v2871, 7
        %v3007 = vrot.slane %v2873, 7
        %v3008 = vrot.slane %v2875, 7
        %v3009 = vrot.slane %v2877, 7
        %v3010 = vrot.slane %v2879, 7
        %v3011 = vrot.slane %v2881, 7
        %v3012 = vrot.slane %v2943, 7
        %v3013 = vrot.slane %v2933, 7
        %v3014 = vrot.slane %v2887, 7
        %v3015 = vrot.slane %v2889, 7
        %v3016 = vrot.slane %v2891, 7
        %v3017 = vrot.slane %v2893, 7
        %v3018 = vrot.slane %v2895, 7
        %v3019 = vrot.slane %v2897, 7
        %v3020 = vrot.slane %v2899, 7
        %v3021 = vrot.slane %v2901, 7
        %v3022 = vrot.slane %v2945, 7
        %v3023 = vrot.slane %v2935, 7
        %v3024 = vrot.slane %v2907, 7
        %v3025 = vrot.slane %v2909, 7
        %v3026 = vrot.slane %v2911, 7
        %v3027 = vrot.slane %v2913, 7
        %v3028 = vrot.slane %v2915, 7
        %v3029 = vrot.slane %v2917, 7
        %v3030 = vrot.slane %v2919, 7
        %v3031 = vrot.slane %v2921, 7
        %v3032 = vrot.slane %v2947, 7
        %vm3033 = vcmp.lt.s32.totalorder %v2949, 1
        %v3034 = vsel %vm3033, %v2953, %v2993
        %v3035 = vsel %vm3033, %v2954, %v2994
        %v3036 = vsel %vm3033, %v2955, %v2995
        %v3037 = vsel %vm3033, %v2956, %v2996
        %v3038 = vsel %vm3033, %v2957, %v2997
        %v3039 = vsel %vm3033, %v2958, %v2998
        %v3040 = vsel %vm3033, %v2959, %v2999
        %v3041 = vsel %vm3033, %v2960, %v3000
        %v3042 = vsel %vm3033, %v2961, %v3001
        %v3043 = vsel %vm3033, %v2962, %v3002
        %v3044 = vsel %vm3033, %v2963, %v3003
        %v3045 = vsel %vm3033, %v2964, %v3004
        %v3046 = vsel %vm3033, %v2965, %v3005
        %v3047 = vsel %vm3033, %v2966, %v3006
        %v3048 = vsel %vm3033, %v2967, %v3007
        %v3049 = vsel %vm3033, %v2968, %v3008
        %v3050 = vsel %vm3033, %v2969, %v3009
        %v3051 = vsel %vm3033, %v2970, %v3010
        %v3052 = vsel %vm3033, %v2971, %v3011
        %v3053 = vsel %vm3033, %v2972, %v3012
        %v3054 = vsel %vm3033, %v2973, %v3013
        %v3055 = vsel %vm3033, %v2974, %v3014
        %v3056 = vsel %vm3033, %v2975, %v3015
        %v3057 = vsel %vm3033, %v2976, %v3016
        %v3058 = vsel %vm3033, %v2977, %v3017
        %v3059 = vsel %vm3033, %v2978, %v3018
        %v3060 = vsel %vm3033, %v2979, %v3019
        %v3061 = vsel %vm3033, %v2980, %v3020
        %v3062 = vsel %vm3033, %v2981, %v3021
        %v3063 = vsel %vm3033, %v2982, %v3022
        %v3064 = vsel %vm3033, %v2983, %v3023
        %v3065 = vsel %vm3033, %v2984, %v3024
        %v3066 = vsel %vm3033, %v2985, %v3025
        %v3067 = vsel %vm3033, %v2986, %v3026
        %v3068 = vsel %vm3033, %v2987, %v3027
        %v3069 = vsel %vm3033, %v2988, %v3028
        %v3070 = vsel %vm3033, %v2989, %v3029
        %v3071 = vsel %vm3033, %v2990, %v3030
        %v3072 = vsel %vm3033, %v2991, %v3031
        %v3073 = vsel %vm3033, %v2992, %v3032
        %v3074 = vsel %vm3033, %v2993, %v2953
        %v3075 = vsel %vm3033, %v2994, %v2954
        %v3076 = vsel %vm3033, %v2995, %v2955
        %v3077 = vsel %vm3033, %v2996, %v2956
        %v3078 = vsel %vm3033, %v2997, %v2957
        %v3079 = vsel %vm3033, %v2998, %v2958
        %v3080 = vsel %vm3033, %v2999, %v2959
        %v3081 = vsel %vm3033, %v3000, %v2960
        %v3082 = vsel %vm3033, %v3001, %v2961
        %v3083 = vsel %vm3033, %v3002, %v2962
        %v3084 = vsel %vm3033, %v3003, %v2963
        %v3085 = vsel %vm3033, %v3004, %v2964
        %v3086 = vsel %vm3033, %v3005, %v2965
        %v3087 = vsel %vm3033, %v3006, %v2966
        %v3088 = vsel %vm3033, %v3007, %v2967
        %v3089 = vsel %vm3033, %v3008, %v2968
        %v3090 = vsel %vm3033, %v3009, %v2969
        %v3091 = vsel %vm3033, %v3010, %v2970
        %v3092 = vsel %vm3033, %v3011, %v2971
        %v3093 = vsel %vm3033, %v3012, %v2972
        %v3094 = vsel %vm3033, %v3013, %v2973
        %v3095 = vsel %vm3033, %v3014, %v2974
        %v3096 = vsel %vm3033, %v3015, %v2975
        %v3097 = vsel %vm3033, %v3016, %v2976
        %v3098 = vsel %vm3033, %v3017, %v2977
        %v3099 = vsel %vm3033, %v3018, %v2978
        %v3100 = vsel %vm3033, %v3019, %v2979
        %v3101 = vsel %vm3033, %v3020, %v2980
        %v3102 = vsel %vm3033, %v3021, %v2981
        %v3103 = vsel %vm3033, %v3022, %v2982
        %v3104 = vsel %vm3033, %v3023, %v2983
        %v3105 = vsel %vm3033, %v3024, %v2984
        %v3106 = vsel %vm3033, %v3025, %v2985
        %v3107 = vsel %vm3033, %v3026, %v2986
        %v3108 = vsel %vm3033, %v3027, %v2987
        %v3109 = vsel %vm3033, %v3028, %v2988
        %v3110 = vsel %vm3033, %v3029, %v2989
        %v3111 = vsel %vm3033, %v3030, %v2990
        %v3112 = vsel %vm3033, %v3031, %v2991
        %v3113 = vsel %vm3033, %v3032, %v2992
        %v3114 = vsel %vm2951, 1, 0
        %v3115 = vsel %vm2952, 1, 0
        %vm3116 = vcmp.eq.s32.totalorder %v3114, 1
        %vm3117 = vcmp.eq.s32.totalorder %v3115, 1
        %v3118 = vsel %vm3116, 0.0, %v3074
        %v3119 = vsel %vm3117, 0.0, %v3034
        %v3120 = vsel %vm3116, 0.0, %v3075
        %v3121 = vsel %vm3117, 0.0, %v3035
        %v3122 = vsel %vm3116, 0.0, %v3076
        %v3123 = vsel %vm3117, 0.0, %v3036
        %v3124 = vsel %vm3116, 0.0, %v3077
        %v3125 = vsel %vm3117, 0.0, %v3037
        %v3126 = vsel %vm3116, 0.0, %v3078
        %v3127 = vsel %vm3117, 0.0, %v3038
        %v3128 = vsel %vm3116, 0.0, %v3079
        %v3129 = vsel %vm3117, 0.0, %v3039
        %v3130 = vsel %vm3116, 0.0, %v3080
        %v3131 = vsel %vm3117, 0.0, %v3040
        %v3132 = vsel %vm3116, 0.0, %v3081
        %v3133 = vsel %vm3117, 0.0, %v3041
        %v3134 = vsel %vm3116, 0.0, %v3082
        %v3135 = vsel %vm3117, 0.0, %v3042
        %v3136 = vsel %vm3116, 0.0, %v3083
        %v3137 = vsel %vm3117, 0.0, %v3043
        %v3138 = vsel %vm3116, 0.0, %v3084
        %v3139 = vsel %vm3117, 0.0, %v3044
        %v3140 = vsel %vm3116, 0.0, %v3085
        %v3141 = vsel %vm3117, 0.0, %v3045
        %v3142 = vsel %vm3116, 0.0, %v3086
        %v3143 = vsel %vm3117, 0.0, %v3046
        %v3144 = vsel %vm3116, 0.0, %v3087
        %v3145 = vsel %vm3117, 0.0, %v3047
        %v3146 = vsel %vm3116, 0.0, %v3088
        %v3147 = vsel %vm3117, 0.0, %v3048
        %v3148 = vsel %vm3116, 0.0, %v3089
        %v3149 = vsel %vm3117, 0.0, %v3049
        %v3150 = vsel %vm3116, 0.0, %v3090
        %v3151 = vsel %vm3117, 0.0, %v3050
        %v3152 = vsel %vm3116, 0.0, %v3091
        %v3153 = vsel %vm3117, 0.0, %v3051
        %v3154 = vsel %vm3116, 0.0, %v3092
        %v3155 = vsel %vm3117, 0.0, %v3052
        %v3156 = vsel %vm3116, 0.0, %v3093
        %v3157 = vsel %vm3117, 0.0, %v3053
        %v3158 = vsel %vm3116, 0.0, %v3094
        %v3159 = vsel %vm3117, 0.0, %v3054
        %v3160 = vsel %vm3116, 0.0, %v3095
        %v3161 = vsel %vm3117, 0.0, %v3055
        %v3162 = vsel %vm3116, 0.0, %v3096
        %v3163 = vsel %vm3117, 0.0, %v3056
        %v3164 = vsel %vm3116, 0.0, %v3097
        %v3165 = vsel %vm3117, 0.0, %v3057
        %v3166 = vsel %vm3116, 0.0, %v3098
        %v3167 = vsel %vm3117, 0.0, %v3058
        %v3168 = vsel %vm3116, 0.0, %v3099
        %v3169 = vsel %vm3117, 0.0, %v3059
        %v3170 = vsel %vm3116, 0.0, %v3100
        %v3171 = vsel %vm3117, 0.0, %v3060
        %v3172 = vsel %vm3116, 0.0, %v3101
        %v3173 = vsel %vm3117, 0.0, %v3061
        %v3174 = vsel %vm3116, 0.0, %v3102
        %v3175 = vsel %vm3117, 0.0, %v3062
        %v3176 = vsel %vm3116, 0.0, %v3103
        %v3177 = vsel %vm3117, 0.0, %v3063
        %v3178 = vsel %vm3116, 0.0, %v3104
        %v3179 = vsel %vm3117, 0.0, %v3064
        %v3180 = vsel %vm3116, 0.0, %v3105
        %v3181 = vsel %vm3117, 0.0, %v3065
        %v3182 = vsel %vm3116, 0.0, %v3106
        %v3183 = vsel %vm3117, 0.0, %v3066
        %v3184 = vsel %vm3116, 0.0, %v3107
        %v3185 = vsel %vm3117, 0.0, %v3067
        %v3186 = vsel %vm3116, 0.0, %v3108
        %v3187 = vsel %vm3117, 0.0, %v3068
        %v3188 = vsel %vm3116, 0.0, %v3109
        %v3189 = vsel %vm3117, 0.0, %v3069
        %v3190 = vsel %vm3116, 0.0, %v3110
        %v3191 = vsel %vm3117, 0.0, %v3070
        %v3192 = vsel %vm3116, 0.0, %v3111
        %v3193 = vsel %vm3117, 0.0, %v3071
        %v3194 = vsel %vm3116, 0.0, %v3112
        %v3195 = vsel %vm3117, 0.0, %v3072
        %v3196 = vsel %vm3116, 0.0, %v3113
        %v3197 = vsel %vm3117, 0.0, %v3073
        %vm3198 = vcmp.eq.s32.totalorder %v2949, 15
        %vm3199 = vcmp.eq.s32.totalorder %v2950, 15
        %v3200 = vrot.slane %v2928, 1
        %v3201 = vrot.slane %v2846, 1
        %v3202 = vrot.slane %v2848, 1
        %v3203 = vrot.slane %v2850, 1
        %v3204 = vrot.slane %v2852, 1
        %v3205 = vrot.slane %v2854, 1
        %v3206 = vrot.slane %v2856, 1
        %v3207 = vrot.slane %v2858, 1
        %v3208 = vrot.slane %v2860, 1
        %v3209 = vrot.slane %v2940, 1
        %v3210 = vrot.slane %v2930, 1
        %v3211 = vrot.slane %v2866, 1
        %v3212 = vrot.slane %v2868, 1
        %v3213 = vrot.slane %v2870, 1
        %v3214 = vrot.slane %v2872, 1
        %v3215 = vrot.slane %v2874, 1
        %v3216 = vrot.slane %v2876, 1
        %v3217 = vrot.slane %v2878, 1
        %v3218 = vrot.slane %v2880, 1
        %v3219 = vrot.slane %v2942, 1
        %v3220 = vrot.slane %v2932, 1
        %v3221 = vrot.slane %v2886, 1
        %v3222 = vrot.slane %v2888, 1
        %v3223 = vrot.slane %v2890, 1
        %v3224 = vrot.slane %v2892, 1
        %v3225 = vrot.slane %v2894, 1
        %v3226 = vrot.slane %v2896, 1
        %v3227 = vrot.slane %v2898, 1
        %v3228 = vrot.slane %v2900, 1
        %v3229 = vrot.slane %v2944, 1
        %v3230 = vrot.slane %v2934, 1
        %v3231 = vrot.slane %v2906, 1
        %v3232 = vrot.slane %v2908, 1
        %v3233 = vrot.slane %v2910, 1
        %v3234 = vrot.slane %v2912, 1
        %v3235 = vrot.slane %v2914, 1
        %v3236 = vrot.slane %v2916, 1
        %v3237 = vrot.slane %v2918, 1
        %v3238 = vrot.slane %v2920, 1
        %v3239 = vrot.slane %v2946, 1
        %v3240 = vrot.slane %v2929, 1
        %v3241 = vrot.slane %v2847, 1
        %v3242 = vrot.slane %v2849, 1
        %v3243 = vrot.slane %v2851, 1
        %v3244 = vrot.slane %v2853, 1
        %v3245 = vrot.slane %v2855, 1
        %v3246 = vrot.slane %v2857, 1
        %v3247 = vrot.slane %v2859, 1
        %v3248 = vrot.slane %v2861, 1
        %v3249 = vrot.slane %v2941, 1
        %v3250 = vrot.slane %v2931, 1
        %v3251 = vrot.slane %v2867, 1
        %v3252 = vrot.slane %v2869, 1
        %v3253 = vrot.slane %v2871, 1
        %v3254 = vrot.slane %v2873, 1
        %v3255 = vrot.slane %v2875, 1
        %v3256 = vrot.slane %v2877, 1
        %v3257 = vrot.slane %v2879, 1
        %v3258 = vrot.slane %v2881, 1
        %v3259 = vrot.slane %v2943, 1
        %v3260 = vrot.slane %v2933, 1
        %v3261 = vrot.slane %v2887, 1
        %v3262 = vrot.slane %v2889, 1
        %v3263 = vrot.slane %v2891, 1
        %v3264 = vrot.slane %v2893, 1
        %v3265 = vrot.slane %v2895, 1
        %v3266 = vrot.slane %v2897, 1
        %v3267 = vrot.slane %v2899, 1
        %v3268 = vrot.slane %v2901, 1
        %v3269 = vrot.slane %v2945, 1
        %v3270 = vrot.slane %v2935, 1
        %v3271 = vrot.slane %v2907, 1
        %v3272 = vrot.slane %v2909, 1
        %v3273 = vrot.slane %v2911, 1
        %v3274 = vrot.slane %v2913, 1
        %v3275 = vrot.slane %v2915, 1
        %v3276 = vrot.slane %v2917, 1
        %v3277 = vrot.slane %v2919, 1
        %v3278 = vrot.slane %v2921, 1
        %v3279 = vrot.slane %v2947, 1
        %vm3280 = vcmp.lt.s32.totalorder %v2949, 7
        %v3281 = vsel %vm3280, %v3200, %v3240
        %v3282 = vsel %vm3280, %v3201, %v3241
        %v3283 = vsel %vm3280, %v3202, %v3242
        %v3284 = vsel %vm3280, %v3203, %v3243
        %v3285 = vsel %vm3280, %v3204, %v3244
        %v3286 = vsel %vm3280, %v3205, %v3245
        %v3287 = vsel %vm3280, %v3206, %v3246
        %v3288 = vsel %vm3280, %v3207, %v3247
        %v3289 = vsel %vm3280, %v3208, %v3248
        %v3290 = vsel %vm3280, %v3209, %v3249
        %v3291 = vsel %vm3280, %v3210, %v3250
        %v3292 = vsel %vm3280, %v3211, %v3251
        %v3293 = vsel %vm3280, %v3212, %v3252
        %v3294 = vsel %vm3280, %v3213, %v3253
        %v3295 = vsel %vm3280, %v3214, %v3254
        %v3296 = vsel %vm3280, %v3215, %v3255
        %v3297 = vsel %vm3280, %v3216, %v3256
        %v3298 = vsel %vm3280, %v3217, %v3257
        %v3299 = vsel %vm3280, %v3218, %v3258
        %v3300 = vsel %vm3280, %v3219, %v3259
        %v3301 = vsel %vm3280, %v3220, %v3260
        %v3302 = vsel %vm3280, %v3221, %v3261
        %v3303 = vsel %vm3280, %v3222, %v3262
        %v3304 = vsel %vm3280, %v3223, %v3263
        %v3305 = vsel %vm3280, %v3224, %v3264
        %v3306 = vsel %vm3280, %v3225, %v3265
        %v3307 = vsel %vm3280, %v3226, %v3266
        %v3308 = vsel %vm3280, %v3227, %v3267
        %v3309 = vsel %vm3280, %v3228, %v3268
        %v3310 = vsel %vm3280, %v3229, %v3269
        %v3311 = vsel %vm3280, %v3230, %v3270
        %v3312 = vsel %vm3280, %v3231, %v3271
        %v3313 = vsel %vm3280, %v3232, %v3272
        %v3314 = vsel %vm3280, %v3233, %v3273
        %v3315 = vsel %vm3280, %v3234, %v3274
        %v3316 = vsel %vm3280, %v3235, %v3275
        %v3317 = vsel %vm3280, %v3236, %v3276
        %v3318 = vsel %vm3280, %v3237, %v3277
        %v3319 = vsel %vm3280, %v3238, %v3278
        %v3320 = vsel %vm3280, %v3239, %v3279
        %v3321 = vsel %vm3280, %v3240, %v3200
        %v3322 = vsel %vm3280, %v3241, %v3201
        %v3323 = vsel %vm3280, %v3242, %v3202
        %v3324 = vsel %vm3280, %v3243, %v3203
        %v3325 = vsel %vm3280, %v3244, %v3204
        %v3326 = vsel %vm3280, %v3245, %v3205
        %v3327 = vsel %vm3280, %v3246, %v3206
        %v3328 = vsel %vm3280, %v3247, %v3207
        %v3329 = vsel %vm3280, %v3248, %v3208
        %v3330 = vsel %vm3280, %v3249, %v3209
        %v3331 = vsel %vm3280, %v3250, %v3210
        %v3332 = vsel %vm3280, %v3251, %v3211
        %v3333 = vsel %vm3280, %v3252, %v3212
        %v3334 = vsel %vm3280, %v3253, %v3213
        %v3335 = vsel %vm3280, %v3254, %v3214
        %v3336 = vsel %vm3280, %v3255, %v3215
        %v3337 = vsel %vm3280, %v3256, %v3216
        %v3338 = vsel %vm3280, %v3257, %v3217
        %v3339 = vsel %vm3280, %v3258, %v3218
        %v3340 = vsel %vm3280, %v3259, %v3219
        %v3341 = vsel %vm3280, %v3260, %v3220
        %v3342 = vsel %vm3280, %v3261, %v3221
        %v3343 = vsel %vm3280, %v3262, %v3222
        %v3344 = vsel %vm3280, %v3263, %v3223
        %v3345 = vsel %vm3280, %v3264, %v3224
        %v3346 = vsel %vm3280, %v3265, %v3225
        %v3347 = vsel %vm3280, %v3266, %v3226
        %v3348 = vsel %vm3280, %v3267, %v3227
        %v3349 = vsel %vm3280, %v3268, %v3228
        %v3350 = vsel %vm3280, %v3269, %v3229
        %v3351 = vsel %vm3280, %v3270, %v3230
        %v3352 = vsel %vm3280, %v3271, %v3231
        %v3353 = vsel %vm3280, %v3272, %v3232
        %v3354 = vsel %vm3280, %v3273, %v3233
        %v3355 = vsel %vm3280, %v3274, %v3234
        %v3356 = vsel %vm3280, %v3275, %v3235
        %v3357 = vsel %vm3280, %v3276, %v3236
        %v3358 = vsel %vm3280, %v3277, %v3237
        %v3359 = vsel %vm3280, %v3278, %v3238
        %v3360 = vsel %vm3280, %v3279, %v3239
        %v3361 = vsel %vm3198, 1, 0
        %v3362 = vsel %vm3199, 1, 0
        %vm3363 = vcmp.eq.s32.totalorder %v3361, 1
        %vm3364 = vcmp.eq.s32.totalorder %v3362, 1
        %v3365 = vsel %vm3363, 0.0, %v3281
        %v3366 = vsel %vm3364, 0.0, %v3321
        %v3367 = vsel %vm3363, 0.0, %v3282
        %v3368 = vsel %vm3364, 0.0, %v3322
        %v3369 = vsel %vm3363, 0.0, %v3283
        %v3370 = vsel %vm3364, 0.0, %v3323
        %v3371 = vsel %vm3363, 0.0, %v3284
        %v3372 = vsel %vm3364, 0.0, %v3324
        %v3373 = vsel %vm3363, 0.0, %v3285
        %v3374 = vsel %vm3364, 0.0, %v3325
        %v3375 = vsel %vm3363, 0.0, %v3286
        %v3376 = vsel %vm3364, 0.0, %v3326
        %v3377 = vsel %vm3363, 0.0, %v3287
        %v3378 = vsel %vm3364, 0.0, %v3327
        %v3379 = vsel %vm3363, 0.0, %v3288
        %v3380 = vsel %vm3364, 0.0, %v3328
        %v3381 = vsel %vm3363, 0.0, %v3289
        %v3382 = vsel %vm3364, 0.0, %v3329
        %v3383 = vsel %vm3363, 0.0, %v3290
        %v3384 = vsel %vm3364, 0.0, %v3330
        %v3385 = vsel %vm3363, 0.0, %v3291
        %v3386 = vsel %vm3364, 0.0, %v3331
        %v3387 = vsel %vm3363, 0.0, %v3292
        %v3388 = vsel %vm3364, 0.0, %v3332
        %v3389 = vsel %vm3363, 0.0, %v3293
        %v3390 = vsel %vm3364, 0.0, %v3333
        %v3391 = vsel %vm3363, 0.0, %v3294
        %v3392 = vsel %vm3364, 0.0, %v3334
        %v3393 = vsel %vm3363, 0.0, %v3295
        %v3394 = vsel %vm3364, 0.0, %v3335
        %v3395 = vsel %vm3363, 0.0, %v3296
        %v3396 = vsel %vm3364, 0.0, %v3336
        %v3397 = vsel %vm3363, 0.0, %v3297
        %v3398 = vsel %vm3364, 0.0, %v3337
        %v3399 = vsel %vm3363, 0.0, %v3298
        %v3400 = vsel %vm3364, 0.0, %v3338
        %v3401 = vsel %vm3363, 0.0, %v3299
        %v3402 = vsel %vm3364, 0.0, %v3339
        %v3403 = vsel %vm3363, 0.0, %v3300
        %v3404 = vsel %vm3364, 0.0, %v3340
        %v3405 = vsel %vm3363, 0.0, %v3301
        %v3406 = vsel %vm3364, 0.0, %v3341
        %v3407 = vsel %vm3363, 0.0, %v3302
        %v3408 = vsel %vm3364, 0.0, %v3342
        %v3409 = vsel %vm3363, 0.0, %v3303
        %v3410 = vsel %vm3364, 0.0, %v3343
        %v3411 = vsel %vm3363, 0.0, %v3304
        %v3412 = vsel %vm3364, 0.0, %v3344
        %v3413 = vsel %vm3363, 0.0, %v3305
        %v3414 = vsel %vm3364, 0.0, %v3345
        %v3415 = vsel %vm3363, 0.0, %v3306
        %v3416 = vsel %vm3364, 0.0, %v3346
        %v3417 = vsel %vm3363, 0.0, %v3307
        %v3418 = vsel %vm3364, 0.0, %v3347
        %v3419 = vsel %vm3363, 0.0, %v3308
        %v3420 = vsel %vm3364, 0.0, %v3348
        %v3421 = vsel %vm3363, 0.0, %v3309
        %v3422 = vsel %vm3364, 0.0, %v3349
        %v3423 = vsel %vm3363, 0.0, %v3310
        %v3424 = vsel %vm3364, 0.0, %v3350
        %v3425 = vsel %vm3363, 0.0, %v3311
        %v3426 = vsel %vm3364, 0.0, %v3351
        %v3427 = vsel %vm3363, 0.0, %v3312
        %v3428 = vsel %vm3364, 0.0, %v3352
        %v3429 = vsel %vm3363, 0.0, %v3313
        %v3430 = vsel %vm3364, 0.0, %v3353
        %v3431 = vsel %vm3363, 0.0, %v3314
        %v3432 = vsel %vm3364, 0.0, %v3354
        %v3433 = vsel %vm3363, 0.0, %v3315
        %v3434 = vsel %vm3364, 0.0, %v3355
        %v3435 = vsel %vm3363, 0.0, %v3316
        %v3436 = vsel %vm3364, 0.0, %v3356
        %v3437 = vsel %vm3363, 0.0, %v3317
        %v3438 = vsel %vm3364, 0.0, %v3357
        %v3439 = vsel %vm3363, 0.0, %v3318
        %v3440 = vsel %vm3364, 0.0, %v3358
        %v3441 = vsel %vm3363, 0.0, %v3319
        %v3442 = vsel %vm3364, 0.0, %v3359
        %v3443 = vsel %vm3363, 0.0, %v3320
        %v3444 = vsel %vm3364, 0.0, %v3360
        %v3445 = vpack.c.bf16 %v3119, %v3118
        %v3446 = vpack.c.bf16 %v3121, %v3120
        %v3447 = vpack.c.bf16 %v3123, %v3122
        %v3448 = vpack.c.bf16 %v3125, %v3124
        %v3449 = vpack.c.bf16 %v3127, %v3126
        %v3450 = vpack.c.bf16 %v3129, %v3128
        %v3451 = vpack.c.bf16 %v3131, %v3130
        %v3452 = vpack.c.bf16 %v3133, %v3132
        %v3453 = vpack.c.bf16 %v3135, %v3134
        %v3454 = vpack.c.bf16 %v3137, %v3136
        %v3455 = vpack.c.bf16 %v3139, %v3138
        %v3456 = vpack.c.bf16 %v3141, %v3140
        %v3457 = vpack.c.bf16 %v3143, %v3142
        %v3458 = vpack.c.bf16 %v3145, %v3144
        %v3459 = vpack.c.bf16 %v3147, %v3146
        %v3460 = vpack.c.bf16 %v3149, %v3148
        %v3461 = vpack.c.bf16 %v3151, %v3150
        %v3462 = vpack.c.bf16 %v3153, %v3152
        %v3463 = vpack.c.bf16 %v3155, %v3154
        %v3464 = vpack.c.bf16 %v3157, %v3156
        %v3465 = vpack.c.bf16 %v3159, %v3158
        %v3466 = vpack.c.bf16 %v3161, %v3160
        %v3467 = vpack.c.bf16 %v3163, %v3162
        %v3468 = vpack.c.bf16 %v3165, %v3164
        %v3469 = vpack.c.bf16 %v3167, %v3166
        %v3470 = vpack.c.bf16 %v3169, %v3168
        %v3471 = vpack.c.bf16 %v3171, %v3170
        %v3472 = vpack.c.bf16 %v3173, %v3172
        %v3473 = vpack.c.bf16 %v3175, %v3174
        %v3474 = vpack.c.bf16 %v3177, %v3176
        %v3475 = vpack.c.bf16 %v3179, %v3178
        %v3476 = vpack.c.bf16 %v3181, %v3180
        %v3477 = vpack.c.bf16 %v3183, %v3182
        %v3478 = vpack.c.bf16 %v3185, %v3184
        %v3479 = vpack.c.bf16 %v3187, %v3186
        %v3480 = vpack.c.bf16 %v3189, %v3188
        %v3481 = vpack.c.bf16 %v3191, %v3190
        %v3482 = vpack.c.bf16 %v3193, %v3192
        %v3483 = vpack.c.bf16 %v3195, %v3194
        %v3484 = vpack.c.bf16 %v3197, %v3196
        %v3485 = vpack.c.bf16 %v2929, %v2928
        %v3486 = vpack.c.bf16 %v2847, %v2846
        %v3487 = vpack.c.bf16 %v2849, %v2848
        %v3488 = vpack.c.bf16 %v2851, %v2850
        %v3489 = vpack.c.bf16 %v2853, %v2852
        %v3490 = vpack.c.bf16 %v2855, %v2854
        %v3491 = vpack.c.bf16 %v2857, %v2856
        %v3492 = vpack.c.bf16 %v2859, %v2858
        %v3493 = vpack.c.bf16 %v2861, %v2860
        %v3494 = vpack.c.bf16 %v2941, %v2940
        %v3495 = vpack.c.bf16 %v2931, %v2930
        %v3496 = vpack.c.bf16 %v2867, %v2866
        %v3497 = vpack.c.bf16 %v2869, %v2868
        %v3498 = vpack.c.bf16 %v2871, %v2870
        %v3499 = vpack.c.bf16 %v2873, %v2872
        %v3500 = vpack.c.bf16 %v2875, %v2874
        %v3501 = vpack.c.bf16 %v2877, %v2876
        %v3502 = vpack.c.bf16 %v2879, %v2878
        %v3503 = vpack.c.bf16 %v2881, %v2880
        %v3504 = vpack.c.bf16 %v2943, %v2942
        %v3505 = vpack.c.bf16 %v2933, %v2932
        %v3506 = vpack.c.bf16 %v2887, %v2886
        %v3507 = vpack.c.bf16 %v2889, %v2888
        %v3508 = vpack.c.bf16 %v2891, %v2890
        %v3509 = vpack.c.bf16 %v2893, %v2892
        %v3510 = vpack.c.bf16 %v2895, %v2894
        %v3511 = vpack.c.bf16 %v2897, %v2896
        %v3512 = vpack.c.bf16 %v2899, %v2898
        %v3513 = vpack.c.bf16 %v2901, %v2900
        %v3514 = vpack.c.bf16 %v2945, %v2944
        %v3515 = vpack.c.bf16 %v2935, %v2934
        %v3516 = vpack.c.bf16 %v2907, %v2906
        %v3517 = vpack.c.bf16 %v2909, %v2908
        %v3518 = vpack.c.bf16 %v2911, %v2910
        %v3519 = vpack.c.bf16 %v2913, %v2912
        %v3520 = vpack.c.bf16 %v2915, %v2914
        %v3521 = vpack.c.bf16 %v2917, %v2916
        %v3522 = vpack.c.bf16 %v2919, %v2918
        %v3523 = vpack.c.bf16 %v2921, %v2920
        %v3524 = vpack.c.bf16 %v2947, %v2946
        %v3525 = vpack.c.bf16 %v3366, %v3365
        %v3526 = vpack.c.bf16 %v3368, %v3367
        %v3527 = vpack.c.bf16 %v3370, %v3369
        %v3528 = vpack.c.bf16 %v3372, %v3371
        %v3529 = vpack.c.bf16 %v3374, %v3373
        %v3530 = vpack.c.bf16 %v3376, %v3375
        %v3531 = vpack.c.bf16 %v3378, %v3377
        %v3532 = vpack.c.bf16 %v3380, %v3379
        %v3533 = vpack.c.bf16 %v3382, %v3381
        %v3534 = vpack.c.bf16 %v3384, %v3383
        %v3535 = vpack.c.bf16 %v3386, %v3385
        %v3536 = vpack.c.bf16 %v3388, %v3387
        %v3537 = vpack.c.bf16 %v3390, %v3389
        %v3538 = vpack.c.bf16 %v3392, %v3391
        %v3539 = vpack.c.bf16 %v3394, %v3393
        %v3540 = vpack.c.bf16 %v3396, %v3395
        %v3541 = vpack.c.bf16 %v3398, %v3397
        %v3542 = vpack.c.bf16 %v3400, %v3399
        %v3543 = vpack.c.bf16 %v3402, %v3401
        %v3544 = vpack.c.bf16 %v3404, %v3403
        %v3545 = vpack.c.bf16 %v3406, %v3405
        %v3546 = vpack.c.bf16 %v3408, %v3407
        %v3547 = vpack.c.bf16 %v3410, %v3409
        %v3548 = vpack.c.bf16 %v3412, %v3411
        %v3549 = vpack.c.bf16 %v3414, %v3413
        %v3550 = vpack.c.bf16 %v3416, %v3415
        %v3551 = vpack.c.bf16 %v3418, %v3417
        %v3552 = vpack.c.bf16 %v3420, %v3419
        %v3553 = vpack.c.bf16 %v3422, %v3421
        %v3554 = vpack.c.bf16 %v3424, %v3423
        %v3555 = vpack.c.bf16 %v3426, %v3425
        %v3556 = vpack.c.bf16 %v3428, %v3427
        %v3557 = vpack.c.bf16 %v3430, %v3429
        %v3558 = vpack.c.bf16 %v3432, %v3431
        %v3559 = vpack.c.bf16 %v3434, %v3433
        %v3560 = vpack.c.bf16 %v3436, %v3435
        %v3561 = vpack.c.bf16 %v3438, %v3437
        %v3562 = vpack.c.bf16 %v3440, %v3439
        %v3563 = vpack.c.bf16 %v3442, %v3441
        %v3564 = vpack.c.bf16 %v3444, %v3443
        %v3565 = vld [vmem:[#allocation8] sm:$0xf]
        %v3566 = vld [vmem:[#allocation8 + $0x4] sm:$0xf]
        %v3567 = vld [vmem:[#allocation8 + $0x8] sm:$0xf]
        %v3568 = vld [vmem:[#allocation8 + $0xc] sm:$0xf]
        %v3569 = vld [vmem:[#allocation8 + $0x10] sm:$0xf]
        %v3570 = vld [vmem:[#allocation8 + $0x14] sm:$0xf]
        %v3571 = vld [vmem:[#allocation8 + $0x18] sm:$0xf]
        %v3572 = vld [vmem:[#allocation8 + $0x1c] sm:$0xf]
        %v3573 = vld [vmem:[#allocation8 + $0x20] sm:$0xf]
        %v3574 = vld [vmem:[#allocation8 + $0x24] sm:$0xf]
        %v3575 = vld [vmem:[#allocation8 + $0x28] sm:$0xf]
        %v3576 = vld [vmem:[#allocation8 + $0x2c] sm:$0xf]
        %v3577 = vld [vmem:[#allocation8 + $0x30] sm:$0xf]
        %v3578 = vld [vmem:[#allocation8 + $0x34] sm:$0xf]
        %v3579 = vld [vmem:[#allocation8 + $0x38] sm:$0xf]
        %v3580 = vld [vmem:[#allocation8 + $0x3c] sm:$0xf]
        %v3581 = vld [vmem:[#allocation8 + $0x40] sm:$0xf]
        %v3582 = vld [vmem:[#allocation8 + $0x44] sm:$0xf]
        %v3583 = vld [vmem:[#allocation8 + $0x48] sm:$0xf]
        %v3584 = vld [vmem:[#allocation8 + $0x4c] sm:$0xf]
        %v3585 = vld [vmem:[#allocation8 + $0x50] sm:$0xf]
        %v3586 = vld [vmem:[#allocation8 + $0x54] sm:$0xf]
        %v3587 = vld [vmem:[#allocation8 + $0x58] sm:$0xf]
        %v3588 = vld [vmem:[#allocation8 + $0x5c] sm:$0xf]
        %v3589 = vld [vmem:[#allocation8 + $0x60] sm:$0xf]
        %v3590 = vld [vmem:[#allocation8 + $0x64] sm:$0xf]
        %v3591 = vld [vmem:[#allocation8 + $0x68] sm:$0xf]
        %v3592 = vld [vmem:[#allocation8 + $0x6c] sm:$0xf]
        %v3593 = vld [vmem:[#allocation8 + $0x70] sm:$0xf]
        %v3594 = vld [vmem:[#allocation8 + $0x74] sm:$0xf]
        %v3595 = vld [vmem:[#allocation8 + $0x78] sm:$0xf]
        %v3596 = vld [vmem:[#allocation8 + $0x7c] sm:$0xf]
        %v3597 = vld [vmem:[#allocation8 + $0x80] sm:$0xf]
        %v3598 = vld [vmem:[#allocation8 + $0x84] sm:$0xf]
        %v3599 = vld [vmem:[#allocation8 + $0x88] sm:$0xf]
        %v3600 = vld [vmem:[#allocation8 + $0x8c] sm:$0xf]
        %v3601 = vld [vmem:[#allocation8 + $0x90] sm:$0xf]
        %v3602 = vld [vmem:[#allocation8 + $0x94] sm:$0xf]
        %v3603 = vld [vmem:[#allocation8 + $0x98] sm:$0xf]
        %v3604 = vld [vmem:[#allocation8 + $0x9c] sm:$0xf]
        %v3605 = vld [vmem:[#allocation8 + $0xa0] sm:$0xf]
        %v3606 = vld [vmem:[#allocation8 + $0xa4] sm:$0xf]
        %v3607 = vld [vmem:[#allocation8 + $0xa8] sm:$0xf]
        %v3608 = vld [vmem:[#allocation8 + $0xac] sm:$0xf]
        %v3609 = vld [vmem:[#allocation8 + $0xb0] sm:$0xf]
        %v3610 = vld [vmem:[#allocation8 + $0xb4] sm:$0xf]
        %v3611 = vld [vmem:[#allocation8 + $0xb8] sm:$0xf]
        %v3612 = vld [vmem:[#allocation8 + $0xbc] sm:$0xf]
        %s3613 = scalar_lea.vmem [#allocation8], 192
        %v3614 = vld [vmem:[%s3613] sm:$0xf]
        %v3615 = vld [vmem:[%s3613 + $0x4] sm:$0xf]
        %v3616 = vld [vmem:[%s3613 + $0x8] sm:$0xf]
        %v3617 = vld [vmem:[%s3613 + $0xc] sm:$0xf]
        %v3618 = vld [vmem:[%s3613 + $0x10] sm:$0xf]
        %v3619 = vld [vmem:[%s3613 + $0x14] sm:$0xf]
        %v3620 = vld [vmem:[%s3613 + $0x18] sm:$0xf]
        %v3621 = vld [vmem:[%s3613 + $0x1c] sm:$0xf]
        %v3622 = vld [vmem:[%s3613 + $0x20] sm:$0xf]
        %v3623 = vld [vmem:[%s3613 + $0x24] sm:$0xf]
        %v3624 = vld [vmem:[%s3613 + $0x28] sm:$0xf]
        %v3625 = vld [vmem:[%s3613 + $0x2c] sm:$0xf]
        %v3626 = vld [vmem:[%s3613 + $0x30] sm:$0xf]
        %v3627 = vld [vmem:[%s3613 + $0x34] sm:$0xf]
        %v3628 = vld [vmem:[%s3613 + $0x38] sm:$0xf]
        %v3629 = vld [vmem:[%s3613 + $0x3c] sm:$0xf]
        %v3630 = vld [vmem:[%s3613 + $0x40] sm:$0xf]
        %v3631 = vld [vmem:[%s3613 + $0x44] sm:$0xf]
        %v3632 = vld [vmem:[%s3613 + $0x48] sm:$0xf]
        %v3633 = vld [vmem:[%s3613 + $0x4c] sm:$0xf]
        %v3634 = vld [vmem:[%s3613 + $0x50] sm:$0xf]
        %v3635 = vld [vmem:[%s3613 + $0x54] sm:$0xf]
        %v3636 = vld [vmem:[%s3613 + $0x58] sm:$0xf]
        %v3637 = vld [vmem:[%s3613 + $0x5c] sm:$0xf]
        %v3638 = vld [vmem:[%s3613 + $0x60] sm:$0xf]
        %v3639 = vld [vmem:[%s3613 + $0x64] sm:$0xf]
        %v3640 = vld [vmem:[%s3613 + $0x68] sm:$0xf]
        %v3641 = vld [vmem:[%s3613 + $0x6c] sm:$0xf]
        %v3642 = vld [vmem:[%s3613 + $0x70] sm:$0xf]
        %v3643 = vld [vmem:[%s3613 + $0x74] sm:$0xf]
        %v3644 = vld [vmem:[%s3613 + $0x78] sm:$0xf]
        %v3645 = vld [vmem:[%s3613 + $0x7c] sm:$0xf]
        %v3646 = vld [vmem:[%s3613 + $0x80] sm:$0xf]
        %v3647 = vld [vmem:[%s3613 + $0x84] sm:$0xf]
        %v3648 = vld [vmem:[%s3613 + $0x88] sm:$0xf]
        %v3649 = vld [vmem:[%s3613 + $0x8c] sm:$0xf]
        %v3650 = vld [vmem:[%s3613 + $0x90] sm:$0xf]
        %v3651 = vld [vmem:[%s3613 + $0x94] sm:$0xf]
        %v3652 = vld [vmem:[%s3613 + $0x98] sm:$0xf]
        %v3653 = vld [vmem:[%s3613 + $0x9c] sm:$0xf]
        %v3654 = vld [vmem:[%s3613 + $0xa0] sm:$0xf]
        %v3655 = vld [vmem:[%s3613 + $0xa4] sm:$0xf]
        %v3656 = vld [vmem:[%s3613 + $0xa8] sm:$0xf]
        %v3657 = vld [vmem:[%s3613 + $0xac] sm:$0xf]
        %v3658 = vld [vmem:[%s3613 + $0xb0] sm:$0xf]
        %v3659 = vld [vmem:[%s3613 + $0xb4] sm:$0xf]
        %v3660 = vld [vmem:[%s3613 + $0xb8] sm:$0xf]
        %v3661 = vld [vmem:[%s3613 + $0xbc] sm:$0xf]
        %v3710 = vunpack.c.l.b16 %v3614
        %v3711 = vunpack.c.l.b16 %v3615
        %v3712 = vunpack.c.l.b16 %v3616
        %v3713 = vunpack.c.l.b16 %v3617
        %v3714 = vunpack.c.l.b16 %v3618
        %v3715 = vunpack.c.l.b16 %v3619
        %v3716 = vunpack.c.l.b16 %v3620
        %v3717 = vunpack.c.l.b16 %v3621
        %v3718 = vunpack.c.l.b16 %v3622
        %v3719 = vunpack.c.l.b16 %v3623
        %v3720 = vunpack.c.l.b16 %v3624
        %v3721 = vunpack.c.l.b16 %v3625
        %v3722 = vunpack.c.l.b16 %v3626
        %v3723 = vunpack.c.l.b16 %v3627
        %v3724 = vunpack.c.l.b16 %v3628
        %v3725 = vunpack.c.l.b16 %v3629
        %v3726 = vunpack.c.l.b16 %v3630
        %v3727 = vunpack.c.l.b16 %v3631
        %v3728 = vunpack.c.l.b16 %v3632
        %v3729 = vunpack.c.l.b16 %v3633
        %v3730 = vunpack.c.l.b16 %v3634
        %v3731 = vunpack.c.l.b16 %v3635
        %v3732 = vunpack.c.l.b16 %v3636
        %v3733 = vunpack.c.l.b16 %v3637
        %v3734 = vunpack.c.l.b16 %v3638
        %v3735 = vunpack.c.l.b16 %v3639
        %v3736 = vunpack.c.l.b16 %v3640
        %v3737 = vunpack.c.l.b16 %v3641
        %v3738 = vunpack.c.l.b16 %v3642
        %v3739 = vunpack.c.l.b16 %v3643
        %v3740 = vunpack.c.l.b16 %v3644
        %v3741 = vunpack.c.l.b16 %v3645
        %v3742 = vunpack.c.l.b16 %v3646
        %v3743 = vunpack.c.l.b16 %v3647
        %v3744 = vunpack.c.l.b16 %v3648
        %v3745 = vunpack.c.l.b16 %v3649
        %v3746 = vunpack.c.l.b16 %v3650
        %v3747 = vunpack.c.l.b16 %v3651
        %v3748 = vunpack.c.l.b16 %v3652
        %v3749 = vunpack.c.l.b16 %v3653
        %v3750 = vunpack.c.l.b16 %v3654
        %v3751 = vunpack.c.l.b16 %v3655
        %v3752 = vunpack.c.l.b16 %v3656
        %v3753 = vunpack.c.l.b16 %v3657
        %v3754 = vunpack.c.l.b16 %v3658
        %v3755 = vunpack.c.l.b16 %v3659
        %v3756 = vunpack.c.l.b16 %v3660
        %v3757 = vunpack.c.l.b16 %v3661
        %v3758 = vpack.c.b16 %v3711, %v3710
        %v3759 = vpack.c.b16 %v3713, %v3712
        %v3760 = vpack.c.b16 %v3715, %v3714
        %v3761 = vpack.c.b16 %v3717, %v3716
        %v3762 = vpack.c.b16 %v3719, %v3718
        %v3763 = vpack.c.b16 %v3721, %v3720
        %v3764 = vpack.c.b16 %v3723, %v3722
        %v3765 = vpack.c.b16 %v3725, %v3724
        %v3766 = vpack.c.b16 %v3727, %v3726
        %v3767 = vpack.c.b16 %v3729, %v3728
        %v3768 = vpack.c.b16 %v3731, %v3730
        %v3769 = vpack.c.b16 %v3733, %v3732
        %v3770 = vpack.c.b16 %v3735, %v3734
        %v3771 = vpack.c.b16 %v3737, %v3736
        %v3772 = vpack.c.b16 %v3739, %v3738
        %v3773 = vpack.c.b16 %v3741, %v3740
        %v3774 = vpack.c.b16 %v3743, %v3742
        %v3775 = vpack.c.b16 %v3745, %v3744
        %v3776 = vpack.c.b16 %v3747, %v3746
        %v3777 = vpack.c.b16 %v3749, %v3748
        %v3778 = vpack.c.b16 %v3751, %v3750
        %v3779 = vpack.c.b16 %v3753, %v3752
        %v3780 = vpack.c.b16 %v3755, %v3754
        %v3781 = vpack.c.b16 %v3757, %v3756
        %3806 = vmatprep.subr.bf16.mxu0 0
        %3807 = vmatpush1.bf16.msra.mxu0 %v3758
        %3808 = vmatprep.subr.bf16.mxu0 0
        %3809 = vmatpush1.bf16.msra.mxu0 %v3759
        %3810 = vmatprep.subr.bf16.mxu0 0
        %3811 = vmatpush1.bf16.msra.mxu0 %v3760
        %3812 = vmatprep.subr.bf16.mxu0 0
        %3813 = vmatpush1.bf16.msra.mxu0 %v3761
        %3814 = vmatprep.subr.bf16.mxu0 0
        %3815 = vmatpush1.bf16.msra.mxu0 %v3762
        %3816 = vmatprep.subr.bf16.mxu0 0
        %3817 = vmatpush1.bf16.msra.mxu0 %v3763
        %3818 = vmatprep.subr.bf16.mxu0 0
        %3819 = vmatpush1.bf16.msra.mxu0 %v3764
        %3820 = vmatprep.subr.bf16.mxu0 0
        %3821 = vmatpush1.bf16.msra.mxu0 %v3765
        %3822 = vmatprep.subr.bf16.mxu0 0
        %3823 = vmatpush1.bf16.msra.mxu0 %v3766
        %3824 = vmatprep.subr.bf16.mxu0 0
        %3825 = vmatpush1.bf16.msra.mxu0 %v3767
        %3826 = vmatprep.subr.bf16.mxu0 0
        %3827 = vmatpush1.bf16.msra.mxu0 %v3768
        %3828 = vmatprep.subr.bf16.mxu0 0
        %3829 = vmatpush1.bf16.msra.mxu0 %v3769
        %3830 = vmatprep.subr.bf16.mxu0 0
        %3831 = vmatpush1.bf16.msra.mxu0 %v3770
        %3832 = vmatprep.subr.bf16.mxu0 0
        %3833 = vmatpush1.bf16.msra.mxu0 %v3771
        %3834 = vmatprep.subr.bf16.mxu0 0
        %3835 = vmatpush1.bf16.msra.mxu0 %v3772
        %3836 = vmatprep.subr.bf16.mxu0 0
        %3837 = vmatpush1.bf16.msra.mxu0 %v3773
        %3838 = vmatprep.mubr.bf16.mxu0 %v3486
        %3839 = vmatmul.mubr.bf16.gmra.mrb[0].mxu0 %v3446
        %v3840 = vpop.f32.mrb[0].mxu0
        %v3841 = vadd.f32 0.0, %v3840
        %v3842 = vpop.f32.mrb[0].mxu0
        %v3843 = vpop.f32.mrb[0].mxu0
        %v3844 = vadd.f32 0.0, %v3843
        %v3845 = vpop.f32.mrb[0].mxu0
        %3846 = vmatprep.mubr.bf16.mxu0 %v3487
        %3847 = vmatmul.mubr.bf16.gmra.mrb[0].mxu0 %v3447
        %v3848 = vpop.f32.mrb[0].mxu0
        %v3849 = vadd.f32 0.0, %v3848
        %v3850 = vpop.f32.mrb[0].mxu0
        %v3851 = vpop.f32.mrb[0].mxu0
        %v3852 = vadd.f32 0.0, %v3851
        %v3853 = vpop.f32.mrb[0].mxu0
        %3854 = vmatprep.mubr.bf16.mxu0 %v3488
        %3855 = vmatmul.mubr.bf16.gmra.mrb[0].mxu0 %v3448
        %v3856 = vpop.f32.mrb[0].mxu0
        %v3857 = vadd.f32 0.0, %v3856
        %v3858 = vpop.f32.mrb[0].mxu0
        %v3859 = vpop.f32.mrb[0].mxu0
        %v3860 = vadd.f32 0.0, %v3859
        %v3861 = vpop.f32.mrb[0].mxu0
        %3862 = vmatprep.mubr.bf16.mxu0 %v3489
        %3863 = vmatmul.mubr.bf16.gmra.mrb[0].mxu0 %v3449
        %v3864 = vpop.f32.mrb[0].mxu0
        %v3865 = vadd.f32 0.0, %v3864
        %v3866 = vpop.f32.mrb[0].mxu0
        %v3867 = vpop.f32.mrb[0].mxu0
        %v3868 = vadd.f32 0.0, %v3867
        %v3869 = vpop.f32.mrb[0].mxu0
        %3870 = vmatprep.mubr.bf16.mxu0 %v3490
        %3871 = vmatmul.mubr.bf16.gmra.mrb[0].mxu0 %v3450
        %v3872 = vpop.f32.mrb[0].mxu0
        %v3873 = vadd.f32 0.0, %v3872
        %v3874 = vpop.f32.mrb[0].mxu0
        %v3875 = vpop.f32.mrb[0].mxu0
        %v3876 = vadd.f32 0.0, %v3875
        %v3877 = vpop.f32.mrb[0].mxu0
        %3878 = vmatprep.mubr.bf16.mxu0 %v3491
        %3879 = vmatmul.mubr.bf16.gmra.mrb[0].mxu0 %v3451
        %v3880 = vpop.f32.mrb[0].mxu0
        %v3881 = vadd.f32 0.0, %v3880
        %v3882 = vpop.f32.mrb[0].mxu0
        %v3883 = vpop.f32.mrb[0].mxu0
        %v3884 = vadd.f32 0.0, %v3883
        %v3885 = vpop.f32.mrb[0].mxu0
        %3886 = vmatprep.mubr.bf16.mxu0 %v3492
        %3887 = vmatmul.mubr.bf16.gmra.mrb[0].mxu0 %v3452
        %v3888 = vpop.f32.mrb[0].mxu0
        %v3889 = vadd.f32 0.0, %v3888
        %v3890 = vpop.f32.mrb[0].mxu0
        %v3891 = vpop.f32.mrb[0].mxu0
        %v3892 = vadd.f32 0.0, %v3891
        %v3893 = vpop.f32.mrb[0].mxu0
        %3894 = vmatprep.mubr.bf16.mxu0 %v3493
        %3895 = vmatmul.mubr.bf16.gmra.mrb[0].mxu0 %v3453
        %v3896 = vpop.f32.mrb[0].mxu0
        %v3897 = vadd.f32 0.0, %v3896
        %v3898 = vpop.f32.mrb[0].mxu0
        %v3899 = vpop.f32.mrb[0].mxu0
        %v3900 = vadd.f32 0.0, %v3899
        %v3901 = vpop.f32.mrb[0].mxu0
        %3902 = vmatprep.mubr.bf16.mxu0 %v3496
        %3903 = vmatmul.mubr.bf16.gmra.mrb[0].mxu0 %v3456
        %v3904 = vpop.f32.mrb[0].mxu0
        %v3905 = vadd.f32 0.0, %v3904
        %v3906 = vpop.f32.mrb[0].mxu0
        %v3907 = vpop.f32.mrb[0].mxu0
        %v3908 = vadd.f32 0.0, %v3907
        %v3909 = vpop.f32.mrb[0].mxu0
        %3910 = vmatprep.mubr.bf16.mxu0 %v3497
        %3911 = vmatmul.mubr.bf16.gmra.mrb[0].mxu0 %v3457
        %v3912 = vpop.f32.mrb[0].mxu0
        %v3913 = vadd.f32 0.0, %v3912
        %v3914 = vpop.f32.mrb[0].mxu0
        %v3915 = vpop.f32.mrb[0].mxu0
        %v3916 = vadd.f32 0.0, %v3915
        %v3917 = vpop.f32.mrb[0].mxu0
        %3918 = vmatprep.mubr.bf16.mxu0 %v3498
        %3919 = vmatmul.mubr.bf16.gmra.mrb[0].mxu0 %v3458
        %v3920 = vpop.f32.mrb[0].mxu0
        %v3921 = vadd.f32 0.0, %v3920
        %v3922 = vpop.f32.mrb[0].mxu0
        %v3923 = vpop.f32.mrb[0].mxu0
        %v3924 = vadd.f32 0.0, %v3923
        %v3925 = vpop.f32.mrb[0].mxu0
        %3926 = vmatprep.mubr.bf16.mxu0 %v3499
        %3927 = vmatmul.mubr.bf16.gmra.mrb[0].mxu0 %v3459
        %v3928 = vpop.f32.mrb[0].mxu0
        %v3929 = vadd.f32 0.0, %v3928
        %v3930 = vpop.f32.mrb[0].mxu0
        %v3931 = vpop.f32.mrb[0].mxu0
        %v3932 = vadd.f32 0.0, %v3931
        %v3933 = vpop.f32.mrb[0].mxu0
        %3934 = vmatprep.mubr.bf16.mxu0 %v3500
        %3935 = vmatmul.mubr.bf16.gmra.mrb[0].mxu0 %v3460
        %v3936 = vpop.f32.mrb[0].mxu0
        %v3937 = vadd.f32 0.0, %v3936
        %v3938 = vpop.f32.mrb[0].mxu0
        %v3939 = vpop.f32.mrb[0].mxu0
        %v3940 = vadd.f32 0.0, %v3939
        %v3941 = vpop.f32.mrb[0].mxu0
        %3942 = vmatprep.mubr.bf16.mxu0 %v3501
        %3943 = vmatmul.mubr.bf16.gmra.mrb[0].mxu0 %v3461
        %v3944 = vpop.f32.mrb[0].mxu0
        %v3945 = vadd.f32 0.0, %v3944
        %v3946 = vpop.f32.mrb[0].mxu0
        %v3947 = vpop.f32.mrb[0].mxu0
        %v3948 = vadd.f32 0.0, %v3947
        %v3949 = vpop.f32.mrb[0].mxu0
        %3950 = vmatprep.mubr.bf16.mxu0 %v3502
        %3951 = vmatmul.mubr.bf16.gmra.mrb[0].mxu0 %v3462
        %v3952 = vpop.f32.mrb[0].mxu0
        %v3953 = vadd.f32 0.0, %v3952
        %v3954 = vpop.f32.mrb[0].mxu0
        %v3955 = vpop.f32.mrb[0].mxu0
        %v3956 = vadd.f32 0.0, %v3955
        %v3957 = vpop.f32.mrb[0].mxu0
        %3958 = vmatprep.mubr.bf16.mxu0 %v3503
        %3959 = vmatmul.mubr.bf16.gmra.mrb[0].mxu0 %v3463
        %v3960 = vpop.f32.mrb[0].mxu0
        %v3961 = vadd.f32 0.0, %v3960
        %v3962 = vpop.f32.mrb[0].mxu0
        %v3963 = vpop.f32.mrb[0].mxu0
        %v3964 = vadd.f32 0.0, %v3963
        %v3965 = vpop.f32.mrb[0].mxu0
        %3966 = vmatprep.mubr.bf16.mxu0 %v3506
        %3967 = vmatmul.mubr.bf16.gmra.mrb[0].mxu0 %v3466
        %v3968 = vpop.f32.mrb[0].mxu0
        %v3969 = vadd.f32 0.0, %v3968
        %v3970 = vpop.f32.mrb[0].mxu0
        %v3971 = vpop.f32.mrb[0].mxu0
        %v3972 = vadd.f32 0.0, %v3971
        %v3973 = vpop.f32.mrb[0].mxu0
        %3974 = vmatprep.mubr.bf16.mxu0 %v3507
        %3975 = vmatmul.mubr.bf16.gmra.mrb[0].mxu0 %v3467
        %v3976 = vpop.f32.mrb[0].mxu0
        %v3977 = vadd.f32 0.0, %v3976
        %v3978 = vpop.f32.mrb[0].mxu0
        %v3979 = vpop.f32.mrb[0].mxu0
        %v3980 = vadd.f32 0.0, %v3979
        %v3981 = vpop.f32.mrb[0].mxu0
        %3982 = vmatprep.mubr.bf16.mxu0 %v3508
        %3983 = vmatmul.mubr.bf16.gmra.mrb[0].mxu0 %v3468
        %v3984 = vpop.f32.mrb[0].mxu0
        %v3985 = vadd.f32 0.0, %v3984
        %v3986 = vpop.f32.mrb[0].mxu0
        %v3987 = vpop.f32.mrb[0].mxu0
        %v3988 = vadd.f32 0.0, %v3987
        %v3989 = vpop.f32.mrb[0].mxu0
        %3990 = vmatprep.mubr.bf16.mxu0 %v3509
        %3991 = vmatmul.mubr.bf16.gmra.mrb[0].mxu0 %v3469
        %v3992 = vpop.f32.mrb[0].mxu0
        %v3993 = vadd.f32 0.0, %v3992
        %v3994 = vpop.f32.mrb[0].mxu0
        %v3995 = vpop.f32.mrb[0].mxu0
        %v3996 = vadd.f32 0.0, %v3995
        %v3997 = vpop.f32.mrb[0].mxu0
        %3998 = vmatprep.mubr.bf16.mxu0 %v3510
        %3999 = vmatmul.mubr.bf16.gmra.mrb[0].mxu0 %v3470
        %v4000 = vpop.f32.mrb[0].mxu0
        %v4001 = vadd.f32 0.0, %v4000
        %v4002 = vpop.f32.mrb[0].mxu0
        %v4003 = vpop.f32.mrb[0].mxu0
        %v4004 = vadd.f32 0.0, %v4003
        %v4005 = vpop.f32.mrb[0].mxu0
        %4006 = vmatprep.mubr.bf16.mxu0 %v3511
        %4007 = vmatmul.mubr.bf16.gmra.mrb[0].mxu0 %v3471
        %v4008 = vpop.f32.mrb[0].mxu0
        %v4009 = vadd.f32 0.0, %v4008
        %v4010 = vpop.f32.mrb[0].mxu0
        %v4011 = vpop.f32.mrb[0].mxu0
        %v4012 = vadd.f32 0.0, %v4011
        %v4013 = vpop.f32.mrb[0].mxu0
        %4014 = vmatprep.mubr.bf16.mxu0 %v3512
        %4015 = vmatmul.mubr.bf16.gmra.mrb[0].mxu0 %v3472
        %v4016 = vpop.f32.mrb[0].mxu0
        %v4017 = vadd.f32 0.0, %v4016
        %v4018 = vpop.f32.mrb[0].mxu0
        %v4019 = vpop.f32.mrb[0].mxu0
        %v4020 = vadd.f32 0.0, %v4019
        %v4021 = vpop.f32.mrb[0].mxu0
        %4022 = vmatprep.mubr.bf16.mxu0 %v3513
        %4023 = vmatmul.mubr.bf16.gmra.mrb[0].mxu0 %v3473
        %v4024 = vpop.f32.mrb[0].mxu0
        %v4025 = vadd.f32 0.0, %v4024
        %v4026 = vpop.f32.mrb[0].mxu0
        %v4027 = vpop.f32.mrb[0].mxu0
        %v4028 = vadd.f32 0.0, %v4027
        %v4029 = vpop.f32.mrb[0].mxu0
        %4030 = vmatprep.mubr.bf16.mxu0 %v3516
        %4031 = vmatmul.mubr.bf16.gmra.mrb[0].mxu0 %v3476
        %v4032 = vpop.f32.mrb[0].mxu0
        %v4033 = vadd.f32 0.0, %v4032
        %v4034 = vpop.f32.mrb[0].mxu0
        %v4035 = vpop.f32.mrb[0].mxu0
        %v4036 = vadd.f32 0.0, %v4035
        %v4037 = vpop.f32.mrb[0].mxu0
        %4038 = vmatprep.mubr.bf16.mxu0 %v3517
        %4039 = vmatmul.mubr.bf16.gmra.mrb[0].mxu0 %v3477
        %v4040 = vpop.f32.mrb[0].mxu0
        %v4041 = vadd.f32 0.0, %v4040
        %v4042 = vpop.f32.mrb[0].mxu0
        %v4043 = vpop.f32.mrb[0].mxu0
        %v4044 = vadd.f32 0.0, %v4043
        %v4045 = vpop.f32.mrb[0].mxu0
        %4046 = vmatprep.mubr.bf16.mxu0 %v3518
        %4047 = vmatmul.mubr.bf16.gmra.mrb[0].mxu0 %v3478
        %v4048 = vpop.f32.mrb[0].mxu0
        %v4049 = vadd.f32 0.0, %v4048
        %v4050 = vpop.f32.mrb[0].mxu0
        %v4051 = vpop.f32.mrb[0].mxu0
        %v4052 = vadd.f32 0.0, %v4051
        %v4053 = vpop.f32.mrb[0].mxu0
        %4054 = vmatprep.mubr.bf16.mxu0 %v3519
        %4055 = vmatmul.mubr.bf16.gmra.mrb[0].mxu0 %v3479
        %v4056 = vpop.f32.mrb[0].mxu0
        %v4057 = vadd.f32 0.0, %v4056
        %v4058 = vpop.f32.mrb[0].mxu0
        %v4059 = vpop.f32.mrb[0].mxu0
        %v4060 = vadd.f32 0.0, %v4059
        %v4061 = vpop.f32.mrb[0].mxu0
        %4062 = vmatprep.mubr.bf16.mxu0 %v3520
        %4063 = vmatmul.mubr.bf16.gmra.mrb[0].mxu0 %v3480
        %v4064 = vpop.f32.mrb[0].mxu0
        %v4065 = vadd.f32 0.0, %v4064
        %v4066 = vpop.f32.mrb[0].mxu0
        %v4067 = vpop.f32.mrb[0].mxu0
        %v4068 = vadd.f32 0.0, %v4067
        %v4069 = vpop.f32.mrb[0].mxu0
        %4070 = vmatprep.mubr.bf16.mxu0 %v3521
        %4071 = vmatmul.mubr.bf16.gmra.mrb[0].mxu0 %v3481
        %v4072 = vpop.f32.mrb[0].mxu0
        %v4073 = vadd.f32 0.0, %v4072
        %v4074 = vpop.f32.mrb[0].mxu0
        %v4075 = vpop.f32.mrb[0].mxu0
        %v4076 = vadd.f32 0.0, %v4075
        %v4077 = vpop.f32.mrb[0].mxu0
        %4078 = vmatprep.mubr.bf16.mxu0 %v3522
        %4079 = vmatmul.mubr.bf16.gmra.mrb[0].mxu0 %v3482
        %v4080 = vpop.f32.mrb[0].mxu0
        %v4081 = vadd.f32 0.0, %v4080
        %v4082 = vpop.f32.mrb[0].mxu0
        %v4083 = vpop.f32.mrb[0].mxu0
        %v4084 = vadd.f32 0.0, %v4083
        %v4085 = vpop.f32.mrb[0].mxu0
        %4086 = vmatprep.mubr.bf16.mxu0 %v3523
        %4087 = vmatmul.mubr.bf16.gmra.mrb[0].mxu0 %v3483
        %v4088 = vpop.f32.mrb[0].mxu0
        %v4089 = vadd.f32 0.0, %v4088
        %v4090 = vpop.f32.mrb[0].mxu0
        %v4091 = vpop.f32.mrb[0].mxu0
        %v4092 = vadd.f32 0.0, %v4091
        %v4093 = vpop.f32.mrb[0].mxu0
        %4094 = vdwg.mxu0
        %4095 = vmatprep.subr.bf16.mxu0 0
        %4096 = vmatpush1.bf16.msra.mxu0 %v3774
        %4097 = vmatprep.subr.bf16.mxu0 0
        %4098 = vmatpush1.bf16.msra.mxu0 %v3775
        %4099 = vmatprep.subr.bf16.mxu0 0
        %4100 = vmatpush1.bf16.msra.mxu0 %v3776
        %4101 = vmatprep.subr.bf16.mxu0 0
        %4102 = vmatpush1.bf16.msra.mxu0 %v3777
        %4103 = vmatprep.subr.bf16.mxu0 0
        %4104 = vmatpush1.bf16.msra.mxu0 %v3778
        %4105 = vmatprep.subr.bf16.mxu0 0
        %4106 = vmatpush1.bf16.msra.mxu0 %v3779
        %4107 = vmatprep.subr.bf16.mxu0 0
        %4108 = vmatpush1.bf16.msra.mxu0 %v3780
        %4109 = vmatprep.subr.bf16.mxu0 0
        %4110 = vmatpush1.bf16.msra.mxu0 %v3781
        %4111 = vmatprep.subr.bf16.mxu0 0
        %4112 = vmatpush1.bf16.msra.mxu0 0
        %4113 = vmatprep.subr.bf16.mxu0 0
        %4114 = vmatpush1.bf16.msra.mxu0 0
        %4115 = vmatprep.subr.bf16.mxu0 0
        %4116 = vmatpush1.bf16.msra.mxu0 0
        %4117 = vmatprep.subr.bf16.mxu0 0
        %4118 = vmatpush1.bf16.msra.mxu0 0
        %4119 = vmatprep.subr.bf16.mxu0 0
        %4120 = vmatpush1.bf16.msra.mxu0 0
        %4121 = vmatprep.subr.bf16.mxu0 0
        %4122 = vmatpush1.bf16.msra.mxu0 0
        %4123 = vmatprep.subr.bf16.mxu0 0
        %4124 = vmatpush1.bf16.msra.mxu0 0
        %4125 = vmatprep.subr.bf16.mxu0 0
        %4126 = vmatpush1.bf16.msra.mxu0 0
        %4127 = vmatprep.mubr.bf16.mxu0 0
        %4128 = vmatmul.mubr.bf16.gmra.mrb[0].mxu0 %v3526
        %v4129 = vpop.f32.mrb[0].mxu0
        %v4130 = vadd.f32 %v3841, %v4129
        %v4131 = vpop.f32.mrb[0].mxu0
        %v4132 = vpop.f32.mrb[0].mxu0
        %v4133 = vadd.f32 %v3844, %v4132
        %v4134 = vpop.f32.mrb[0].mxu0
        %4135 = vmatprep.mubr.bf16.mxu0 0
        %4136 = vmatmul.mubr.bf16.gmra.mrb[0].mxu0 %v3527
        %v4137 = vpop.f32.mrb[0].mxu0
        %v4138 = vadd.f32 %v3849, %v4137
        %v4139 = vpop.f32.mrb[0].mxu0
        %v4140 = vpop.f32.mrb[0].mxu0
        %v4141 = vadd.f32 %v3852, %v4140
        %v4142 = vpop.f32.mrb[0].mxu0
        %4143 = vmatprep.mubr.bf16.mxu0 0
        %4144 = vmatmul.mubr.bf16.gmra.mrb[0].mxu0 %v3528
        %v4145 = vpop.f32.mrb[0].mxu0
        %v4146 = vadd.f32 %v3857, %v4145
        %v4147 = vpop.f32.mrb[0].mxu0
        %v4148 = vpop.f32.mrb[0].mxu0
        %v4149 = vadd.f32 %v3860, %v4148
        %v4150 = vpop.f32.mrb[0].mxu0
        %4151 = vmatprep.mubr.bf16.mxu0 0
        %4152 = vmatmul.mubr.bf16.gmra.mrb[0].mxu0 %v3529
        %v4153 = vpop.f32.mrb[0].mxu0
        %v4154 = vadd.f32 %v3865, %v4153
        %v4155 = vpop.f32.mrb[0].mxu0
        %v4156 = vpop.f32.mrb[0].mxu0
        %v4157 = vadd.f32 %v3868, %v4156
        %v4158 = vpop.f32.mrb[0].mxu0
        %4159 = vmatprep.mubr.bf16.mxu0 0
        %4160 = vmatmul.mubr.bf16.gmra.mrb[0].mxu0 %v3530
        %v4161 = vpop.f32.mrb[0].mxu0
        %v4162 = vadd.f32 %v3873, %v4161
        %v4163 = vpop.f32.mrb[0].mxu0
        %v4164 = vpop.f32.mrb[0].mxu0
        %v4165 = vadd.f32 %v3876, %v4164
        %v4166 = vpop.f32.mrb[0].mxu0
        %4167 = vmatprep.mubr.bf16.mxu0 0
        %4168 = vmatmul.mubr.bf16.gmra.mrb[0].mxu0 %v3531
        %v4169 = vpop.f32.mrb[0].mxu0
        %v4170 = vadd.f32 %v3881, %v4169
        %v4171 = vpop.f32.mrb[0].mxu0
        %v4172 = vpop.f32.mrb[0].mxu0
        %v4173 = vadd.f32 %v3884, %v4172
        %v4174 = vpop.f32.mrb[0].mxu0
        %4175 = vmatprep.mubr.bf16.mxu0 0
        %4176 = vmatmul.mubr.bf16.gmra.mrb[0].mxu0 %v3532
        %v4177 = vpop.f32.mrb[0].mxu0
        %v4178 = vadd.f32 %v3889, %v4177
        %v4179 = vpop.f32.mrb[0].mxu0
        %v4180 = vpop.f32.mrb[0].mxu0
        %v4181 = vadd.f32 %v3892, %v4180
        %v4182 = vpop.f32.mrb[0].mxu0
        %4183 = vmatprep.mubr.bf16.mxu0 0
        %4184 = vmatmul.mubr.bf16.gmra.mrb[0].mxu0 %v3533
        %v4185 = vpop.f32.mrb[0].mxu0
        %v4186 = vadd.f32 %v3897, %v4185
        %v4187 = vpop.f32.mrb[0].mxu0
        %v4188 = vpop.f32.mrb[0].mxu0
        %v4189 = vadd.f32 %v3900, %v4188
        %v4190 = vpop.f32.mrb[0].mxu0
        %4191 = vmatprep.mubr.bf16.mxu0 0
        %4192 = vmatmul.mubr.bf16.gmra.mrb[0].mxu0 %v3536
        %v4193 = vpop.f32.mrb[0].mxu0
        %v4194 = vadd.f32 %v3905, %v4193
        %v4195 = vpop.f32.mrb[0].mxu0
        %v4196 = vpop.f32.mrb[0].mxu0
        %v4197 = vadd.f32 %v3908, %v4196
        %v4198 = vpop.f32.mrb[0].mxu0
        %4199 = vmatprep.mubr.bf16.mxu0 0
        %4200 = vmatmul.mubr.bf16.gmra.mrb[0].mxu0 %v3537
        %v4201 = vpop.f32.mrb[0].mxu0
        %v4202 = vadd.f32 %v3913, %v4201
        %v4203 = vpop.f32.mrb[0].mxu0
        %v4204 = vpop.f32.mrb[0].mxu0
        %v4205 = vadd.f32 %v3916, %v4204
        %v4206 = vpop.f32.mrb[0].mxu0
        %4207 = vmatprep.mubr.bf16.mxu0 0
        %4208 = vmatmul.mubr.bf16.gmra.mrb[0].mxu0 %v3538
        %v4209 = vpop.f32.mrb[0].mxu0
        %v4210 = vadd.f32 %v3921, %v4209
        %v4211 = vpop.f32.mrb[0].mxu0
        %v4212 = vpop.f32.mrb[0].mxu0
        %v4213 = vadd.f32 %v3924, %v4212
        %v4214 = vpop.f32.mrb[0].mxu0
        %4215 = vmatprep.mubr.bf16.mxu0 0
        %4216 = vmatmul.mubr.bf16.gmra.mrb[0].mxu0 %v3539
        %v4217 = vpop.f32.mrb[0].mxu0
        %v4218 = vadd.f32 %v3929, %v4217
        %v4219 = vpop.f32.mrb[0].mxu0
        %v4220 = vpop.f32.mrb[0].mxu0
        %v4221 = vadd.f32 %v3932, %v4220
        %v4222 = vpop.f32.mrb[0].mxu0
        %4223 = vmatprep.mubr.bf16.mxu0 0
        %4224 = vmatmul.mubr.bf16.gmra.mrb[0].mxu0 %v3540
        %v4225 = vpop.f32.mrb[0].mxu0
        %v4226 = vadd.f32 %v3937, %v4225
        %v4227 = vpop.f32.mrb[0].mxu0
        %v4228 = vpop.f32.mrb[0].mxu0
        %v4229 = vadd.f32 %v3940, %v4228
        %v4230 = vpop.f32.mrb[0].mxu0
        %4231 = vmatprep.mubr.bf16.mxu0 0
        %4232 = vmatmul.mubr.bf16.gmra.mrb[0].mxu0 %v3541
        %v4233 = vpop.f32.mrb[0].mxu0
        %v4234 = vadd.f32 %v3945, %v4233
        %v4235 = vpop.f32.mrb[0].mxu0
        %v4236 = vpop.f32.mrb[0].mxu0
        %v4237 = vadd.f32 %v3948, %v4236
        %v4238 = vpop.f32.mrb[0].mxu0
        %4239 = vmatprep.mubr.bf16.mxu0 0
        %4240 = vmatmul.mubr.bf16.gmra.mrb[0].mxu0 %v3542
        %v4241 = vpop.f32.mrb[0].mxu0
        %v4242 = vadd.f32 %v3953, %v4241
        %v4243 = vpop.f32.mrb[0].mxu0
        %v4244 = vpop.f32.mrb[0].mxu0
        %v4245 = vadd.f32 %v3956, %v4244
        %v4246 = vpop.f32.mrb[0].mxu0
        %4247 = vmatprep.mubr.bf16.mxu0 0
        %4248 = vmatmul.mubr.bf16.gmra.mrb[0].mxu0 %v3543
        %v4249 = vpop.f32.mrb[0].mxu0
        %v4250 = vadd.f32 %v3961, %v4249
        %v4251 = vpop.f32.mrb[0].mxu0
        %v4252 = vpop.f32.mrb[0].mxu0
        %v4253 = vadd.f32 %v3964, %v4252
        %v4254 = vpop.f32.mrb[0].mxu0
        %4255 = vmatprep.mubr.bf16.mxu0 0
        %4256 = vmatmul.mubr.bf16.gmra.mrb[0].mxu0 %v3546
        %v4257 = vpop.f32.mrb[0].mxu0
        %v4258 = vadd.f32 %v3969, %v4257
        %v4259 = vpop.f32.mrb[0].mxu0
        %v4260 = vpop.f32.mrb[0].mxu0
        %v4261 = vadd.f32 %v3972, %v4260
        %v4262 = vpop.f32.mrb[0].mxu0
        %4263 = vmatprep.mubr.bf16.mxu0 0
        %4264 = vmatmul.mubr.bf16.gmra.mrb[0].mxu0 %v3547
        %v4265 = vpop.f32.mrb[0].mxu0
        %v4266 = vadd.f32 %v3977, %v4265
        %v4267 = vpop.f32.mrb[0].mxu0
        %v4268 = vpop.f32.mrb[0].mxu0
        %v4269 = vadd.f32 %v3980, %v4268
        %v4270 = vpop.f32.mrb[0].mxu0
        %4271 = vmatprep.mubr.bf16.mxu0 0
        %4272 = vmatmul.mubr.bf16.gmra.mrb[0].mxu0 %v3548
        %v4273 = vpop.f32.mrb[0].mxu0
        %v4274 = vadd.f32 %v3985, %v4273
        %v4275 = vpop.f32.mrb[0].mxu0
        %v4276 = vpop.f32.mrb[0].mxu0
        %v4277 = vadd.f32 %v3988, %v4276
        %v4278 = vpop.f32.mrb[0].mxu0
        %4279 = vmatprep.mubr.bf16.mxu0 0
        %4280 = vmatmul.mubr.bf16.gmra.mrb[0].mxu0 %v3549
        %v4281 = vpop.f32.mrb[0].mxu0
        %v4282 = vadd.f32 %v3993, %v4281
        %v4283 = vpop.f32.mrb[0].mxu0
        %v4284 = vpop.f32.mrb[0].mxu0
        %v4285 = vadd.f32 %v3996, %v4284
        %v4286 = vpop.f32.mrb[0].mxu0
        %4287 = vmatprep.mubr.bf16.mxu0 0
        %4288 = vmatmul.mubr.bf16.gmra.mrb[0].mxu0 %v3550
        %v4289 = vpop.f32.mrb[0].mxu0
        %v4290 = vadd.f32 %v4001, %v4289
        %v4291 = vpop.f32.mrb[0].mxu0
        %v4292 = vpop.f32.mrb[0].mxu0
        %v4293 = vadd.f32 %v4004, %v4292
        %v4294 = vpop.f32.mrb[0].mxu0
        %4295 = vmatprep.mubr.bf16.mxu0 0
        %4296 = vmatmul.mubr.bf16.gmra.mrb[0].mxu0 %v3551
        %v4297 = vpop.f32.mrb[0].mxu0
        %v4298 = vadd.f32 %v4009, %v4297
        %v4299 = vpop.f32.mrb[0].mxu0
        %v4300 = vpop.f32.mrb[0].mxu0
        %v4301 = vadd.f32 %v4012, %v4300
        %v4302 = vpop.f32.mrb[0].mxu0
        %4303 = vmatprep.mubr.bf16.mxu0 0
        %4304 = vmatmul.mubr.bf16.gmra.mrb[0].mxu0 %v3552
        %v4305 = vpop.f32.mrb[0].mxu0
        %v4306 = vadd.f32 %v4017, %v4305
        %v4307 = vpop.f32.mrb[0].mxu0
        %v4308 = vpop.f32.mrb[0].mxu0
        %v4309 = vadd.f32 %v4020, %v4308
        %v4310 = vpop.f32.mrb[0].mxu0
        %4311 = vmatprep.mubr.bf16.mxu0 0
        %4312 = vmatmul.mubr.bf16.gmra.mrb[0].mxu0 %v3553
        %v4313 = vpop.f32.mrb[0].mxu0
        %v4314 = vadd.f32 %v4025, %v4313
        %v4315 = vpop.f32.mrb[0].mxu0
        %v4316 = vpop.f32.mrb[0].mxu0
        %v4317 = vadd.f32 %v4028, %v4316
        %v4318 = vpop.f32.mrb[0].mxu0
        %4319 = vmatprep.mubr.bf16.mxu0 0
        %4320 = vmatmul.mubr.bf16.gmra.mrb[0].mxu0 %v3556
        %v4321 = vpop.f32.mrb[0].mxu0
        %v4322 = vadd.f32 %v4033, %v4321
        %v4323 = vpop.f32.mrb[0].mxu0
        %v4324 = vpop.f32.mrb[0].mxu0
        %v4325 = vadd.f32 %v4036, %v4324
        %v4326 = vpop.f32.mrb[0].mxu0
        %4327 = vmatprep.mubr.bf16.mxu0 0
        %4328 = vmatmul.mubr.bf16.gmra.mrb[0].mxu0 %v3557
        %v4329 = vpop.f32.mrb[0].mxu0
        %v4330 = vadd.f32 %v4041, %v4329
        %v4331 = vpop.f32.mrb[0].mxu0
        %v4332 = vpop.f32.mrb[0].mxu0
        %v4333 = vadd.f32 %v4044, %v4332
        %v4334 = vpop.f32.mrb[0].mxu0
        %4335 = vmatprep.mubr.bf16.mxu0 0
        %4336 = vmatmul.mubr.bf16.gmra.mrb[0].mxu0 %v3558
        %v4337 = vpop.f32.mrb[0].mxu0
        %v4338 = vadd.f32 %v4049, %v4337
        %v4339 = vpop.f32.mrb[0].mxu0
        %v4340 = vpop.f32.mrb[0].mxu0
        %v4341 = vadd.f32 %v4052, %v4340
        %v4342 = vpop.f32.mrb[0].mxu0
        %4343 = vmatprep.mubr.bf16.mxu0 0
        %4344 = vmatmul.mubr.bf16.gmra.mrb[0].mxu0 %v3559
        %v4345 = vpop.f32.mrb[0].mxu0
        %v4346 = vadd.f32 %v4057, %v4345
        %v4347 = vpop.f32.mrb[0].mxu0
        %v4348 = vpop.f32.mrb[0].mxu0
        %v4349 = vadd.f32 %v4060, %v4348
        %v4350 = vpop.f32.mrb[0].mxu0
        %4351 = vmatprep.mubr.bf16.mxu0 0
        %4352 = vmatmul.mubr.bf16.gmra.mrb[0].mxu0 %v3560
        %v4353 = vpop.f32.mrb[0].mxu0
        %v4354 = vadd.f32 %v4065, %v4353
        %v4355 = vpop.f32.mrb[0].mxu0
        %v4356 = vpop.f32.mrb[0].mxu0
        %v4357 = vadd.f32 %v4068, %v4356
        %v4358 = vpop.f32.mrb[0].mxu0
        %4359 = vmatprep.mubr.bf16.mxu0 0
        %4360 = vmatmul.mubr.bf16.gmra.mrb[0].mxu0 %v3561
        %v4361 = vpop.f32.mrb[0].mxu0
        %v4362 = vadd.f32 %v4073, %v4361
        %v4363 = vpop.f32.mrb[0].mxu0
        %v4364 = vpop.f32.mrb[0].mxu0
        %v4365 = vadd.f32 %v4076, %v4364
        %v4366 = vpop.f32.mrb[0].mxu0
        %4367 = vmatprep.mubr.bf16.mxu0 0
        %4368 = vmatmul.mubr.bf16.gmra.mrb[0].mxu0 %v3562
        %v4369 = vpop.f32.mrb[0].mxu0
        %v4370 = vadd.f32 %v4081, %v4369
        %v4371 = vpop.f32.mrb[0].mxu0
        %v4372 = vpop.f32.mrb[0].mxu0
        %v4373 = vadd.f32 %v4084, %v4372
        %v4374 = vpop.f32.mrb[0].mxu0
        %4375 = vmatprep.mubr.bf16.mxu0 0
        %4376 = vmatmul.mubr.bf16.gmra.mrb[0].mxu0 %v3563
        %v4377 = vpop.f32.mrb[0].mxu0
        %v4378 = vadd.f32 %v4089, %v4377
        %v4379 = vpop.f32.mrb[0].mxu0
        %v4380 = vpop.f32.mrb[0].mxu0
        %v4381 = vadd.f32 %v4092, %v4380
        %v4382 = vpop.f32.mrb[0].mxu0
        %4383 = vdwg.mxu0
        %v4432 = vunpack.c.l.b16 %v3565
        %v4433 = vunpack.c.l.b16 %v3566
        %v4434 = vunpack.c.l.b16 %v3567
        %v4435 = vunpack.c.l.b16 %v3568
        %v4436 = vunpack.c.l.b16 %v3569
        %v4437 = vunpack.c.l.b16 %v3570
        %v4438 = vunpack.c.l.b16 %v3571
        %v4439 = vunpack.c.l.b16 %v3572
        %v4440 = vunpack.c.l.b16 %v3573
        %v4441 = vunpack.c.l.b16 %v3574
        %v4442 = vunpack.c.l.b16 %v3575
        %v4443 = vunpack.c.l.b16 %v3576
        %v4444 = vunpack.c.l.b16 %v3577
        %v4445 = vunpack.c.l.b16 %v3578
        %v4446 = vunpack.c.l.b16 %v3579
        %v4447 = vunpack.c.l.b16 %v3580
        %v4448 = vunpack.c.l.b16 %v3581
        %v4449 = vunpack.c.l.b16 %v3582
        %v4450 = vunpack.c.l.b16 %v3583
        %v4451 = vunpack.c.l.b16 %v3584
        %v4452 = vunpack.c.l.b16 %v3585
        %v4453 = vunpack.c.l.b16 %v3586
        %v4454 = vunpack.c.l.b16 %v3587
        %v4455 = vunpack.c.l.b16 %v3588
        %v4456 = vunpack.c.l.b16 %v3589
        %v4457 = vunpack.c.l.b16 %v3590
        %v4458 = vunpack.c.l.b16 %v3591
        %v4459 = vunpack.c.l.b16 %v3592
        %v4460 = vunpack.c.l.b16 %v3593
        %v4461 = vunpack.c.l.b16 %v3594
        %v4462 = vunpack.c.l.b16 %v3595
        %v4463 = vunpack.c.l.b16 %v3596
        %v4464 = vunpack.c.l.b16 %v3597
        %v4465 = vunpack.c.l.b16 %v3598
        %v4466 = vunpack.c.l.b16 %v3599
        %v4467 = vunpack.c.l.b16 %v3600
        %v4468 = vunpack.c.l.b16 %v3601
        %v4469 = vunpack.c.l.b16 %v3602
        %v4470 = vunpack.c.l.b16 %v3603
        %v4471 = vunpack.c.l.b16 %v3604
        %v4472 = vunpack.c.l.b16 %v3605
        %v4473 = vunpack.c.l.b16 %v3606
        %v4474 = vunpack.c.l.b16 %v3607
        %v4475 = vunpack.c.l.b16 %v3608
        %v4476 = vunpack.c.l.b16 %v3609
        %v4477 = vunpack.c.l.b16 %v3610
        %v4478 = vunpack.c.l.b16 %v3611
        %v4479 = vunpack.c.l.b16 %v3612
        %v4480 = vpack.c.b16 %v4433, %v4432
        %v4481 = vpack.c.b16 %v4435, %v4434
        %v4482 = vpack.c.b16 %v4437, %v4436
        %v4483 = vpack.c.b16 %v4439, %v4438
        %v4484 = vpack.c.b16 %v4441, %v4440
        %v4485 = vpack.c.b16 %v4443, %v4442
        %v4486 = vpack.c.b16 %v4445, %v4444
        %v4487 = vpack.c.b16 %v4447, %v4446
        %v4488 = vpack.c.b16 %v4449, %v4448
        %v4489 = vpack.c.b16 %v4451, %v4450
        %v4490 = vpack.c.b16 %v4453, %v4452
        %v4491 = vpack.c.b16 %v4455, %v4454
        %v4492 = vpack.c.b16 %v4457, %v4456
        %v4493 = vpack.c.b16 %v4459, %v4458
        %v4494 = vpack.c.b16 %v4461, %v4460
        %v4495 = vpack.c.b16 %v4463, %v4462
        %v4496 = vpack.c.b16 %v4465, %v4464
        %v4497 = vpack.c.b16 %v4467, %v4466
        %v4498 = vpack.c.b16 %v4469, %v4468
        %v4499 = vpack.c.b16 %v4471, %v4470
        %v4500 = vpack.c.b16 %v4473, %v4472
        %v4501 = vpack.c.b16 %v4475, %v4474
        %v4502 = vpack.c.b16 %v4477, %v4476
        %v4503 = vpack.c.b16 %v4479, %v4478
        %4528 = vmatprep.subr.bf16.mxu0 0
        %4529 = vmatpush1.bf16.msra.mxu0 %v4480
        %4530 = vmatprep.subr.bf16.mxu0 0
        %4531 = vmatpush1.bf16.msra.mxu0 %v4481
        %4532 = vmatprep.subr.bf16.mxu0 0
        %4533 = vmatpush1.bf16.msra.mxu0 %v4482
        %4534 = vmatprep.subr.bf16.mxu0 0
        %4535 = vmatpush1.bf16.msra.mxu0 %v4483
        %4536 = vmatprep.subr.bf16.mxu0 0
        %4537 = vmatpush1.bf16.msra.mxu0 %v4484
        %4538 = vmatprep.subr.bf16.mxu0 0
        %4539 = vmatpush1.bf16.msra.mxu0 %v4485
        %4540 = vmatprep.subr.bf16.mxu0 0
        %4541 = vmatpush1.bf16.msra.mxu0 %v4486
        %4542 = vmatprep.subr.bf16.mxu0 0
        %4543 = vmatpush1.bf16.msra.mxu0 %v4487
        %4544 = vmatprep.subr.bf16.mxu0 0
        %4545 = vmatpush1.bf16.msra.mxu0 %v4488
        %4546 = vmatprep.subr.bf16.mxu0 0
        %4547 = vmatpush1.bf16.msra.mxu0 %v4489
        %4548 = vmatprep.subr.bf16.mxu0 0
        %4549 = vmatpush1.bf16.msra.mxu0 %v4490
        %4550 = vmatprep.subr.bf16.mxu0 0
        %4551 = vmatpush1.bf16.msra.mxu0 %v4491
        %4552 = vmatprep.subr.bf16.mxu0 0
        %4553 = vmatpush1.bf16.msra.mxu0 %v4492
        %4554 = vmatprep.subr.bf16.mxu0 0
        %4555 = vmatpush1.bf16.msra.mxu0 %v4493
        %4556 = vmatprep.subr.bf16.mxu0 0
        %4557 = vmatpush1.bf16.msra.mxu0 %v4494
        %4558 = vmatprep.subr.bf16.mxu0 0
        %4559 = vmatpush1.bf16.msra.mxu0 %v4495
        %4560 = vmatprep.mubr.bf16.mxu0 %v3485
        %4561 = vmatmul.mubr.bf16.gmra.mrb[0].mxu0 %v3445
        %v4562 = vpop.f32.mrb[0].mxu0
        %v4563 = vadd.f32 %v4130, %v4562
        %v4564 = vpop.f32.mrb[0].mxu0
        %v4565 = vpop.f32.mrb[0].mxu0
        %v4566 = vadd.f32 %v4133, %v4565
        %v4567 = vpop.f32.mrb[0].mxu0
        %4568 = vmatprep.mubr.bf16.mxu0 %v3486
        %4569 = vmatmul.mubr.bf16.gmra.mrb[0].mxu0 %v3446
        %v4570 = vpop.f32.mrb[0].mxu0
        %v4571 = vadd.f32 %v4138, %v4570
        %v4572 = vpop.f32.mrb[0].mxu0
        %v4573 = vpop.f32.mrb[0].mxu0
        %v4574 = vadd.f32 %v4141, %v4573
        %v4575 = vpop.f32.mrb[0].mxu0
        %4576 = vmatprep.mubr.bf16.mxu0 %v3487
        %4577 = vmatmul.mubr.bf16.gmra.mrb[0].mxu0 %v3447
        %v4578 = vpop.f32.mrb[0].mxu0
        %v4579 = vadd.f32 %v4146, %v4578
        %v4580 = vpop.f32.mrb[0].mxu0
        %v4581 = vpop.f32.mrb[0].mxu0
        %v4582 = vadd.f32 %v4149, %v4581
        %v4583 = vpop.f32.mrb[0].mxu0
        %4584 = vmatprep.mubr.bf16.mxu0 %v3488
        %4585 = vmatmul.mubr.bf16.gmra.mrb[0].mxu0 %v3448
        %v4586 = vpop.f32.mrb[0].mxu0
        %v4587 = vadd.f32 %v4154, %v4586
        %v4588 = vpop.f32.mrb[0].mxu0
        %v4589 = vpop.f32.mrb[0].mxu0
        %v4590 = vadd.f32 %v4157, %v4589
        %v4591 = vpop.f32.mrb[0].mxu0
        %4592 = vmatprep.mubr.bf16.mxu0 %v3489
        %4593 = vmatmul.mubr.bf16.gmra.mrb[0].mxu0 %v3449
        %v4594 = vpop.f32.mrb[0].mxu0
        %v4595 = vadd.f32 %v4162, %v4594
        %v4596 = vpop.f32.mrb[0].mxu0
        %v4597 = vpop.f32.mrb[0].mxu0
        %v4598 = vadd.f32 %v4165, %v4597
        %v4599 = vpop.f32.mrb[0].mxu0
        %4600 = vmatprep.mubr.bf16.mxu0 %v3490
        %4601 = vmatmul.mubr.bf16.gmra.mrb[0].mxu0 %v3450
        %v4602 = vpop.f32.mrb[0].mxu0
        %v4603 = vadd.f32 %v4170, %v4602
        %v4604 = vpop.f32.mrb[0].mxu0
        %v4605 = vpop.f32.mrb[0].mxu0
        %v4606 = vadd.f32 %v4173, %v4605
        %v4607 = vpop.f32.mrb[0].mxu0
        %4608 = vmatprep.mubr.bf16.mxu0 %v3491
        %4609 = vmatmul.mubr.bf16.gmra.mrb[0].mxu0 %v3451
        %v4610 = vpop.f32.mrb[0].mxu0
        %v4611 = vadd.f32 %v4178, %v4610
        %v4612 = vpop.f32.mrb[0].mxu0
        %v4613 = vpop.f32.mrb[0].mxu0
        %v4614 = vadd.f32 %v4181, %v4613
        %v4615 = vpop.f32.mrb[0].mxu0
        %4616 = vmatprep.mubr.bf16.mxu0 %v3492
        %4617 = vmatmul.mubr.bf16.gmra.mrb[0].mxu0 %v3452
        %v4618 = vpop.f32.mrb[0].mxu0
        %v4619 = vadd.f32 %v4186, %v4618
        %v4620 = vpop.f32.mrb[0].mxu0
        %v4621 = vpop.f32.mrb[0].mxu0
        %v4622 = vadd.f32 %v4189, %v4621
        %v4623 = vpop.f32.mrb[0].mxu0
        %4624 = vmatprep.mubr.bf16.mxu0 %v3495
        %4625 = vmatmul.mubr.bf16.gmra.mrb[0].mxu0 %v3455
        %v4626 = vpop.f32.mrb[0].mxu0
        %v4627 = vadd.f32 %v4194, %v4626
        %v4628 = vpop.f32.mrb[0].mxu0
        %v4629 = vpop.f32.mrb[0].mxu0
        %v4630 = vadd.f32 %v4197, %v4629
        %v4631 = vpop.f32.mrb[0].mxu0
        %4632 = vmatprep.mubr.bf16.mxu0 %v3496
        %4633 = vmatmul.mubr.bf16.gmra.mrb[0].mxu0 %v3456
        %v4634 = vpop.f32.mrb[0].mxu0
        %v4635 = vadd.f32 %v4202, %v4634
        %v4636 = vpop.f32.mrb[0].mxu0
        %v4637 = vpop.f32.mrb[0].mxu0
        %v4638 = vadd.f32 %v4205, %v4637
        %v4639 = vpop.f32.mrb[0].mxu0
        %4640 = vmatprep.mubr.bf16.mxu0 %v3497
        %4641 = vmatmul.mubr.bf16.gmra.mrb[0].mxu0 %v3457
        %v4642 = vpop.f32.mrb[0].mxu0
        %v4643 = vadd.f32 %v4210, %v4642
        %v4644 = vpop.f32.mrb[0].mxu0
        %v4645 = vpop.f32.mrb[0].mxu0
        %v4646 = vadd.f32 %v4213, %v4645
        %v4647 = vpop.f32.mrb[0].mxu0
        %4648 = vmatprep.mubr.bf16.mxu0 %v3498
        %4649 = vmatmul.mubr.bf16.gmra.mrb[0].mxu0 %v3458
        %v4650 = vpop.f32.mrb[0].mxu0
        %v4651 = vadd.f32 %v4218, %v4650
        %v4652 = vpop.f32.mrb[0].mxu0
        %v4653 = vpop.f32.mrb[0].mxu0
        %v4654 = vadd.f32 %v4221, %v4653
        %v4655 = vpop.f32.mrb[0].mxu0
        %4656 = vmatprep.mubr.bf16.mxu0 %v3499
        %4657 = vmatmul.mubr.bf16.gmra.mrb[0].mxu0 %v3459
        %v4658 = vpop.f32.mrb[0].mxu0
        %v4659 = vadd.f32 %v4226, %v4658
        %v4660 = vpop.f32.mrb[0].mxu0
        %v4661 = vpop.f32.mrb[0].mxu0
        %v4662 = vadd.f32 %v4229, %v4661
        %v4663 = vpop.f32.mrb[0].mxu0
        %4664 = vmatprep.mubr.bf16.mxu0 %v3500
        %4665 = vmatmul.mubr.bf16.gmra.mrb[0].mxu0 %v3460
        %v4666 = vpop.f32.mrb[0].mxu0
        %v4667 = vadd.f32 %v4234, %v4666
        %v4668 = vpop.f32.mrb[0].mxu0
        %v4669 = vpop.f32.mrb[0].mxu0
        %v4670 = vadd.f32 %v4237, %v4669
        %v4671 = vpop.f32.mrb[0].mxu0
        %4672 = vmatprep.mubr.bf16.mxu0 %v3501
        %4673 = vmatmul.mubr.bf16.gmra.mrb[0].mxu0 %v3461
        %v4674 = vpop.f32.mrb[0].mxu0
        %v4675 = vadd.f32 %v4242, %v4674
        %v4676 = vpop.f32.mrb[0].mxu0
        %v4677 = vpop.f32.mrb[0].mxu0
        %v4678 = vadd.f32 %v4245, %v4677
        %v4679 = vpop.f32.mrb[0].mxu0
        %4680 = vmatprep.mubr.bf16.mxu0 %v3502
        %4681 = vmatmul.mubr.bf16.gmra.mrb[0].mxu0 %v3462
        %v4682 = vpop.f32.mrb[0].mxu0
        %v4683 = vadd.f32 %v4250, %v4682
        %v4684 = vpop.f32.mrb[0].mxu0
        %v4685 = vpop.f32.mrb[0].mxu0
        %v4686 = vadd.f32 %v4253, %v4685
        %v4687 = vpop.f32.mrb[0].mxu0
        %4688 = vmatprep.mubr.bf16.mxu0 %v3505
        %4689 = vmatmul.mubr.bf16.gmra.mrb[0].mxu0 %v3465
        %v4690 = vpop.f32.mrb[0].mxu0
        %v4691 = vadd.f32 %v4258, %v4690
        %v4692 = vpop.f32.mrb[0].mxu0
        %v4693 = vpop.f32.mrb[0].mxu0
        %v4694 = vadd.f32 %v4261, %v4693
        %v4695 = vpop.f32.mrb[0].mxu0
        %4696 = vmatprep.mubr.bf16.mxu0 %v3506
        %4697 = vmatmul.mubr.bf16.gmra.mrb[0].mxu0 %v3466
        %v4698 = vpop.f32.mrb[0].mxu0
        %v4699 = vadd.f32 %v4266, %v4698
        %v4700 = vpop.f32.mrb[0].mxu0
        %v4701 = vpop.f32.mrb[0].mxu0
        %v4702 = vadd.f32 %v4269, %v4701
        %v4703 = vpop.f32.mrb[0].mxu0
        %4704 = vmatprep.mubr.bf16.mxu0 %v3507
        %4705 = vmatmul.mubr.bf16.gmra.mrb[0].mxu0 %v3467
        %v4706 = vpop.f32.mrb[0].mxu0
        %v4707 = vadd.f32 %v4274, %v4706
        %v4708 = vpop.f32.mrb[0].mxu0
        %v4709 = vpop.f32.mrb[0].mxu0
        %v4710 = vadd.f32 %v4277, %v4709
        %v4711 = vpop.f32.mrb[0].mxu0
        %4712 = vmatprep.mubr.bf16.mxu0 %v3508
        %4713 = vmatmul.mubr.bf16.gmra.mrb[0].mxu0 %v3468
        %v4714 = vpop.f32.mrb[0].mxu0
        %v4715 = vadd.f32 %v4282, %v4714
        %v4716 = vpop.f32.mrb[0].mxu0
        %v4717 = vpop.f32.mrb[0].mxu0
        %v4718 = vadd.f32 %v4285, %v4717
        %v4719 = vpop.f32.mrb[0].mxu0
        %4720 = vmatprep.mubr.bf16.mxu0 %v3509
        %4721 = vmatmul.mubr.bf16.gmra.mrb[0].mxu0 %v3469
        %v4722 = vpop.f32.mrb[0].mxu0
        %v4723 = vadd.f32 %v4290, %v4722
        %v4724 = vpop.f32.mrb[0].mxu0
        %v4725 = vpop.f32.mrb[0].mxu0
        %v4726 = vadd.f32 %v4293, %v4725
        %v4727 = vpop.f32.mrb[0].mxu0
        %4728 = vmatprep.mubr.bf16.mxu0 %v3510
        %4729 = vmatmul.mubr.bf16.gmra.mrb[0].mxu0 %v3470
        %v4730 = vpop.f32.mrb[0].mxu0
        %v4731 = vadd.f32 %v4298, %v4730
        %v4732 = vpop.f32.mrb[0].mxu0
        %v4733 = vpop.f32.mrb[0].mxu0
        %v4734 = vadd.f32 %v4301, %v4733
        %v4735 = vpop.f32.mrb[0].mxu0
        %4736 = vmatprep.mubr.bf16.mxu0 %v3511
        %4737 = vmatmul.mubr.bf16.gmra.mrb[0].mxu0 %v3471
        %v4738 = vpop.f32.mrb[0].mxu0
        %v4739 = vadd.f32 %v4306, %v4738
        %v4740 = vpop.f32.mrb[0].mxu0
        %v4741 = vpop.f32.mrb[0].mxu0
        %v4742 = vadd.f32 %v4309, %v4741
        %v4743 = vpop.f32.mrb[0].mxu0
        %4744 = vmatprep.mubr.bf16.mxu0 %v3512
        %4745 = vmatmul.mubr.bf16.gmra.mrb[0].mxu0 %v3472
        %v4746 = vpop.f32.mrb[0].mxu0
        %v4747 = vadd.f32 %v4314, %v4746
        %v4748 = vpop.f32.mrb[0].mxu0
        %v4749 = vpop.f32.mrb[0].mxu0
        %v4750 = vadd.f32 %v4317, %v4749
        %v4751 = vpop.f32.mrb[0].mxu0
        %4752 = vmatprep.mubr.bf16.mxu0 %v3515
        %4753 = vmatmul.mubr.bf16.gmra.mrb[0].mxu0 %v3475
        %v4754 = vpop.f32.mrb[0].mxu0
        %v4755 = vadd.f32 %v4322, %v4754
        %v4756 = vpop.f32.mrb[0].mxu0
        %v4757 = vpop.f32.mrb[0].mxu0
        %v4758 = vadd.f32 %v4325, %v4757
        %v4759 = vpop.f32.mrb[0].mxu0
        %4760 = vmatprep.mubr.bf16.mxu0 %v3516
        %4761 = vmatmul.mubr.bf16.gmra.mrb[0].mxu0 %v3476
        %v4762 = vpop.f32.mrb[0].mxu0
        %v4763 = vadd.f32 %v4330, %v4762
        %v4764 = vpop.f32.mrb[0].mxu0
        %v4765 = vpop.f32.mrb[0].mxu0
        %v4766 = vadd.f32 %v4333, %v4765
        %v4767 = vpop.f32.mrb[0].mxu0
        %4768 = vmatprep.mubr.bf16.mxu0 %v3517
        %4769 = vmatmul.mubr.bf16.gmra.mrb[0].mxu0 %v3477
        %v4770 = vpop.f32.mrb[0].mxu0
        %v4771 = vadd.f32 %v4338, %v4770
        %v4772 = vpop.f32.mrb[0].mxu0
        %v4773 = vpop.f32.mrb[0].mxu0
        %v4774 = vadd.f32 %v4341, %v4773
        %v4775 = vpop.f32.mrb[0].mxu0
        %4776 = vmatprep.mubr.bf16.mxu0 %v3518
        %4777 = vmatmul.mubr.bf16.gmra.mrb[0].mxu0 %v3478
        %v4778 = vpop.f32.mrb[0].mxu0
        %v4779 = vadd.f32 %v4346, %v4778
        %v4780 = vpop.f32.mrb[0].mxu0
        %v4781 = vpop.f32.mrb[0].mxu0
        %v4782 = vadd.f32 %v4349, %v4781
        %v4783 = vpop.f32.mrb[0].mxu0
        %4784 = vmatprep.mubr.bf16.mxu0 %v3519
        %4785 = vmatmul.mubr.bf16.gmra.mrb[0].mxu0 %v3479
        %v4786 = vpop.f32.mrb[0].mxu0
        %v4787 = vadd.f32 %v4354, %v4786
        %v4788 = vpop.f32.mrb[0].mxu0
        %v4789 = vpop.f32.mrb[0].mxu0
        %v4790 = vadd.f32 %v4357, %v4789
        %v4791 = vpop.f32.mrb[0].mxu0
        %4792 = vmatprep.mubr.bf16.mxu0 %v3520
        %4793 = vmatmul.mubr.bf16.gmra.mrb[0].mxu0 %v3480
        %v4794 = vpop.f32.mrb[0].mxu0
        %v4795 = vadd.f32 %v4362, %v4794
        %v4796 = vpop.f32.mrb[0].mxu0
        %v4797 = vpop.f32.mrb[0].mxu0
        %v4798 = vadd.f32 %v4365, %v4797
        %v4799 = vpop.f32.mrb[0].mxu0
        %4800 = vmatprep.mubr.bf16.mxu0 %v3521
        %4801 = vmatmul.mubr.bf16.gmra.mrb[0].mxu0 %v3481
        %v4802 = vpop.f32.mrb[0].mxu0
        %v4803 = vadd.f32 %v4370, %v4802
        %v4804 = vpop.f32.mrb[0].mxu0
        %v4805 = vpop.f32.mrb[0].mxu0
        %v4806 = vadd.f32 %v4373, %v4805
        %v4807 = vpop.f32.mrb[0].mxu0
        %4808 = vmatprep.mubr.bf16.mxu0 %v3522
        %4809 = vmatmul.mubr.bf16.gmra.mrb[0].mxu0 %v3482
        %v4810 = vpop.f32.mrb[0].mxu0
        %v4811 = vadd.f32 %v4378, %v4810
        %v4812 = vpop.f32.mrb[0].mxu0
        %v4813 = vpop.f32.mrb[0].mxu0
        %v4814 = vadd.f32 %v4381, %v4813
        %v4815 = vpop.f32.mrb[0].mxu0
        %4816 = vdwg.mxu0
        %4817 = vmatprep.subr.bf16.mxu0 0
        %4818 = vmatpush1.bf16.msra.mxu0 %v4496
        %4819 = vmatprep.subr.bf16.mxu0 0
        %4820 = vmatpush1.bf16.msra.mxu0 %v4497
        %4821 = vmatprep.subr.bf16.mxu0 0
        %4822 = vmatpush1.bf16.msra.mxu0 %v4498
        %4823 = vmatprep.subr.bf16.mxu0 0
        %4824 = vmatpush1.bf16.msra.mxu0 %v4499
        %4825 = vmatprep.subr.bf16.mxu0 0
        %4826 = vmatpush1.bf16.msra.mxu0 %v4500
        %4827 = vmatprep.subr.bf16.mxu0 0
        %4828 = vmatpush1.bf16.msra.mxu0 %v4501
        %4829 = vmatprep.subr.bf16.mxu0 0
        %4830 = vmatpush1.bf16.msra.mxu0 %v4502
        %4831 = vmatprep.subr.bf16.mxu0 0
        %4832 = vmatpush1.bf16.msra.mxu0 %v4503
        %4833 = vmatprep.subr.bf16.mxu0 0
        %4834 = vmatpush1.bf16.msra.mxu0 0
        %4835 = vmatprep.subr.bf16.mxu0 0
        %4836 = vmatpush1.bf16.msra.mxu0 0
        %4837 = vmatprep.subr.bf16.mxu0 0
        %4838 = vmatpush1.bf16.msra.mxu0 0
        %4839 = vmatprep.subr.bf16.mxu0 0
        %4840 = vmatpush1.bf16.msra.mxu0 0
        %4841 = vmatprep.subr.bf16.mxu0 0
        %4842 = vmatpush1.bf16.msra.mxu0 0
        %4843 = vmatprep.subr.bf16.mxu0 0
        %4844 = vmatpush1.bf16.msra.mxu0 0
        %4845 = vmatprep.subr.bf16.mxu0 0
        %4846 = vmatpush1.bf16.msra.mxu0 0
        %4847 = vmatprep.subr.bf16.mxu0 0
        %4848 = vmatpush1.bf16.msra.mxu0 0
        %4849 = vmatprep.mubr.bf16.mxu0 0
        %4850 = vmatmul.mubr.bf16.gmra.mrb[0].mxu0 %v3525
        %v4851 = vpop.f32.mrb[0].mxu0
        %v4852 = vadd.f32 %v4563, %v4851
        %v4853 = vpop.f32.mrb[0].mxu0
        %v4854 = vpop.f32.mrb[0].mxu0
        %v4855 = vadd.f32 %v4566, %v4854
        %v4856 = vpop.f32.mrb[0].mxu0
        %4857 = vmatprep.mubr.bf16.mxu0 0
        %4858 = vmatmul.mubr.bf16.gmra.mrb[0].mxu0 %v3526
        %v4859 = vpop.f32.mrb[0].mxu0
        %v4860 = vadd.f32 %v4571, %v4859
        %v4861 = vpop.f32.mrb[0].mxu0
        %v4862 = vpop.f32.mrb[0].mxu0
        %v4863 = vadd.f32 %v4574, %v4862
        %v4864 = vpop.f32.mrb[0].mxu0
        %4865 = vmatprep.mubr.bf16.mxu0 0
        %4866 = vmatmul.mubr.bf16.gmra.mrb[0].mxu0 %v3527
        %v4867 = vpop.f32.mrb[0].mxu0
        %v4868 = vadd.f32 %v4579, %v4867
        %v4869 = vpop.f32.mrb[0].mxu0
        %v4870 = vpop.f32.mrb[0].mxu0
        %v4871 = vadd.f32 %v4582, %v4870
        %v4872 = vpop.f32.mrb[0].mxu0
        %4873 = vmatprep.mubr.bf16.mxu0 0
        %4874 = vmatmul.mubr.bf16.gmra.mrb[0].mxu0 %v3528
        %v4875 = vpop.f32.mrb[0].mxu0
        %v4876 = vadd.f32 %v4587, %v4875
        %v4877 = vpop.f32.mrb[0].mxu0
        %v4878 = vpop.f32.mrb[0].mxu0
        %v4879 = vadd.f32 %v4590, %v4878
        %v4880 = vpop.f32.mrb[0].mxu0
        %4881 = vmatprep.mubr.bf16.mxu0 0
        %4882 = vmatmul.mubr.bf16.gmra.mrb[0].mxu0 %v3529
        %v4883 = vpop.f32.mrb[0].mxu0
        %v4884 = vadd.f32 %v4595, %v4883
        %v4885 = vpop.f32.mrb[0].mxu0
        %v4886 = vpop.f32.mrb[0].mxu0
        %v4887 = vadd.f32 %v4598, %v4886
        %v4888 = vpop.f32.mrb[0].mxu0
        %4889 = vmatprep.mubr.bf16.mxu0 0
        %4890 = vmatmul.mubr.bf16.gmra.mrb[0].mxu0 %v3530
        %v4891 = vpop.f32.mrb[0].mxu0
        %v4892 = vadd.f32 %v4603, %v4891
        %v4893 = vpop.f32.mrb[0].mxu0
        %v4894 = vpop.f32.mrb[0].mxu0
        %v4895 = vadd.f32 %v4606, %v4894
        %v4896 = vpop.f32.mrb[0].mxu0
        %4897 = vmatprep.mubr.bf16.mxu0 0
        %4898 = vmatmul.mubr.bf16.gmra.mrb[0].mxu0 %v3531
        %v4899 = vpop.f32.mrb[0].mxu0
        %v4900 = vadd.f32 %v4611, %v4899
        %v4901 = vpop.f32.mrb[0].mxu0
        %v4902 = vpop.f32.mrb[0].mxu0
        %v4903 = vadd.f32 %v4614, %v4902
        %v4904 = vpop.f32.mrb[0].mxu0
        %4905 = vmatprep.mubr.bf16.mxu0 0
        %4906 = vmatmul.mubr.bf16.gmra.mrb[0].mxu0 %v3532
        %v4907 = vpop.f32.mrb[0].mxu0
        %v4908 = vadd.f32 %v4619, %v4907
        %v4909 = vpop.f32.mrb[0].mxu0
        %v4910 = vpop.f32.mrb[0].mxu0
        %v4911 = vadd.f32 %v4622, %v4910
        %v4912 = vpop.f32.mrb[0].mxu0
        %4913 = vmatprep.mubr.bf16.mxu0 0
        %4914 = vmatmul.mubr.bf16.gmra.mrb[0].mxu0 %v3535
        %v4915 = vpop.f32.mrb[0].mxu0
        %v4916 = vadd.f32 %v4627, %v4915
        %v4917 = vpop.f32.mrb[0].mxu0
        %v4918 = vpop.f32.mrb[0].mxu0
        %v4919 = vadd.f32 %v4630, %v4918
        %v4920 = vpop.f32.mrb[0].mxu0
        %4921 = vmatprep.mubr.bf16.mxu0 0
        %4922 = vmatmul.mubr.bf16.gmra.mrb[0].mxu0 %v3536
        %v4923 = vpop.f32.mrb[0].mxu0
        %v4924 = vadd.f32 %v4635, %v4923
        %v4925 = vpop.f32.mrb[0].mxu0
        %v4926 = vpop.f32.mrb[0].mxu0
        %v4927 = vadd.f32 %v4638, %v4926
        %v4928 = vpop.f32.mrb[0].mxu0
        %4929 = vmatprep.mubr.bf16.mxu0 0
        %4930 = vmatmul.mubr.bf16.gmra.mrb[0].mxu0 %v3537
        %v4931 = vpop.f32.mrb[0].mxu0
        %v4932 = vadd.f32 %v4643, %v4931
        %v4933 = vpop.f32.mrb[0].mxu0
        %v4934 = vpop.f32.mrb[0].mxu0
        %v4935 = vadd.f32 %v4646, %v4934
        %v4936 = vpop.f32.mrb[0].mxu0
        %4937 = vmatprep.mubr.bf16.mxu0 0
        %4938 = vmatmul.mubr.bf16.gmra.mrb[0].mxu0 %v3538
        %v4939 = vpop.f32.mrb[0].mxu0
        %v4940 = vadd.f32 %v4651, %v4939
        %v4941 = vpop.f32.mrb[0].mxu0
        %v4942 = vpop.f32.mrb[0].mxu0
        %v4943 = vadd.f32 %v4654, %v4942
        %v4944 = vpop.f32.mrb[0].mxu0
        %4945 = vmatprep.mubr.bf16.mxu0 0
        %4946 = vmatmul.mubr.bf16.gmra.mrb[0].mxu0 %v3539
        %v4947 = vpop.f32.mrb[0].mxu0
        %v4948 = vadd.f32 %v4659, %v4947
        %v4949 = vpop.f32.mrb[0].mxu0
        %v4950 = vpop.f32.mrb[0].mxu0
        %v4951 = vadd.f32 %v4662, %v4950
        %v4952 = vpop.f32.mrb[0].mxu0
        %4953 = vmatprep.mubr.bf16.mxu0 0
        %4954 = vmatmul.mubr.bf16.gmra.mrb[0].mxu0 %v3540
        %v4955 = vpop.f32.mrb[0].mxu0
        %v4956 = vadd.f32 %v4667, %v4955
        %v4957 = vpop.f32.mrb[0].mxu0
        %v4958 = vpop.f32.mrb[0].mxu0
        %v4959 = vadd.f32 %v4670, %v4958
        %v4960 = vpop.f32.mrb[0].mxu0
        %4961 = vmatprep.mubr.bf16.mxu0 0
        %4962 = vmatmul.mubr.bf16.gmra.mrb[0].mxu0 %v3541
        %v4963 = vpop.f32.mrb[0].mxu0
        %v4964 = vadd.f32 %v4675, %v4963
        %v4965 = vpop.f32.mrb[0].mxu0
        %v4966 = vpop.f32.mrb[0].mxu0
        %v4967 = vadd.f32 %v4678, %v4966
        %v4968 = vpop.f32.mrb[0].mxu0
        %4969 = vmatprep.mubr.bf16.mxu0 0
        %4970 = vmatmul.mubr.bf16.gmra.mrb[0].mxu0 %v3542
        %v4971 = vpop.f32.mrb[0].mxu0
        %v4972 = vadd.f32 %v4683, %v4971
        %v4973 = vpop.f32.mrb[0].mxu0
        %v4974 = vpop.f32.mrb[0].mxu0
        %v4975 = vadd.f32 %v4686, %v4974
        %v4976 = vpop.f32.mrb[0].mxu0
        %4977 = vmatprep.mubr.bf16.mxu0 0
        %4978 = vmatmul.mubr.bf16.gmra.mrb[0].mxu0 %v3545
        %v4979 = vpop.f32.mrb[0].mxu0
        %v4980 = vadd.f32 %v4691, %v4979
        %v4981 = vpop.f32.mrb[0].mxu0
        %v4982 = vpop.f32.mrb[0].mxu0
        %v4983 = vadd.f32 %v4694, %v4982
        %v4984 = vpop.f32.mrb[0].mxu0
        %4985 = vmatprep.mubr.bf16.mxu0 0
        %4986 = vmatmul.mubr.bf16.gmra.mrb[0].mxu0 %v3546
        %v4987 = vpop.f32.mrb[0].mxu0
        %v4988 = vadd.f32 %v4699, %v4987
        %v4989 = vpop.f32.mrb[0].mxu0
        %v4990 = vpop.f32.mrb[0].mxu0
        %v4991 = vadd.f32 %v4702, %v4990
        %v4992 = vpop.f32.mrb[0].mxu0
        %4993 = vmatprep.mubr.bf16.mxu0 0
        %4994 = vmatmul.mubr.bf16.gmra.mrb[0].mxu0 %v3547
        %v4995 = vpop.f32.mrb[0].mxu0
        %v4996 = vadd.f32 %v4707, %v4995
        %v4997 = vpop.f32.mrb[0].mxu0
        %v4998 = vpop.f32.mrb[0].mxu0
        %v4999 = vadd.f32 %v4710, %v4998
        %v5000 = vpop.f32.mrb[0].mxu0
        %5001 = vmatprep.mubr.bf16.mxu0 0
        %5002 = vmatmul.mubr.bf16.gmra.mrb[0].mxu0 %v3548
        %v5003 = vpop.f32.mrb[0].mxu0
        %v5004 = vadd.f32 %v4715, %v5003
        %v5005 = vpop.f32.mrb[0].mxu0
        %v5006 = vpop.f32.mrb[0].mxu0
        %v5007 = vadd.f32 %v4718, %v5006
        %v5008 = vpop.f32.mrb[0].mxu0
        %5009 = vmatprep.mubr.bf16.mxu0 0
        %5010 = vmatmul.mubr.bf16.gmra.mrb[0].mxu0 %v3549
        %v5011 = vpop.f32.mrb[0].mxu0
        %v5012 = vadd.f32 %v4723, %v5011
        %v5013 = vpop.f32.mrb[0].mxu0
        %v5014 = vpop.f32.mrb[0].mxu0
        %v5015 = vadd.f32 %v4726, %v5014
        %v5016 = vpop.f32.mrb[0].mxu0
        %5017 = vmatprep.mubr.bf16.mxu0 0
        %5018 = vmatmul.mubr.bf16.gmra.mrb[0].mxu0 %v3550
        %v5019 = vpop.f32.mrb[0].mxu0
        %v5020 = vadd.f32 %v4731, %v5019
        %v5021 = vpop.f32.mrb[0].mxu0
        %v5022 = vpop.f32.mrb[0].mxu0
        %v5023 = vadd.f32 %v4734, %v5022
        %v5024 = vpop.f32.mrb[0].mxu0
        %5025 = vmatprep.mubr.bf16.mxu0 0
        %5026 = vmatmul.mubr.bf16.gmra.mrb[0].mxu0 %v3551
        %v5027 = vpop.f32.mrb[0].mxu0
        %v5028 = vadd.f32 %v4739, %v5027
        %v5029 = vpop.f32.mrb[0].mxu0
        %v5030 = vpop.f32.mrb[0].mxu0
        %v5031 = vadd.f32 %v4742, %v5030
        %v5032 = vpop.f32.mrb[0].mxu0
        %5033 = vmatprep.mubr.bf16.mxu0 0
        %5034 = vmatmul.mubr.bf16.gmra.mrb[0].mxu0 %v3552
        %v5035 = vpop.f32.mrb[0].mxu0
        %v5036 = vadd.f32 %v4747, %v5035
        %v5037 = vpop.f32.mrb[0].mxu0
        %v5038 = vpop.f32.mrb[0].mxu0
        %v5039 = vadd.f32 %v4750, %v5038
        %v5040 = vpop.f32.mrb[0].mxu0
        %5041 = vmatprep.mubr.bf16.mxu0 0
        %5042 = vmatmul.mubr.bf16.gmra.mrb[0].mxu0 %v3555
        %v5043 = vpop.f32.mrb[0].mxu0
        %v5044 = vadd.f32 %v4755, %v5043
        %v5045 = vpop.f32.mrb[0].mxu0
        %v5046 = vpop.f32.mrb[0].mxu0
        %v5047 = vadd.f32 %v4758, %v5046
        %v5048 = vpop.f32.mrb[0].mxu0
        %5049 = vmatprep.mubr.bf16.mxu0 0
        %5050 = vmatmul.mubr.bf16.gmra.mrb[0].mxu0 %v3556
        %v5051 = vpop.f32.mrb[0].mxu0
        %v5052 = vadd.f32 %v4763, %v5051
        %v5053 = vpop.f32.mrb[0].mxu0
        %v5054 = vpop.f32.mrb[0].mxu0
        %v5055 = vadd.f32 %v4766, %v5054
        %v5056 = vpop.f32.mrb[0].mxu0
        %5057 = vmatprep.mubr.bf16.mxu0 0
        %5058 = vmatmul.mubr.bf16.gmra.mrb[0].mxu0 %v3557
        %v5059 = vpop.f32.mrb[0].mxu0
        %v5060 = vadd.f32 %v4771, %v5059
        %v5061 = vpop.f32.mrb[0].mxu0
        %v5062 = vpop.f32.mrb[0].mxu0
        %v5063 = vadd.f32 %v4774, %v5062
        %v5064 = vpop.f32.mrb[0].mxu0
        %5065 = vmatprep.mubr.bf16.mxu0 0
        %5066 = vmatmul.mubr.bf16.gmra.mrb[0].mxu0 %v3558
        %v5067 = vpop.f32.mrb[0].mxu0
        %v5068 = vadd.f32 %v4779, %v5067
        %v5069 = vpop.f32.mrb[0].mxu0
        %v5070 = vpop.f32.mrb[0].mxu0
        %v5071 = vadd.f32 %v4782, %v5070
        %v5072 = vpop.f32.mrb[0].mxu0
        %5073 = vmatprep.mubr.bf16.mxu0 0
        %5074 = vmatmul.mubr.bf16.gmra.mrb[0].mxu0 %v3559
        %v5075 = vpop.f32.mrb[0].mxu0
        %v5076 = vadd.f32 %v4787, %v5075
        %v5077 = vpop.f32.mrb[0].mxu0
        %v5078 = vpop.f32.mrb[0].mxu0
        %v5079 = vadd.f32 %v4790, %v5078
        %v5080 = vpop.f32.mrb[0].mxu0
        %5081 = vmatprep.mubr.bf16.mxu0 0
        %5082 = vmatmul.mubr.bf16.gmra.mrb[0].mxu0 %v3560
        %v5083 = vpop.f32.mrb[0].mxu0
        %v5084 = vadd.f32 %v4795, %v5083
        %v5085 = vpop.f32.mrb[0].mxu0
        %v5086 = vpop.f32.mrb[0].mxu0
        %v5087 = vadd.f32 %v4798, %v5086
        %v5088 = vpop.f32.mrb[0].mxu0
        %5089 = vmatprep.mubr.bf16.mxu0 0
        %5090 = vmatmul.mubr.bf16.gmra.mrb[0].mxu0 %v3561
        %v5091 = vpop.f32.mrb[0].mxu0
        %v5092 = vadd.f32 %v4803, %v5091
        %v5093 = vpop.f32.mrb[0].mxu0
        %v5094 = vpop.f32.mrb[0].mxu0
        %v5095 = vadd.f32 %v4806, %v5094
        %v5096 = vpop.f32.mrb[0].mxu0
        %5097 = vmatprep.mubr.bf16.mxu0 0
        %5098 = vmatmul.mubr.bf16.gmra.mrb[0].mxu0 %v3562
        %v5099 = vpop.f32.mrb[0].mxu0
        %v5100 = vadd.f32 %v4811, %v5099
        %v5101 = vpop.f32.mrb[0].mxu0
        %v5102 = vpop.f32.mrb[0].mxu0
        %v5103 = vadd.f32 %v4814, %v5102
        %v5104 = vpop.f32.mrb[0].mxu0
        %5105 = vdwg.mxu0
        %s5106 = scalar_lea.vmem [#allocation8], 384
        %v5107 = vld [vmem:[%s5106] sm:$0xf]
        %v5108 = vld [vmem:[%s5106 + $0x4] sm:$0xf]
        %v5109 = vld [vmem:[%s5106 + $0x8] sm:$0xf]
        %v5110 = vld [vmem:[%s5106 + $0xc] sm:$0xf]
        %v5111 = vld [vmem:[%s5106 + $0x10] sm:$0xf]
        %v5112 = vld [vmem:[%s5106 + $0x14] sm:$0xf]
        %v5113 = vld [vmem:[%s5106 + $0x18] sm:$0xf]
        %v5114 = vld [vmem:[%s5106 + $0x1c] sm:$0xf]
        %v5115 = vld [vmem:[%s5106 + $0x20] sm:$0xf]
        %v5116 = vld [vmem:[%s5106 + $0x24] sm:$0xf]
        %v5117 = vld [vmem:[%s5106 + $0x28] sm:$0xf]
        %v5118 = vld [vmem:[%s5106 + $0x2c] sm:$0xf]
        %v5119 = vld [vmem:[%s5106 + $0x30] sm:$0xf]
        %v5120 = vld [vmem:[%s5106 + $0x34] sm:$0xf]
        %v5121 = vld [vmem:[%s5106 + $0x38] sm:$0xf]
        %v5122 = vld [vmem:[%s5106 + $0x3c] sm:$0xf]
        %v5123 = vld [vmem:[%s5106 + $0x40] sm:$0xf]
        %v5124 = vld [vmem:[%s5106 + $0x44] sm:$0xf]
        %v5125 = vld [vmem:[%s5106 + $0x48] sm:$0xf]
        %v5126 = vld [vmem:[%s5106 + $0x4c] sm:$0xf]
        %v5127 = vld [vmem:[%s5106 + $0x50] sm:$0xf]
        %v5128 = vld [vmem:[%s5106 + $0x54] sm:$0xf]
        %v5129 = vld [vmem:[%s5106 + $0x58] sm:$0xf]
        %v5130 = vld [vmem:[%s5106 + $0x5c] sm:$0xf]
        %v5131 = vld [vmem:[%s5106 + $0x60] sm:$0xf]
        %v5132 = vld [vmem:[%s5106 + $0x64] sm:$0xf]
        %v5133 = vld [vmem:[%s5106 + $0x68] sm:$0xf]
        %v5134 = vld [vmem:[%s5106 + $0x6c] sm:$0xf]
        %v5135 = vld [vmem:[%s5106 + $0x70] sm:$0xf]
        %v5136 = vld [vmem:[%s5106 + $0x74] sm:$0xf]
        %v5137 = vld [vmem:[%s5106 + $0x78] sm:$0xf]
        %v5138 = vld [vmem:[%s5106 + $0x7c] sm:$0xf]
        %v5139 = vld [vmem:[%s5106 + $0x80] sm:$0xf]
        %v5140 = vld [vmem:[%s5106 + $0x84] sm:$0xf]
        %v5141 = vld [vmem:[%s5106 + $0x88] sm:$0xf]
        %v5142 = vld [vmem:[%s5106 + $0x8c] sm:$0xf]
        %v5143 = vld [vmem:[%s5106 + $0x90] sm:$0xf]
        %v5144 = vld [vmem:[%s5106 + $0x94] sm:$0xf]
        %v5145 = vld [vmem:[%s5106 + $0x98] sm:$0xf]
        %v5146 = vld [vmem:[%s5106 + $0x9c] sm:$0xf]
        %v5147 = vld [vmem:[%s5106 + $0xa0] sm:$0xf]
        %v5148 = vld [vmem:[%s5106 + $0xa4] sm:$0xf]
        %v5149 = vld [vmem:[%s5106 + $0xa8] sm:$0xf]
        %v5150 = vld [vmem:[%s5106 + $0xac] sm:$0xf]
        %v5151 = vld [vmem:[%s5106 + $0xb0] sm:$0xf]
        %v5152 = vld [vmem:[%s5106 + $0xb4] sm:$0xf]
        %v5153 = vld [vmem:[%s5106 + $0xb8] sm:$0xf]
        %v5154 = vld [vmem:[%s5106 + $0xbc] sm:$0xf]
        %v5203 = vunpack.c.l.b16 %v5107
        %v5204 = vunpack.c.l.b16 %v5108
        %v5205 = vunpack.c.l.b16 %v5109
        %v5206 = vunpack.c.l.b16 %v5110
        %v5207 = vunpack.c.l.b16 %v5111
        %v5208 = vunpack.c.l.b16 %v5112
        %v5209 = vunpack.c.l.b16 %v5113
        %v5210 = vunpack.c.l.b16 %v5114
        %v5211 = vunpack.c.l.b16 %v5115
        %v5212 = vunpack.c.l.b16 %v5116
        %v5213 = vunpack.c.l.b16 %v5117
        %v5214 = vunpack.c.l.b16 %v5118
        %v5215 = vunpack.c.l.b16 %v5119
        %v5216 = vunpack.c.l.b16 %v5120
        %v5217 = vunpack.c.l.b16 %v5121
        %v5218 = vunpack.c.l.b16 %v5122
        %v5219 = vunpack.c.l.b16 %v5123
        %v5220 = vunpack.c.l.b16 %v5124
        %v5221 = vunpack.c.l.b16 %v5125
        %v5222 = vunpack.c.l.b16 %v5126
        %v5223 = vunpack.c.l.b16 %v5127
        %v5224 = vunpack.c.l.b16 %v5128
        %v5225 = vunpack.c.l.b16 %v5129
        %v5226 = vunpack.c.l.b16 %v5130
        %v5227 = vunpack.c.l.b16 %v5131
        %v5228 = vunpack.c.l.b16 %v5132
        %v5229 = vunpack.c.l.b16 %v5133
        %v5230 = vunpack.c.l.b16 %v5134
        %v5231 = vunpack.c.l.b16 %v5135
        %v5232 = vunpack.c.l.b16 %v5136
        %v5233 = vunpack.c.l.b16 %v5137
        %v5234 = vunpack.c.l.b16 %v5138
        %v5235 = vunpack.c.l.b16 %v5139
        %v5236 = vunpack.c.l.b16 %v5140
        %v5237 = vunpack.c.l.b16 %v5141
        %v5238 = vunpack.c.l.b16 %v5142
        %v5239 = vunpack.c.l.b16 %v5143
        %v5240 = vunpack.c.l.b16 %v5144
        %v5241 = vunpack.c.l.b16 %v5145
        %v5242 = vunpack.c.l.b16 %v5146
        %v5243 = vunpack.c.l.b16 %v5147
        %v5244 = vunpack.c.l.b16 %v5148
        %v5245 = vunpack.c.l.b16 %v5149
        %v5246 = vunpack.c.l.b16 %v5150
        %v5247 = vunpack.c.l.b16 %v5151
        %v5248 = vunpack.c.l.b16 %v5152
        %v5249 = vunpack.c.l.b16 %v5153
        %v5250 = vunpack.c.l.b16 %v5154
        %v5251 = vpack.c.b16 %v5204, %v5203
        %v5252 = vpack.c.b16 %v5206, %v5205
        %v5253 = vpack.c.b16 %v5208, %v5207
        %v5254 = vpack.c.b16 %v5210, %v5209
        %v5255 = vpack.c.b16 %v5212, %v5211
        %v5256 = vpack.c.b16 %v5214, %v5213
        %v5257 = vpack.c.b16 %v5216, %v5215
        %v5258 = vpack.c.b16 %v5218, %v5217
        %v5259 = vpack.c.b16 %v5220, %v5219
        %v5260 = vpack.c.b16 %v5222, %v5221
        %v5261 = vpack.c.b16 %v5224, %v5223
        %v5262 = vpack.c.b16 %v5226, %v5225
        %v5263 = vpack.c.b16 %v5228, %v5227
        %v5264 = vpack.c.b16 %v5230, %v5229
        %v5265 = vpack.c.b16 %v5232, %v5231
        %v5266 = vpack.c.b16 %v5234, %v5233
        %v5267 = vpack.c.b16 %v5236, %v5235
        %v5268 = vpack.c.b16 %v5238, %v5237
        %v5269 = vpack.c.b16 %v5240, %v5239
        %v5270 = vpack.c.b16 %v5242, %v5241
        %v5271 = vpack.c.b16 %v5244, %v5243
        %v5272 = vpack.c.b16 %v5246, %v5245
        %v5273 = vpack.c.b16 %v5248, %v5247
        %v5274 = vpack.c.b16 %v5250, %v5249
        %5299 = vmatprep.subr.bf16.mxu0 0
        %5300 = vmatpush1.bf16.msra.mxu0 %v5251
        %5301 = vmatprep.subr.bf16.mxu0 0
        %5302 = vmatpush1.bf16.msra.mxu0 %v5252
        %5303 = vmatprep.subr.bf16.mxu0 0
        %5304 = vmatpush1.bf16.msra.mxu0 %v5253
        %5305 = vmatprep.subr.bf16.mxu0 0
        %5306 = vmatpush1.bf16.msra.mxu0 %v5254
        %5307 = vmatprep.subr.bf16.mxu0 0
        %5308 = vmatpush1.bf16.msra.mxu0 %v5255
        %5309 = vmatprep.subr.bf16.mxu0 0
        %5310 = vmatpush1.bf16.msra.mxu0 %v5256
        %5311 = vmatprep.subr.bf16.mxu0 0
        %5312 = vmatpush1.bf16.msra.mxu0 %v5257
        %5313 = vmatprep.subr.bf16.mxu0 0
        %5314 = vmatpush1.bf16.msra.mxu0 %v5258
        %5315 = vmatprep.subr.bf16.mxu0 0
        %5316 = vmatpush1.bf16.msra.mxu0 %v5259
        %5317 = vmatprep.subr.bf16.mxu0 0
        %5318 = vmatpush1.bf16.msra.mxu0 %v5260
        %5319 = vmatprep.subr.bf16.mxu0 0
        %5320 = vmatpush1.bf16.msra.mxu0 %v5261
        %5321 = vmatprep.subr.bf16.mxu0 0
        %5322 = vmatpush1.bf16.msra.mxu0 %v5262
        %5323 = vmatprep.subr.bf16.mxu0 0
        %5324 = vmatpush1.bf16.msra.mxu0 %v5263
        %5325 = vmatprep.subr.bf16.mxu0 0
        %5326 = vmatpush1.bf16.msra.mxu0 %v5264
        %5327 = vmatprep.subr.bf16.mxu0 0
        %5328 = vmatpush1.bf16.msra.mxu0 %v5265
        %5329 = vmatprep.subr.bf16.mxu0 0
        %5330 = vmatpush1.bf16.msra.mxu0 %v5266
        %5331 = vmatprep.mubr.bf16.mxu0 %v3487
        %5332 = vmatmul.mubr.bf16.gmra.mrb[0].mxu0 %v3447
        %v5333 = vpop.f32.mrb[0].mxu0
        %v5334 = vadd.f32 0.0, %v5333
        %v5335 = vpop.f32.mrb[0].mxu0
        %v5336 = vpop.f32.mrb[0].mxu0
        %v5337 = vadd.f32 0.0, %v5336
        %v5338 = vpop.f32.mrb[0].mxu0
        %5339 = vmatprep.mubr.bf16.mxu0 %v3488
        %5340 = vmatmul.mubr.bf16.gmra.mrb[0].mxu0 %v3448
        %v5341 = vpop.f32.mrb[0].mxu0
        %v5342 = vadd.f32 0.0, %v5341
        %v5343 = vpop.f32.mrb[0].mxu0
        %v5344 = vpop.f32.mrb[0].mxu0
        %v5345 = vadd.f32 0.0, %v5344
        %v5346 = vpop.f32.mrb[0].mxu0
        %5347 = vmatprep.mubr.bf16.mxu0 %v3489
        %5348 = vmatmul.mubr.bf16.gmra.mrb[0].mxu0 %v3449
        %v5349 = vpop.f32.mrb[0].mxu0
        %v5350 = vadd.f32 0.0, %v5349
        %v5351 = vpop.f32.mrb[0].mxu0
        %v5352 = vpop.f32.mrb[0].mxu0
        %v5353 = vadd.f32 0.0, %v5352
        %v5354 = vpop.f32.mrb[0].mxu0
        %5355 = vmatprep.mubr.bf16.mxu0 %v3490
        %5356 = vmatmul.mubr.bf16.gmra.mrb[0].mxu0 %v3450
        %v5357 = vpop.f32.mrb[0].mxu0
        %v5358 = vadd.f32 0.0, %v5357
        %v5359 = vpop.f32.mrb[0].mxu0
        %v5360 = vpop.f32.mrb[0].mxu0
        %v5361 = vadd.f32 0.0, %v5360
        %v5362 = vpop.f32.mrb[0].mxu0
        %5363 = vmatprep.mubr.bf16.mxu0 %v3491
        %5364 = vmatmul.mubr.bf16.gmra.mrb[0].mxu0 %v3451
        %v5365 = vpop.f32.mrb[0].mxu0
        %v5366 = vadd.f32 0.0, %v5365
        %v5367 = vpop.f32.mrb[0].mxu0
        %v5368 = vpop.f32.mrb[0].mxu0
        %v5369 = vadd.f32 0.0, %v5368
        %v5370 = vpop.f32.mrb[0].mxu0
        %5371 = vmatprep.mubr.bf16.mxu0 %v3492
        %5372 = vmatmul.mubr.bf16.gmra.mrb[0].mxu0 %v3452
        %v5373 = vpop.f32.mrb[0].mxu0
        %v5374 = vadd.f32 0.0, %v5373
        %v5375 = vpop.f32.mrb[0].mxu0
        %v5376 = vpop.f32.mrb[0].mxu0
        %v5377 = vadd.f32 0.0, %v5376
        %v5378 = vpop.f32.mrb[0].mxu0
        %5379 = vmatprep.mubr.bf16.mxu0 %v3493
        %5380 = vmatmul.mubr.bf16.gmra.mrb[0].mxu0 %v3453
        %v5381 = vpop.f32.mrb[0].mxu0
        %v5382 = vadd.f32 0.0, %v5381
        %v5383 = vpop.f32.mrb[0].mxu0
        %v5384 = vpop.f32.mrb[0].mxu0
        %v5385 = vadd.f32 0.0, %v5384
        %v5386 = vpop.f32.mrb[0].mxu0
        %5387 = vmatprep.mubr.bf16.mxu0 %v3494
        %5388 = vmatmul.mubr.bf16.gmra.mrb[0].mxu0 %v3454
        %v5389 = vpop.f32.mrb[0].mxu0
        %v5390 = vadd.f32 0.0, %v5389
        %v5391 = vpop.f32.mrb[0].mxu0
        %v5392 = vpop.f32.mrb[0].mxu0
        %v5393 = vadd.f32 0.0, %v5392
        %v5394 = vpop.f32.mrb[0].mxu0
        %5395 = vmatprep.mubr.bf16.mxu0 %v3497
        %5396 = vmatmul.mubr.bf16.gmra.mrb[0].mxu0 %v3457
        %v5397 = vpop.f32.mrb[0].mxu0
        %v5398 = vadd.f32 0.0, %v5397
        %v5399 = vpop.f32.mrb[0].mxu0
        %v5400 = vpop.f32.mrb[0].mxu0
        %v5401 = vadd.f32 0.0, %v5400
        %v5402 = vpop.f32.mrb[0].mxu0
        %5403 = vmatprep.mubr.bf16.mxu0 %v3498
        %5404 = vmatmul.mubr.bf16.gmra.mrb[0].mxu0 %v3458
        %v5405 = vpop.f32.mrb[0].mxu0
        %v5406 = vadd.f32 0.0, %v5405
        %v5407 = vpop.f32.mrb[0].mxu0
        %v5408 = vpop.f32.mrb[0].mxu0
        %v5409 = vadd.f32 0.0, %v5408
        %v5410 = vpop.f32.mrb[0].mxu0
        %5411 = vmatprep.mubr.bf16.mxu0 %v3499
        %5412 = vmatmul.mubr.bf16.gmra.mrb[0].mxu0 %v3459
        %v5413 = vpop.f32.mrb[0].mxu0
        %v5414 = vadd.f32 0.0, %v5413
        %v5415 = vpop.f32.mrb[0].mxu0
        %v5416 = vpop.f32.mrb[0].mxu0
        %v5417 = vadd.f32 0.0, %v5416
        %v5418 = vpop.f32.mrb[0].mxu0
        %5419 = vmatprep.mubr.bf16.mxu0 %v3500
        %5420 = vmatmul.mubr.bf16.gmra.mrb[0].mxu0 %v3460
        %v5421 = vpop.f32.mrb[0].mxu0
        %v5422 = vadd.f32 0.0, %v5421
        %v5423 = vpop.f32.mrb[0].mxu0
        %v5424 = vpop.f32.mrb[0].mxu0
        %v5425 = vadd.f32 0.0, %v5424
        %v5426 = vpop.f32.mrb[0].mxu0
        %5427 = vmatprep.mubr.bf16.mxu0 %v3501
        %5428 = vmatmul.mubr.bf16.gmra.mrb[0].mxu0 %v3461
        %v5429 = vpop.f32.mrb[0].mxu0
        %v5430 = vadd.f32 0.0, %v5429
        %v5431 = vpop.f32.mrb[0].mxu0
        %v5432 = vpop.f32.mrb[0].mxu0
        %v5433 = vadd.f32 0.0, %v5432
        %v5434 = vpop.f32.mrb[0].mxu0
        %5435 = vmatprep.mubr.bf16.mxu0 %v3502
        %5436 = vmatmul.mubr.bf16.gmra.mrb[0].mxu0 %v3462
        %v5437 = vpop.f32.mrb[0].mxu0
        %v5438 = vadd.f32 0.0, %v5437
        %v5439 = vpop.f32.mrb[0].mxu0
        %v5440 = vpop.f32.mrb[0].mxu0
        %v5441 = vadd.f32 0.0, %v5440
        %v5442 = vpop.f32.mrb[0].mxu0
        %5443 = vmatprep.mubr.bf16.mxu0 %v3503
        %5444 = vmatmul.mubr.bf16.gmra.mrb[0].mxu0 %v3463
        %v5445 = vpop.f32.mrb[0].mxu0
        %v5446 = vadd.f32 0.0, %v5445
        %v5447 = vpop.f32.mrb[0].mxu0
        %v5448 = vpop.f32.mrb[0].mxu0
        %v5449 = vadd.f32 0.0, %v5448
        %v5450 = vpop.f32.mrb[0].mxu0
        %5451 = vmatprep.mubr.bf16.mxu0 %v3504
        %5452 = vmatmul.mubr.bf16.gmra.mrb[0].mxu0 %v3464
        %v5453 = vpop.f32.mrb[0].mxu0
        %v5454 = vadd.f32 0.0, %v5453
        %v5455 = vpop.f32.mrb[0].mxu0
        %v5456 = vpop.f32.mrb[0].mxu0
        %v5457 = vadd.f32 0.0, %v5456
        %v5458 = vpop.f32.mrb[0].mxu0
        %5459 = vmatprep.mubr.bf16.mxu0 %v3507
        %5460 = vmatmul.mubr.bf16.gmra.mrb[0].mxu0 %v3467
        %v5461 = vpop.f32.mrb[0].mxu0
        %v5462 = vadd.f32 0.0, %v5461
        %v5463 = vpop.f32.mrb[0].mxu0
        %v5464 = vpop.f32.mrb[0].mxu0
        %v5465 = vadd.f32 0.0, %v5464
        %v5466 = vpop.f32.mrb[0].mxu0
        %5467 = vmatprep.mubr.bf16.mxu0 %v3508
        %5468 = vmatmul.mubr.bf16.gmra.mrb[0].mxu0 %v3468
        %v5469 = vpop.f32.mrb[0].mxu0
        %v5470 = vadd.f32 0.0, %v5469
        %v5471 = vpop.f32.mrb[0].mxu0
        %v5472 = vpop.f32.mrb[0].mxu0
        %v5473 = vadd.f32 0.0, %v5472
        %v5474 = vpop.f32.mrb[0].mxu0
        %5475 = vmatprep.mubr.bf16.mxu0 %v3509
        %5476 = vmatmul.mubr.bf16.gmra.mrb[0].mxu0 %v3469
        %v5477 = vpop.f32.mrb[0].mxu0
        %v5478 = vadd.f32 0.0, %v5477
        %v5479 = vpop.f32.mrb[0].mxu0
        %v5480 = vpop.f32.mrb[0].mxu0
        %v5481 = vadd.f32 0.0, %v5480
        %v5482 = vpop.f32.mrb[0].mxu0
        %5483 = vmatprep.mubr.bf16.mxu0 %v3510
        %5484 = vmatmul.mubr.bf16.gmra.mrb[0].mxu0 %v3470
        %v5485 = vpop.f32.mrb[0].mxu0
        %v5486 = vadd.f32 0.0, %v5485
        %v5487 = vpop.f32.mrb[0].mxu0
        %v5488 = vpop.f32.mrb[0].mxu0
        %v5489 = vadd.f32 0.0, %v5488
        %v5490 = vpop.f32.mrb[0].mxu0
        %5491 = vmatprep.mubr.bf16.mxu0 %v3511
        %5492 = vmatmul.mubr.bf16.gmra.mrb[0].mxu0 %v3471
        %v5493 = vpop.f32.mrb[0].mxu0
        %v5494 = vadd.f32 0.0, %v5493
        %v5495 = vpop.f32.mrb[0].mxu0
        %v5496 = vpop.f32.mrb[0].mxu0
        %v5497 = vadd.f32 0.0, %v5496
        %v5498 = vpop.f32.mrb[0].mxu0
        %5499 = vmatprep.mubr.bf16.mxu0 %v3512
        %5500 = vmatmul.mubr.bf16.gmra.mrb[0].mxu0 %v3472
        %v5501 = vpop.f32.mrb[0].mxu0
        %v5502 = vadd.f32 0.0, %v5501
        %v5503 = vpop.f32.mrb[0].mxu0
        %v5504 = vpop.f32.mrb[0].mxu0
        %v5505 = vadd.f32 0.0, %v5504
        %v5506 = vpop.f32.mrb[0].mxu0
        %5507 = vmatprep.mubr.bf16.mxu0 %v3513
        %5508 = vmatmul.mubr.bf16.gmra.mrb[0].mxu0 %v3473
        %v5509 = vpop.f32.mrb[0].mxu0
        %v5510 = vadd.f32 0.0, %v5509
        %v5511 = vpop.f32.mrb[0].mxu0
        %v5512 = vpop.f32.mrb[0].mxu0
        %v5513 = vadd.f32 0.0, %v5512
        %v5514 = vpop.f32.mrb[0].mxu0
        %5515 = vmatprep.mubr.bf16.mxu0 %v3514
        %5516 = vmatmul.mubr.bf16.gmra.mrb[0].mxu0 %v3474
        %v5517 = vpop.f32.mrb[0].mxu0
        %v5518 = vadd.f32 0.0, %v5517
        %v5519 = vpop.f32.mrb[0].mxu0
        %v5520 = vpop.f32.mrb[0].mxu0
        %v5521 = vadd.f32 0.0, %v5520
        %v5522 = vpop.f32.mrb[0].mxu0
        %5523 = vmatprep.mubr.bf16.mxu0 %v3517
        %5524 = vmatmul.mubr.bf16.gmra.mrb[0].mxu0 %v3477
        %v5525 = vpop.f32.mrb[0].mxu0
        %v5526 = vadd.f32 0.0, %v5525
        %v5527 = vpop.f32.mrb[0].mxu0
        %v5528 = vpop.f32.mrb[0].mxu0
        %v5529 = vadd.f32 0.0, %v5528
        %v5530 = vpop.f32.mrb[0].mxu0
        %5531 = vmatprep.mubr.bf16.mxu0 %v3518
        %5532 = vmatmul.mubr.bf16.gmra.mrb[0].mxu0 %v3478
        %v5533 = vpop.f32.mrb[0].mxu0
        %v5534 = vadd.f32 0.0, %v5533
        %v5535 = vpop.f32.mrb[0].mxu0
        %v5536 = vpop.f32.mrb[0].mxu0
        %v5537 = vadd.f32 0.0, %v5536
        %v5538 = vpop.f32.mrb[0].mxu0
        %5539 = vmatprep.mubr.bf16.mxu0 %v3519
        %5540 = vmatmul.mubr.bf16.gmra.mrb[0].mxu0 %v3479
        %v5541 = vpop.f32.mrb[0].mxu0
        %v5542 = vadd.f32 0.0, %v5541
        %v5543 = vpop.f32.mrb[0].mxu0
        %v5544 = vpop.f32.mrb[0].mxu0
        %v5545 = vadd.f32 0.0, %v5544
        %v5546 = vpop.f32.mrb[0].mxu0
        %5547 = vmatprep.mubr.bf16.mxu0 %v3520
        %5548 = vmatmul.mubr.bf16.gmra.mrb[0].mxu0 %v3480
        %v5549 = vpop.f32.mrb[0].mxu0
        %v5550 = vadd.f32 0.0, %v5549
        %v5551 = vpop.f32.mrb[0].mxu0
        %v5552 = vpop.f32.mrb[0].mxu0
        %v5553 = vadd.f32 0.0, %v5552
        %v5554 = vpop.f32.mrb[0].mxu0
        %5555 = vmatprep.mubr.bf16.mxu0 %v3521
        %5556 = vmatmul.mubr.bf16.gmra.mrb[0].mxu0 %v3481
        %v5557 = vpop.f32.mrb[0].mxu0
        %v5558 = vadd.f32 0.0, %v5557
        %v5559 = vpop.f32.mrb[0].mxu0
        %v5560 = vpop.f32.mrb[0].mxu0
        %v5561 = vadd.f32 0.0, %v5560
        %v5562 = vpop.f32.mrb[0].mxu0
        %5563 = vmatprep.mubr.bf16.mxu0 %v3522
        %5564 = vmatmul.mubr.bf16.gmra.mrb[0].mxu0 %v3482
        %v5565 = vpop.f32.mrb[0].mxu0
        %v5566 = vadd.f32 0.0, %v5565
        %v5567 = vpop.f32.mrb[0].mxu0
        %v5568 = vpop.f32.mrb[0].mxu0
        %v5569 = vadd.f32 0.0, %v5568
        %v5570 = vpop.f32.mrb[0].mxu0
        %5571 = vmatprep.mubr.bf16.mxu0 %v3523
        %5572 = vmatmul.mubr.bf16.gmra.mrb[0].mxu0 %v3483
        %v5573 = vpop.f32.mrb[0].mxu0
        %v5574 = vadd.f32 0.0, %v5573
        %v5575 = vpop.f32.mrb[0].mxu0
        %v5576 = vpop.f32.mrb[0].mxu0
        %v5577 = vadd.f32 0.0, %v5576
        %v5578 = vpop.f32.mrb[0].mxu0
        %5579 = vmatprep.mubr.bf16.mxu0 %v3524
        %5580 = vmatmul.mubr.bf16.gmra.mrb[0].mxu0 %v3484
        %v5581 = vpop.f32.mrb[0].mxu0
        %v5582 = vadd.f32 0.0, %v5581
        %v5583 = vpop.f32.mrb[0].mxu0
        %v5584 = vpop.f32.mrb[0].mxu0
        %v5585 = vadd.f32 0.0, %v5584
        %v5586 = vpop.f32.mrb[0].mxu0
        %5587 = vdwg.mxu0
        %5588 = vmatprep.subr.bf16.mxu0 0
        %5589 = vmatpush1.bf16.msra.mxu0 %v5267
        %5590 = vmatprep.subr.bf16.mxu0 0
        %5591 = vmatpush1.bf16.msra.mxu0 %v5268
        %5592 = vmatprep.subr.bf16.mxu0 0
        %5593 = vmatpush1.bf16.msra.mxu0 %v5269
        %5594 = vmatprep.subr.bf16.mxu0 0
        %5595 = vmatpush1.bf16.msra.mxu0 %v5270
        %5596 = vmatprep.subr.bf16.mxu0 0
        %5597 = vmatpush1.bf16.msra.mxu0 %v5271
        %5598 = vmatprep.subr.bf16.mxu0 0
        %5599 = vmatpush1.bf16.msra.mxu0 %v5272
        %5600 = vmatprep.subr.bf16.mxu0 0
        %5601 = vmatpush1.bf16.msra.mxu0 %v5273
        %5602 = vmatprep.subr.bf16.mxu0 0
        %5603 = vmatpush1.bf16.msra.mxu0 %v5274
        %5604 = vmatprep.subr.bf16.mxu0 0
        %5605 = vmatpush1.bf16.msra.mxu0 0
        %5606 = vmatprep.subr.bf16.mxu0 0
        %5607 = vmatpush1.bf16.msra.mxu0 0
        %5608 = vmatprep.subr.bf16.mxu0 0
        %5609 = vmatpush1.bf16.msra.mxu0 0
        %5610 = vmatprep.subr.bf16.mxu0 0
        %5611 = vmatpush1.bf16.msra.mxu0 0
        %5612 = vmatprep.subr.bf16.mxu0 0
        %5613 = vmatpush1.bf16.msra.mxu0 0
        %5614 = vmatprep.subr.bf16.mxu0 0
        %5615 = vmatpush1.bf16.msra.mxu0 0
        %5616 = vmatprep.subr.bf16.mxu0 0
        %5617 = vmatpush1.bf16.msra.mxu0 0
        %5618 = vmatprep.subr.bf16.mxu0 0
        %5619 = vmatpush1.bf16.msra.mxu0 0
        %5620 = vmatprep.mubr.bf16.mxu0 0
        %5621 = vmatmul.mubr.bf16.gmra.mrb[0].mxu0 %v3527
        %v5622 = vpop.f32.mrb[0].mxu0
        %v5623 = vadd.f32 %v5334, %v5622
        %v5624 = vpop.f32.mrb[0].mxu0
        %v5625 = vpop.f32.mrb[0].mxu0
        %v5626 = vadd.f32 %v5337, %v5625
        %v5627 = vpop.f32.mrb[0].mxu0
        %5628 = vmatprep.mubr.bf16.mxu0 0
        %5629 = vmatmul.mubr.bf16.gmra.mrb[0].mxu0 %v3528
        %v5630 = vpop.f32.mrb[0].mxu0
        %v5631 = vadd.f32 %v5342, %v5630
        %v5632 = vpop.f32.mrb[0].mxu0
        %v5633 = vpop.f32.mrb[0].mxu0
        %v5634 = vadd.f32 %v5345, %v5633
        %v5635 = vpop.f32.mrb[0].mxu0
        %5636 = vmatprep.mubr.bf16.mxu0 0
        %5637 = vmatmul.mubr.bf16.gmra.mrb[0].mxu0 %v3529
        %v5638 = vpop.f32.mrb[0].mxu0
        %v5639 = vadd.f32 %v5350, %v5638
        %v5640 = vpop.f32.mrb[0].mxu0
        %v5641 = vpop.f32.mrb[0].mxu0
        %v5642 = vadd.f32 %v5353, %v5641
        %v5643 = vpop.f32.mrb[0].mxu0
        %5644 = vmatprep.mubr.bf16.mxu0 0
        %5645 = vmatmul.mubr.bf16.gmra.mrb[0].mxu0 %v3530
        %v5646 = vpop.f32.mrb[0].mxu0
        %v5647 = vadd.f32 %v5358, %v5646
        %v5648 = vpop.f32.mrb[0].mxu0
        %v5649 = vpop.f32.mrb[0].mxu0
        %v5650 = vadd.f32 %v5361, %v5649
        %v5651 = vpop.f32.mrb[0].mxu0
        %5652 = vmatprep.mubr.bf16.mxu0 0
        %5653 = vmatmul.mubr.bf16.gmra.mrb[0].mxu0 %v3531
        %v5654 = vpop.f32.mrb[0].mxu0
        %v5655 = vadd.f32 %v5366, %v5654
        %v5656 = vpop.f32.mrb[0].mxu0
        %v5657 = vpop.f32.mrb[0].mxu0
        %v5658 = vadd.f32 %v5369, %v5657
        %v5659 = vpop.f32.mrb[0].mxu0
        %5660 = vmatprep.mubr.bf16.mxu0 0
        %5661 = vmatmul.mubr.bf16.gmra.mrb[0].mxu0 %v3532
        %v5662 = vpop.f32.mrb[0].mxu0
        %v5663 = vadd.f32 %v5374, %v5662
        %v5664 = vpop.f32.mrb[0].mxu0
        %v5665 = vpop.f32.mrb[0].mxu0
        %v5666 = vadd.f32 %v5377, %v5665
        %v5667 = vpop.f32.mrb[0].mxu0
        %5668 = vmatprep.mubr.bf16.mxu0 0
        %5669 = vmatmul.mubr.bf16.gmra.mrb[0].mxu0 %v3533
        %v5670 = vpop.f32.mrb[0].mxu0
        %v5671 = vadd.f32 %v5382, %v5670
        %v5672 = vpop.f32.mrb[0].mxu0
        %v5673 = vpop.f32.mrb[0].mxu0
        %v5674 = vadd.f32 %v5385, %v5673
        %v5675 = vpop.f32.mrb[0].mxu0
        %5676 = vmatprep.mubr.bf16.mxu0 0
        %5677 = vmatmul.mubr.bf16.gmra.mrb[0].mxu0 %v3534
        %v5678 = vpop.f32.mrb[0].mxu0
        %v5679 = vadd.f32 %v5390, %v5678
        %v5680 = vpop.f32.mrb[0].mxu0
        %v5681 = vpop.f32.mrb[0].mxu0
        %v5682 = vadd.f32 %v5393, %v5681
        %v5683 = vpop.f32.mrb[0].mxu0
        %5684 = vmatprep.mubr.bf16.mxu0 0
        %5685 = vmatmul.mubr.bf16.gmra.mrb[0].mxu0 %v3537
        %v5686 = vpop.f32.mrb[0].mxu0
        %v5687 = vadd.f32 %v5398, %v5686
        %v5688 = vpop.f32.mrb[0].mxu0
        %v5689 = vpop.f32.mrb[0].mxu0
        %v5690 = vadd.f32 %v5401, %v5689
        %v5691 = vpop.f32.mrb[0].mxu0
        %5692 = vmatprep.mubr.bf16.mxu0 0
        %5693 = vmatmul.mubr.bf16.gmra.mrb[0].mxu0 %v3538
        %v5694 = vpop.f32.mrb[0].mxu0
        %v5695 = vadd.f32 %v5406, %v5694
        %v5696 = vpop.f32.mrb[0].mxu0
        %v5697 = vpop.f32.mrb[0].mxu0
        %v5698 = vadd.f32 %v5409, %v5697
        %v5699 = vpop.f32.mrb[0].mxu0
        %5700 = vmatprep.mubr.bf16.mxu0 0
        %5701 = vmatmul.mubr.bf16.gmra.mrb[0].mxu0 %v3539
        %v5702 = vpop.f32.mrb[0].mxu0
        %v5703 = vadd.f32 %v5414, %v5702
        %v5704 = vpop.f32.mrb[0].mxu0
        %v5705 = vpop.f32.mrb[0].mxu0
        %v5706 = vadd.f32 %v5417, %v5705
        %v5707 = vpop.f32.mrb[0].mxu0
        %5708 = vmatprep.mubr.bf16.mxu0 0
        %5709 = vmatmul.mubr.bf16.gmra.mrb[0].mxu0 %v3540
        %v5710 = vpop.f32.mrb[0].mxu0
        %v5711 = vadd.f32 %v5422, %v5710
        %v5712 = vpop.f32.mrb[0].mxu0
        %v5713 = vpop.f32.mrb[0].mxu0
        %v5714 = vadd.f32 %v5425, %v5713
        %v5715 = vpop.f32.mrb[0].mxu0
        %5716 = vmatprep.mubr.bf16.mxu0 0
        %5717 = vmatmul.mubr.bf16.gmra.mrb[0].mxu0 %v3541
        %v5718 = vpop.f32.mrb[0].mxu0
        %v5719 = vadd.f32 %v5430, %v5718
        %v5720 = vpop.f32.mrb[0].mxu0
        %v5721 = vpop.f32.mrb[0].mxu0
        %v5722 = vadd.f32 %v5433, %v5721
        %v5723 = vpop.f32.mrb[0].mxu0
        %5724 = vmatprep.mubr.bf16.mxu0 0
        %5725 = vmatmul.mubr.bf16.gmra.mrb[0].mxu0 %v3542
        %v5726 = vpop.f32.mrb[0].mxu0
        %v5727 = vadd.f32 %v5438, %v5726
        %v5728 = vpop.f32.mrb[0].mxu0
        %v5729 = vpop.f32.mrb[0].mxu0
        %v5730 = vadd.f32 %v5441, %v5729
        %v5731 = vpop.f32.mrb[0].mxu0
        %5732 = vmatprep.mubr.bf16.mxu0 0
        %5733 = vmatmul.mubr.bf16.gmra.mrb[0].mxu0 %v3543
        %v5734 = vpop.f32.mrb[0].mxu0
        %v5735 = vadd.f32 %v5446, %v5734
        %v5736 = vpop.f32.mrb[0].mxu0
        %v5737 = vpop.f32.mrb[0].mxu0
        %v5738 = vadd.f32 %v5449, %v5737
        %v5739 = vpop.f32.mrb[0].mxu0
        %5740 = vmatprep.mubr.bf16.mxu0 0
        %5741 = vmatmul.mubr.bf16.gmra.mrb[0].mxu0 %v3544
        %v5742 = vpop.f32.mrb[0].mxu0
        %v5743 = vadd.f32 %v5454, %v5742
        %v5744 = vpop.f32.mrb[0].mxu0
        %v5745 = vpop.f32.mrb[0].mxu0
        %v5746 = vadd.f32 %v5457, %v5745
        %v5747 = vpop.f32.mrb[0].mxu0
        %5748 = vmatprep.mubr.bf16.mxu0 0
        %5749 = vmatmul.mubr.bf16.gmra.mrb[0].mxu0 %v3547
        %v5750 = vpop.f32.mrb[0].mxu0
        %v5751 = vadd.f32 %v5462, %v5750
        %v5752 = vpop.f32.mrb[0].mxu0
        %v5753 = vpop.f32.mrb[0].mxu0
        %v5754 = vadd.f32 %v5465, %v5753
        %v5755 = vpop.f32.mrb[0].mxu0
        %5756 = vmatprep.mubr.bf16.mxu0 0
        %5757 = vmatmul.mubr.bf16.gmra.mrb[0].mxu0 %v3548
        %v5758 = vpop.f32.mrb[0].mxu0
        %v5759 = vadd.f32 %v5470, %v5758
        %v5760 = vpop.f32.mrb[0].mxu0
        %v5761 = vpop.f32.mrb[0].mxu0
        %v5762 = vadd.f32 %v5473, %v5761
        %v5763 = vpop.f32.mrb[0].mxu0
        %5764 = vmatprep.mubr.bf16.mxu0 0
        %5765 = vmatmul.mubr.bf16.gmra.mrb[0].mxu0 %v3549
        %v5766 = vpop.f32.mrb[0].mxu0
        %v5767 = vadd.f32 %v5478, %v5766
        %v5768 = vpop.f32.mrb[0].mxu0
        %v5769 = vpop.f32.mrb[0].mxu0
        %v5770 = vadd.f32 %v5481, %v5769
        %v5771 = vpop.f32.mrb[0].mxu0
        %5772 = vmatprep.mubr.bf16.mxu0 0
        %5773 = vmatmul.mubr.bf16.gmra.mrb[0].mxu0 %v3550
        %v5774 = vpop.f32.mrb[0].mxu0
        %v5775 = vadd.f32 %v5486, %v5774
        %v5776 = vpop.f32.mrb[0].mxu0
        %v5777 = vpop.f32.mrb[0].mxu0
        %v5778 = vadd.f32 %v5489, %v5777
        %v5779 = vpop.f32.mrb[0].mxu0
        %5780 = vmatprep.mubr.bf16.mxu0 0
        %5781 = vmatmul.mubr.bf16.gmra.mrb[0].mxu0 %v3551
        %v5782 = vpop.f32.mrb[0].mxu0
        %v5783 = vadd.f32 %v5494, %v5782
        %v5784 = vpop.f32.mrb[0].mxu0
        %v5785 = vpop.f32.mrb[0].mxu0
        %v5786 = vadd.f32 %v5497, %v5785
        %v5787 = vpop.f32.mrb[0].mxu0
        %5788 = vmatprep.mubr.bf16.mxu0 0
        %5789 = vmatmul.mubr.bf16.gmra.mrb[0].mxu0 %v3552
        %v5790 = vpop.f32.mrb[0].mxu0
        %v5791 = vadd.f32 %v5502, %v5790
        %v5792 = vpop.f32.mrb[0].mxu0
        %v5793 = vpop.f32.mrb[0].mxu0
        %v5794 = vadd.f32 %v5505, %v5793
        %v5795 = vpop.f32.mrb[0].mxu0
        %5796 = vmatprep.mubr.bf16.mxu0 0
        %5797 = vmatmul.mubr.bf16.gmra.mrb[0].mxu0 %v3553
        %v5798 = vpop.f32.mrb[0].mxu0
        %v5799 = vadd.f32 %v5510, %v5798
        %v5800 = vpop.f32.mrb[0].mxu0
        %v5801 = vpop.f32.mrb[0].mxu0
        %v5802 = vadd.f32 %v5513, %v5801
        %v5803 = vpop.f32.mrb[0].mxu0
        %5804 = vmatprep.mubr.bf16.mxu0 0
        %5805 = vmatmul.mubr.bf16.gmra.mrb[0].mxu0 %v3554
        %v5806 = vpop.f32.mrb[0].mxu0
        %v5807 = vadd.f32 %v5518, %v5806
        %v5808 = vpop.f32.mrb[0].mxu0
        %v5809 = vpop.f32.mrb[0].mxu0
        %v5810 = vadd.f32 %v5521, %v5809
        %v5811 = vpop.f32.mrb[0].mxu0
        %5812 = vmatprep.mubr.bf16.mxu0 0
        %5813 = vmatmul.mubr.bf16.gmra.mrb[0].mxu0 %v3557
        %v5814 = vpop.f32.mrb[0].mxu0
        %v5815 = vadd.f32 %v5526, %v5814
        %v5816 = vpop.f32.mrb[0].mxu0
        %v5817 = vpop.f32.mrb[0].mxu0
        %v5818 = vadd.f32 %v5529, %v5817
        %v5819 = vpop.f32.mrb[0].mxu0
        %5820 = vmatprep.mubr.bf16.mxu0 0
        %5821 = vmatmul.mubr.bf16.gmra.mrb[0].mxu0 %v3558
        %v5822 = vpop.f32.mrb[0].mxu0
        %v5823 = vadd.f32 %v5534, %v5822
        %v5824 = vpop.f32.mrb[0].mxu0
        %v5825 = vpop.f32.mrb[0].mxu0
        %v5826 = vadd.f32 %v5537, %v5825
        %v5827 = vpop.f32.mrb[0].mxu0
        %5828 = vmatprep.mubr.bf16.mxu0 0
        %5829 = vmatmul.mubr.bf16.gmra.mrb[0].mxu0 %v3559
        %v5830 = vpop.f32.mrb[0].mxu0
        %v5831 = vadd.f32 %v5542, %v5830
        %v5832 = vpop.f32.mrb[0].mxu0
        %v5833 = vpop.f32.mrb[0].mxu0
        %v5834 = vadd.f32 %v5545, %v5833
        %v5835 = vpop.f32.mrb[0].mxu0
        %5836 = vmatprep.mubr.bf16.mxu0 0
        %5837 = vmatmul.mubr.bf16.gmra.mrb[0].mxu0 %v3560
        %v5838 = vpop.f32.mrb[0].mxu0
        %v5839 = vadd.f32 %v5550, %v5838
        %v5840 = vpop.f32.mrb[0].mxu0
        %v5841 = vpop.f32.mrb[0].mxu0
        %v5842 = vadd.f32 %v5553, %v5841
        %v5843 = vpop.f32.mrb[0].mxu0
        %5844 = vmatprep.mubr.bf16.mxu0 0
        %5845 = vmatmul.mubr.bf16.gmra.mrb[0].mxu0 %v3561
        %v5846 = vpop.f32.mrb[0].mxu0
        %v5847 = vadd.f32 %v5558, %v5846
        %v5848 = vpop.f32.mrb[0].mxu0
        %v5849 = vpop.f32.mrb[0].mxu0
        %v5850 = vadd.f32 %v5561, %v5849
        %v5851 = vpop.f32.mrb[0].mxu0
        %5852 = vmatprep.mubr.bf16.mxu0 0
        %5853 = vmatmul.mubr.bf16.gmra.mrb[0].mxu0 %v3562
        %v5854 = vpop.f32.mrb[0].mxu0
        %v5855 = vadd.f32 %v5566, %v5854
        %v5856 = vpop.f32.mrb[0].mxu0
        %v5857 = vpop.f32.mrb[0].mxu0
        %v5858 = vadd.f32 %v5569, %v5857
        %v5859 = vpop.f32.mrb[0].mxu0
        %5860 = vmatprep.mubr.bf16.mxu0 0
        %5861 = vmatmul.mubr.bf16.gmra.mrb[0].mxu0 %v3563
        %v5862 = vpop.f32.mrb[0].mxu0
        %v5863 = vadd.f32 %v5574, %v5862
        %v5864 = vpop.f32.mrb[0].mxu0
        %v5865 = vpop.f32.mrb[0].mxu0
        %v5866 = vadd.f32 %v5577, %v5865
        %v5867 = vpop.f32.mrb[0].mxu0
        %5868 = vmatprep.mubr.bf16.mxu0 0
        %5869 = vmatmul.mubr.bf16.gmra.mrb[0].mxu0 %v3564
        %v5870 = vpop.f32.mrb[0].mxu0
        %v5871 = vadd.f32 %v5582, %v5870
        %v5872 = vpop.f32.mrb[0].mxu0
        %v5873 = vpop.f32.mrb[0].mxu0
        %v5874 = vadd.f32 %v5585, %v5873
        %v5875 = vpop.f32.mrb[0].mxu0
        %5876 = vdwg.mxu0
        %v5877 = vadd.f32 %v4852, %v5623
        %v5878 = vadd.f32 %v4855, %v5626
        %v5879 = vadd.f32 %v4860, %v5631
        %v5880 = vadd.f32 %v4863, %v5634
        %v5881 = vadd.f32 %v4868, %v5639
        %v5882 = vadd.f32 %v4871, %v5642
        %v5883 = vadd.f32 %v4876, %v5647
        %v5884 = vadd.f32 %v4879, %v5650
        %v5885 = vadd.f32 %v4884, %v5655
        %v5886 = vadd.f32 %v4887, %v5658
        %v5887 = vadd.f32 %v4892, %v5663
        %v5888 = vadd.f32 %v4895, %v5666
        %v5889 = vadd.f32 %v4900, %v5671
        %v5890 = vadd.f32 %v4903, %v5674
        %v5891 = vadd.f32 %v4908, %v5679
        %v5892 = vadd.f32 %v4911, %v5682
        %v5893 = vadd.f32 %v4916, %v5687
        %v5894 = vadd.f32 %v4919, %v5690
        %v5895 = vadd.f32 %v4924, %v5695
        %v5896 = vadd.f32 %v4927, %v5698
        %v5897 = vadd.f32 %v4932, %v5703
        %v5898 = vadd.f32 %v4935, %v5706
        %v5899 = vadd.f32 %v4940, %v5711
        %v5900 = vadd.f32 %v4943, %v5714
        %v5901 = vadd.f32 %v4948, %v5719
        %v5902 = vadd.f32 %v4951, %v5722
        %v5903 = vadd.f32 %v4956, %v5727
        %v5904 = vadd.f32 %v4959, %v5730
        %v5905 = vadd.f32 %v4964, %v5735
        %v5906 = vadd.f32 %v4967, %v5738
        %v5907 = vadd.f32 %v4972, %v5743
        %v5908 = vadd.f32 %v4975, %v5746
        %v5909 = vadd.f32 %v4980, %v5751
        %v5910 = vadd.f32 %v4983, %v5754
        %v5911 = vadd.f32 %v4988, %v5759
        %v5912 = vadd.f32 %v4991, %v5762
        %v5913 = vadd.f32 %v4996, %v5767
        %v5914 = vadd.f32 %v4999, %v5770
        %v5915 = vadd.f32 %v5004, %v5775
        %v5916 = vadd.f32 %v5007, %v5778
        %v5917 = vadd.f32 %v5012, %v5783
        %v5918 = vadd.f32 %v5015, %v5786
        %v5919 = vadd.f32 %v5020, %v5791
        %v5920 = vadd.f32 %v5023, %v5794
        %v5921 = vadd.f32 %v5028, %v5799
        %v5922 = vadd.f32 %v5031, %v5802
        %v5923 = vadd.f32 %v5036, %v5807
        %v5924 = vadd.f32 %v5039, %v5810
        %v5925 = vadd.f32 %v5044, %v5815
        %v5926 = vadd.f32 %v5047, %v5818
        %v5927 = vadd.f32 %v5052, %v5823
        %v5928 = vadd.f32 %v5055, %v5826
        %v5929 = vadd.f32 %v5060, %v5831
        %v5930 = vadd.f32 %v5063, %v5834
        %v5931 = vadd.f32 %v5068, %v5839
        %v5932 = vadd.f32 %v5071, %v5842
        %v5933 = vadd.f32 %v5076, %v5847
        %v5934 = vadd.f32 %v5079, %v5850
        %v5935 = vadd.f32 %v5084, %v5855
        %v5936 = vadd.f32 %v5087, %v5858
        %v5937 = vadd.f32 %v5092, %v5863
        %v5938 = vadd.f32 %v5095, %v5866
        %v5939 = vadd.f32 %v5100, %v5871
        %v5940 = vadd.f32 %v5103, %v5874
        %v5941 = vld [vmem:[%s7] sm:$0x1]
        %v5943 = vlaneseq
        %v5944 = vshrl.u32 %v5943, 7
        %v5945 = vsub.s32 0, %v5944
        %v5946 = vrot.slane %v5941, %v5945
        %v5948 = vmul.f32 %v5877, %v5946
        %v5949 = vmul.f32 %v5878, %v5946
        %v5950 = vmul.f32 %v5879, %v5946
        %v5951 = vmul.f32 %v5880, %v5946
        %v5952 = vmul.f32 %v5881, %v5946
        %v5953 = vmul.f32 %v5882, %v5946
        %v5954 = vmul.f32 %v5883, %v5946
        %v5955 = vmul.f32 %v5884, %v5946
        %v5956 = vmul.f32 %v5885, %v5946
        %v5957 = vmul.f32 %v5886, %v5946
        %v5958 = vmul.f32 %v5887, %v5946
        %v5959 = vmul.f32 %v5888, %v5946
        %v5960 = vmul.f32 %v5889, %v5946
        %v5961 = vmul.f32 %v5890, %v5946
        %v5962 = vmul.f32 %v5891, %v5946
        %v5963 = vmul.f32 %v5892, %v5946
        %v5964 = vmul.f32 %v5893, %v5946
        %v5965 = vmul.f32 %v5894, %v5946
        %v5966 = vmul.f32 %v5895, %v5946
        %v5967 = vmul.f32 %v5896, %v5946
        %v5968 = vmul.f32 %v5897, %v5946
        %v5969 = vmul.f32 %v5898, %v5946
        %v5970 = vmul.f32 %v5899, %v5946
        %v5971 = vmul.f32 %v5900, %v5946
        %v5972 = vmul.f32 %v5901, %v5946
        %v5973 = vmul.f32 %v5902, %v5946
        %v5974 = vmul.f32 %v5903, %v5946
        %v5975 = vmul.f32 %v5904, %v5946
        %v5976 = vmul.f32 %v5905, %v5946
        %v5977 = vmul.f32 %v5906, %v5946
        %v5978 = vmul.f32 %v5907, %v5946
        %v5979 = vmul.f32 %v5908, %v5946
        %v5980 = vmul.f32 %v5909, %v5946
        %v5981 = vmul.f32 %v5910, %v5946
        %v5982 = vmul.f32 %v5911, %v5946
        %v5983 = vmul.f32 %v5912, %v5946
        %v5984 = vmul.f32 %v5913, %v5946
        %v5985 = vmul.f32 %v5914, %v5946
        %v5986 = vmul.f32 %v5915, %v5946
        %v5987 = vmul.f32 %v5916, %v5946
        %v5988 = vmul.f32 %v5917, %v5946
        %v5989 = vmul.f32 %v5918, %v5946
        %v5990 = vmul.f32 %v5919, %v5946
        %v5991 = vmul.f32 %v5920, %v5946
        %v5992 = vmul.f32 %v5921, %v5946
        %v5993 = vmul.f32 %v5922, %v5946
        %v5994 = vmul.f32 %v5923, %v5946
        %v5995 = vmul.f32 %v5924, %v5946
        %v5996 = vmul.f32 %v5925, %v5946
        %v5997 = vmul.f32 %v5926, %v5946
        %v5998 = vmul.f32 %v5927, %v5946
        %v5999 = vmul.f32 %v5928, %v5946
        %v6000 = vmul.f32 %v5929, %v5946
        %v6001 = vmul.f32 %v5930, %v5946
        %v6002 = vmul.f32 %v5931, %v5946
        %v6003 = vmul.f32 %v5932, %v5946
        %v6004 = vmul.f32 %v5933, %v5946
        %v6005 = vmul.f32 %v5934, %v5946
        %v6006 = vmul.f32 %v5935, %v5946
        %v6007 = vmul.f32 %v5936, %v5946
        %v6008 = vmul.f32 %v5937, %v5946
        %v6009 = vmul.f32 %v5938, %v5946
        %v6010 = vmul.f32 %v5939, %v5946
        %v6011 = vmul.f32 %v5940, %v5946
        %v6012 = vld [vmem:[%s8] sm:$0x1]
        %v6014 = vlaneseq
        %v6015 = vshrl.u32 %v6014, 7
        %v6016 = vsub.s32 0, %v6015
        %v6017 = vrot.slane %v6012, %v6016
        %v6019 = vadd.f32 %v5948, %v6017
        %v6020 = vadd.f32 %v5949, %v6017
        %v6021 = vadd.f32 %v5950, %v6017
        %v6022 = vadd.f32 %v5951, %v6017
        %v6023 = vadd.f32 %v5952, %v6017
        %v6024 = vadd.f32 %v5953, %v6017
        %v6025 = vadd.f32 %v5954, %v6017
        %v6026 = vadd.f32 %v5955, %v6017
        %v6027 = vadd.f32 %v5956, %v6017
        %v6028 = vadd.f32 %v5957, %v6017
        %v6029 = vadd.f32 %v5958, %v6017
        %v6030 = vadd.f32 %v5959, %v6017
        %v6031 = vadd.f32 %v5960, %v6017
        %v6032 = vadd.f32 %v5961, %v6017
        %v6033 = vadd.f32 %v5962, %v6017
        %v6034 = vadd.f32 %v5963, %v6017
        %v6035 = vadd.f32 %v5964, %v6017
        %v6036 = vadd.f32 %v5965, %v6017
        %v6037 = vadd.f32 %v5966, %v6017
        %v6038 = vadd.f32 %v5967, %v6017
        %v6039 = vadd.f32 %v5968, %v6017
        %v6040 = vadd.f32 %v5969, %v6017
        %v6041 = vadd.f32 %v5970, %v6017
        %v6042 = vadd.f32 %v5971, %v6017
        %v6043 = vadd.f32 %v5972, %v6017
        %v6044 = vadd.f32 %v5973, %v6017
        %v6045 = vadd.f32 %v5974, %v6017
        %v6046 = vadd.f32 %v5975, %v6017
        %v6047 = vadd.f32 %v5976, %v6017
        %v6048 = vadd.f32 %v5977, %v6017
        %v6049 = vadd.f32 %v5978, %v6017
        %v6050 = vadd.f32 %v5979, %v6017
        %v6051 = vadd.f32 %v5980, %v6017
        %v6052 = vadd.f32 %v5981, %v6017
        %v6053 = vadd.f32 %v5982, %v6017
        %v6054 = vadd.f32 %v5983, %v6017
        %v6055 = vadd.f32 %v5984, %v6017
        %v6056 = vadd.f32 %v5985, %v6017
        %v6057 = vadd.f32 %v5986, %v6017
        %v6058 = vadd.f32 %v5987, %v6017
        %v6059 = vadd.f32 %v5988, %v6017
        %v6060 = vadd.f32 %v5989, %v6017
        %v6061 = vadd.f32 %v5990, %v6017
        %v6062 = vadd.f32 %v5991, %v6017
        %v6063 = vadd.f32 %v5992, %v6017
        %v6064 = vadd.f32 %v5993, %v6017
        %v6065 = vadd.f32 %v5994, %v6017
        %v6066 = vadd.f32 %v5995, %v6017
        %v6067 = vadd.f32 %v5996, %v6017
        %v6068 = vadd.f32 %v5997, %v6017
        %v6069 = vadd.f32 %v5998, %v6017
        %v6070 = vadd.f32 %v5999, %v6017
        %v6071 = vadd.f32 %v6000, %v6017
        %v6072 = vadd.f32 %v6001, %v6017
        %v6073 = vadd.f32 %v6002, %v6017
        %v6074 = vadd.f32 %v6003, %v6017
        %v6075 = vadd.f32 %v6004, %v6017
        %v6076 = vadd.f32 %v6005, %v6017
        %v6077 = vadd.f32 %v6006, %v6017
        %v6078 = vadd.f32 %v6007, %v6017
        %v6079 = vadd.f32 %v6008, %v6017
        %v6080 = vadd.f32 %v6009, %v6017
        %v6081 = vadd.f32 %v6010, %v6017
        %v6082 = vadd.f32 %v6011, %v6017
        %v6083 = vmax.f32 %v6019, 0.0
        %v6084 = vmax.f32 %v6020, 0.0
        %v6085 = vmax.f32 %v6021, 0.0
        %v6086 = vmax.f32 %v6022, 0.0
        %v6087 = vmax.f32 %v6023, 0.0
        %v6088 = vmax.f32 %v6024, 0.0
        %v6089 = vmax.f32 %v6025, 0.0
        %v6090 = vmax.f32 %v6026, 0.0
        %v6091 = vmax.f32 %v6027, 0.0
        %v6092 = vmax.f32 %v6028, 0.0
        %v6093 = vmax.f32 %v6029, 0.0
        %v6094 = vmax.f32 %v6030, 0.0
        %v6095 = vmax.f32 %v6031, 0.0
        %v6096 = vmax.f32 %v6032, 0.0
        %v6097 = vmax.f32 %v6033, 0.0
        %v6098 = vmax.f32 %v6034, 0.0
        %v6099 = vmax.f32 %v6035, 0.0
        %v6100 = vmax.f32 %v6036, 0.0
        %v6101 = vmax.f32 %v6037, 0.0
        %v6102 = vmax.f32 %v6038, 0.0
        %v6103 = vmax.f32 %v6039, 0.0
        %v6104 = vmax.f32 %v6040, 0.0
        %v6105 = vmax.f32 %v6041, 0.0
        %v6106 = vmax.f32 %v6042, 0.0
        %v6107 = vmax.f32 %v6043, 0.0
        %v6108 = vmax.f32 %v6044, 0.0
        %v6109 = vmax.f32 %v6045, 0.0
        %v6110 = vmax.f32 %v6046, 0.0
        %v6111 = vmax.f32 %v6047, 0.0
        %v6112 = vmax.f32 %v6048, 0.0
        %v6113 = vmax.f32 %v6049, 0.0
        %v6114 = vmax.f32 %v6050, 0.0
        %v6115 = vmax.f32 %v6051, 0.0
        %v6116 = vmax.f32 %v6052, 0.0
        %v6117 = vmax.f32 %v6053, 0.0
        %v6118 = vmax.f32 %v6054, 0.0
        %v6119 = vmax.f32 %v6055, 0.0
        %v6120 = vmax.f32 %v6056, 0.0
        %v6121 = vmax.f32 %v6057, 0.0
        %v6122 = vmax.f32 %v6058, 0.0
        %v6123 = vmax.f32 %v6059, 0.0
        %v6124 = vmax.f32 %v6060, 0.0
        %v6125 = vmax.f32 %v6061, 0.0
        %v6126 = vmax.f32 %v6062, 0.0
        %v6127 = vmax.f32 %v6063, 0.0
        %v6128 = vmax.f32 %v6064, 0.0
        %v6129 = vmax.f32 %v6065, 0.0
        %v6130 = vmax.f32 %v6066, 0.0
        %v6131 = vmax.f32 %v6067, 0.0
        %v6132 = vmax.f32 %v6068, 0.0
        %v6133 = vmax.f32 %v6069, 0.0
        %v6134 = vmax.f32 %v6070, 0.0
        %v6135 = vmax.f32 %v6071, 0.0
        %v6136 = vmax.f32 %v6072, 0.0
        %v6137 = vmax.f32 %v6073, 0.0
        %v6138 = vmax.f32 %v6074, 0.0
        %v6139 = vmax.f32 %v6075, 0.0
        %v6140 = vmax.f32 %v6076, 0.0
        %v6141 = vmax.f32 %v6077, 0.0
        %v6142 = vmax.f32 %v6078, 0.0
        %v6143 = vmax.f32 %v6079, 0.0
        %v6144 = vmax.f32 %v6080, 0.0
        %v6145 = vmax.f32 %v6081, 0.0
        %v6146 = vmax.f32 %v6082, 0.0
        %v6147 = vpack.c.bf16 %v6084, %v6083
        %v6148 = vpack.c.bf16 %v6086, %v6085
        %v6149 = vpack.c.bf16 %v6088, %v6087
        %v6150 = vpack.c.bf16 %v6090, %v6089
        %v6151 = vpack.c.bf16 %v6092, %v6091
        %v6152 = vpack.c.bf16 %v6094, %v6093
        %v6153 = vpack.c.bf16 %v6096, %v6095
        %v6154 = vpack.c.bf16 %v6098, %v6097
        %v6155 = vpack.c.bf16 %v6100, %v6099
        %v6156 = vpack.c.bf16 %v6102, %v6101
        %v6157 = vpack.c.bf16 %v6104, %v6103
        %v6158 = vpack.c.bf16 %v6106, %v6105
        %v6159 = vpack.c.bf16 %v6108, %v6107
        %v6160 = vpack.c.bf16 %v6110, %v6109
        %v6161 = vpack.c.bf16 %v6112, %v6111
        %v6162 = vpack.c.bf16 %v6114, %v6113
        %v6163 = vpack.c.bf16 %v6116, %v6115
        %v6164 = vpack.c.bf16 %v6118, %v6117
        %v6165 = vpack.c.bf16 %v6120, %v6119
        %v6166 = vpack.c.bf16 %v6122, %v6121
        %v6167 = vpack.c.bf16 %v6124, %v6123
        %v6168 = vpack.c.bf16 %v6126, %v6125
        %v6169 = vpack.c.bf16 %v6128, %v6127
        %v6170 = vpack.c.bf16 %v6130, %v6129
        %v6171 = vpack.c.bf16 %v6132, %v6131
        %v6172 = vpack.c.bf16 %v6134, %v6133
        %v6173 = vpack.c.bf16 %v6136, %v6135
        %v6174 = vpack.c.bf16 %v6138, %v6137
        %v6175 = vpack.c.bf16 %v6140, %v6139
        %v6176 = vpack.c.bf16 %v6142, %v6141
        %v6177 = vpack.c.bf16 %v6144, %v6143
        %v6178 = vpack.c.bf16 %v6146, %v6145
        %v6179 = vld [vmem:[%s9] sm:$0xf]
        %v6180 = vld [vmem:[%s9 + $0x4] sm:$0xf]
        %v6181 = vld [vmem:[%s9 + $0x8] sm:$0xf]
        %v6182 = vld [vmem:[%s9 + $0xc] sm:$0xf]
        %v6183 = vld [vmem:[%s9 + $0x10] sm:$0xf]
        %v6184 = vld [vmem:[%s9 + $0x14] sm:$0xf]
        %v6185 = vld [vmem:[%s9 + $0x18] sm:$0xf]
        %v6186 = vld [vmem:[%s9 + $0x1c] sm:$0xf]
        %v6187 = vld [vmem:[%s9 + $0x20] sm:$0xf]
        %v6188 = vld [vmem:[%s9 + $0x24] sm:$0xf]
        %v6189 = vld [vmem:[%s9 + $0x28] sm:$0xf]
        %v6190 = vld [vmem:[%s9 + $0x2c] sm:$0xf]
        %v6191 = vld [vmem:[%s9 + $0x30] sm:$0xf]
        %v6192 = vld [vmem:[%s9 + $0x34] sm:$0xf]
        %v6193 = vld [vmem:[%s9 + $0x38] sm:$0xf]
        %v6194 = vld [vmem:[%s9 + $0x3c] sm:$0xf]
        %v6211 = vunpack.c.l.b16 %v6179
        %v6212 = vunpack.c.l.b16 %v6180
        %v6213 = vunpack.c.l.b16 %v6181
        %v6214 = vunpack.c.l.b16 %v6182
        %v6215 = vunpack.c.l.b16 %v6183
        %v6216 = vunpack.c.l.b16 %v6184
        %v6217 = vunpack.c.l.b16 %v6185
        %v6218 = vunpack.c.l.b16 %v6186
        %v6219 = vunpack.c.l.b16 %v6187
        %v6220 = vunpack.c.l.b16 %v6188
        %v6221 = vunpack.c.l.b16 %v6189
        %v6222 = vunpack.c.l.b16 %v6190
        %v6223 = vunpack.c.l.b16 %v6191
        %v6224 = vunpack.c.l.b16 %v6192
        %v6225 = vunpack.c.l.b16 %v6193
        %v6226 = vunpack.c.l.b16 %v6194
        %v6227 = vpack.c.b16 %v6212, %v6211
        %v6228 = vpack.c.b16 %v6214, %v6213
        %v6229 = vpack.c.b16 %v6216, %v6215
        %v6230 = vpack.c.b16 %v6218, %v6217
        %v6231 = vpack.c.b16 %v6220, %v6219
        %v6232 = vpack.c.b16 %v6222, %v6221
        %v6233 = vpack.c.b16 %v6224, %v6223
        %v6234 = vpack.c.b16 %v6226, %v6225
        %6243 = vmatprep.subr.bf16.mxu0 0
        %6244 = vmatpush1.bf16.msra.mxu0 %v6227
        %6245 = vmatprep.subr.bf16.mxu0 0
        %6246 = vmatpush1.bf16.msra.mxu0 %v6228
        %6247 = vmatprep.subr.bf16.mxu0 0
        %6248 = vmatpush1.bf16.msra.mxu0 %v6229
        %6249 = vmatprep.subr.bf16.mxu0 0
        %6250 = vmatpush1.bf16.msra.mxu0 %v6230
        %6251 = vmatprep.subr.bf16.mxu0 0
        %6252 = vmatpush1.bf16.msra.mxu0 %v6231
        %6253 = vmatprep.subr.bf16.mxu0 0
        %6254 = vmatpush1.bf16.msra.mxu0 %v6232
        %6255 = vmatprep.subr.bf16.mxu0 0
        %6256 = vmatpush1.bf16.msra.mxu0 %v6233
        %6257 = vmatprep.subr.bf16.mxu0 0
        %6258 = vmatpush1.bf16.msra.mxu0 %v6234
        %6259 = vmatprep.subr.bf16.mxu0 0
        %6260 = vmatpush1.bf16.msra.mxu0 0
        %6261 = vmatprep.subr.bf16.mxu0 0
        %6262 = vmatpush1.bf16.msra.mxu0 0
        %6263 = vmatprep.subr.bf16.mxu0 0
        %6264 = vmatpush1.bf16.msra.mxu0 0
        %6265 = vmatprep.subr.bf16.mxu0 0
        %6266 = vmatpush1.bf16.msra.mxu0 0
        %6267 = vmatprep.subr.bf16.mxu0 0
        %6268 = vmatpush1.bf16.msra.mxu0 0
        %6269 = vmatprep.subr.bf16.mxu0 0
        %6270 = vmatpush1.bf16.msra.mxu0 0
        %6271 = vmatprep.subr.bf16.mxu0 0
        %6272 = vmatpush1.bf16.msra.mxu0 0
        %6273 = vmatprep.subr.bf16.mxu0 0
        %6274 = vmatpush1.bf16.msra.mxu0 0
        %6275 = vmatprep.mubr.bf16.mxu0 0
        %6276 = vmatmul.mubr.bf16.gmra.mrb[0].mxu0 %v6147
        %v6277 = vpop.f32.mrb[0].mxu0
        %v6278 = vadd.f32 0.0, %v6277
        %v6279 = vpop.f32.mrb[0].mxu0
        %v6280 = vpop.f32.mrb[0].mxu0
        %v6281 = vadd.f32 0.0, %v6280
        %v6282 = vpop.f32.mrb[0].mxu0
        %6283 = vmatprep.mubr.bf16.mxu0 0
        %6284 = vmatmul.mubr.bf16.gmra.mrb[0].mxu0 %v6148
        %v6285 = vpop.f32.mrb[0].mxu0
        %v6286 = vadd.f32 0.0, %v6285
        %v6287 = vpop.f32.mrb[0].mxu0
        %v6288 = vpop.f32.mrb[0].mxu0
        %v6289 = vadd.f32 0.0, %v6288
        %v6290 = vpop.f32.mrb[0].mxu0
        %6291 = vmatprep.mubr.bf16.mxu0 0
        %6292 = vmatmul.mubr.bf16.gmra.mrb[0].mxu0 %v6149
        %v6293 = vpop.f32.mrb[0].mxu0
        %v6294 = vadd.f32 0.0, %v6293
        %v6295 = vpop.f32.mrb[0].mxu0
        %v6296 = vpop.f32.mrb[0].mxu0
        %v6297 = vadd.f32 0.0, %v6296
        %v6298 = vpop.f32.mrb[0].mxu0
        %6299 = vmatprep.mubr.bf16.mxu0 0
        %6300 = vmatmul.mubr.bf16.gmra.mrb[0].mxu0 %v6150
        %v6301 = vpop.f32.mrb[0].mxu0
        %v6302 = vadd.f32 0.0, %v6301
        %v6303 = vpop.f32.mrb[0].mxu0
        %v6304 = vpop.f32.mrb[0].mxu0
        %v6305 = vadd.f32 0.0, %v6304
        %v6306 = vpop.f32.mrb[0].mxu0
        %6307 = vmatprep.mubr.bf16.mxu0 0
        %6308 = vmatmul.mubr.bf16.gmra.mrb[0].mxu0 %v6151
        %v6309 = vpop.f32.mrb[0].mxu0
        %v6310 = vadd.f32 0.0, %v6309
        %v6311 = vpop.f32.mrb[0].mxu0
        %v6312 = vpop.f32.mrb[0].mxu0
        %v6313 = vadd.f32 0.0, %v6312
        %v6314 = vpop.f32.mrb[0].mxu0
        %6315 = vmatprep.mubr.bf16.mxu0 0
        %6316 = vmatmul.mubr.bf16.gmra.mrb[0].mxu0 %v6152
        %v6317 = vpop.f32.mrb[0].mxu0
        %v6318 = vadd.f32 0.0, %v6317
        %v6319 = vpop.f32.mrb[0].mxu0
        %v6320 = vpop.f32.mrb[0].mxu0
        %v6321 = vadd.f32 0.0, %v6320
        %v6322 = vpop.f32.mrb[0].mxu0
        %6323 = vmatprep.mubr.bf16.mxu0 0
        %6324 = vmatmul.mubr.bf16.gmra.mrb[0].mxu0 %v6153
        %v6325 = vpop.f32.mrb[0].mxu0
        %v6326 = vadd.f32 0.0, %v6325
        %v6327 = vpop.f32.mrb[0].mxu0
        %v6328 = vpop.f32.mrb[0].mxu0
        %v6329 = vadd.f32 0.0, %v6328
        %v6330 = vpop.f32.mrb[0].mxu0
        %6331 = vmatprep.mubr.bf16.mxu0 0
        %6332 = vmatmul.mubr.bf16.gmra.mrb[0].mxu0 %v6154
        %v6333 = vpop.f32.mrb[0].mxu0
        %v6334 = vadd.f32 0.0, %v6333
        %v6335 = vpop.f32.mrb[0].mxu0
        %v6336 = vpop.f32.mrb[0].mxu0
        %v6337 = vadd.f32 0.0, %v6336
        %v6338 = vpop.f32.mrb[0].mxu0
        %6339 = vmatprep.mubr.bf16.mxu0 0
        %6340 = vmatmul.mubr.bf16.gmra.mrb[0].mxu0 %v6155
        %v6341 = vpop.f32.mrb[0].mxu0
        %v6342 = vadd.f32 0.0, %v6341
        %v6343 = vpop.f32.mrb[0].mxu0
        %v6344 = vpop.f32.mrb[0].mxu0
        %v6345 = vadd.f32 0.0, %v6344
        %v6346 = vpop.f32.mrb[0].mxu0
        %6347 = vmatprep.mubr.bf16.mxu0 0
        %6348 = vmatmul.mubr.bf16.gmra.mrb[0].mxu0 %v6156
        %v6349 = vpop.f32.mrb[0].mxu0
        %v6350 = vadd.f32 0.0, %v6349
        %v6351 = vpop.f32.mrb[0].mxu0
        %v6352 = vpop.f32.mrb[0].mxu0
        %v6353 = vadd.f32 0.0, %v6352
        %v6354 = vpop.f32.mrb[0].mxu0
        %6355 = vmatprep.mubr.bf16.mxu0 0
        %6356 = vmatmul.mubr.bf16.gmra.mrb[0].mxu0 %v6157
        %v6357 = vpop.f32.mrb[0].mxu0
        %v6358 = vadd.f32 0.0, %v6357
        %v6359 = vpop.f32.mrb[0].mxu0
        %v6360 = vpop.f32.mrb[0].mxu0
        %v6361 = vadd.f32 0.0, %v6360
        %v6362 = vpop.f32.mrb[0].mxu0
        %6363 = vmatprep.mubr.bf16.mxu0 0
        %6364 = vmatmul.mubr.bf16.gmra.mrb[0].mxu0 %v6158
        %v6365 = vpop.f32.mrb[0].mxu0
        %v6366 = vadd.f32 0.0, %v6365
        %v6367 = vpop.f32.mrb[0].mxu0
        %v6368 = vpop.f32.mrb[0].mxu0
        %v6369 = vadd.f32 0.0, %v6368
        %v6370 = vpop.f32.mrb[0].mxu0
        %6371 = vmatprep.mubr.bf16.mxu0 0
        %6372 = vmatmul.mubr.bf16.gmra.mrb[0].mxu0 %v6159
        %v6373 = vpop.f32.mrb[0].mxu0
        %v6374 = vadd.f32 0.0, %v6373
        %v6375 = vpop.f32.mrb[0].mxu0
        %v6376 = vpop.f32.mrb[0].mxu0
        %v6377 = vadd.f32 0.0, %v6376
        %v6378 = vpop.f32.mrb[0].mxu0
        %6379 = vmatprep.mubr.bf16.mxu0 0
        %6380 = vmatmul.mubr.bf16.gmra.mrb[0].mxu0 %v6160
        %v6381 = vpop.f32.mrb[0].mxu0
        %v6382 = vadd.f32 0.0, %v6381
        %v6383 = vpop.f32.mrb[0].mxu0
        %v6384 = vpop.f32.mrb[0].mxu0
        %v6385 = vadd.f32 0.0, %v6384
        %v6386 = vpop.f32.mrb[0].mxu0
        %6387 = vmatprep.mubr.bf16.mxu0 0
        %6388 = vmatmul.mubr.bf16.gmra.mrb[0].mxu0 %v6161
        %v6389 = vpop.f32.mrb[0].mxu0
        %v6390 = vadd.f32 0.0, %v6389
        %v6391 = vpop.f32.mrb[0].mxu0
        %v6392 = vpop.f32.mrb[0].mxu0
        %v6393 = vadd.f32 0.0, %v6392
        %v6394 = vpop.f32.mrb[0].mxu0
        %6395 = vmatprep.mubr.bf16.mxu0 0
        %6396 = vmatmul.mubr.bf16.gmra.mrb[0].mxu0 %v6162
        %v6397 = vpop.f32.mrb[0].mxu0
        %v6398 = vadd.f32 0.0, %v6397
        %v6399 = vpop.f32.mrb[0].mxu0
        %v6400 = vpop.f32.mrb[0].mxu0
        %v6401 = vadd.f32 0.0, %v6400
        %v6402 = vpop.f32.mrb[0].mxu0
        %6403 = vmatprep.mubr.bf16.mxu0 0
        %6404 = vmatmul.mubr.bf16.gmra.mrb[0].mxu0 %v6163
        %v6405 = vpop.f32.mrb[0].mxu0
        %v6406 = vadd.f32 0.0, %v6405
        %v6407 = vpop.f32.mrb[0].mxu0
        %v6408 = vpop.f32.mrb[0].mxu0
        %v6409 = vadd.f32 0.0, %v6408
        %v6410 = vpop.f32.mrb[0].mxu0
        %6411 = vmatprep.mubr.bf16.mxu0 0
        %6412 = vmatmul.mubr.bf16.gmra.mrb[0].mxu0 %v6164
        %v6413 = vpop.f32.mrb[0].mxu0
        %v6414 = vadd.f32 0.0, %v6413
        %v6415 = vpop.f32.mrb[0].mxu0
        %v6416 = vpop.f32.mrb[0].mxu0
        %v6417 = vadd.f32 0.0, %v6416
        %v6418 = vpop.f32.mrb[0].mxu0
        %6419 = vmatprep.mubr.bf16.mxu0 0
        %6420 = vmatmul.mubr.bf16.gmra.mrb[0].mxu0 %v6165
        %v6421 = vpop.f32.mrb[0].mxu0
        %v6422 = vadd.f32 0.0, %v6421
        %v6423 = vpop.f32.mrb[0].mxu0
        %v6424 = vpop.f32.mrb[0].mxu0
        %v6425 = vadd.f32 0.0, %v6424
        %v6426 = vpop.f32.mrb[0].mxu0
        %6427 = vmatprep.mubr.bf16.mxu0 0
        %6428 = vmatmul.mubr.bf16.gmra.mrb[0].mxu0 %v6166
        %v6429 = vpop.f32.mrb[0].mxu0
        %v6430 = vadd.f32 0.0, %v6429
        %v6431 = vpop.f32.mrb[0].mxu0
        %v6432 = vpop.f32.mrb[0].mxu0
        %v6433 = vadd.f32 0.0, %v6432
        %v6434 = vpop.f32.mrb[0].mxu0
        %6435 = vmatprep.mubr.bf16.mxu0 0
        %6436 = vmatmul.mubr.bf16.gmra.mrb[0].mxu0 %v6167
        %v6437 = vpop.f32.mrb[0].mxu0
        %v6438 = vadd.f32 0.0, %v6437
        %v6439 = vpop.f32.mrb[0].mxu0
        %v6440 = vpop.f32.mrb[0].mxu0
        %v6441 = vadd.f32 0.0, %v6440
        %v6442 = vpop.f32.mrb[0].mxu0
        %6443 = vmatprep.mubr.bf16.mxu0 0
        %6444 = vmatmul.mubr.bf16.gmra.mrb[0].mxu0 %v6168
        %v6445 = vpop.f32.mrb[0].mxu0
        %v6446 = vadd.f32 0.0, %v6445
        %v6447 = vpop.f32.mrb[0].mxu0
        %v6448 = vpop.f32.mrb[0].mxu0
        %v6449 = vadd.f32 0.0, %v6448
        %v6450 = vpop.f32.mrb[0].mxu0
        %6451 = vmatprep.mubr.bf16.mxu0 0
        %6452 = vmatmul.mubr.bf16.gmra.mrb[0].mxu0 %v6169
        %v6453 = vpop.f32.mrb[0].mxu0
        %v6454 = vadd.f32 0.0, %v6453
        %v6455 = vpop.f32.mrb[0].mxu0
        %v6456 = vpop.f32.mrb[0].mxu0
        %v6457 = vadd.f32 0.0, %v6456
        %v6458 = vpop.f32.mrb[0].mxu0
        %6459 = vmatprep.mubr.bf16.mxu0 0
        %6460 = vmatmul.mubr.bf16.gmra.mrb[0].mxu0 %v6170
        %v6461 = vpop.f32.mrb[0].mxu0
        %v6462 = vadd.f32 0.0, %v6461
        %v6463 = vpop.f32.mrb[0].mxu0
        %v6464 = vpop.f32.mrb[0].mxu0
        %v6465 = vadd.f32 0.0, %v6464
        %v6466 = vpop.f32.mrb[0].mxu0
        %6467 = vmatprep.mubr.bf16.mxu0 0
        %6468 = vmatmul.mubr.bf16.gmra.mrb[0].mxu0 %v6171
        %v6469 = vpop.f32.mrb[0].mxu0
        %v6470 = vadd.f32 0.0, %v6469
        %v6471 = vpop.f32.mrb[0].mxu0
        %v6472 = vpop.f32.mrb[0].mxu0
        %v6473 = vadd.f32 0.0, %v6472
        %v6474 = vpop.f32.mrb[0].mxu0
        %6475 = vmatprep.mubr.bf16.mxu0 0
        %6476 = vmatmul.mubr.bf16.gmra.mrb[0].mxu0 %v6172
        %v6477 = vpop.f32.mrb[0].mxu0
        %v6478 = vadd.f32 0.0, %v6477
        %v6479 = vpop.f32.mrb[0].mxu0
        %v6480 = vpop.f32.mrb[0].mxu0
        %v6481 = vadd.f32 0.0, %v6480
        %v6482 = vpop.f32.mrb[0].mxu0
        %6483 = vmatprep.mubr.bf16.mxu0 0
        %6484 = vmatmul.mubr.bf16.gmra.mrb[0].mxu0 %v6173
        %v6485 = vpop.f32.mrb[0].mxu0
        %v6486 = vadd.f32 0.0, %v6485
        %v6487 = vpop.f32.mrb[0].mxu0
        %v6488 = vpop.f32.mrb[0].mxu0
        %v6489 = vadd.f32 0.0, %v6488
        %v6490 = vpop.f32.mrb[0].mxu0
        %6491 = vmatprep.mubr.bf16.mxu0 0
        %6492 = vmatmul.mubr.bf16.gmra.mrb[0].mxu0 %v6174
        %v6493 = vpop.f32.mrb[0].mxu0
        %v6494 = vadd.f32 0.0, %v6493
        %v6495 = vpop.f32.mrb[0].mxu0
        %v6496 = vpop.f32.mrb[0].mxu0
        %v6497 = vadd.f32 0.0, %v6496
        %v6498 = vpop.f32.mrb[0].mxu0
        %6499 = vmatprep.mubr.bf16.mxu0 0
        %6500 = vmatmul.mubr.bf16.gmra.mrb[0].mxu0 %v6175
        %v6501 = vpop.f32.mrb[0].mxu0
        %v6502 = vadd.f32 0.0, %v6501
        %v6503 = vpop.f32.mrb[0].mxu0
        %v6504 = vpop.f32.mrb[0].mxu0
        %v6505 = vadd.f32 0.0, %v6504
        %v6506 = vpop.f32.mrb[0].mxu0
        %6507 = vmatprep.mubr.bf16.mxu0 0
        %6508 = vmatmul.mubr.bf16.gmra.mrb[0].mxu0 %v6176
        %v6509 = vpop.f32.mrb[0].mxu0
        %v6510 = vadd.f32 0.0, %v6509
        %v6511 = vpop.f32.mrb[0].mxu0
        %v6512 = vpop.f32.mrb[0].mxu0
        %v6513 = vadd.f32 0.0, %v6512
        %v6514 = vpop.f32.mrb[0].mxu0
        %6515 = vmatprep.mubr.bf16.mxu0 0
        %6516 = vmatmul.mubr.bf16.gmra.mrb[0].mxu0 %v6177
        %v6517 = vpop.f32.mrb[0].mxu0
        %v6518 = vadd.f32 0.0, %v6517
        %v6519 = vpop.f32.mrb[0].mxu0
        %v6520 = vpop.f32.mrb[0].mxu0
        %v6521 = vadd.f32 0.0, %v6520
        %v6522 = vpop.f32.mrb[0].mxu0
        %6523 = vmatprep.mubr.bf16.mxu0 0
        %6524 = vmatmul.mubr.bf16.gmra.mrb[0].mxu0 %v6178
        %v6525 = vpop.f32.mrb[0].mxu0
        %v6526 = vadd.f32 0.0, %v6525
        %v6527 = vpop.f32.mrb[0].mxu0
        %v6528 = vpop.f32.mrb[0].mxu0
        %v6529 = vadd.f32 0.0, %v6528
        %v6530 = vpop.f32.mrb[0].mxu0
        %6531 = vdwg.mxu0
        %v6532 = vld [vmem:[%s10] sm:$0x1]
        %v6534 = vlaneseq
        %v6535 = vshrl.u32 %v6534, 7
        %v6536 = vsub.s32 0, %v6535
        %v6537 = vrot.slane %v6532, %v6536
        %v6539 = vmul.f32 %v6278, %v6537
        %v6540 = vmul.f32 %v6281, %v6537
        %v6541 = vmul.f32 %v6286, %v6537
        %v6542 = vmul.f32 %v6289, %v6537
        %v6543 = vmul.f32 %v6294, %v6537
        %v6544 = vmul.f32 %v6297, %v6537
        %v6545 = vmul.f32 %v6302, %v6537
        %v6546 = vmul.f32 %v6305, %v6537
        %v6547 = vmul.f32 %v6310, %v6537
        %v6548 = vmul.f32 %v6313, %v6537
        %v6549 = vmul.f32 %v6318, %v6537
        %v6550 = vmul.f32 %v6321, %v6537
        %v6551 = vmul.f32 %v6326, %v6537
        %v6552 = vmul.f32 %v6329, %v6537
        %v6553 = vmul.f32 %v6334, %v6537
        %v6554 = vmul.f32 %v6337, %v6537
        %v6555 = vmul.f32 %v6342, %v6537
        %v6556 = vmul.f32 %v6345, %v6537
        %v6557 = vmul.f32 %v6350, %v6537
        %v6558 = vmul.f32 %v6353, %v6537
        %v6559 = vmul.f32 %v6358, %v6537
        %v6560 = vmul.f32 %v6361, %v6537
        %v6561 = vmul.f32 %v6366, %v6537
        %v6562 = vmul.f32 %v6369, %v6537
        %v6563 = vmul.f32 %v6374, %v6537
        %v6564 = vmul.f32 %v6377, %v6537
        %v6565 = vmul.f32 %v6382, %v6537
        %v6566 = vmul.f32 %v6385, %v6537
        %v6567 = vmul.f32 %v6390, %v6537
        %v6568 = vmul.f32 %v6393, %v6537
        %v6569 = vmul.f32 %v6398, %v6537
        %v6570 = vmul.f32 %v6401, %v6537
        %v6571 = vmul.f32 %v6406, %v6537
        %v6572 = vmul.f32 %v6409, %v6537
        %v6573 = vmul.f32 %v6414, %v6537
        %v6574 = vmul.f32 %v6417, %v6537
        %v6575 = vmul.f32 %v6422, %v6537
        %v6576 = vmul.f32 %v6425, %v6537
        %v6577 = vmul.f32 %v6430, %v6537
        %v6578 = vmul.f32 %v6433, %v6537
        %v6579 = vmul.f32 %v6438, %v6537
        %v6580 = vmul.f32 %v6441, %v6537
        %v6581 = vmul.f32 %v6446, %v6537
        %v6582 = vmul.f32 %v6449, %v6537
        %v6583 = vmul.f32 %v6454, %v6537
        %v6584 = vmul.f32 %v6457, %v6537
        %v6585 = vmul.f32 %v6462, %v6537
        %v6586 = vmul.f32 %v6465, %v6537
        %v6587 = vmul.f32 %v6470, %v6537
        %v6588 = vmul.f32 %v6473, %v6537
        %v6589 = vmul.f32 %v6478, %v6537
        %v6590 = vmul.f32 %v6481, %v6537
        %v6591 = vmul.f32 %v6486, %v6537
        %v6592 = vmul.f32 %v6489, %v6537
        %v6593 = vmul.f32 %v6494, %v6537
        %v6594 = vmul.f32 %v6497, %v6537
        %v6595 = vmul.f32 %v6502, %v6537
        %v6596 = vmul.f32 %v6505, %v6537
        %v6597 = vmul.f32 %v6510, %v6537
        %v6598 = vmul.f32 %v6513, %v6537
        %v6599 = vmul.f32 %v6518, %v6537
        %v6600 = vmul.f32 %v6521, %v6537
        %v6601 = vmul.f32 %v6526, %v6537
        %v6602 = vmul.f32 %v6529, %v6537
        %v6603 = vld [vmem:[%s11] sm:$0x1]
        %v6605 = vlaneseq
        %v6606 = vshrl.u32 %v6605, 7
        %v6607 = vsub.s32 0, %v6606
        %v6608 = vrot.slane %v6603, %v6607
        %v6610 = vadd.f32 %v6539, %v6608
        %v6611 = vadd.f32 %v6540, %v6608
        %v6612 = vadd.f32 %v6541, %v6608
        %v6613 = vadd.f32 %v6542, %v6608
        %v6614 = vadd.f32 %v6543, %v6608
        %v6615 = vadd.f32 %v6544, %v6608
        %v6616 = vadd.f32 %v6545, %v6608
        %v6617 = vadd.f32 %v6546, %v6608
        %v6618 = vadd.f32 %v6547, %v6608
        %v6619 = vadd.f32 %v6548, %v6608
        %v6620 = vadd.f32 %v6549, %v6608
        %v6621 = vadd.f32 %v6550, %v6608
        %v6622 = vadd.f32 %v6551, %v6608
        %v6623 = vadd.f32 %v6552, %v6608
        %v6624 = vadd.f32 %v6553, %v6608
        %v6625 = vadd.f32 %v6554, %v6608
        %v6626 = vadd.f32 %v6555, %v6608
        %v6627 = vadd.f32 %v6556, %v6608
        %v6628 = vadd.f32 %v6557, %v6608
        %v6629 = vadd.f32 %v6558, %v6608
        %v6630 = vadd.f32 %v6559, %v6608
        %v6631 = vadd.f32 %v6560, %v6608
        %v6632 = vadd.f32 %v6561, %v6608
        %v6633 = vadd.f32 %v6562, %v6608
        %v6634 = vadd.f32 %v6563, %v6608
        %v6635 = vadd.f32 %v6564, %v6608
        %v6636 = vadd.f32 %v6565, %v6608
        %v6637 = vadd.f32 %v6566, %v6608
        %v6638 = vadd.f32 %v6567, %v6608
        %v6639 = vadd.f32 %v6568, %v6608
        %v6640 = vadd.f32 %v6569, %v6608
        %v6641 = vadd.f32 %v6570, %v6608
        %v6642 = vadd.f32 %v6571, %v6608
        %v6643 = vadd.f32 %v6572, %v6608
        %v6644 = vadd.f32 %v6573, %v6608
        %v6645 = vadd.f32 %v6574, %v6608
        %v6646 = vadd.f32 %v6575, %v6608
        %v6647 = vadd.f32 %v6576, %v6608
        %v6648 = vadd.f32 %v6577, %v6608
        %v6649 = vadd.f32 %v6578, %v6608
        %v6650 = vadd.f32 %v6579, %v6608
        %v6651 = vadd.f32 %v6580, %v6608
        %v6652 = vadd.f32 %v6581, %v6608
        %v6653 = vadd.f32 %v6582, %v6608
        %v6654 = vadd.f32 %v6583, %v6608
        %v6655 = vadd.f32 %v6584, %v6608
        %v6656 = vadd.f32 %v6585, %v6608
        %v6657 = vadd.f32 %v6586, %v6608
        %v6658 = vadd.f32 %v6587, %v6608
        %v6659 = vadd.f32 %v6588, %v6608
        %v6660 = vadd.f32 %v6589, %v6608
        %v6661 = vadd.f32 %v6590, %v6608
        %v6662 = vadd.f32 %v6591, %v6608
        %v6663 = vadd.f32 %v6592, %v6608
        %v6664 = vadd.f32 %v6593, %v6608
        %v6665 = vadd.f32 %v6594, %v6608
        %v6666 = vadd.f32 %v6595, %v6608
        %v6667 = vadd.f32 %v6596, %v6608
        %v6668 = vadd.f32 %v6597, %v6608
        %v6669 = vadd.f32 %v6598, %v6608
        %v6670 = vadd.f32 %v6599, %v6608
        %v6671 = vadd.f32 %v6600, %v6608
        %v6672 = vadd.f32 %v6601, %v6608
        %v6673 = vadd.f32 %v6602, %v6608
        %v6674 = vunpack.c.l.bf16 %v676
        %v6675 = vunpack.c.l.bf16 %v677
        %v6676 = vunpack.c.l.bf16 %v678
        %v6677 = vunpack.c.l.bf16 %v679
        %v6678 = vunpack.c.l.bf16 %v680
        %v6679 = vunpack.c.l.bf16 %v681
        %v6680 = vunpack.c.l.bf16 %v682
        %v6681 = vunpack.c.l.bf16 %v683
        %v6682 = vunpack.c.l.bf16 %v684
        %v6683 = vunpack.c.l.bf16 %v685
        %v6684 = vunpack.c.l.bf16 %v686
        %v6685 = vunpack.c.l.bf16 %v687
        %v6686 = vunpack.c.l.bf16 %v688
        %v6687 = vunpack.c.l.bf16 %v689
        %v6688 = vunpack.c.l.bf16 %v690
        %v6689 = vunpack.c.l.bf16 %v691
        %v6690 = vunpack.c.l.bf16 %v692
        %v6691 = vunpack.c.l.bf16 %v693
        %v6692 = vunpack.c.l.bf16 %v694
        %v6693 = vunpack.c.l.bf16 %v695
        %v6694 = vunpack.c.l.bf16 %v696
        %v6695 = vunpack.c.l.bf16 %v697
        %v6696 = vunpack.c.l.bf16 %v698
        %v6697 = vunpack.c.l.bf16 %v699
        %v6698 = vunpack.c.l.bf16 %v700
        %v6699 = vunpack.c.l.bf16 %v701
        %v6700 = vunpack.c.l.bf16 %v702
        %v6701 = vunpack.c.l.bf16 %v703
        %v6702 = vunpack.c.l.bf16 %v704
        %v6703 = vunpack.c.l.bf16 %v705
        %v6704 = vunpack.c.l.bf16 %v706
        %v6705 = vunpack.c.l.bf16 %v707
        %v6706 = vunpack.c.l.bf16 %v708
        %v6707 = vunpack.c.l.bf16 %v709
        %v6708 = vunpack.c.l.bf16 %v710
        %v6709 = vunpack.c.l.bf16 %v711
        %v6710 = vunpack.c.l.bf16 %v712
        %v6711 = vunpack.c.l.bf16 %v713
        %v6712 = vunpack.c.l.bf16 %v714
        %v6713 = vunpack.c.l.bf16 %v715
        %v6714 = vunpack.c.l.bf16 %v716
        %v6715 = vunpack.c.l.bf16 %v717
        %v6716 = vunpack.c.l.bf16 %v718
        %v6717 = vunpack.c.l.bf16 %v719
        %v6718 = vunpack.c.l.bf16 %v720
        %v6719 = vunpack.c.l.bf16 %v721
        %v6720 = vunpack.c.l.bf16 %v722
        %v6721 = vunpack.c.l.bf16 %v723
        %v6722 = vunpack.c.l.bf16 %v724
        %v6723 = vunpack.c.l.bf16 %v725
        %v6724 = vunpack.c.l.bf16 %v726
        %v6725 = vunpack.c.l.bf16 %v727
        %v6726 = vunpack.c.l.bf16 %v728
        %v6727 = vunpack.c.l.bf16 %v729
        %v6728 = vunpack.c.l.bf16 %v730
        %v6729 = vunpack.c.l.bf16 %v731
        %v6730 = vunpack.c.l.bf16 %v732
        %v6731 = vunpack.c.l.bf16 %v733
        %v6732 = vunpack.c.l.bf16 %v734
        %v6733 = vunpack.c.l.bf16 %v735
        %v6734 = vunpack.c.l.bf16 %v736
        %v6735 = vunpack.c.l.bf16 %v737
        %v6736 = vunpack.c.l.bf16 %v738
        %v6737 = vunpack.c.l.bf16 %v739
        %v6738 = vadd.f32 %v6610, %v6674
        %v6739 = vadd.f32 %v6611, %v6675
        %v6740 = vadd.f32 %v6612, %v6676
        %v6741 = vadd.f32 %v6613, %v6677
        %v6742 = vadd.f32 %v6614, %v6678
        %v6743 = vadd.f32 %v6615, %v6679
        %v6744 = vadd.f32 %v6616, %v6680
        %v6745 = vadd.f32 %v6617, %v6681
        %v6746 = vadd.f32 %v6618, %v6682
        %v6747 = vadd.f32 %v6619, %v6683
        %v6748 = vadd.f32 %v6620, %v6684
        %v6749 = vadd.f32 %v6621, %v6685
        %v6750 = vadd.f32 %v6622, %v6686
        %v6751 = vadd.f32 %v6623, %v6687
        %v6752 = vadd.f32 %v6624, %v6688
        %v6753 = vadd.f32 %v6625, %v6689
        %v6754 = vadd.f32 %v6626, %v6690
        %v6755 = vadd.f32 %v6627, %v6691
        %v6756 = vadd.f32 %v6628, %v6692
        %v6757 = vadd.f32 %v6629, %v6693
        %v6758 = vadd.f32 %v6630, %v6694
        %v6759 = vadd.f32 %v6631, %v6695
        %v6760 = vadd.f32 %v6632, %v6696
        %v6761 = vadd.f32 %v6633, %v6697
        %v6762 = vadd.f32 %v6634, %v6698
        %v6763 = vadd.f32 %v6635, %v6699
        %v6764 = vadd.f32 %v6636, %v6700
        %v6765 = vadd.f32 %v6637, %v6701
        %v6766 = vadd.f32 %v6638, %v6702
        %v6767 = vadd.f32 %v6639, %v6703
        %v6768 = vadd.f32 %v6640, %v6704
        %v6769 = vadd.f32 %v6641, %v6705
        %v6770 = vadd.f32 %v6642, %v6706
        %v6771 = vadd.f32 %v6643, %v6707
        %v6772 = vadd.f32 %v6644, %v6708
        %v6773 = vadd.f32 %v6645, %v6709
        %v6774 = vadd.f32 %v6646, %v6710
        %v6775 = vadd.f32 %v6647, %v6711
        %v6776 = vadd.f32 %v6648, %v6712
        %v6777 = vadd.f32 %v6649, %v6713
        %v6778 = vadd.f32 %v6650, %v6714
        %v6779 = vadd.f32 %v6651, %v6715
        %v6780 = vadd.f32 %v6652, %v6716
        %v6781 = vadd.f32 %v6653, %v6717
        %v6782 = vadd.f32 %v6654, %v6718
        %v6783 = vadd.f32 %v6655, %v6719
        %v6784 = vadd.f32 %v6656, %v6720
        %v6785 = vadd.f32 %v6657, %v6721
        %v6786 = vadd.f32 %v6658, %v6722
        %v6787 = vadd.f32 %v6659, %v6723
        %v6788 = vadd.f32 %v6660, %v6724
        %v6789 = vadd.f32 %v6661, %v6725
        %v6790 = vadd.f32 %v6662, %v6726
        %v6791 = vadd.f32 %v6663, %v6727
        %v6792 = vadd.f32 %v6664, %v6728
        %v6793 = vadd.f32 %v6665, %v6729
        %v6794 = vadd.f32 %v6666, %v6730
        %v6795 = vadd.f32 %v6667, %v6731
        %v6796 = vadd.f32 %v6668, %v6732
        %v6797 = vadd.f32 %v6669, %v6733
        %v6798 = vadd.f32 %v6670, %v6734
        %v6799 = vadd.f32 %v6671, %v6735
        %v6800 = vadd.f32 %v6672, %v6736
        %v6801 = vadd.f32 %v6673, %v6737
        %v6802 = vmax.f32 %v6738, 0.0
        %v6803 = vmax.f32 %v6739, 0.0
        %v6804 = vmax.f32 %v6740, 0.0
        %v6805 = vmax.f32 %v6741, 0.0
        %v6806 = vmax.f32 %v6742, 0.0
        %v6807 = vmax.f32 %v6743, 0.0
        %v6808 = vmax.f32 %v6744, 0.0
        %v6809 = vmax.f32 %v6745, 0.0
        %v6810 = vmax.f32 %v6746, 0.0
        %v6811 = vmax.f32 %v6747, 0.0
        %v6812 = vmax.f32 %v6748, 0.0
        %v6813 = vmax.f32 %v6749, 0.0
        %v6814 = vmax.f32 %v6750, 0.0
        %v6815 = vmax.f32 %v6751, 0.0
        %v6816 = vmax.f32 %v6752, 0.0
        %v6817 = vmax.f32 %v6753, 0.0
        %v6818 = vmax.f32 %v6754, 0.0
        %v6819 = vmax.f32 %v6755, 0.0
        %v6820 = vmax.f32 %v6756, 0.0
        %v6821 = vmax.f32 %v6757, 0.0
        %v6822 = vmax.f32 %v6758, 0.0
        %v6823 = vmax.f32 %v6759, 0.0
        %v6824 = vmax.f32 %v6760, 0.0
        %v6825 = vmax.f32 %v6761, 0.0
        %v6826 = vmax.f32 %v6762, 0.0
        %v6827 = vmax.f32 %v6763, 0.0
        %v6828 = vmax.f32 %v6764, 0.0
        %v6829 = vmax.f32 %v6765, 0.0
        %v6830 = vmax.f32 %v6766, 0.0
        %v6831 = vmax.f32 %v6767, 0.0
        %v6832 = vmax.f32 %v6768, 0.0
        %v6833 = vmax.f32 %v6769, 0.0
        %v6834 = vmax.f32 %v6770, 0.0
        %v6835 = vmax.f32 %v6771, 0.0
        %v6836 = vmax.f32 %v6772, 0.0
        %v6837 = vmax.f32 %v6773, 0.0
        %v6838 = vmax.f32 %v6774, 0.0
        %v6839 = vmax.f32 %v6775, 0.0
        %v6840 = vmax.f32 %v6776, 0.0
        %v6841 = vmax.f32 %v6777, 0.0
        %v6842 = vmax.f32 %v6778, 0.0
        %v6843 = vmax.f32 %v6779, 0.0
        %v6844 = vmax.f32 %v6780, 0.0
        %v6845 = vmax.f32 %v6781, 0.0
        %v6846 = vmax.f32 %v6782, 0.0
        %v6847 = vmax.f32 %v6783, 0.0
        %v6848 = vmax.f32 %v6784, 0.0
        %v6849 = vmax.f32 %v6785, 0.0
        %v6850 = vmax.f32 %v6786, 0.0
        %v6851 = vmax.f32 %v6787, 0.0
        %v6852 = vmax.f32 %v6788, 0.0
        %v6853 = vmax.f32 %v6789, 0.0
        %v6854 = vmax.f32 %v6790, 0.0
        %v6855 = vmax.f32 %v6791, 0.0
        %v6856 = vmax.f32 %v6792, 0.0
        %v6857 = vmax.f32 %v6793, 0.0
        %v6858 = vmax.f32 %v6794, 0.0
        %v6859 = vmax.f32 %v6795, 0.0
        %v6860 = vmax.f32 %v6796, 0.0
        %v6861 = vmax.f32 %v6797, 0.0
        %v6862 = vmax.f32 %v6798, 0.0
        %v6863 = vmax.f32 %v6799, 0.0
        %v6864 = vmax.f32 %v6800, 0.0
        %v6865 = vmax.f32 %v6801, 0.0
        %v6866 = vpack.c.bf16 %v6803, %v6802
        %v6867 = vpack.c.bf16 %v6805, %v6804
        %v6868 = vpack.c.bf16 %v6807, %v6806
        %v6869 = vpack.c.bf16 %v6809, %v6808
        %v6870 = vpack.c.bf16 %v6811, %v6810
        %v6871 = vpack.c.bf16 %v6813, %v6812
        %v6872 = vpack.c.bf16 %v6815, %v6814
        %v6873 = vpack.c.bf16 %v6817, %v6816
        %v6874 = vpack.c.bf16 %v6819, %v6818
        %v6875 = vpack.c.bf16 %v6821, %v6820
        %v6876 = vpack.c.bf16 %v6823, %v6822
        %v6877 = vpack.c.bf16 %v6825, %v6824
        %v6878 = vpack.c.bf16 %v6827, %v6826
        %v6879 = vpack.c.bf16 %v6829, %v6828
        %v6880 = vpack.c.bf16 %v6831, %v6830
        %v6881 = vpack.c.bf16 %v6833, %v6832
        %v6882 = vpack.c.bf16 %v6835, %v6834
        %v6883 = vpack.c.bf16 %v6837, %v6836
        %v6884 = vpack.c.bf16 %v6839, %v6838
        %v6885 = vpack.c.bf16 %v6841, %v6840
        %v6886 = vpack.c.bf16 %v6843, %v6842
        %v6887 = vpack.c.bf16 %v6845, %v6844
        %v6888 = vpack.c.bf16 %v6847, %v6846
        %v6889 = vpack.c.bf16 %v6849, %v6848
        %v6890 = vpack.c.bf16 %v6851, %v6850
        %v6891 = vpack.c.bf16 %v6853, %v6852
        %v6892 = vpack.c.bf16 %v6855, %v6854
        %v6893 = vpack.c.bf16 %v6857, %v6856
        %v6894 = vpack.c.bf16 %v6859, %v6858
        %v6895 = vpack.c.bf16 %v6861, %v6860
        %v6896 = vpack.c.bf16 %v6863, %v6862
        %v6897 = vpack.c.bf16 %v6865, %v6864
        %v6930 = vunpack.c.l.b16 %v6866
        %v6931 = vunpack.c.h.b16 %v6866
        %v6932 = vunpack.c.l.b16 %v6867
        %v6933 = vunpack.c.h.b16 %v6867
        %v6934 = vunpack.c.l.b16 %v6868
        %v6935 = vunpack.c.h.b16 %v6868
        %v6936 = vunpack.c.l.b16 %v6869
        %v6937 = vunpack.c.h.b16 %v6869
        %v6938 = vunpack.c.l.b16 %v6870
        %v6939 = vunpack.c.h.b16 %v6870
        %v6940 = vunpack.c.l.b16 %v6871
        %v6941 = vunpack.c.h.b16 %v6871
        %v6942 = vunpack.c.l.b16 %v6872
        %v6943 = vunpack.c.h.b16 %v6872
        %v6944 = vunpack.c.l.b16 %v6873
        %v6945 = vunpack.c.h.b16 %v6873
        %v6946 = vunpack.c.l.b16 %v6874
        %v6947 = vunpack.c.h.b16 %v6874
        %v6948 = vunpack.c.l.b16 %v6875
        %v6949 = vunpack.c.h.b16 %v6875
        %v6950 = vunpack.c.l.b16 %v6876
        %v6951 = vunpack.c.h.b16 %v6876
        %v6952 = vunpack.c.l.b16 %v6877
        %v6953 = vunpack.c.h.b16 %v6877
        %v6954 = vunpack.c.l.b16 %v6878
        %v6955 = vunpack.c.h.b16 %v6878
        %v6956 = vunpack.c.l.b16 %v6879
        %v6957 = vunpack.c.h.b16 %v6879
        %v6958 = vunpack.c.l.b16 %v6880
        %v6959 = vunpack.c.h.b16 %v6880
        %v6960 = vunpack.c.l.b16 %v6881
        %v6961 = vunpack.c.h.b16 %v6881
        %v6962 = vunpack.c.l.b16 %v6882
        %v6963 = vunpack.c.h.b16 %v6882
        %v6964 = vunpack.c.l.b16 %v6883
        %v6965 = vunpack.c.h.b16 %v6883
        %v6966 = vunpack.c.l.b16 %v6884
        %v6967 = vunpack.c.h.b16 %v6884
        %v6968 = vunpack.c.l.b16 %v6885
        %v6969 = vunpack.c.h.b16 %v6885
        %v6970 = vunpack.c.l.b16 %v6886
        %v6971 = vunpack.c.h.b16 %v6886
        %v6972 = vunpack.c.l.b16 %v6887
        %v6973 = vunpack.c.h.b16 %v6887
        %v6974 = vunpack.c.l.b16 %v6888
        %v6975 = vunpack.c.h.b16 %v6888
        %v6976 = vunpack.c.l.b16 %v6889
        %v6977 = vunpack.c.h.b16 %v6889
        %v6978 = vunpack.c.l.b16 %v6890
        %v6979 = vunpack.c.h.b16 %v6890
        %v6980 = vunpack.c.l.b16 %v6891
        %v6981 = vunpack.c.h.b16 %v6891
        %v6982 = vunpack.c.l.b16 %v6892
        %v6983 = vunpack.c.h.b16 %v6892
        %v6984 = vunpack.c.l.b16 %v6893
        %v6985 = vunpack.c.h.b16 %v6893
        %v6986 = vunpack.c.l.b16 %v6894
        %v6987 = vunpack.c.h.b16 %v6894
        %v6988 = vunpack.c.l.b16 %v6895
        %v6989 = vunpack.c.h.b16 %v6895
        %v6990 = vunpack.c.l.b16 %v6896
        %v6991 = vunpack.c.h.b16 %v6896
        %v6992 = vunpack.c.l.b16 %v6897
        %v6993 = vunpack.c.h.b16 %v6897
        %v6994 = vpack.c.b16 %v6930, %v6930
        %v6995 = vpack.c.b16 %v6931, %v6931
        %v6996 = vpack.c.b16 %v6932, %v6932
        %v6997 = vpack.c.b16 %v6933, %v6933
        %v6998 = vpack.c.b16 %v6934, %v6934
        %v6999 = vpack.c.b16 %v6935, %v6935
        %v7000 = vpack.c.b16 %v6936, %v6936
        %v7001 = vpack.c.b16 %v6937, %v6937
        %v7002 = vpack.c.b16 %v6938, %v6938
        %v7003 = vpack.c.b16 %v6939, %v6939
        %v7004 = vpack.c.b16 %v6940, %v6940
        %v7005 = vpack.c.b16 %v6941, %v6941
        %v7006 = vpack.c.b16 %v6942, %v6942
        %v7007 = vpack.c.b16 %v6943, %v6943
        %v7008 = vpack.c.b16 %v6944, %v6944
        %v7009 = vpack.c.b16 %v6945, %v6945
        %v7010 = vpack.c.b16 %v6946, %v6946
        %v7011 = vpack.c.b16 %v6947, %v6947
        %v7012 = vpack.c.b16 %v6948, %v6948
        %v7013 = vpack.c.b16 %v6949, %v6949
        %v7014 = vpack.c.b16 %v6950, %v6950
        %v7015 = vpack.c.b16 %v6951, %v6951
        %v7016 = vpack.c.b16 %v6952, %v6952
        %v7017 = vpack.c.b16 %v6953, %v6953
        %v7018 = vpack.c.b16 %v6954, %v6954
        %v7019 = vpack.c.b16 %v6955, %v6955
        %v7020 = vpack.c.b16 %v6956, %v6956
        %v7021 = vpack.c.b16 %v6957, %v6957
        %v7022 = vpack.c.b16 %v6958, %v6958
        %v7023 = vpack.c.b16 %v6959, %v6959
        %v7024 = vpack.c.b16 %v6960, %v6960
        %v7025 = vpack.c.b16 %v6961, %v6961
        %v7026 = vpack.c.b16 %v6962, %v6962
        %v7027 = vpack.c.b16 %v6963, %v6963
        %v7028 = vpack.c.b16 %v6964, %v6964
        %v7029 = vpack.c.b16 %v6965, %v6965
        %v7030 = vpack.c.b16 %v6966, %v6966
        %v7031 = vpack.c.b16 %v6967, %v6967
        %v7032 = vpack.c.b16 %v6968, %v6968
        %v7033 = vpack.c.b16 %v6969, %v6969
        %v7034 = vpack.c.b16 %v6970, %v6970
        %v7035 = vpack.c.b16 %v6971, %v6971
        %v7036 = vpack.c.b16 %v6972, %v6972
        %v7037 = vpack.c.b16 %v6973, %v6973
        %v7038 = vpack.c.b16 %v6974, %v6974
        %v7039 = vpack.c.b16 %v6975, %v6975
        %v7040 = vpack.c.b16 %v6976, %v6976
        %v7041 = vpack.c.b16 %v6977, %v6977
        %v7042 = vpack.c.b16 %v6978, %v6978
        %v7043 = vpack.c.b16 %v6979, %v6979
        %v7044 = vpack.c.b16 %v6980, %v6980
        %v7045 = vpack.c.b16 %v6981, %v6981
        %v7046 = vpack.c.b16 %v6982, %v6982
        %v7047 = vpack.c.b16 %v6983, %v6983
        %v7048 = vpack.c.b16 %v6984, %v6984
        %v7049 = vpack.c.b16 %v6985, %v6985
        %v7050 = vpack.c.b16 %v6986, %v6986
        %v7051 = vpack.c.b16 %v6987, %v6987
        %v7052 = vpack.c.b16 %v6988, %v6988
        %v7053 = vpack.c.b16 %v6989, %v6989
        %v7054 = vpack.c.b16 %v6990, %v6990
        %v7055 = vpack.c.b16 %v6991, %v6991
        %v7056 = vpack.c.b16 %v6992, %v6992
        %v7057 = vpack.c.b16 %v6993, %v6993
        %vm7122 = vcmask 125952
        %7123 = vst.msk [vmem:[%s652] sm:$0xf] %vm7122, %v6994
        %7124 = vst.msk [vmem:[%s652 + $0x4] sm:$0xf] %vm7122, %v6995
        %7125 = vst.msk [vmem:[%s652 + $0x8] sm:$0xf] %vm7122, %v6996
        %7126 = vst.msk [vmem:[%s652 + $0xc] sm:$0xf] %vm7122, %v6997
        %7127 = vst.msk [vmem:[%s652 + $0x10] sm:$0xf] %vm7122, %v6998
        %7128 = vst.msk [vmem:[%s652 + $0x14] sm:$0xf] %vm7122, %v6999
        %7129 = vst.msk [vmem:[%s652 + $0x18] sm:$0xf] %vm7122, %v7000
        %7130 = vst.msk [vmem:[%s652 + $0x1c] sm:$0xf] %vm7122, %v7001
        %7131 = vst.msk [vmem:[%s652 + $0x20] sm:$0xf] %vm7122, %v7002
        %7132 = vst.msk [vmem:[%s652 + $0x24] sm:$0xf] %vm7122, %v7003
        %7133 = vst.msk [vmem:[%s652 + $0x28] sm:$0xf] %vm7122, %v7004
        %7134 = vst.msk [vmem:[%s652 + $0x2c] sm:$0xf] %vm7122, %v7005
        %7135 = vst.msk [vmem:[%s652 + $0x30] sm:$0xf] %vm7122, %v7006
        %7136 = vst.msk [vmem:[%s652 + $0x34] sm:$0xf] %vm7122, %v7007
        %7137 = vst.msk [vmem:[%s652 + $0x38] sm:$0xf] %vm7122, %v7008
        %7138 = vst.msk [vmem:[%s652 + $0x3c] sm:$0xf] %vm7122, %v7009
        %7139 = vst.msk [vmem:[%s652 + $0x40] sm:$0xf] %vm7122, %v7010
        %7140 = vst.msk [vmem:[%s652 + $0x44] sm:$0xf] %vm7122, %v7011
        %7141 = vst.msk [vmem:[%s652 + $0x48] sm:$0xf] %vm7122, %v7012
        %7142 = vst.msk [vmem:[%s652 + $0x4c] sm:$0xf] %vm7122, %v7013
        %7143 = vst.msk [vmem:[%s652 + $0x50] sm:$0xf] %vm7122, %v7014
        %7144 = vst.msk [vmem:[%s652 + $0x54] sm:$0xf] %vm7122, %v7015
        %7145 = vst.msk [vmem:[%s652 + $0x58] sm:$0xf] %vm7122, %v7016
        %7146 = vst.msk [vmem:[%s652 + $0x5c] sm:$0xf] %vm7122, %v7017
        %7147 = vst.msk [vmem:[%s652 + $0x60] sm:$0xf] %vm7122, %v7018
        %7148 = vst.msk [vmem:[%s652 + $0x64] sm:$0xf] %vm7122, %v7019
        %7149 = vst.msk [vmem:[%s652 + $0x68] sm:$0xf] %vm7122, %v7020
        %7150 = vst.msk [vmem:[%s652 + $0x6c] sm:$0xf] %vm7122, %v7021
        %7151 = vst.msk [vmem:[%s652 + $0x70] sm:$0xf] %vm7122, %v7022
        %7152 = vst.msk [vmem:[%s652 + $0x74] sm:$0xf] %vm7122, %v7023
        %7153 = vst.msk [vmem:[%s652 + $0x78] sm:$0xf] %vm7122, %v7024
        %7154 = vst.msk [vmem:[%s652 + $0x7c] sm:$0xf] %vm7122, %v7025
        %7155 = vst.msk [vmem:[%s652 + $0x80] sm:$0xf] %vm7122, %v7026
        %7156 = vst.msk [vmem:[%s652 + $0x84] sm:$0xf] %vm7122, %v7027
        %7157 = vst.msk [vmem:[%s652 + $0x88] sm:$0xf] %vm7122, %v7028
        %7158 = vst.msk [vmem:[%s652 + $0x8c] sm:$0xf] %vm7122, %v7029
        %7159 = vst.msk [vmem:[%s652 + $0x90] sm:$0xf] %vm7122, %v7030
        %7160 = vst.msk [vmem:[%s652 + $0x94] sm:$0xf] %vm7122, %v7031
        %7161 = vst.msk [vmem:[%s652 + $0x98] sm:$0xf] %vm7122, %v7032
        %7162 = vst.msk [vmem:[%s652 + $0x9c] sm:$0xf] %vm7122, %v7033
        %7163 = vst.msk [vmem:[%s652 + $0xa0] sm:$0xf] %vm7122, %v7034
        %7164 = vst.msk [vmem:[%s652 + $0xa4] sm:$0xf] %vm7122, %v7035
        %7165 = vst.msk [vmem:[%s652 + $0xa8] sm:$0xf] %vm7122, %v7036
        %7166 = vst.msk [vmem:[%s652 + $0xac] sm:$0xf] %vm7122, %v7037
        %7167 = vst.msk [vmem:[%s652 + $0xb0] sm:$0xf] %vm7122, %v7038
        %7168 = vst.msk [vmem:[%s652 + $0xb4] sm:$0xf] %vm7122, %v7039
        %7169 = vst.msk [vmem:[%s652 + $0xb8] sm:$0xf] %vm7122, %v7040
        %7170 = vst.msk [vmem:[%s652 + $0xbc] sm:$0xf] %vm7122, %v7041
        %7171 = vst.msk [vmem:[%s652 + $0xc0] sm:$0xf] %vm7122, %v7042
        %7172 = vst.msk [vmem:[%s652 + $0xc4] sm:$0xf] %vm7122, %v7043
        %7173 = vst.msk [vmem:[%s652 + $0xc8] sm:$0xf] %vm7122, %v7044
        %7174 = vst.msk [vmem:[%s652 + $0xcc] sm:$0xf] %vm7122, %v7045
        %7175 = vst.msk [vmem:[%s652 + $0xd0] sm:$0xf] %vm7122, %v7046
        %7176 = vst.msk [vmem:[%s652 + $0xd4] sm:$0xf] %vm7122, %v7047
        %7177 = vst.msk [vmem:[%s652 + $0xd8] sm:$0xf] %vm7122, %v7048
        %7178 = vst.msk [vmem:[%s652 + $0xdc] sm:$0xf] %vm7122, %v7049
        %7179 = vst.msk [vmem:[%s652 + $0xe0] sm:$0xf] %vm7122, %v7050
        %7180 = vst.msk [vmem:[%s652 + $0xe4] sm:$0xf] %vm7122, %v7051
        %7181 = vst.msk [vmem:[%s652 + $0xe8] sm:$0xf] %vm7122, %v7052
        %7182 = vst.msk [vmem:[%s652 + $0xec] sm:$0xf] %vm7122, %v7053
        %7183 = vst.msk [vmem:[%s652 + $0xf0] sm:$0xf] %vm7122, %v7054
        %7184 = vst.msk [vmem:[%s652 + $0xf4] sm:$0xf] %vm7122, %v7055
        %7185 = vst.msk [vmem:[%s652 + $0xf8] sm:$0xf] %vm7122, %v7056
        %7186 = vst.msk [vmem:[%s652 + $0xfc] sm:$0xf] %vm7122, %v7057
        %s7187 = sand.u32 %s344, 1
        %s7188 = scalar_lea.sflag [#allocation4], %s7187
        %s7189 = sand.u32 %s344, 1
        %s7190 = smul.addr %s7189, 256
        %s7191 = scalar_lea.vmem [#allocation10], %s7190
        // Predicated region
        $region85: #{tpu_custom_call.1} parent=67 // pred_check
          %p7192 = pneg %p354
        $region86: #{tpu_custom_call.1} parent=67 // pred_check_branch
          %7194 = sbr.rel (%p7192) target = $region88
        $region87: #{tpu_custom_call.1} parent=67 // pred_region
          #allocation18 [shape = 'u32[6]{0}', space=smem, size = 0x18, scoped, tag = 'DMA stride descriptor']
          %s7195 = smul.u32 4, %s37
          %s7196 = smul.u32 8, %s38
          %s7198 = ssub.s32 4096, 4096
          %7199 = vsyncadd %s7188, %s7198
          %s7200 = smul.addr %s7196, 2
          %s7201 = smul.addr %s7195, 32
          %s7202 = sadd.s32 %s7200, %s7201
          %s7203 = smul.addr %s7202, 64
          %s7204 = scalar_lea.hbm %s12, %s7203
          %s7206 = sshll.u32 1, 14
          %s7207 = sxor.u32 4294967295, %s7206
          %s7210 = sshll.u32 7, 18
          %s7211 = sxor.u32 4294967295, %s7210
          %s7212 = sand.u32 0, %s7211
          %s7214 = sor.u32 %s7212, 0
          %s7216 = sshll.u32 3, 24
          %s7217 = sxor.u32 4294967295, %s7216
          %s7218 = sand.u32 %s7214, %s7217
          %s7220 = sor.u32 %s7218, 0
          %s7221 = sshll.u32 %s7191, 4
          %s7222 = int_to_ptr.vmem [resolvable:$true] %s7221
          %7228 = sst [smem:[#allocation18]] 1024
          %s7229 = scalar_lea.smem [#allocation18], 1
          %7230 = sst [smem:[%s7229]] 2048
          %s7231 = scalar_lea.smem [#allocation18], 2
          %7232 = sst [smem:[%s7231]] 16
          %s7233 = scalar_lea.smem [#allocation18], 3
          %7234 = sst [smem:[%s7233]] 64
          %s7235 = scalar_lea.smem [#allocation18], 4
          %7236 = sst [smem:[%s7235]] 64
          %s7237 = scalar_lea.smem [#allocation18], 5
          %7238 = sst [smem:[%s7237]] 4
          %7240 = dma.general %s7222, 4096, %s7204, %s7188, [#allocation17], [#allocation18], %s7220, 0
        $region88: #{tpu_custom_call.1} parent=67 // pred_fallthru
          _
      $region68: #{tpu_custom_call.1} parent=5 // pred_fallthru
        _
      %p7241 = scmp.le.s32.totalorder 2, %s28
      // Predicated region
      $region89: #{tpu_custom_call.1} parent=5 // pred_check
        %p7242 = pneg %p7241
      $region90: #{tpu_custom_call.1} parent=5 // pred_check_branch
        %7244 = sbr.rel (%p7242) target = $region92
      $region91: #{tpu_custom_call.1} parent=5 // pred_region
        %s7245 = ssub.s32 %s28, 2
        // Predicated region
        $region93: #{tpu_custom_call.1} parent=91 // pred_check
          %p7246 = pneg %p360
        $region94: #{tpu_custom_call.1} parent=91 // pred_check_branch
          %7248 = sbr.rel (%p7246) target = $region96
        $region95: #{tpu_custom_call.1} parent=91 // pred_region
          %s7249 = sand.u32 %s345, 1
          %s7250 = scalar_lea.sflag [#allocation4], %s7249
          %s7251 = sand.u32 %s345, 1
          %s7252 = smul.addr %s7251, 256
          %s7253 = scalar_lea.vmem [#allocation10], %s7252
          %7254 = dma.done %s7250, 4096
        $region96: #{tpu_custom_call.1} parent=91 // pred_fallthru
          _
      $region92: #{tpu_custom_call.1} parent=5 // pred_fallthru
        _
    $region6: #{tpu_custom_call.1} parent=1 // loop_footer
      %s32 = sadd.s32 1, %s28
    $region7: #{tpu_custom_call.1} parent=1 // loop_footer_branch
      %27 = sbr.rel target = $region3
    $region8: #{tpu_custom_call.1} parent=1 // loop_exit
      _
    %7255 = vsyncpa [#allocation3], 1
    %s7256 = scalar_lea.sflag [#allocation3], 1
    %7257 = vsyncpa %s7256, 1
    %7258 = vsyncpa [#allocation6], 1
    %s7259 = scalar_lea.sflag [#allocation6], 1
    %7260 = vsyncpa %s7259, 1
    %7261 = vsyncpa [#allocation9], 1
    %7262 = vsyncpa [#allocation4], 1
    %s7263 = scalar_lea.sflag [#allocation4], 1
    %7264 = vsyncpa %s7263, 1

</llo_original>
